<compile_context>
chip_gen: v5e
topology: v5e:2x2
jax: 0.10.0
libtpu: 0.0.40
codegen_flags: <defaults>
</compile_context>

<pallas_src>
import math
import functools

import jax
import jax.numpy as jnp
from jax.experimental import pallas as pl
from jax.experimental.pallas import tpu as pltpu


# ------------------------------ configuration ------------------------------ #

OBS_DIM, ACTION_DIM = 33, 8
D_MODEL, N_LAYERS, N_HEADS = 128, 4, 4
D_FF = 4 * D_MODEL
OBS_PAD = 128          # obs_dim 33 padded to a lane-aligned K
ACT_PAD = 128          # action_dim 8 padded so the output store is lane-dense
LN_EPS = 1e-5


# ------------------------------- fused kernel ------------------------------ #

def _opta_fused_kernel(obs_ref, pe_ref, ew_ref, eb_ref,
                       wqkv_ref, bqkv_ref, wo_ref, bo_ref,
                       ln1g_ref, ln1b_ref, w1_ref, b1_ref,
                       w2_ref, b2_ref, ln2g_ref, ln2b_ref,
                       hw_ref, hb_ref, out_ref,
                       *, n_layers, n_heads, d_model, eps):
    """One grid step = one batch element: (T, D) activation resident in vregs."""
    dh = d_model // n_heads
    scale = 1.0 / math.sqrt(dh)
    f32 = jnp.float32
    bf16 = jnp.bfloat16

    def layernorm(y, g, b):
        mu = jnp.mean(y, axis=-1, keepdims=True)
        yc = y - mu
        var = jnp.mean(yc * yc, axis=-1, keepdims=True)
        return yc * jax.lax.rsqrt(var + eps) * g + b

    # ---- embedding: ReLU(obs @ W + b) + positional encoding ----
    x = jnp.dot(obs_ref[...].astype(bf16), ew_ref[...],
                preferred_element_type=f32)
    x = jnp.maximum(x + eb_ref[...], 0.0) + pe_ref[...]            # (T, D) f32

    for l in range(n_layers):
        # ---- multi-head self-attention (post-norm residual block) ----
        qkv = jnp.dot(x.astype(bf16), wqkv_ref[l],
                      preferred_element_type=f32) + bqkv_ref[l]    # (T, 3D)
        q = qkv[:, 0:d_model]
        k = qkv[:, d_model:2 * d_model]
        v = qkv[:, 2 * d_model:3 * d_model]

        heads = []
        for h in range(n_heads):                                   # heads by lane offset
            sl = slice(h * dh, (h + 1) * dh)
            qh = q[:, sl].astype(bf16)                             # (T, dh)
            kh = k[:, sl].astype(bf16)
            vh = v[:, sl].astype(bf16)
            # scores = qh @ kh^T via dot_general (no explicit transpose)
            s = jax.lax.dot_general(
                qh, kh, (((1,), (1,)), ((), ())),
                preferred_element_type=f32) * scale                # (T, T) f32
            m = jnp.max(s, axis=-1, keepdims=True)
            p = jnp.exp(s - m)
            denom = jnp.sum(p, axis=-1, keepdims=True)
            p = p * pl.reciprocal(denom, approx=True)
            heads.append(jnp.dot(p.astype(bf16), vh,
                                 preferred_element_type=f32))      # (T, dh)
        a = jnp.concatenate(heads, axis=-1)                        # (T, D)
        a = jnp.dot(a.astype(bf16), wo_ref[l],
                    preferred_element_type=f32) + bo_ref[l]
        x = layernorm(x + a, ln1g_ref[l], ln1b_ref[l])

        # ---- feed-forward (ReLU) ----
        h1 = jnp.dot(x.astype(bf16), w1_ref[l],
                     preferred_element_type=f32) + b1_ref[l]
        h1 = jnp.maximum(h1, 0.0)
        h2 = jnp.dot(h1.astype(bf16), w2_ref[l],
                     preferred_element_type=f32) + b2_ref[l]
        x = layernorm(x + h2, ln2g_ref[l], ln2b_ref[l])

    # ---- policy head (lane-dense padded output) ----
    logits = jnp.dot(x.astype(bf16), hw_ref[...],
                     preferred_element_type=f32) + hb_ref[...]
    out_ref[...] = logits.astype(out_ref.dtype)


# ------------------------------ call wrapper -------------------------------- #

def _rep0(shape):
    """Full-array block that stays at block index 0 for every grid step."""
    n = len(shape)
    return pl.BlockSpec(shape, lambda i, n=n: (0,) * n)


def opta_forward(params, obs_seq):
    """obs_seq: (B, T, obs_dim) -> logits (B, T, action_dim)."""
    B, T, obs_dim = obs_seq.shape
    D = D_MODEL

    x2d = obs_seq.reshape(B * T, obs_dim).astype(jnp.float32)
    x2d = jnp.pad(x2d, ((0, 0), (0, OBS_PAD - obs_dim)))           # (B*T, OBS_PAD)
    pe = params["pe"][:T]                                          # (T, D), precomputed

    operands = (
        x2d,                    # (B*T, OBS_PAD) f32
        pe,                     # (T, D)         f32
        params["embed_w"],      # (OBS_PAD, D)   bf16
        params["embed_b"],      # (1, D)         f32
        params["wqkv"],         # (L, D, 3D)     bf16
        params["bqkv"],         # (L, 1, 3D)     f32
        params["wo"],           # (L, D, D)      bf16
        params["bo"],           # (L, 1, D)      f32
        params["ln1_g"],        # (L, 1, D)      f32
        params["ln1_b"],        # (L, 1, D)      f32
        params["w1"],           # (L, D, D_FF)   bf16
        params["b1"],           # (L, 1, D_FF)   f32
        params["w2"],           # (L, D_FF, D)   bf16
        params["b2"],           # (L, 1, D)      f32
        params["ln2_g"],        # (L, 1, D)      f32
        params["ln2_b"],        # (L, 1, D)      f32
        params["head_w"],       # (D, ACT_PAD)   bf16
        params["head_b"],       # (1, ACT_PAD)   f32
    )

    in_specs = [pl.BlockSpec((T, OBS_PAD), lambda i: (i, 0))]
    in_specs += [_rep0(op.shape) for op in operands[1:]]

    kernel = functools.partial(
        _opta_fused_kernel,
        n_layers=N_LAYERS, n_heads=N_HEADS, d_model=D, eps=LN_EPS)

    out = pl.pallas_call(
        kernel,
        out_shape=jax.ShapeDtypeStruct((B * T, ACT_PAD), jnp.float32),
        grid=(B,),
        in_specs=in_specs,
        out_specs=pl.BlockSpec((T, ACT_PAD), lambda i: (i, 0)),
        compiler_params=pltpu.CompilerParams(
            dimension_semantics=("parallel",)),                    # megacore on v7x
    )(*operands)

    return out[:, :ACTION_DIM].reshape(B, T, ACTION_DIM)


# --------------------------- params / constants ----------------------------- #

def sinusoidal_pe(T, d_model):
    pos = jnp.arange(T, dtype=jnp.float32)[:, None]
    div = jnp.exp(jnp.arange(0, d_model, 2, dtype=jnp.float32)
                  * -(math.log(10000.0) / d_model))
    pe = jnp.zeros((T, d_model), jnp.float32)
    pe = pe.at[:, 0::2].set(jnp.sin(pos * div))
    pe = pe.at[:, 1::2].set(jnp.cos(pos * div))
    return pe


def init_params(key, max_len=64):
    """Deterministic synthetic init (stand-in for orthogonal gain=0.01 init)."""
    L = N_LAYERS
    keys = jax.random.split(key, 2 + 4 * L)

    embed_w = jnp.zeros((OBS_PAD, D_MODEL), jnp.float32)
    embed_w = embed_w.at[:OBS_DIM].set(
        0.01 * jax.random.normal(keys[0], (OBS_DIM, D_MODEL), jnp.float32))
    head_w = jnp.zeros((D_MODEL, ACT_PAD), jnp.float32)
    head_w = head_w.at[:, :ACTION_DIM].set(
        0.01 * jax.random.normal(keys[1], (D_MODEL, ACTION_DIM), jnp.float32))

    wqkv, wo, w1, w2 = [], [], [], []
    for l in range(L):
        k0, k1, k2, k3 = keys[2 + 4 * l: 6 + 4 * l]
        wqkv.append(0.02 * jax.random.normal(k0, (D_MODEL, 3 * D_MODEL), jnp.float32))
        wo.append(0.01 * jax.random.normal(k1, (D_MODEL, D_MODEL), jnp.float32))
        w1.append(0.01 * jax.random.normal(k2, (D_MODEL, D_FF), jnp.float32))
        w2.append(0.01 * jax.random.normal(k3, (D_FF, D_MODEL), jnp.float32))

    return {
        "pe": sinusoidal_pe(max_len, D_MODEL),                    # precomputed once
        "embed_w": embed_w.astype(jnp.bfloat16),
        "embed_b": jnp.zeros((1, D_MODEL), jnp.float32),
        "wqkv": jnp.stack(wqkv).astype(jnp.bfloat16),
        "bqkv": jnp.zeros((L, 1, 3 * D_MODEL), jnp.float32),
        "wo": jnp.stack(wo).astype(jnp.bfloat16),
        "bo": jnp.zeros((L, 1, D_MODEL), jnp.float32),
        "ln1_g": jnp.ones((L, 1, D_MODEL), jnp.float32),
        "ln1_b": jnp.zeros((L, 1, D_MODEL), jnp.float32),
        "w1": jnp.stack(w1).astype(jnp.bfloat16),
        "b1": jnp.zeros((L, 1, D_FF), jnp.float32),
        "w2": jnp.stack(w2).astype(jnp.bfloat16),
        "b2": jnp.zeros((L, 1, D_MODEL), jnp.float32),
        "ln2_g": jnp.ones((L, 1, D_MODEL), jnp.float32),
        "ln2_b": jnp.zeros((L, 1, D_MODEL), jnp.float32),
        "head_w": head_w.astype(jnp.bfloat16),
        "head_b": jnp.zeros((1, ACT_PAD), jnp.float32),
    }


# ----------------------------------- main ----------------------------------- #

if __name__ == "__main__":
    B, T = 2, 8

    key = jax.random.PRNGKey(0)
    pkey, xkey = jax.random.split(key)
    params = init_params(pkey, max_len=64)
    obs_seq = jax.random.normal(xkey, (B, T, OBS_DIM), jnp.float32)

    fwd = jax.jit(opta_forward)
    logits = fwd(params, obs_seq)
    jax.block_until_ready(logits)

    assert logits.shape == (B, T, ACTION_DIM)
    assert bool(jnp.all(jnp.isfinite(logits)))
    print("KERNEL_OK")
</pallas_src>

<mosaic_0001>
module attributes {stable_mosaic.version = 11 : i64} {
  func.func @_opta_fused_kernel(%arg0: i32, %arg1: memref<8x128xf32, #tpu.memory_space<vmem>>, %arg2: memref<8x128xf32, #tpu.memory_space<vmem>>, %arg3: memref<128x128xbf16, #tpu.memory_space<vmem>>, %arg4: memref<1x128xf32, #tpu.memory_space<vmem>>, %arg5: memref<4x128x384xbf16, #tpu.memory_space<vmem>>, %arg6: memref<4x1x384xf32, #tpu.memory_space<vmem>>, %arg7: memref<4x128x128xbf16, #tpu.memory_space<vmem>>, %arg8: memref<4x1x128xf32, #tpu.memory_space<vmem>>, %arg9: memref<4x1x128xf32, #tpu.memory_space<vmem>>, %arg10: memref<4x1x128xf32, #tpu.memory_space<vmem>>, %arg11: memref<4x128x512xbf16, #tpu.memory_space<vmem>>, %arg12: memref<4x1x512xf32, #tpu.memory_space<vmem>>, %arg13: memref<4x512x128xbf16, #tpu.memory_space<vmem>>, %arg14: memref<4x1x128xf32, #tpu.memory_space<vmem>>, %arg15: memref<4x1x128xf32, #tpu.memory_space<vmem>>, %arg16: memref<4x1x128xf32, #tpu.memory_space<vmem>>, %arg17: memref<128x128xbf16, #tpu.memory_space<vmem>>, %arg18: memref<1x128xf32, #tpu.memory_space<vmem>>, %arg19: memref<8x128xf32, #tpu.memory_space<vmem>>) attributes {dimension_semantics = [#tpu.dimension_semantics<parallel>], iteration_bounds = array<i64: 2>, scalar_prefetch = 0 : i64, scratch_operands = 0 : i64, tpu.core_type = #tpu.core_type<tc>, window_params = [{transform_indices = @transform_0, window_bounds = array<i64: 8, 128>}, {pipeline_mode = #tpu.pipeline_mode<synchronous>, transform_indices = @transform_1, window_bounds = array<i64: 8, 128>}, {pipeline_mode = #tpu.pipeline_mode<synchronous>, transform_indices = @transform_2, window_bounds = array<i64: 128, 128>}, {pipeline_mode = #tpu.pipeline_mode<synchronous>, transform_indices = @transform_3, window_bounds = array<i64: 1, 128>}, {pipeline_mode = #tpu.pipeline_mode<synchronous>, transform_indices = @transform_4, window_bounds = array<i64: 4, 128, 384>}, {pipeline_mode = #tpu.pipeline_mode<synchronous>, transform_indices = @transform_5, window_bounds = array<i64: 4, 1, 384>}, {pipeline_mode = #tpu.pipeline_mode<synchronous>, transform_indices = @transform_6, window_bounds = array<i64: 4, 128, 128>}, {pipeline_mode = #tpu.pipeline_mode<synchronous>, transform_indices = @transform_7, window_bounds = array<i64: 4, 1, 128>}, {pipeline_mode = #tpu.pipeline_mode<synchronous>, transform_indices = @transform_8, window_bounds = array<i64: 4, 1, 128>}, {pipeline_mode = #tpu.pipeline_mode<synchronous>, transform_indices = @transform_9, window_bounds = array<i64: 4, 1, 128>}, {pipeline_mode = #tpu.pipeline_mode<synchronous>, transform_indices = @transform_10, window_bounds = array<i64: 4, 128, 512>}, {pipeline_mode = #tpu.pipeline_mode<synchronous>, transform_indices = @transform_11, window_bounds = array<i64: 4, 1, 512>}, {pipeline_mode = #tpu.pipeline_mode<synchronous>, transform_indices = @transform_12, window_bounds = array<i64: 4, 512, 128>}, {pipeline_mode = #tpu.pipeline_mode<synchronous>, transform_indices = @transform_13, window_bounds = array<i64: 4, 1, 128>}, {pipeline_mode = #tpu.pipeline_mode<synchronous>, transform_indices = @transform_14, window_bounds = array<i64: 4, 1, 128>}, {pipeline_mode = #tpu.pipeline_mode<synchronous>, transform_indices = @transform_15, window_bounds = array<i64: 4, 1, 128>}, {pipeline_mode = #tpu.pipeline_mode<synchronous>, transform_indices = @transform_16, window_bounds = array<i64: 128, 128>}, {pipeline_mode = #tpu.pipeline_mode<synchronous>, transform_indices = @transform_17, window_bounds = array<i64: 1, 128>}, {transform_indices = @transform_18, window_bounds = array<i64: 8, 128>}]} {
    %c0 = arith.constant 0 : index
    %c0_0 = arith.constant 0 : index
    %0 = vector.load %arg1[%c0, %c0_0] : memref<8x128xf32, #tpu.memory_space<vmem>>, vector<8x128xf32>
    %1 = arith.truncf %0 : vector<8x128xf32> to vector<8x128xbf16>
    %c0_1 = arith.constant 0 : index
    %c0_2 = arith.constant 0 : index
    %2 = vector.load %arg3[%c0_1, %c0_2] : memref<128x128xbf16, #tpu.memory_space<vmem>>, vector<128x128xbf16>
    %cst = arith.constant dense<0.000000e+00> : vector<8x128xf32>
    %3 = tpu.matmul %1, %2, %cst {dimension_numbers = #tpu.dot_dimension_numbers<[1], [0], [0], [1], [0, 0, 1, 1], [], []>} : vector<8x128xbf16>, vector<128x128xbf16>, vector<8x128xf32> -> vector<8x128xf32>
    %c0_3 = arith.constant 0 : index
    %c0_4 = arith.constant 0 : index
    %4 = vector.load %arg4[%c0_3, %c0_4] : memref<1x128xf32, #tpu.memory_space<vmem>>, vector<1x128xf32>
    %5 = vector.broadcast %4 : vector<1x128xf32> to vector<8x128xf32>
    %6 = arith.addf %3, %5 : vector<8x128xf32>
    %cst_5 = arith.constant 0.000000e+00 : f32
    %7 = vector.broadcast %cst_5 : f32 to vector<8x128xf32>
    %8 = arith.maximumf %6, %7 : vector<8x128xf32>
    %c0_6 = arith.constant 0 : index
    %c0_7 = arith.constant 0 : index
    %9 = vector.load %arg2[%c0_6, %c0_7] : memref<8x128xf32, #tpu.memory_space<vmem>>, vector<8x128xf32>
    %10 = arith.addf %8, %9 : vector<8x128xf32>
    %11 = arith.truncf %10 : vector<8x128xf32> to vector<8x128xbf16>
    %c0_8 = arith.constant 0 : index
    %c0_9 = arith.constant 0 : index
    %c0_10 = arith.constant 0 : index
    %12 = vector.load %arg5[%c0_8, %c0_9, %c0_10] : memref<4x128x384xbf16, #tpu.memory_space<vmem>>, vector<1x128x384xbf16>
    %13 = vector.shape_cast %12 : vector<1x128x384xbf16> to vector<128x384xbf16>
    %cst_11 = arith.constant dense<0.000000e+00> : vector<8x384xf32>
    %14 = tpu.matmul %11, %13, %cst_11 {dimension_numbers = #tpu.dot_dimension_numbers<[1], [0], [0], [1], [0, 0, 1, 1], [], []>} : vector<8x128xbf16>, vector<128x384xbf16>, vector<8x384xf32> -> vector<8x384xf32>
    %c0_12 = arith.constant 0 : index
    %c0_13 = arith.constant 0 : index
    %c0_14 = arith.constant 0 : index
    %15 = vector.load %arg6[%c0_12, %c0_13, %c0_14] : memref<4x1x384xf32, #tpu.memory_space<vmem>>, vector<1x1x384xf32>
    %16 = vector.shape_cast %15 : vector<1x1x384xf32> to vector<1x384xf32>
    %17 = vector.broadcast %16 : vector<1x384xf32> to vector<8x384xf32>
    %18 = arith.addf %14, %17 : vector<8x384xf32>
    %19 = vector.extract_strided_slice %18 {offsets = [0, 0], sizes = [8, 128], strides = [1, 1]} : vector<8x384xf32> to vector<8x128xf32>
    %20 = vector.extract_strided_slice %18 {offsets = [0, 128], sizes = [8, 128], strides = [1, 1]} : vector<8x384xf32> to vector<8x128xf32>
    %21 = vector.extract_strided_slice %18 {offsets = [0, 256], sizes = [8, 128], strides = [1, 1]} : vector<8x384xf32> to vector<8x128xf32>
    %22 = vector.extract_strided_slice %19 {offsets = [0, 0], sizes = [8, 32], strides = [1, 1]} : vector<8x128xf32> to vector<8x32xf32>
    %23 = arith.truncf %22 : vector<8x32xf32> to vector<8x32xbf16>
    %24 = vector.extract_strided_slice %20 {offsets = [0, 0], sizes = [8, 32], strides = [1, 1]} : vector<8x128xf32> to vector<8x32xf32>
    %25 = arith.truncf %24 : vector<8x32xf32> to vector<8x32xbf16>
    %26 = vector.extract_strided_slice %21 {offsets = [0, 0], sizes = [8, 32], strides = [1, 1]} : vector<8x128xf32> to vector<8x32xf32>
    %27 = arith.truncf %26 : vector<8x32xf32> to vector<8x32xbf16>
    %cst_15 = arith.constant dense<0.000000e+00> : vector<8x8xf32>
    %28 = tpu.matmul %23, %25, %cst_15 {dimension_numbers = #tpu.dot_dimension_numbers<[1], [1], [0], [0], [0, 0, 1, 0], [], []>} : vector<8x32xbf16>, vector<8x32xbf16>, vector<8x8xf32> -> vector<8x8xf32>
    %cst_16 = arith.constant 0.176776692 : f32
    %29 = vector.broadcast %cst_16 : f32 to vector<8x8xf32>
    %30 = arith.mulf %28, %29 : vector<8x8xf32>
    %cst_17 = arith.constant dense<0xFF800000> : vector<8xf32>
    %31 = vector.multi_reduction <maximumf>, %30, %cst_17 [1] : vector<8x8xf32> to vector<8xf32>
    %32 = vector.shape_cast %31 : vector<8xf32> to vector<8x1xf32>
    %33 = vector.broadcast %32 : vector<8x1xf32> to vector<8x8xf32>
    %34 = arith.subf %30, %33 : vector<8x8xf32>
    %35 = math.exp %34 : vector<8x8xf32>
    %cst_18 = arith.constant dense<0.000000e+00> : vector<8xf32>
    %36 = vector.multi_reduction <add>, %35, %cst_18 [1] : vector<8x8xf32> to vector<8xf32>
    %37 = vector.shape_cast %36 : vector<8xf32> to vector<8x1xf32>
    %38 = tpu.reciprocal %37 {approx = true} : vector<8x1xf32> -> vector<8x1xf32>
    %39 = vector.broadcast %38 : vector<8x1xf32> to vector<8x8xf32>
    %40 = arith.mulf %35, %39 : vector<8x8xf32>
    %41 = arith.truncf %40 : vector<8x8xf32> to vector<8x8xbf16>
    %cst_19 = arith.constant dense<0.000000e+00> : vector<8x32xf32>
    %42 = tpu.matmul %41, %27, %cst_19 {dimension_numbers = #tpu.dot_dimension_numbers<[1], [0], [0], [1], [0, 0, 1, 1], [], []>} : vector<8x8xbf16>, vector<8x32xbf16>, vector<8x32xf32> -> vector<8x32xf32>
    %43 = vector.extract_strided_slice %19 {offsets = [0, 32], sizes = [8, 32], strides = [1, 1]} : vector<8x128xf32> to vector<8x32xf32>
    %44 = arith.truncf %43 : vector<8x32xf32> to vector<8x32xbf16>
    %45 = vector.extract_strided_slice %20 {offsets = [0, 32], sizes = [8, 32], strides = [1, 1]} : vector<8x128xf32> to vector<8x32xf32>
    %46 = arith.truncf %45 : vector<8x32xf32> to vector<8x32xbf16>
    %47 = vector.extract_strided_slice %21 {offsets = [0, 32], sizes = [8, 32], strides = [1, 1]} : vector<8x128xf32> to vector<8x32xf32>
    %48 = arith.truncf %47 : vector<8x32xf32> to vector<8x32xbf16>
    %cst_20 = arith.constant dense<0.000000e+00> : vector<8x8xf32>
    %49 = tpu.matmul %44, %46, %cst_20 {dimension_numbers = #tpu.dot_dimension_numbers<[1], [1], [0], [0], [0, 0, 1, 0], [], []>} : vector<8x32xbf16>, vector<8x32xbf16>, vector<8x8xf32> -> vector<8x8xf32>
    %cst_21 = arith.constant 0.176776692 : f32
    %50 = vector.broadcast %cst_21 : f32 to vector<8x8xf32>
    %51 = arith.mulf %49, %50 : vector<8x8xf32>
    %cst_22 = arith.constant dense<0xFF800000> : vector<8xf32>
    %52 = vector.multi_reduction <maximumf>, %51, %cst_22 [1] : vector<8x8xf32> to vector<8xf32>
    %53 = vector.shape_cast %52 : vector<8xf32> to vector<8x1xf32>
    %54 = vector.broadcast %53 : vector<8x1xf32> to vector<8x8xf32>
    %55 = arith.subf %51, %54 : vector<8x8xf32>
    %56 = math.exp %55 : vector<8x8xf32>
    %cst_23 = arith.constant dense<0.000000e+00> : vector<8xf32>
    %57 = vector.multi_reduction <add>, %56, %cst_23 [1] : vector<8x8xf32> to vector<8xf32>
    %58 = vector.shape_cast %57 : vector<8xf32> to vector<8x1xf32>
    %59 = tpu.reciprocal %58 {approx = true} : vector<8x1xf32> -> vector<8x1xf32>
    %60 = vector.broadcast %59 : vector<8x1xf32> to vector<8x8xf32>
    %61 = arith.mulf %56, %60 : vector<8x8xf32>
    %62 = arith.truncf %61 : vector<8x8xf32> to vector<8x8xbf16>
    %cst_24 = arith.constant dense<0.000000e+00> : vector<8x32xf32>
    %63 = tpu.matmul %62, %48, %cst_24 {dimension_numbers = #tpu.dot_dimension_numbers<[1], [0], [0], [1], [0, 0, 1, 1], [], []>} : vector<8x8xbf16>, vector<8x32xbf16>, vector<8x32xf32> -> vector<8x32xf32>
    %64 = vector.extract_strided_slice %19 {offsets = [0, 64], sizes = [8, 32], strides = [1, 1]} : vector<8x128xf32> to vector<8x32xf32>
    %65 = arith.truncf %64 : vector<8x32xf32> to vector<8x32xbf16>
    %66 = vector.extract_strided_slice %20 {offsets = [0, 64], sizes = [8, 32], strides = [1, 1]} : vector<8x128xf32> to vector<8x32xf32>
    %67 = arith.truncf %66 : vector<8x32xf32> to vector<8x32xbf16>
    %68 = vector.extract_strided_slice %21 {offsets = [0, 64], sizes = [8, 32], strides = [1, 1]} : vector<8x128xf32> to vector<8x32xf32>
    %69 = arith.truncf %68 : vector<8x32xf32> to vector<8x32xbf16>
    %cst_25 = arith.constant dense<0.000000e+00> : vector<8x8xf32>
    %70 = tpu.matmul %65, %67, %cst_25 {dimension_numbers = #tpu.dot_dimension_numbers<[1], [1], [0], [0], [0, 0, 1, 0], [], []>} : vector<8x32xbf16>, vector<8x32xbf16>, vector<8x8xf32> -> vector<8x8xf32>
    %cst_26 = arith.constant 0.176776692 : f32
    %71 = vector.broadcast %cst_26 : f32 to vector<8x8xf32>
    %72 = arith.mulf %70, %71 : vector<8x8xf32>
    %cst_27 = arith.constant dense<0xFF800000> : vector<8xf32>
    %73 = vector.multi_reduction <maximumf>, %72, %cst_27 [1] : vector<8x8xf32> to vector<8xf32>
    %74 = vector.shape_cast %73 : vector<8xf32> to vector<8x1xf32>
    %75 = vector.broadcast %74 : vector<8x1xf32> to vector<8x8xf32>
    %76 = arith.subf %72, %75 : vector<8x8xf32>
    %77 = math.exp %76 : vector<8x8xf32>
    %cst_28 = arith.constant dense<0.000000e+00> : vector<8xf32>
    %78 = vector.multi_reduction <add>, %77, %cst_28 [1] : vector<8x8xf32> to vector<8xf32>
    %79 = vector.shape_cast %78 : vector<8xf32> to vector<8x1xf32>
    %80 = tpu.reciprocal %79 {approx = true} : vector<8x1xf32> -> vector<8x1xf32>
    %81 = vector.broadcast %80 : vector<8x1xf32> to vector<8x8xf32>
    %82 = arith.mulf %77, %81 : vector<8x8xf32>
    %83 = arith.truncf %82 : vector<8x8xf32> to vector<8x8xbf16>
    %cst_29 = arith.constant dense<0.000000e+00> : vector<8x32xf32>
    %84 = tpu.matmul %83, %69, %cst_29 {dimension_numbers = #tpu.dot_dimension_numbers<[1], [0], [0], [1], [0, 0, 1, 1], [], []>} : vector<8x8xbf16>, vector<8x32xbf16>, vector<8x32xf32> -> vector<8x32xf32>
    %85 = vector.extract_strided_slice %19 {offsets = [0, 96], sizes = [8, 32], strides = [1, 1]} : vector<8x128xf32> to vector<8x32xf32>
    %86 = arith.truncf %85 : vector<8x32xf32> to vector<8x32xbf16>
    %87 = vector.extract_strided_slice %20 {offsets = [0, 96], sizes = [8, 32], strides = [1, 1]} : vector<8x128xf32> to vector<8x32xf32>
    %88 = arith.truncf %87 : vector<8x32xf32> to vector<8x32xbf16>
    %89 = vector.extract_strided_slice %21 {offsets = [0, 96], sizes = [8, 32], strides = [1, 1]} : vector<8x128xf32> to vector<8x32xf32>
    %90 = arith.truncf %89 : vector<8x32xf32> to vector<8x32xbf16>
    %cst_30 = arith.constant dense<0.000000e+00> : vector<8x8xf32>
    %91 = tpu.matmul %86, %88, %cst_30 {dimension_numbers = #tpu.dot_dimension_numbers<[1], [1], [0], [0], [0, 0, 1, 0], [], []>} : vector<8x32xbf16>, vector<8x32xbf16>, vector<8x8xf32> -> vector<8x8xf32>
    %cst_31 = arith.constant 0.176776692 : f32
    %92 = vector.broadcast %cst_31 : f32 to vector<8x8xf32>
    %93 = arith.mulf %91, %92 : vector<8x8xf32>
    %cst_32 = arith.constant dense<0xFF800000> : vector<8xf32>
    %94 = vector.multi_reduction <maximumf>, %93, %cst_32 [1] : vector<8x8xf32> to vector<8xf32>
    %95 = vector.shape_cast %94 : vector<8xf32> to vector<8x1xf32>
    %96 = vector.broadcast %95 : vector<8x1xf32> to vector<8x8xf32>
    %97 = arith.subf %93, %96 : vector<8x8xf32>
    %98 = math.exp %97 : vector<8x8xf32>
    %cst_33 = arith.constant dense<0.000000e+00> : vector<8xf32>
    %99 = vector.multi_reduction <add>, %98, %cst_33 [1] : vector<8x8xf32> to vector<8xf32>
    %100 = vector.shape_cast %99 : vector<8xf32> to vector<8x1xf32>
    %101 = tpu.reciprocal %100 {approx = true} : vector<8x1xf32> -> vector<8x1xf32>
    %102 = vector.broadcast %101 : vector<8x1xf32> to vector<8x8xf32>
    %103 = arith.mulf %98, %102 : vector<8x8xf32>
    %104 = arith.truncf %103 : vector<8x8xf32> to vector<8x8xbf16>
    %cst_34 = arith.constant dense<0.000000e+00> : vector<8x32xf32>
    %105 = tpu.matmul %104, %90, %cst_34 {dimension_numbers = #tpu.dot_dimension_numbers<[1], [0], [0], [1], [0, 0, 1, 1], [], []>} : vector<8x8xbf16>, vector<8x32xbf16>, vector<8x32xf32> -> vector<8x32xf32>
    %106 = tpu.concatenate %42, %63, %84, %105 in 1 : vector<8x32xf32>, vector<8x32xf32>, vector<8x32xf32>, vector<8x32xf32> -> vector<8x128xf32>
    %107 = arith.truncf %106 : vector<8x128xf32> to vector<8x128xbf16>
    %c0_35 = arith.constant 0 : index
    %c0_36 = arith.constant 0 : index
    %c0_37 = arith.constant 0 : index
    %108 = vector.load %arg7[%c0_35, %c0_36, %c0_37] : memref<4x128x128xbf16, #tpu.memory_space<vmem>>, vector<1x128x128xbf16>
    %109 = vector.shape_cast %108 : vector<1x128x128xbf16> to vector<128x128xbf16>
    %cst_38 = arith.constant dense<0.000000e+00> : vector<8x128xf32>
    %110 = tpu.matmul %107, %109, %cst_38 {dimension_numbers = #tpu.dot_dimension_numbers<[1], [0], [0], [1], [0, 0, 1, 1], [], []>} : vector<8x128xbf16>, vector<128x128xbf16>, vector<8x128xf32> -> vector<8x128xf32>
    %c0_39 = arith.constant 0 : index
    %c0_40 = arith.constant 0 : index
    %c0_41 = arith.constant 0 : index
    %111 = vector.load %arg8[%c0_39, %c0_40, %c0_41] : memref<4x1x128xf32, #tpu.memory_space<vmem>>, vector<1x1x128xf32>
    %112 = vector.shape_cast %111 : vector<1x1x128xf32> to vector<1x128xf32>
    %113 = vector.broadcast %112 : vector<1x128xf32> to vector<8x128xf32>
    %114 = arith.addf %110, %113 : vector<8x128xf32>
    %115 = arith.addf %10, %114 : vector<8x128xf32>
    %c0_42 = arith.constant 0 : index
    %c0_43 = arith.constant 0 : index
    %c0_44 = arith.constant 0 : index
    %116 = vector.load %arg9[%c0_42, %c0_43, %c0_44] : memref<4x1x128xf32, #tpu.memory_space<vmem>>, vector<1x1x128xf32>
    %117 = vector.shape_cast %116 : vector<1x1x128xf32> to vector<1x128xf32>
    %c0_45 = arith.constant 0 : index
    %c0_46 = arith.constant 0 : index
    %c0_47 = arith.constant 0 : index
    %118 = vector.load %arg10[%c0_45, %c0_46, %c0_47] : memref<4x1x128xf32, #tpu.memory_space<vmem>>, vector<1x1x128xf32>
    %119 = vector.shape_cast %118 : vector<1x1x128xf32> to vector<1x128xf32>
    %cst_48 = arith.constant dense<0.000000e+00> : vector<8xf32>
    %120 = vector.multi_reduction <add>, %115, %cst_48 [1] : vector<8x128xf32> to vector<8xf32>
    %121 = vector.shape_cast %120 : vector<8xf32> to vector<8x1xf32>
    %cst_49 = arith.constant 1.280000e+02 : f32
    %122 = vector.broadcast %cst_49 : f32 to vector<8x1xf32>
    %123 = arith.divf %121, %122 : vector<8x1xf32>
    %124 = vector.broadcast %123 : vector<8x1xf32> to vector<8x128xf32>
    %125 = arith.subf %115, %124 : vector<8x128xf32>
    %126 = arith.mulf %125, %125 : vector<8x128xf32>
    %cst_50 = arith.constant dense<0.000000e+00> : vector<8xf32>
    %127 = vector.multi_reduction <add>, %126, %cst_50 [1] : vector<8x128xf32> to vector<8xf32>
    %128 = vector.shape_cast %127 : vector<8xf32> to vector<8x1xf32>
    %cst_51 = arith.constant 1.280000e+02 : f32
    %129 = vector.broadcast %cst_51 : f32 to vector<8x1xf32>
    %130 = arith.divf %128, %129 : vector<8x1xf32>
    %cst_52 = arith.constant 9.99999974E-6 : f32
    %131 = vector.broadcast %cst_52 : f32 to vector<8x1xf32>
    %132 = arith.addf %130, %131 : vector<8x1xf32>
    %133 = math.rsqrt %132 : vector<8x1xf32>
    %134 = vector.broadcast %133 : vector<8x1xf32> to vector<8x128xf32>
    %135 = arith.mulf %125, %134 : vector<8x128xf32>
    %136 = vector.broadcast %117 : vector<1x128xf32> to vector<8x128xf32>
    %137 = arith.mulf %135, %136 : vector<8x128xf32>
    %138 = vector.broadcast %119 : vector<1x128xf32> to vector<8x128xf32>
    %139 = arith.addf %137, %138 : vector<8x128xf32>
    %140 = arith.truncf %139 : vector<8x128xf32> to vector<8x128xbf16>
    %c0_53 = arith.constant 0 : index
    %c0_54 = arith.constant 0 : index
    %c0_55 = arith.constant 0 : index
    %141 = vector.load %arg11[%c0_53, %c0_54, %c0_55] : memref<4x128x512xbf16, #tpu.memory_space<vmem>>, vector<1x128x512xbf16>
    %142 = vector.shape_cast %141 : vector<1x128x512xbf16> to vector<128x512xbf16>
    %cst_56 = arith.constant dense<0.000000e+00> : vector<8x512xf32>
    %143 = tpu.matmul %140, %142, %cst_56 {dimension_numbers = #tpu.dot_dimension_numbers<[1], [0], [0], [1], [0, 0, 1, 1], [], []>} : vector<8x128xbf16>, vector<128x512xbf16>, vector<8x512xf32> -> vector<8x512xf32>
    %c0_57 = arith.constant 0 : index
    %c0_58 = arith.constant 0 : index
    %c0_59 = arith.constant 0 : index
    %144 = vector.load %arg12[%c0_57, %c0_58, %c0_59] : memref<4x1x512xf32, #tpu.memory_space<vmem>>, vector<1x1x512xf32>
    %145 = vector.shape_cast %144 : vector<1x1x512xf32> to vector<1x512xf32>
    %146 = vector.broadcast %145 : vector<1x512xf32> to vector<8x512xf32>
    %147 = arith.addf %143, %146 : vector<8x512xf32>
    %cst_60 = arith.constant 0.000000e+00 : f32
    %148 = vector.broadcast %cst_60 : f32 to vector<8x512xf32>
    %149 = arith.maximumf %147, %148 : vector<8x512xf32>
    %150 = arith.truncf %149 : vector<8x512xf32> to vector<8x512xbf16>
    %c0_61 = arith.constant 0 : index
    %c0_62 = arith.constant 0 : index
    %c0_63 = arith.constant 0 : index
    %151 = vector.load %arg13[%c0_61, %c0_62, %c0_63] : memref<4x512x128xbf16, #tpu.memory_space<vmem>>, vector<1x512x128xbf16>
    %152 = vector.shape_cast %151 : vector<1x512x128xbf16> to vector<512x128xbf16>
    %cst_64 = arith.constant dense<0.000000e+00> : vector<8x128xf32>
    %153 = tpu.matmul %150, %152, %cst_64 {dimension_numbers = #tpu.dot_dimension_numbers<[1], [0], [0], [1], [0, 0, 1, 1], [], []>} : vector<8x512xbf16>, vector<512x128xbf16>, vector<8x128xf32> -> vector<8x128xf32>
    %c0_65 = arith.constant 0 : index
    %c0_66 = arith.constant 0 : index
    %c0_67 = arith.constant 0 : index
    %154 = vector.load %arg14[%c0_65, %c0_66, %c0_67] : memref<4x1x128xf32, #tpu.memory_space<vmem>>, vector<1x1x128xf32>
    %155 = vector.shape_cast %154 : vector<1x1x128xf32> to vector<1x128xf32>
    %156 = vector.broadcast %155 : vector<1x128xf32> to vector<8x128xf32>
    %157 = arith.addf %153, %156 : vector<8x128xf32>
    %158 = arith.addf %139, %157 : vector<8x128xf32>
    %c0_68 = arith.constant 0 : index
    %c0_69 = arith.constant 0 : index
    %c0_70 = arith.constant 0 : index
    %159 = vector.load %arg15[%c0_68, %c0_69, %c0_70] : memref<4x1x128xf32, #tpu.memory_space<vmem>>, vector<1x1x128xf32>
    %160 = vector.shape_cast %159 : vector<1x1x128xf32> to vector<1x128xf32>
    %c0_71 = arith.constant 0 : index
    %c0_72 = arith.constant 0 : index
    %c0_73 = arith.constant 0 : index
    %161 = vector.load %arg16[%c0_71, %c0_72, %c0_73] : memref<4x1x128xf32, #tpu.memory_space<vmem>>, vector<1x1x128xf32>
    %162 = vector.shape_cast %161 : vector<1x1x128xf32> to vector<1x128xf32>
    %cst_74 = arith.constant dense<0.000000e+00> : vector<8xf32>
    %163 = vector.multi_reduction <add>, %158, %cst_74 [1] : vector<8x128xf32> to vector<8xf32>
    %164 = vector.shape_cast %163 : vector<8xf32> to vector<8x1xf32>
    %cst_75 = arith.constant 1.280000e+02 : f32
    %165 = vector.broadcast %cst_75 : f32 to vector<8x1xf32>
    %166 = arith.divf %164, %165 : vector<8x1xf32>
    %167 = vector.broadcast %166 : vector<8x1xf32> to vector<8x128xf32>
    %168 = arith.subf %158, %167 : vector<8x128xf32>
    %169 = arith.mulf %168, %168 : vector<8x128xf32>
    %cst_76 = arith.constant dense<0.000000e+00> : vector<8xf32>
    %170 = vector.multi_reduction <add>, %169, %cst_76 [1] : vector<8x128xf32> to vector<8xf32>
    %171 = vector.shape_cast %170 : vector<8xf32> to vector<8x1xf32>
    %cst_77 = arith.constant 1.280000e+02 : f32
    %172 = vector.broadcast %cst_77 : f32 to vector<8x1xf32>
    %173 = arith.divf %171, %172 : vector<8x1xf32>
    %cst_78 = arith.constant 9.99999974E-6 : f32
    %174 = vector.broadcast %cst_78 : f32 to vector<8x1xf32>
    %175 = arith.addf %173, %174 : vector<8x1xf32>
    %176 = math.rsqrt %175 : vector<8x1xf32>
    %177 = vector.broadcast %176 : vector<8x1xf32> to vector<8x128xf32>
    %178 = arith.mulf %168, %177 : vector<8x128xf32>
    %179 = vector.broadcast %160 : vector<1x128xf32> to vector<8x128xf32>
    %180 = arith.mulf %178, %179 : vector<8x128xf32>
    %181 = vector.broadcast %162 : vector<1x128xf32> to vector<8x128xf32>
    %182 = arith.addf %180, %181 : vector<8x128xf32>
    %183 = arith.truncf %182 : vector<8x128xf32> to vector<8x128xbf16>
    %c1 = arith.constant 1 : index
    %c0_79 = arith.constant 0 : index
    %c0_80 = arith.constant 0 : index
    %184 = vector.load %arg5[%c1, %c0_79, %c0_80] : memref<4x128x384xbf16, #tpu.memory_space<vmem>>, vector<1x128x384xbf16>
    %185 = vector.shape_cast %184 : vector<1x128x384xbf16> to vector<128x384xbf16>
    %cst_81 = arith.constant dense<0.000000e+00> : vector<8x384xf32>
    %186 = tpu.matmul %183, %185, %cst_81 {dimension_numbers = #tpu.dot_dimension_numbers<[1], [0], [0], [1], [0, 0, 1, 1], [], []>} : vector<8x128xbf16>, vector<128x384xbf16>, vector<8x384xf32> -> vector<8x384xf32>
    %c1_82 = arith.constant 1 : index
    %c0_83 = arith.constant 0 : index
    %c0_84 = arith.constant 0 : index
    %187 = vector.load %arg6[%c1_82, %c0_83, %c0_84] : memref<4x1x384xf32, #tpu.memory_space<vmem>>, vector<1x1x384xf32>
    %188 = vector.shape_cast %187 : vector<1x1x384xf32> to vector<1x384xf32>
    %189 = vector.broadcast %188 : vector<1x384xf32> to vector<8x384xf32>
    %190 = arith.addf %186, %189 : vector<8x384xf32>
    %191 = vector.extract_strided_slice %190 {offsets = [0, 0], sizes = [8, 128], strides = [1, 1]} : vector<8x384xf32> to vector<8x128xf32>
    %192 = vector.extract_strided_slice %190 {offsets = [0, 128], sizes = [8, 128], strides = [1, 1]} : vector<8x384xf32> to vector<8x128xf32>
    %193 = vector.extract_strided_slice %190 {offsets = [0, 256], sizes = [8, 128], strides = [1, 1]} : vector<8x384xf32> to vector<8x128xf32>
    %194 = vector.extract_strided_slice %191 {offsets = [0, 0], sizes = [8, 32], strides = [1, 1]} : vector<8x128xf32> to vector<8x32xf32>
    %195 = arith.truncf %194 : vector<8x32xf32> to vector<8x32xbf16>
    %196 = vector.extract_strided_slice %192 {offsets = [0, 0], sizes = [8, 32], strides = [1, 1]} : vector<8x128xf32> to vector<8x32xf32>
    %197 = arith.truncf %196 : vector<8x32xf32> to vector<8x32xbf16>
    %198 = vector.extract_strided_slice %193 {offsets = [0, 0], sizes = [8, 32], strides = [1, 1]} : vector<8x128xf32> to vector<8x32xf32>
    %199 = arith.truncf %198 : vector<8x32xf32> to vector<8x32xbf16>
    %cst_85 = arith.constant dense<0.000000e+00> : vector<8x8xf32>
    %200 = tpu.matmul %195, %197, %cst_85 {dimension_numbers = #tpu.dot_dimension_numbers<[1], [1], [0], [0], [0, 0, 1, 0], [], []>} : vector<8x32xbf16>, vector<8x32xbf16>, vector<8x8xf32> -> vector<8x8xf32>
    %cst_86 = arith.constant 0.176776692 : f32
    %201 = vector.broadcast %cst_86 : f32 to vector<8x8xf32>
    %202 = arith.mulf %200, %201 : vector<8x8xf32>
    %cst_87 = arith.constant dense<0xFF800000> : vector<8xf32>
    %203 = vector.multi_reduction <maximumf>, %202, %cst_87 [1] : vector<8x8xf32> to vector<8xf32>
    %204 = vector.shape_cast %203 : vector<8xf32> to vector<8x1xf32>
    %205 = vector.broadcast %204 : vector<8x1xf32> to vector<8x8xf32>
    %206 = arith.subf %202, %205 : vector<8x8xf32>
    %207 = math.exp %206 : vector<8x8xf32>
    %cst_88 = arith.constant dense<0.000000e+00> : vector<8xf32>
    %208 = vector.multi_reduction <add>, %207, %cst_88 [1] : vector<8x8xf32> to vector<8xf32>
    %209 = vector.shape_cast %208 : vector<8xf32> to vector<8x1xf32>
    %210 = tpu.reciprocal %209 {approx = true} : vector<8x1xf32> -> vector<8x1xf32>
    %211 = vector.broadcast %210 : vector<8x1xf32> to vector<8x8xf32>
    %212 = arith.mulf %207, %211 : vector<8x8xf32>
    %213 = arith.truncf %212 : vector<8x8xf32> to vector<8x8xbf16>
    %cst_89 = arith.constant dense<0.000000e+00> : vector<8x32xf32>
    %214 = tpu.matmul %213, %199, %cst_89 {dimension_numbers = #tpu.dot_dimension_numbers<[1], [0], [0], [1], [0, 0, 1, 1], [], []>} : vector<8x8xbf16>, vector<8x32xbf16>, vector<8x32xf32> -> vector<8x32xf32>
    %215 = vector.extract_strided_slice %191 {offsets = [0, 32], sizes = [8, 32], strides = [1, 1]} : vector<8x128xf32> to vector<8x32xf32>
    %216 = arith.truncf %215 : vector<8x32xf32> to vector<8x32xbf16>
    %217 = vector.extract_strided_slice %192 {offsets = [0, 32], sizes = [8, 32], strides = [1, 1]} : vector<8x128xf32> to vector<8x32xf32>
    %218 = arith.truncf %217 : vector<8x32xf32> to vector<8x32xbf16>
    %219 = vector.extract_strided_slice %193 {offsets = [0, 32], sizes = [8, 32], strides = [1, 1]} : vector<8x128xf32> to vector<8x32xf32>
    %220 = arith.truncf %219 : vector<8x32xf32> to vector<8x32xbf16>
    %cst_90 = arith.constant dense<0.000000e+00> : vector<8x8xf32>
    %221 = tpu.matmul %216, %218, %cst_90 {dimension_numbers = #tpu.dot_dimension_numbers<[1], [1], [0], [0], [0, 0, 1, 0], [], []>} : vector<8x32xbf16>, vector<8x32xbf16>, vector<8x8xf32> -> vector<8x8xf32>
    %cst_91 = arith.constant 0.176776692 : f32
    %222 = vector.broadcast %cst_91 : f32 to vector<8x8xf32>
    %223 = arith.mulf %221, %222 : vector<8x8xf32>
    %cst_92 = arith.constant dense<0xFF800000> : vector<8xf32>
    %224 = vector.multi_reduction <maximumf>, %223, %cst_92 [1] : vector<8x8xf32> to vector<8xf32>
    %225 = vector.shape_cast %224 : vector<8xf32> to vector<8x1xf32>
    %226 = vector.broadcast %225 : vector<8x1xf32> to vector<8x8xf32>
    %227 = arith.subf %223, %226 : vector<8x8xf32>
    %228 = math.exp %227 : vector<8x8xf32>
    %cst_93 = arith.constant dense<0.000000e+00> : vector<8xf32>
    %229 = vector.multi_reduction <add>, %228, %cst_93 [1] : vector<8x8xf32> to vector<8xf32>
    %230 = vector.shape_cast %229 : vector<8xf32> to vector<8x1xf32>
    %231 = tpu.reciprocal %230 {approx = true} : vector<8x1xf32> -> vector<8x1xf32>
    %232 = vector.broadcast %231 : vector<8x1xf32> to vector<8x8xf32>
    %233 = arith.mulf %228, %232 : vector<8x8xf32>
    %234 = arith.truncf %233 : vector<8x8xf32> to vector<8x8xbf16>
    %cst_94 = arith.constant dense<0.000000e+00> : vector<8x32xf32>
    %235 = tpu.matmul %234, %220, %cst_94 {dimension_numbers = #tpu.dot_dimension_numbers<[1], [0], [0], [1], [0, 0, 1, 1], [], []>} : vector<8x8xbf16>, vector<8x32xbf16>, vector<8x32xf32> -> vector<8x32xf32>
    %236 = vector.extract_strided_slice %191 {offsets = [0, 64], sizes = [8, 32], strides = [1, 1]} : vector<8x128xf32> to vector<8x32xf32>
    %237 = arith.truncf %236 : vector<8x32xf32> to vector<8x32xbf16>
    %238 = vector.extract_strided_slice %192 {offsets = [0, 64], sizes = [8, 32], strides = [1, 1]} : vector<8x128xf32> to vector<8x32xf32>
    %239 = arith.truncf %238 : vector<8x32xf32> to vector<8x32xbf16>
    %240 = vector.extract_strided_slice %193 {offsets = [0, 64], sizes = [8, 32], strides = [1, 1]} : vector<8x128xf32> to vector<8x32xf32>
    %241 = arith.truncf %240 : vector<8x32xf32> to vector<8x32xbf16>
    %cst_95 = arith.constant dense<0.000000e+00> : vector<8x8xf32>
    %242 = tpu.matmul %237, %239, %cst_95 {dimension_numbers = #tpu.dot_dimension_numbers<[1], [1], [0], [0], [0, 0, 1, 0], [], []>} : vector<8x32xbf16>, vector<8x32xbf16>, vector<8x8xf32> -> vector<8x8xf32>
    %cst_96 = arith.constant 0.176776692 : f32
    %243 = vector.broadcast %cst_96 : f32 to vector<8x8xf32>
    %244 = arith.mulf %242, %243 : vector<8x8xf32>
    %cst_97 = arith.constant dense<0xFF800000> : vector<8xf32>
    %245 = vector.multi_reduction <maximumf>, %244, %cst_97 [1] : vector<8x8xf32> to vector<8xf32>
    %246 = vector.shape_cast %245 : vector<8xf32> to vector<8x1xf32>
    %247 = vector.broadcast %246 : vector<8x1xf32> to vector<8x8xf32>
    %248 = arith.subf %244, %247 : vector<8x8xf32>
    %249 = math.exp %248 : vector<8x8xf32>
    %cst_98 = arith.constant dense<0.000000e+00> : vector<8xf32>
    %250 = vector.multi_reduction <add>, %249, %cst_98 [1] : vector<8x8xf32> to vector<8xf32>
    %251 = vector.shape_cast %250 : vector<8xf32> to vector<8x1xf32>
    %252 = tpu.reciprocal %251 {approx = true} : vector<8x1xf32> -> vector<8x1xf32>
    %253 = vector.broadcast %252 : vector<8x1xf32> to vector<8x8xf32>
    %254 = arith.mulf %249, %253 : vector<8x8xf32>
    %255 = arith.truncf %254 : vector<8x8xf32> to vector<8x8xbf16>
    %cst_99 = arith.constant dense<0.000000e+00> : vector<8x32xf32>
    %256 = tpu.matmul %255, %241, %cst_99 {dimension_numbers = #tpu.dot_dimension_numbers<[1], [0], [0], [1], [0, 0, 1, 1], [], []>} : vector<8x8xbf16>, vector<8x32xbf16>, vector<8x32xf32> -> vector<8x32xf32>
    %257 = vector.extract_strided_slice %191 {offsets = [0, 96], sizes = [8, 32], strides = [1, 1]} : vector<8x128xf32> to vector<8x32xf32>
    %258 = arith.truncf %257 : vector<8x32xf32> to vector<8x32xbf16>
    %259 = vector.extract_strided_slice %192 {offsets = [0, 96], sizes = [8, 32], strides = [1, 1]} : vector<8x128xf32> to vector<8x32xf32>
    %260 = arith.truncf %259 : vector<8x32xf32> to vector<8x32xbf16>
    %261 = vector.extract_strided_slice %193 {offsets = [0, 96], sizes = [8, 32], strides = [1, 1]} : vector<8x128xf32> to vector<8x32xf32>
    %262 = arith.truncf %261 : vector<8x32xf32> to vector<8x32xbf16>
    %cst_100 = arith.constant dense<0.000000e+00> : vector<8x8xf32>
    %263 = tpu.matmul %258, %260, %cst_100 {dimension_numbers = #tpu.dot_dimension_numbers<[1], [1], [0], [0], [0, 0, 1, 0], [], []>} : vector<8x32xbf16>, vector<8x32xbf16>, vector<8x8xf32> -> vector<8x8xf32>
    %cst_101 = arith.constant 0.176776692 : f32
    %264 = vector.broadcast %cst_101 : f32 to vector<8x8xf32>
    %265 = arith.mulf %263, %264 : vector<8x8xf32>
    %cst_102 = arith.constant dense<0xFF800000> : vector<8xf32>
    %266 = vector.multi_reduction <maximumf>, %265, %cst_102 [1] : vector<8x8xf32> to vector<8xf32>
    %267 = vector.shape_cast %266 : vector<8xf32> to vector<8x1xf32>
    %268 = vector.broadcast %267 : vector<8x1xf32> to vector<8x8xf32>
    %269 = arith.subf %265, %268 : vector<8x8xf32>
    %270 = math.exp %269 : vector<8x8xf32>
    %cst_103 = arith.constant dense<0.000000e+00> : vector<8xf32>
    %271 = vector.multi_reduction <add>, %270, %cst_103 [1] : vector<8x8xf32> to vector<8xf32>
    %272 = vector.shape_cast %271 : vector<8xf32> to vector<8x1xf32>
    %273 = tpu.reciprocal %272 {approx = true} : vector<8x1xf32> -> vector<8x1xf32>
    %274 = vector.broadcast %273 : vector<8x1xf32> to vector<8x8xf32>
    %275 = arith.mulf %270, %274 : vector<8x8xf32>
    %276 = arith.truncf %275 : vector<8x8xf32> to vector<8x8xbf16>
    %cst_104 = arith.constant dense<0.000000e+00> : vector<8x32xf32>
    %277 = tpu.matmul %276, %262, %cst_104 {dimension_numbers = #tpu.dot_dimension_numbers<[1], [0], [0], [1], [0, 0, 1, 1], [], []>} : vector<8x8xbf16>, vector<8x32xbf16>, vector<8x32xf32> -> vector<8x32xf32>
    %278 = tpu.concatenate %214, %235, %256, %277 in 1 : vector<8x32xf32>, vector<8x32xf32>, vector<8x32xf32>, vector<8x32xf32> -> vector<8x128xf32>
    %279 = arith.truncf %278 : vector<8x128xf32> to vector<8x128xbf16>
    %c1_105 = arith.constant 1 : index
    %c0_106 = arith.constant 0 : index
    %c0_107 = arith.constant 0 : index
    %280 = vector.load %arg7[%c1_105, %c0_106, %c0_107] : memref<4x128x128xbf16, #tpu.memory_space<vmem>>, vector<1x128x128xbf16>
    %281 = vector.shape_cast %280 : vector<1x128x128xbf16> to vector<128x128xbf16>
    %cst_108 = arith.constant dense<0.000000e+00> : vector<8x128xf32>
    %282 = tpu.matmul %279, %281, %cst_108 {dimension_numbers = #tpu.dot_dimension_numbers<[1], [0], [0], [1], [0, 0, 1, 1], [], []>} : vector<8x128xbf16>, vector<128x128xbf16>, vector<8x128xf32> -> vector<8x128xf32>
    %c1_109 = arith.constant 1 : index
    %c0_110 = arith.constant 0 : index
    %c0_111 = arith.constant 0 : index
    %283 = vector.load %arg8[%c1_109, %c0_110, %c0_111] : memref<4x1x128xf32, #tpu.memory_space<vmem>>, vector<1x1x128xf32>
    %284 = vector.shape_cast %283 : vector<1x1x128xf32> to vector<1x128xf32>
    %285 = vector.broadcast %284 : vector<1x128xf32> to vector<8x128xf32>
    %286 = arith.addf %282, %285 : vector<8x128xf32>
    %287 = arith.addf %182, %286 : vector<8x128xf32>
    %c1_112 = arith.constant 1 : index
    %c0_113 = arith.constant 0 : index
    %c0_114 = arith.constant 0 : index
    %288 = vector.load %arg9[%c1_112, %c0_113, %c0_114] : memref<4x1x128xf32, #tpu.memory_space<vmem>>, vector<1x1x128xf32>
    %289 = vector.shape_cast %288 : vector<1x1x128xf32> to vector<1x128xf32>
    %c1_115 = arith.constant 1 : index
    %c0_116 = arith.constant 0 : index
    %c0_117 = arith.constant 0 : index
    %290 = vector.load %arg10[%c1_115, %c0_116, %c0_117] : memref<4x1x128xf32, #tpu.memory_space<vmem>>, vector<1x1x128xf32>
    %291 = vector.shape_cast %290 : vector<1x1x128xf32> to vector<1x128xf32>
    %cst_118 = arith.constant dense<0.000000e+00> : vector<8xf32>
    %292 = vector.multi_reduction <add>, %287, %cst_118 [1] : vector<8x128xf32> to vector<8xf32>
    %293 = vector.shape_cast %292 : vector<8xf32> to vector<8x1xf32>
    %cst_119 = arith.constant 1.280000e+02 : f32
    %294 = vector.broadcast %cst_119 : f32 to vector<8x1xf32>
    %295 = arith.divf %293, %294 : vector<8x1xf32>
    %296 = vector.broadcast %295 : vector<8x1xf32> to vector<8x128xf32>
    %297 = arith.subf %287, %296 : vector<8x128xf32>
    %298 = arith.mulf %297, %297 : vector<8x128xf32>
    %cst_120 = arith.constant dense<0.000000e+00> : vector<8xf32>
    %299 = vector.multi_reduction <add>, %298, %cst_120 [1] : vector<8x128xf32> to vector<8xf32>
    %300 = vector.shape_cast %299 : vector<8xf32> to vector<8x1xf32>
    %cst_121 = arith.constant 1.280000e+02 : f32
    %301 = vector.broadcast %cst_121 : f32 to vector<8x1xf32>
    %302 = arith.divf %300, %301 : vector<8x1xf32>
    %cst_122 = arith.constant 9.99999974E-6 : f32
    %303 = vector.broadcast %cst_122 : f32 to vector<8x1xf32>
    %304 = arith.addf %302, %303 : vector<8x1xf32>
    %305 = math.rsqrt %304 : vector<8x1xf32>
    %306 = vector.broadcast %305 : vector<8x1xf32> to vector<8x128xf32>
    %307 = arith.mulf %297, %306 : vector<8x128xf32>
    %308 = vector.broadcast %289 : vector<1x128xf32> to vector<8x128xf32>
    %309 = arith.mulf %307, %308 : vector<8x128xf32>
    %310 = vector.broadcast %291 : vector<1x128xf32> to vector<8x128xf32>
    %311 = arith.addf %309, %310 : vector<8x128xf32>
    %312 = arith.truncf %311 : vector<8x128xf32> to vector<8x128xbf16>
    %c1_123 = arith.constant 1 : index
    %c0_124 = arith.constant 0 : index
    %c0_125 = arith.constant 0 : index
    %313 = vector.load %arg11[%c1_123, %c0_124, %c0_125] : memref<4x128x512xbf16, #tpu.memory_space<vmem>>, vector<1x128x512xbf16>
    %314 = vector.shape_cast %313 : vector<1x128x512xbf16> to vector<128x512xbf16>
    %cst_126 = arith.constant dense<0.000000e+00> : vector<8x512xf32>
    %315 = tpu.matmul %312, %314, %cst_126 {dimension_numbers = #tpu.dot_dimension_numbers<[1], [0], [0], [1], [0, 0, 1, 1], [], []>} : vector<8x128xbf16>, vector<128x512xbf16>, vector<8x512xf32> -> vector<8x512xf32>
    %c1_127 = arith.constant 1 : index
    %c0_128 = arith.constant 0 : index
    %c0_129 = arith.constant 0 : index
    %316 = vector.load %arg12[%c1_127, %c0_128, %c0_129] : memref<4x1x512xf32, #tpu.memory_space<vmem>>, vector<1x1x512xf32>
    %317 = vector.shape_cast %316 : vector<1x1x512xf32> to vector<1x512xf32>
    %318 = vector.broadcast %317 : vector<1x512xf32> to vector<8x512xf32>
    %319 = arith.addf %315, %318 : vector<8x512xf32>
    %cst_130 = arith.constant 0.000000e+00 : f32
    %320 = vector.broadcast %cst_130 : f32 to vector<8x512xf32>
    %321 = arith.maximumf %319, %320 : vector<8x512xf32>
    %322 = arith.truncf %321 : vector<8x512xf32> to vector<8x512xbf16>
    %c1_131 = arith.constant 1 : index
    %c0_132 = arith.constant 0 : index
    %c0_133 = arith.constant 0 : index
    %323 = vector.load %arg13[%c1_131, %c0_132, %c0_133] : memref<4x512x128xbf16, #tpu.memory_space<vmem>>, vector<1x512x128xbf16>
    %324 = vector.shape_cast %323 : vector<1x512x128xbf16> to vector<512x128xbf16>
    %cst_134 = arith.constant dense<0.000000e+00> : vector<8x128xf32>
    %325 = tpu.matmul %322, %324, %cst_134 {dimension_numbers = #tpu.dot_dimension_numbers<[1], [0], [0], [1], [0, 0, 1, 1], [], []>} : vector<8x512xbf16>, vector<512x128xbf16>, vector<8x128xf32> -> vector<8x128xf32>
    %c1_135 = arith.constant 1 : index
    %c0_136 = arith.constant 0 : index
    %c0_137 = arith.constant 0 : index
    %326 = vector.load %arg14[%c1_135, %c0_136, %c0_137] : memref<4x1x128xf32, #tpu.memory_space<vmem>>, vector<1x1x128xf32>
    %327 = vector.shape_cast %326 : vector<1x1x128xf32> to vector<1x128xf32>
    %328 = vector.broadcast %327 : vector<1x128xf32> to vector<8x128xf32>
    %329 = arith.addf %325, %328 : vector<8x128xf32>
    %330 = arith.addf %311, %329 : vector<8x128xf32>
    %c1_138 = arith.constant 1 : index
    %c0_139 = arith.constant 0 : index
    %c0_140 = arith.constant 0 : index
    %331 = vector.load %arg15[%c1_138, %c0_139, %c0_140] : memref<4x1x128xf32, #tpu.memory_space<vmem>>, vector<1x1x128xf32>
    %332 = vector.shape_cast %331 : vector<1x1x128xf32> to vector<1x128xf32>
    %c1_141 = arith.constant 1 : index
    %c0_142 = arith.constant 0 : index
    %c0_143 = arith.constant 0 : index
    %333 = vector.load %arg16[%c1_141, %c0_142, %c0_143] : memref<4x1x128xf32, #tpu.memory_space<vmem>>, vector<1x1x128xf32>
    %334 = vector.shape_cast %333 : vector<1x1x128xf32> to vector<1x128xf32>
    %cst_144 = arith.constant dense<0.000000e+00> : vector<8xf32>
    %335 = vector.multi_reduction <add>, %330, %cst_144 [1] : vector<8x128xf32> to vector<8xf32>
    %336 = vector.shape_cast %335 : vector<8xf32> to vector<8x1xf32>
    %cst_145 = arith.constant 1.280000e+02 : f32
    %337 = vector.broadcast %cst_145 : f32 to vector<8x1xf32>
    %338 = arith.divf %336, %337 : vector<8x1xf32>
    %339 = vector.broadcast %338 : vector<8x1xf32> to vector<8x128xf32>
    %340 = arith.subf %330, %339 : vector<8x128xf32>
    %341 = arith.mulf %340, %340 : vector<8x128xf32>
    %cst_146 = arith.constant dense<0.000000e+00> : vector<8xf32>
    %342 = vector.multi_reduction <add>, %341, %cst_146 [1] : vector<8x128xf32> to vector<8xf32>
    %343 = vector.shape_cast %342 : vector<8xf32> to vector<8x1xf32>
    %cst_147 = arith.constant 1.280000e+02 : f32
    %344 = vector.broadcast %cst_147 : f32 to vector<8x1xf32>
    %345 = arith.divf %343, %344 : vector<8x1xf32>
    %cst_148 = arith.constant 9.99999974E-6 : f32
    %346 = vector.broadcast %cst_148 : f32 to vector<8x1xf32>
    %347 = arith.addf %345, %346 : vector<8x1xf32>
    %348 = math.rsqrt %347 : vector<8x1xf32>
    %349 = vector.broadcast %348 : vector<8x1xf32> to vector<8x128xf32>
    %350 = arith.mulf %340, %349 : vector<8x128xf32>
    %351 = vector.broadcast %332 : vector<1x128xf32> to vector<8x128xf32>
    %352 = arith.mulf %350, %351 : vector<8x128xf32>
    %353 = vector.broadcast %334 : vector<1x128xf32> to vector<8x128xf32>
    %354 = arith.addf %352, %353 : vector<8x128xf32>
    %355 = arith.truncf %354 : vector<8x128xf32> to vector<8x128xbf16>
    %c2 = arith.constant 2 : index
    %c0_149 = arith.constant 0 : index
    %c0_150 = arith.constant 0 : index
    %356 = vector.load %arg5[%c2, %c0_149, %c0_150] : memref<4x128x384xbf16, #tpu.memory_space<vmem>>, vector<1x128x384xbf16>
    %357 = vector.shape_cast %356 : vector<1x128x384xbf16> to vector<128x384xbf16>
    %cst_151 = arith.constant dense<0.000000e+00> : vector<8x384xf32>
    %358 = tpu.matmul %355, %357, %cst_151 {dimension_numbers = #tpu.dot_dimension_numbers<[1], [0], [0], [1], [0, 0, 1, 1], [], []>} : vector<8x128xbf16>, vector<128x384xbf16>, vector<8x384xf32> -> vector<8x384xf32>
    %c2_152 = arith.constant 2 : index
    %c0_153 = arith.constant 0 : index
    %c0_154 = arith.constant 0 : index
    %359 = vector.load %arg6[%c2_152, %c0_153, %c0_154] : memref<4x1x384xf32, #tpu.memory_space<vmem>>, vector<1x1x384xf32>
    %360 = vector.shape_cast %359 : vector<1x1x384xf32> to vector<1x384xf32>
    %361 = vector.broadcast %360 : vector<1x384xf32> to vector<8x384xf32>
    %362 = arith.addf %358, %361 : vector<8x384xf32>
    %363 = vector.extract_strided_slice %362 {offsets = [0, 0], sizes = [8, 128], strides = [1, 1]} : vector<8x384xf32> to vector<8x128xf32>
    %364 = vector.extract_strided_slice %362 {offsets = [0, 128], sizes = [8, 128], strides = [1, 1]} : vector<8x384xf32> to vector<8x128xf32>
    %365 = vector.extract_strided_slice %362 {offsets = [0, 256], sizes = [8, 128], strides = [1, 1]} : vector<8x384xf32> to vector<8x128xf32>
    %366 = vector.extract_strided_slice %363 {offsets = [0, 0], sizes = [8, 32], strides = [1, 1]} : vector<8x128xf32> to vector<8x32xf32>
    %367 = arith.truncf %366 : vector<8x32xf32> to vector<8x32xbf16>
    %368 = vector.extract_strided_slice %364 {offsets = [0, 0], sizes = [8, 32], strides = [1, 1]} : vector<8x128xf32> to vector<8x32xf32>
    %369 = arith.truncf %368 : vector<8x32xf32> to vector<8x32xbf16>
    %370 = vector.extract_strided_slice %365 {offsets = [0, 0], sizes = [8, 32], strides = [1, 1]} : vector<8x128xf32> to vector<8x32xf32>
    %371 = arith.truncf %370 : vector<8x32xf32> to vector<8x32xbf16>
    %cst_155 = arith.constant dense<0.000000e+00> : vector<8x8xf32>
    %372 = tpu.matmul %367, %369, %cst_155 {dimension_numbers = #tpu.dot_dimension_numbers<[1], [1], [0], [0], [0, 0, 1, 0], [], []>} : vector<8x32xbf16>, vector<8x32xbf16>, vector<8x8xf32> -> vector<8x8xf32>
    %cst_156 = arith.constant 0.176776692 : f32
    %373 = vector.broadcast %cst_156 : f32 to vector<8x8xf32>
    %374 = arith.mulf %372, %373 : vector<8x8xf32>
    %cst_157 = arith.constant dense<0xFF800000> : vector<8xf32>
    %375 = vector.multi_reduction <maximumf>, %374, %cst_157 [1] : vector<8x8xf32> to vector<8xf32>
    %376 = vector.shape_cast %375 : vector<8xf32> to vector<8x1xf32>
    %377 = vector.broadcast %376 : vector<8x1xf32> to vector<8x8xf32>
    %378 = arith.subf %374, %377 : vector<8x8xf32>
    %379 = math.exp %378 : vector<8x8xf32>
    %cst_158 = arith.constant dense<0.000000e+00> : vector<8xf32>
    %380 = vector.multi_reduction <add>, %379, %cst_158 [1] : vector<8x8xf32> to vector<8xf32>
    %381 = vector.shape_cast %380 : vector<8xf32> to vector<8x1xf32>
    %382 = tpu.reciprocal %381 {approx = true} : vector<8x1xf32> -> vector<8x1xf32>
    %383 = vector.broadcast %382 : vector<8x1xf32> to vector<8x8xf32>
    %384 = arith.mulf %379, %383 : vector<8x8xf32>
    %385 = arith.truncf %384 : vector<8x8xf32> to vector<8x8xbf16>
    %cst_159 = arith.constant dense<0.000000e+00> : vector<8x32xf32>
    %386 = tpu.matmul %385, %371, %cst_159 {dimension_numbers = #tpu.dot_dimension_numbers<[1], [0], [0], [1], [0, 0, 1, 1], [], []>} : vector<8x8xbf16>, vector<8x32xbf16>, vector<8x32xf32> -> vector<8x32xf32>
    %387 = vector.extract_strided_slice %363 {offsets = [0, 32], sizes = [8, 32], strides = [1, 1]} : vector<8x128xf32> to vector<8x32xf32>
    %388 = arith.truncf %387 : vector<8x32xf32> to vector<8x32xbf16>
    %389 = vector.extract_strided_slice %364 {offsets = [0, 32], sizes = [8, 32], strides = [1, 1]} : vector<8x128xf32> to vector<8x32xf32>
    %390 = arith.truncf %389 : vector<8x32xf32> to vector<8x32xbf16>
    %391 = vector.extract_strided_slice %365 {offsets = [0, 32], sizes = [8, 32], strides = [1, 1]} : vector<8x128xf32> to vector<8x32xf32>
    %392 = arith.truncf %391 : vector<8x32xf32> to vector<8x32xbf16>
    %cst_160 = arith.constant dense<0.000000e+00> : vector<8x8xf32>
    %393 = tpu.matmul %388, %390, %cst_160 {dimension_numbers = #tpu.dot_dimension_numbers<[1], [1], [0], [0], [0, 0, 1, 0], [], []>} : vector<8x32xbf16>, vector<8x32xbf16>, vector<8x8xf32> -> vector<8x8xf32>
    %cst_161 = arith.constant 0.176776692 : f32
    %394 = vector.broadcast %cst_161 : f32 to vector<8x8xf32>
    %395 = arith.mulf %393, %394 : vector<8x8xf32>
    %cst_162 = arith.constant dense<0xFF800000> : vector<8xf32>
    %396 = vector.multi_reduction <maximumf>, %395, %cst_162 [1] : vector<8x8xf32> to vector<8xf32>
    %397 = vector.shape_cast %396 : vector<8xf32> to vector<8x1xf32>
    %398 = vector.broadcast %397 : vector<8x1xf32> to vector<8x8xf32>
    %399 = arith.subf %395, %398 : vector<8x8xf32>
    %400 = math.exp %399 : vector<8x8xf32>
    %cst_163 = arith.constant dense<0.000000e+00> : vector<8xf32>
    %401 = vector.multi_reduction <add>, %400, %cst_163 [1] : vector<8x8xf32> to vector<8xf32>
    %402 = vector.shape_cast %401 : vector<8xf32> to vector<8x1xf32>
    %403 = tpu.reciprocal %402 {approx = true} : vector<8x1xf32> -> vector<8x1xf32>
    %404 = vector.broadcast %403 : vector<8x1xf32> to vector<8x8xf32>
    %405 = arith.mulf %400, %404 : vector<8x8xf32>
    %406 = arith.truncf %405 : vector<8x8xf32> to vector<8x8xbf16>
    %cst_164 = arith.constant dense<0.000000e+00> : vector<8x32xf32>
    %407 = tpu.matmul %406, %392, %cst_164 {dimension_numbers = #tpu.dot_dimension_numbers<[1], [0], [0], [1], [0, 0, 1, 1], [], []>} : vector<8x8xbf16>, vector<8x32xbf16>, vector<8x32xf32> -> vector<8x32xf32>
    %408 = vector.extract_strided_slice %363 {offsets = [0, 64], sizes = [8, 32], strides = [1, 1]} : vector<8x128xf32> to vector<8x32xf32>
    %409 = arith.truncf %408 : vector<8x32xf32> to vector<8x32xbf16>
    %410 = vector.extract_strided_slice %364 {offsets = [0, 64], sizes = [8, 32], strides = [1, 1]} : vector<8x128xf32> to vector<8x32xf32>
    %411 = arith.truncf %410 : vector<8x32xf32> to vector<8x32xbf16>
    %412 = vector.extract_strided_slice %365 {offsets = [0, 64], sizes = [8, 32], strides = [1, 1]} : vector<8x128xf32> to vector<8x32xf32>
    %413 = arith.truncf %412 : vector<8x32xf32> to vector<8x32xbf16>
    %cst_165 = arith.constant dense<0.000000e+00> : vector<8x8xf32>
    %414 = tpu.matmul %409, %411, %cst_165 {dimension_numbers = #tpu.dot_dimension_numbers<[1], [1], [0], [0], [0, 0, 1, 0], [], []>} : vector<8x32xbf16>, vector<8x32xbf16>, vector<8x8xf32> -> vector<8x8xf32>
    %cst_166 = arith.constant 0.176776692 : f32
    %415 = vector.broadcast %cst_166 : f32 to vector<8x8xf32>
    %416 = arith.mulf %414, %415 : vector<8x8xf32>
    %cst_167 = arith.constant dense<0xFF800000> : vector<8xf32>
    %417 = vector.multi_reduction <maximumf>, %416, %cst_167 [1] : vector<8x8xf32> to vector<8xf32>
    %418 = vector.shape_cast %417 : vector<8xf32> to vector<8x1xf32>
    %419 = vector.broadcast %418 : vector<8x1xf32> to vector<8x8xf32>
    %420 = arith.subf %416, %419 : vector<8x8xf32>
    %421 = math.exp %420 : vector<8x8xf32>
    %cst_168 = arith.constant dense<0.000000e+00> : vector<8xf32>
    %422 = vector.multi_reduction <add>, %421, %cst_168 [1] : vector<8x8xf32> to vector<8xf32>
    %423 = vector.shape_cast %422 : vector<8xf32> to vector<8x1xf32>
    %424 = tpu.reciprocal %423 {approx = true} : vector<8x1xf32> -> vector<8x1xf32>
    %425 = vector.broadcast %424 : vector<8x1xf32> to vector<8x8xf32>
    %426 = arith.mulf %421, %425 : vector<8x8xf32>
    %427 = arith.truncf %426 : vector<8x8xf32> to vector<8x8xbf16>
    %cst_169 = arith.constant dense<0.000000e+00> : vector<8x32xf32>
    %428 = tpu.matmul %427, %413, %cst_169 {dimension_numbers = #tpu.dot_dimension_numbers<[1], [0], [0], [1], [0, 0, 1, 1], [], []>} : vector<8x8xbf16>, vector<8x32xbf16>, vector<8x32xf32> -> vector<8x32xf32>
    %429 = vector.extract_strided_slice %363 {offsets = [0, 96], sizes = [8, 32], strides = [1, 1]} : vector<8x128xf32> to vector<8x32xf32>
    %430 = arith.truncf %429 : vector<8x32xf32> to vector<8x32xbf16>
    %431 = vector.extract_strided_slice %364 {offsets = [0, 96], sizes = [8, 32], strides = [1, 1]} : vector<8x128xf32> to vector<8x32xf32>
    %432 = arith.truncf %431 : vector<8x32xf32> to vector<8x32xbf16>
    %433 = vector.extract_strided_slice %365 {offsets = [0, 96], sizes = [8, 32], strides = [1, 1]} : vector<8x128xf32> to vector<8x32xf32>
    %434 = arith.truncf %433 : vector<8x32xf32> to vector<8x32xbf16>
    %cst_170 = arith.constant dense<0.000000e+00> : vector<8x8xf32>
    %435 = tpu.matmul %430, %432, %cst_170 {dimension_numbers = #tpu.dot_dimension_numbers<[1], [1], [0], [0], [0, 0, 1, 0], [], []>} : vector<8x32xbf16>, vector<8x32xbf16>, vector<8x8xf32> -> vector<8x8xf32>
    %cst_171 = arith.constant 0.176776692 : f32
    %436 = vector.broadcast %cst_171 : f32 to vector<8x8xf32>
    %437 = arith.mulf %435, %436 : vector<8x8xf32>
    %cst_172 = arith.constant dense<0xFF800000> : vector<8xf32>
    %438 = vector.multi_reduction <maximumf>, %437, %cst_172 [1] : vector<8x8xf32> to vector<8xf32>
    %439 = vector.shape_cast %438 : vector<8xf32> to vector<8x1xf32>
    %440 = vector.broadcast %439 : vector<8x1xf32> to vector<8x8xf32>
    %441 = arith.subf %437, %440 : vector<8x8xf32>
    %442 = math.exp %441 : vector<8x8xf32>
    %cst_173 = arith.constant dense<0.000000e+00> : vector<8xf32>
    %443 = vector.multi_reduction <add>, %442, %cst_173 [1] : vector<8x8xf32> to vector<8xf32>
    %444 = vector.shape_cast %443 : vector<8xf32> to vector<8x1xf32>
    %445 = tpu.reciprocal %444 {approx = true} : vector<8x1xf32> -> vector<8x1xf32>
    %446 = vector.broadcast %445 : vector<8x1xf32> to vector<8x8xf32>
    %447 = arith.mulf %442, %446 : vector<8x8xf32>
    %448 = arith.truncf %447 : vector<8x8xf32> to vector<8x8xbf16>
    %cst_174 = arith.constant dense<0.000000e+00> : vector<8x32xf32>
    %449 = tpu.matmul %448, %434, %cst_174 {dimension_numbers = #tpu.dot_dimension_numbers<[1], [0], [0], [1], [0, 0, 1, 1], [], []>} : vector<8x8xbf16>, vector<8x32xbf16>, vector<8x32xf32> -> vector<8x32xf32>
    %450 = tpu.concatenate %386, %407, %428, %449 in 1 : vector<8x32xf32>, vector<8x32xf32>, vector<8x32xf32>, vector<8x32xf32> -> vector<8x128xf32>
    %451 = arith.truncf %450 : vector<8x128xf32> to vector<8x128xbf16>
    %c2_175 = arith.constant 2 : index
    %c0_176 = arith.constant 0 : index
    %c0_177 = arith.constant 0 : index
    %452 = vector.load %arg7[%c2_175, %c0_176, %c0_177] : memref<4x128x128xbf16, #tpu.memory_space<vmem>>, vector<1x128x128xbf16>
    %453 = vector.shape_cast %452 : vector<1x128x128xbf16> to vector<128x128xbf16>
    %cst_178 = arith.constant dense<0.000000e+00> : vector<8x128xf32>
    %454 = tpu.matmul %451, %453, %cst_178 {dimension_numbers = #tpu.dot_dimension_numbers<[1], [0], [0], [1], [0, 0, 1, 1], [], []>} : vector<8x128xbf16>, vector<128x128xbf16>, vector<8x128xf32> -> vector<8x128xf32>
    %c2_179 = arith.constant 2 : index
    %c0_180 = arith.constant 0 : index
    %c0_181 = arith.constant 0 : index
    %455 = vector.load %arg8[%c2_179, %c0_180, %c0_181] : memref<4x1x128xf32, #tpu.memory_space<vmem>>, vector<1x1x128xf32>
    %456 = vector.shape_cast %455 : vector<1x1x128xf32> to vector<1x128xf32>
    %457 = vector.broadcast %456 : vector<1x128xf32> to vector<8x128xf32>
    %458 = arith.addf %454, %457 : vector<8x128xf32>
    %459 = arith.addf %354, %458 : vector<8x128xf32>
    %c2_182 = arith.constant 2 : index
    %c0_183 = arith.constant 0 : index
    %c0_184 = arith.constant 0 : index
    %460 = vector.load %arg9[%c2_182, %c0_183, %c0_184] : memref<4x1x128xf32, #tpu.memory_space<vmem>>, vector<1x1x128xf32>
    %461 = vector.shape_cast %460 : vector<1x1x128xf32> to vector<1x128xf32>
    %c2_185 = arith.constant 2 : index
    %c0_186 = arith.constant 0 : index
    %c0_187 = arith.constant 0 : index
    %462 = vector.load %arg10[%c2_185, %c0_186, %c0_187] : memref<4x1x128xf32, #tpu.memory_space<vmem>>, vector<1x1x128xf32>
    %463 = vector.shape_cast %462 : vector<1x1x128xf32> to vector<1x128xf32>
    %cst_188 = arith.constant dense<0.000000e+00> : vector<8xf32>
    %464 = vector.multi_reduction <add>, %459, %cst_188 [1] : vector<8x128xf32> to vector<8xf32>
    %465 = vector.shape_cast %464 : vector<8xf32> to vector<8x1xf32>
    %cst_189 = arith.constant 1.280000e+02 : f32
    %466 = vector.broadcast %cst_189 : f32 to vector<8x1xf32>
    %467 = arith.divf %465, %466 : vector<8x1xf32>
    %468 = vector.broadcast %467 : vector<8x1xf32> to vector<8x128xf32>
    %469 = arith.subf %459, %468 : vector<8x128xf32>
    %470 = arith.mulf %469, %469 : vector<8x128xf32>
    %cst_190 = arith.constant dense<0.000000e+00> : vector<8xf32>
    %471 = vector.multi_reduction <add>, %470, %cst_190 [1] : vector<8x128xf32> to vector<8xf32>
    %472 = vector.shape_cast %471 : vector<8xf32> to vector<8x1xf32>
    %cst_191 = arith.constant 1.280000e+02 : f32
    %473 = vector.broadcast %cst_191 : f32 to vector<8x1xf32>
    %474 = arith.divf %472, %473 : vector<8x1xf32>
    %cst_192 = arith.constant 9.99999974E-6 : f32
    %475 = vector.broadcast %cst_192 : f32 to vector<8x1xf32>
    %476 = arith.addf %474, %475 : vector<8x1xf32>
    %477 = math.rsqrt %476 : vector<8x1xf32>
    %478 = vector.broadcast %477 : vector<8x1xf32> to vector<8x128xf32>
    %479 = arith.mulf %469, %478 : vector<8x128xf32>
    %480 = vector.broadcast %461 : vector<1x128xf32> to vector<8x128xf32>
    %481 = arith.mulf %479, %480 : vector<8x128xf32>
    %482 = vector.broadcast %463 : vector<1x128xf32> to vector<8x128xf32>
    %483 = arith.addf %481, %482 : vector<8x128xf32>
    %484 = arith.truncf %483 : vector<8x128xf32> to vector<8x128xbf16>
    %c2_193 = arith.constant 2 : index
    %c0_194 = arith.constant 0 : index
    %c0_195 = arith.constant 0 : index
    %485 = vector.load %arg11[%c2_193, %c0_194, %c0_195] : memref<4x128x512xbf16, #tpu.memory_space<vmem>>, vector<1x128x512xbf16>
    %486 = vector.shape_cast %485 : vector<1x128x512xbf16> to vector<128x512xbf16>
    %cst_196 = arith.constant dense<0.000000e+00> : vector<8x512xf32>
    %487 = tpu.matmul %484, %486, %cst_196 {dimension_numbers = #tpu.dot_dimension_numbers<[1], [0], [0], [1], [0, 0, 1, 1], [], []>} : vector<8x128xbf16>, vector<128x512xbf16>, vector<8x512xf32> -> vector<8x512xf32>
    %c2_197 = arith.constant 2 : index
    %c0_198 = arith.constant 0 : index
    %c0_199 = arith.constant 0 : index
    %488 = vector.load %arg12[%c2_197, %c0_198, %c0_199] : memref<4x1x512xf32, #tpu.memory_space<vmem>>, vector<1x1x512xf32>
    %489 = vector.shape_cast %488 : vector<1x1x512xf32> to vector<1x512xf32>
    %490 = vector.broadcast %489 : vector<1x512xf32> to vector<8x512xf32>
    %491 = arith.addf %487, %490 : vector<8x512xf32>
    %cst_200 = arith.constant 0.000000e+00 : f32
    %492 = vector.broadcast %cst_200 : f32 to vector<8x512xf32>
    %493 = arith.maximumf %491, %492 : vector<8x512xf32>
    %494 = arith.truncf %493 : vector<8x512xf32> to vector<8x512xbf16>
    %c2_201 = arith.constant 2 : index
    %c0_202 = arith.constant 0 : index
    %c0_203 = arith.constant 0 : index
    %495 = vector.load %arg13[%c2_201, %c0_202, %c0_203] : memref<4x512x128xbf16, #tpu.memory_space<vmem>>, vector<1x512x128xbf16>
    %496 = vector.shape_cast %495 : vector<1x512x128xbf16> to vector<512x128xbf16>
    %cst_204 = arith.constant dense<0.000000e+00> : vector<8x128xf32>
    %497 = tpu.matmul %494, %496, %cst_204 {dimension_numbers = #tpu.dot_dimension_numbers<[1], [0], [0], [1], [0, 0, 1, 1], [], []>} : vector<8x512xbf16>, vector<512x128xbf16>, vector<8x128xf32> -> vector<8x128xf32>
    %c2_205 = arith.constant 2 : index
    %c0_206 = arith.constant 0 : index
    %c0_207 = arith.constant 0 : index
    %498 = vector.load %arg14[%c2_205, %c0_206, %c0_207] : memref<4x1x128xf32, #tpu.memory_space<vmem>>, vector<1x1x128xf32>
    %499 = vector.shape_cast %498 : vector<1x1x128xf32> to vector<1x128xf32>
    %500 = vector.broadcast %499 : vector<1x128xf32> to vector<8x128xf32>
    %501 = arith.addf %497, %500 : vector<8x128xf32>
    %502 = arith.addf %483, %501 : vector<8x128xf32>
    %c2_208 = arith.constant 2 : index
    %c0_209 = arith.constant 0 : index
    %c0_210 = arith.constant 0 : index
    %503 = vector.load %arg15[%c2_208, %c0_209, %c0_210] : memref<4x1x128xf32, #tpu.memory_space<vmem>>, vector<1x1x128xf32>
    %504 = vector.shape_cast %503 : vector<1x1x128xf32> to vector<1x128xf32>
    %c2_211 = arith.constant 2 : index
    %c0_212 = arith.constant 0 : index
    %c0_213 = arith.constant 0 : index
    %505 = vector.load %arg16[%c2_211, %c0_212, %c0_213] : memref<4x1x128xf32, #tpu.memory_space<vmem>>, vector<1x1x128xf32>
    %506 = vector.shape_cast %505 : vector<1x1x128xf32> to vector<1x128xf32>
    %cst_214 = arith.constant dense<0.000000e+00> : vector<8xf32>
    %507 = vector.multi_reduction <add>, %502, %cst_214 [1] : vector<8x128xf32> to vector<8xf32>
    %508 = vector.shape_cast %507 : vector<8xf32> to vector<8x1xf32>
    %cst_215 = arith.constant 1.280000e+02 : f32
    %509 = vector.broadcast %cst_215 : f32 to vector<8x1xf32>
    %510 = arith.divf %508, %509 : vector<8x1xf32>
    %511 = vector.broadcast %510 : vector<8x1xf32> to vector<8x128xf32>
    %512 = arith.subf %502, %511 : vector<8x128xf32>
    %513 = arith.mulf %512, %512 : vector<8x128xf32>
    %cst_216 = arith.constant dense<0.000000e+00> : vector<8xf32>
    %514 = vector.multi_reduction <add>, %513, %cst_216 [1] : vector<8x128xf32> to vector<8xf32>
    %515 = vector.shape_cast %514 : vector<8xf32> to vector<8x1xf32>
    %cst_217 = arith.constant 1.280000e+02 : f32
    %516 = vector.broadcast %cst_217 : f32 to vector<8x1xf32>
    %517 = arith.divf %515, %516 : vector<8x1xf32>
    %cst_218 = arith.constant 9.99999974E-6 : f32
    %518 = vector.broadcast %cst_218 : f32 to vector<8x1xf32>
    %519 = arith.addf %517, %518 : vector<8x1xf32>
    %520 = math.rsqrt %519 : vector<8x1xf32>
    %521 = vector.broadcast %520 : vector<8x1xf32> to vector<8x128xf32>
    %522 = arith.mulf %512, %521 : vector<8x128xf32>
    %523 = vector.broadcast %504 : vector<1x128xf32> to vector<8x128xf32>
    %524 = arith.mulf %522, %523 : vector<8x128xf32>
    %525 = vector.broadcast %506 : vector<1x128xf32> to vector<8x128xf32>
    %526 = arith.addf %524, %525 : vector<8x128xf32>
    %527 = arith.truncf %526 : vector<8x128xf32> to vector<8x128xbf16>
    %c3 = arith.constant 3 : index
    %c0_219 = arith.constant 0 : index
    %c0_220 = arith.constant 0 : index
    %528 = vector.load %arg5[%c3, %c0_219, %c0_220] : memref<4x128x384xbf16, #tpu.memory_space<vmem>>, vector<1x128x384xbf16>
    %529 = vector.shape_cast %528 : vector<1x128x384xbf16> to vector<128x384xbf16>
    %cst_221 = arith.constant dense<0.000000e+00> : vector<8x384xf32>
    %530 = tpu.matmul %527, %529, %cst_221 {dimension_numbers = #tpu.dot_dimension_numbers<[1], [0], [0], [1], [0, 0, 1, 1], [], []>} : vector<8x128xbf16>, vector<128x384xbf16>, vector<8x384xf32> -> vector<8x384xf32>
    %c3_222 = arith.constant 3 : index
    %c0_223 = arith.constant 0 : index
    %c0_224 = arith.constant 0 : index
    %531 = vector.load %arg6[%c3_222, %c0_223, %c0_224] : memref<4x1x384xf32, #tpu.memory_space<vmem>>, vector<1x1x384xf32>
    %532 = vector.shape_cast %531 : vector<1x1x384xf32> to vector<1x384xf32>
    %533 = vector.broadcast %532 : vector<1x384xf32> to vector<8x384xf32>
    %534 = arith.addf %530, %533 : vector<8x384xf32>
    %535 = vector.extract_strided_slice %534 {offsets = [0, 0], sizes = [8, 128], strides = [1, 1]} : vector<8x384xf32> to vector<8x128xf32>
    %536 = vector.extract_strided_slice %534 {offsets = [0, 128], sizes = [8, 128], strides = [1, 1]} : vector<8x384xf32> to vector<8x128xf32>
    %537 = vector.extract_strided_slice %534 {offsets = [0, 256], sizes = [8, 128], strides = [1, 1]} : vector<8x384xf32> to vector<8x128xf32>
    %538 = vector.extract_strided_slice %535 {offsets = [0, 0], sizes = [8, 32], strides = [1, 1]} : vector<8x128xf32> to vector<8x32xf32>
    %539 = arith.truncf %538 : vector<8x32xf32> to vector<8x32xbf16>
    %540 = vector.extract_strided_slice %536 {offsets = [0, 0], sizes = [8, 32], strides = [1, 1]} : vector<8x128xf32> to vector<8x32xf32>
    %541 = arith.truncf %540 : vector<8x32xf32> to vector<8x32xbf16>
    %542 = vector.extract_strided_slice %537 {offsets = [0, 0], sizes = [8, 32], strides = [1, 1]} : vector<8x128xf32> to vector<8x32xf32>
    %543 = arith.truncf %542 : vector<8x32xf32> to vector<8x32xbf16>
    %cst_225 = arith.constant dense<0.000000e+00> : vector<8x8xf32>
    %544 = tpu.matmul %539, %541, %cst_225 {dimension_numbers = #tpu.dot_dimension_numbers<[1], [1], [0], [0], [0, 0, 1, 0], [], []>} : vector<8x32xbf16>, vector<8x32xbf16>, vector<8x8xf32> -> vector<8x8xf32>
    %cst_226 = arith.constant 0.176776692 : f32
    %545 = vector.broadcast %cst_226 : f32 to vector<8x8xf32>
    %546 = arith.mulf %544, %545 : vector<8x8xf32>
    %cst_227 = arith.constant dense<0xFF800000> : vector<8xf32>
    %547 = vector.multi_reduction <maximumf>, %546, %cst_227 [1] : vector<8x8xf32> to vector<8xf32>
    %548 = vector.shape_cast %547 : vector<8xf32> to vector<8x1xf32>
    %549 = vector.broadcast %548 : vector<8x1xf32> to vector<8x8xf32>
    %550 = arith.subf %546, %549 : vector<8x8xf32>
    %551 = math.exp %550 : vector<8x8xf32>
    %cst_228 = arith.constant dense<0.000000e+00> : vector<8xf32>
    %552 = vector.multi_reduction <add>, %551, %cst_228 [1] : vector<8x8xf32> to vector<8xf32>
    %553 = vector.shape_cast %552 : vector<8xf32> to vector<8x1xf32>
    %554 = tpu.reciprocal %553 {approx = true} : vector<8x1xf32> -> vector<8x1xf32>
    %555 = vector.broadcast %554 : vector<8x1xf32> to vector<8x8xf32>
    %556 = arith.mulf %551, %555 : vector<8x8xf32>
    %557 = arith.truncf %556 : vector<8x8xf32> to vector<8x8xbf16>
    %cst_229 = arith.constant dense<0.000000e+00> : vector<8x32xf32>
    %558 = tpu.matmul %557, %543, %cst_229 {dimension_numbers = #tpu.dot_dimension_numbers<[1], [0], [0], [1], [0, 0, 1, 1], [], []>} : vector<8x8xbf16>, vector<8x32xbf16>, vector<8x32xf32> -> vector<8x32xf32>
    %559 = vector.extract_strided_slice %535 {offsets = [0, 32], sizes = [8, 32], strides = [1, 1]} : vector<8x128xf32> to vector<8x32xf32>
    %560 = arith.truncf %559 : vector<8x32xf32> to vector<8x32xbf16>
    %561 = vector.extract_strided_slice %536 {offsets = [0, 32], sizes = [8, 32], strides = [1, 1]} : vector<8x128xf32> to vector<8x32xf32>
    %562 = arith.truncf %561 : vector<8x32xf32> to vector<8x32xbf16>
    %563 = vector.extract_strided_slice %537 {offsets = [0, 32], sizes = [8, 32], strides = [1, 1]} : vector<8x128xf32> to vector<8x32xf32>
    %564 = arith.truncf %563 : vector<8x32xf32> to vector<8x32xbf16>
    %cst_230 = arith.constant dense<0.000000e+00> : vector<8x8xf32>
    %565 = tpu.matmul %560, %562, %cst_230 {dimension_numbers = #tpu.dot_dimension_numbers<[1], [1], [0], [0], [0, 0, 1, 0], [], []>} : vector<8x32xbf16>, vector<8x32xbf16>, vector<8x8xf32> -> vector<8x8xf32>
    %cst_231 = arith.constant 0.176776692 : f32
    %566 = vector.broadcast %cst_231 : f32 to vector<8x8xf32>
    %567 = arith.mulf %565, %566 : vector<8x8xf32>
    %cst_232 = arith.constant dense<0xFF800000> : vector<8xf32>
    %568 = vector.multi_reduction <maximumf>, %567, %cst_232 [1] : vector<8x8xf32> to vector<8xf32>
    %569 = vector.shape_cast %568 : vector<8xf32> to vector<8x1xf32>
    %570 = vector.broadcast %569 : vector<8x1xf32> to vector<8x8xf32>
    %571 = arith.subf %567, %570 : vector<8x8xf32>
    %572 = math.exp %571 : vector<8x8xf32>
    %cst_233 = arith.constant dense<0.000000e+00> : vector<8xf32>
    %573 = vector.multi_reduction <add>, %572, %cst_233 [1] : vector<8x8xf32> to vector<8xf32>
    %574 = vector.shape_cast %573 : vector<8xf32> to vector<8x1xf32>
    %575 = tpu.reciprocal %574 {approx = true} : vector<8x1xf32> -> vector<8x1xf32>
    %576 = vector.broadcast %575 : vector<8x1xf32> to vector<8x8xf32>
    %577 = arith.mulf %572, %576 : vector<8x8xf32>
    %578 = arith.truncf %577 : vector<8x8xf32> to vector<8x8xbf16>
    %cst_234 = arith.constant dense<0.000000e+00> : vector<8x32xf32>
    %579 = tpu.matmul %578, %564, %cst_234 {dimension_numbers = #tpu.dot_dimension_numbers<[1], [0], [0], [1], [0, 0, 1, 1], [], []>} : vector<8x8xbf16>, vector<8x32xbf16>, vector<8x32xf32> -> vector<8x32xf32>
    %580 = vector.extract_strided_slice %535 {offsets = [0, 64], sizes = [8, 32], strides = [1, 1]} : vector<8x128xf32> to vector<8x32xf32>
    %581 = arith.truncf %580 : vector<8x32xf32> to vector<8x32xbf16>
    %582 = vector.extract_strided_slice %536 {offsets = [0, 64], sizes = [8, 32], strides = [1, 1]} : vector<8x128xf32> to vector<8x32xf32>
    %583 = arith.truncf %582 : vector<8x32xf32> to vector<8x32xbf16>
    %584 = vector.extract_strided_slice %537 {offsets = [0, 64], sizes = [8, 32], strides = [1, 1]} : vector<8x128xf32> to vector<8x32xf32>
    %585 = arith.truncf %584 : vector<8x32xf32> to vector<8x32xbf16>
    %cst_235 = arith.constant dense<0.000000e+00> : vector<8x8xf32>
    %586 = tpu.matmul %581, %583, %cst_235 {dimension_numbers = #tpu.dot_dimension_numbers<[1], [1], [0], [0], [0, 0, 1, 0], [], []>} : vector<8x32xbf16>, vector<8x32xbf16>, vector<8x8xf32> -> vector<8x8xf32>
    %cst_236 = arith.constant 0.176776692 : f32
    %587 = vector.broadcast %cst_236 : f32 to vector<8x8xf32>
    %588 = arith.mulf %586, %587 : vector<8x8xf32>
    %cst_237 = arith.constant dense<0xFF800000> : vector<8xf32>
    %589 = vector.multi_reduction <maximumf>, %588, %cst_237 [1] : vector<8x8xf32> to vector<8xf32>
    %590 = vector.shape_cast %589 : vector<8xf32> to vector<8x1xf32>
    %591 = vector.broadcast %590 : vector<8x1xf32> to vector<8x8xf32>
    %592 = arith.subf %588, %591 : vector<8x8xf32>
    %593 = math.exp %592 : vector<8x8xf32>
    %cst_238 = arith.constant dense<0.000000e+00> : vector<8xf32>
    %594 = vector.multi_reduction <add>, %593, %cst_238 [1] : vector<8x8xf32> to vector<8xf32>
    %595 = vector.shape_cast %594 : vector<8xf32> to vector<8x1xf32>
    %596 = tpu.reciprocal %595 {approx = true} : vector<8x1xf32> -> vector<8x1xf32>
    %597 = vector.broadcast %596 : vector<8x1xf32> to vector<8x8xf32>
    %598 = arith.mulf %593, %597 : vector<8x8xf32>
    %599 = arith.truncf %598 : vector<8x8xf32> to vector<8x8xbf16>
    %cst_239 = arith.constant dense<0.000000e+00> : vector<8x32xf32>
    %600 = tpu.matmul %599, %585, %cst_239 {dimension_numbers = #tpu.dot_dimension_numbers<[1], [0], [0], [1], [0, 0, 1, 1], [], []>} : vector<8x8xbf16>, vector<8x32xbf16>, vector<8x32xf32> -> vector<8x32xf32>
    %601 = vector.extract_strided_slice %535 {offsets = [0, 96], sizes = [8, 32], strides = [1, 1]} : vector<8x128xf32> to vector<8x32xf32>
    %602 = arith.truncf %601 : vector<8x32xf32> to vector<8x32xbf16>
    %603 = vector.extract_strided_slice %536 {offsets = [0, 96], sizes = [8, 32], strides = [1, 1]} : vector<8x128xf32> to vector<8x32xf32>
    %604 = arith.truncf %603 : vector<8x32xf32> to vector<8x32xbf16>
    %605 = vector.extract_strided_slice %537 {offsets = [0, 96], sizes = [8, 32], strides = [1, 1]} : vector<8x128xf32> to vector<8x32xf32>
    %606 = arith.truncf %605 : vector<8x32xf32> to vector<8x32xbf16>
    %cst_240 = arith.constant dense<0.000000e+00> : vector<8x8xf32>
    %607 = tpu.matmul %602, %604, %cst_240 {dimension_numbers = #tpu.dot_dimension_numbers<[1], [1], [0], [0], [0, 0, 1, 0], [], []>} : vector<8x32xbf16>, vector<8x32xbf16>, vector<8x8xf32> -> vector<8x8xf32>
    %cst_241 = arith.constant 0.176776692 : f32
    %608 = vector.broadcast %cst_241 : f32 to vector<8x8xf32>
    %609 = arith.mulf %607, %608 : vector<8x8xf32>
    %cst_242 = arith.constant dense<0xFF800000> : vector<8xf32>
    %610 = vector.multi_reduction <maximumf>, %609, %cst_242 [1] : vector<8x8xf32> to vector<8xf32>
    %611 = vector.shape_cast %610 : vector<8xf32> to vector<8x1xf32>
    %612 = vector.broadcast %611 : vector<8x1xf32> to vector<8x8xf32>
    %613 = arith.subf %609, %612 : vector<8x8xf32>
    %614 = math.exp %613 : vector<8x8xf32>
    %cst_243 = arith.constant dense<0.000000e+00> : vector<8xf32>
    %615 = vector.multi_reduction <add>, %614, %cst_243 [1] : vector<8x8xf32> to vector<8xf32>
    %616 = vector.shape_cast %615 : vector<8xf32> to vector<8x1xf32>
    %617 = tpu.reciprocal %616 {approx = true} : vector<8x1xf32> -> vector<8x1xf32>
    %618 = vector.broadcast %617 : vector<8x1xf32> to vector<8x8xf32>
    %619 = arith.mulf %614, %618 : vector<8x8xf32>
    %620 = arith.truncf %619 : vector<8x8xf32> to vector<8x8xbf16>
    %cst_244 = arith.constant dense<0.000000e+00> : vector<8x32xf32>
    %621 = tpu.matmul %620, %606, %cst_244 {dimension_numbers = #tpu.dot_dimension_numbers<[1], [0], [0], [1], [0, 0, 1, 1], [], []>} : vector<8x8xbf16>, vector<8x32xbf16>, vector<8x32xf32> -> vector<8x32xf32>
    %622 = tpu.concatenate %558, %579, %600, %621 in 1 : vector<8x32xf32>, vector<8x32xf32>, vector<8x32xf32>, vector<8x32xf32> -> vector<8x128xf32>
    %623 = arith.truncf %622 : vector<8x128xf32> to vector<8x128xbf16>
    %c3_245 = arith.constant 3 : index
    %c0_246 = arith.constant 0 : index
    %c0_247 = arith.constant 0 : index
    %624 = vector.load %arg7[%c3_245, %c0_246, %c0_247] : memref<4x128x128xbf16, #tpu.memory_space<vmem>>, vector<1x128x128xbf16>
    %625 = vector.shape_cast %624 : vector<1x128x128xbf16> to vector<128x128xbf16>
    %cst_248 = arith.constant dense<0.000000e+00> : vector<8x128xf32>
    %626 = tpu.matmul %623, %625, %cst_248 {dimension_numbers = #tpu.dot_dimension_numbers<[1], [0], [0], [1], [0, 0, 1, 1], [], []>} : vector<8x128xbf16>, vector<128x128xbf16>, vector<8x128xf32> -> vector<8x128xf32>
    %c3_249 = arith.constant 3 : index
    %c0_250 = arith.constant 0 : index
    %c0_251 = arith.constant 0 : index
    %627 = vector.load %arg8[%c3_249, %c0_250, %c0_251] : memref<4x1x128xf32, #tpu.memory_space<vmem>>, vector<1x1x128xf32>
    %628 = vector.shape_cast %627 : vector<1x1x128xf32> to vector<1x128xf32>
    %629 = vector.broadcast %628 : vector<1x128xf32> to vector<8x128xf32>
    %630 = arith.addf %626, %629 : vector<8x128xf32>
    %631 = arith.addf %526, %630 : vector<8x128xf32>
    %c3_252 = arith.constant 3 : index
    %c0_253 = arith.constant 0 : index
    %c0_254 = arith.constant 0 : index
    %632 = vector.load %arg9[%c3_252, %c0_253, %c0_254] : memref<4x1x128xf32, #tpu.memory_space<vmem>>, vector<1x1x128xf32>
    %633 = vector.shape_cast %632 : vector<1x1x128xf32> to vector<1x128xf32>
    %c3_255 = arith.constant 3 : index
    %c0_256 = arith.constant 0 : index
    %c0_257 = arith.constant 0 : index
    %634 = vector.load %arg10[%c3_255, %c0_256, %c0_257] : memref<4x1x128xf32, #tpu.memory_space<vmem>>, vector<1x1x128xf32>
    %635 = vector.shape_cast %634 : vector<1x1x128xf32> to vector<1x128xf32>
    %cst_258 = arith.constant dense<0.000000e+00> : vector<8xf32>
    %636 = vector.multi_reduction <add>, %631, %cst_258 [1] : vector<8x128xf32> to vector<8xf32>
    %637 = vector.shape_cast %636 : vector<8xf32> to vector<8x1xf32>
    %cst_259 = arith.constant 1.280000e+02 : f32
    %638 = vector.broadcast %cst_259 : f32 to vector<8x1xf32>
    %639 = arith.divf %637, %638 : vector<8x1xf32>
    %640 = vector.broadcast %639 : vector<8x1xf32> to vector<8x128xf32>
    %641 = arith.subf %631, %640 : vector<8x128xf32>
    %642 = arith.mulf %641, %641 : vector<8x128xf32>
    %cst_260 = arith.constant dense<0.000000e+00> : vector<8xf32>
    %643 = vector.multi_reduction <add>, %642, %cst_260 [1] : vector<8x128xf32> to vector<8xf32>
    %644 = vector.shape_cast %643 : vector<8xf32> to vector<8x1xf32>
    %cst_261 = arith.constant 1.280000e+02 : f32
    %645 = vector.broadcast %cst_261 : f32 to vector<8x1xf32>
    %646 = arith.divf %644, %645 : vector<8x1xf32>
    %cst_262 = arith.constant 9.99999974E-6 : f32
    %647 = vector.broadcast %cst_262 : f32 to vector<8x1xf32>
    %648 = arith.addf %646, %647 : vector<8x1xf32>
    %649 = math.rsqrt %648 : vector<8x1xf32>
    %650 = vector.broadcast %649 : vector<8x1xf32> to vector<8x128xf32>
    %651 = arith.mulf %641, %650 : vector<8x128xf32>
    %652 = vector.broadcast %633 : vector<1x128xf32> to vector<8x128xf32>
    %653 = arith.mulf %651, %652 : vector<8x128xf32>
    %654 = vector.broadcast %635 : vector<1x128xf32> to vector<8x128xf32>
    %655 = arith.addf %653, %654 : vector<8x128xf32>
    %656 = arith.truncf %655 : vector<8x128xf32> to vector<8x128xbf16>
    %c3_263 = arith.constant 3 : index
    %c0_264 = arith.constant 0 : index
    %c0_265 = arith.constant 0 : index
    %657 = vector.load %arg11[%c3_263, %c0_264, %c0_265] : memref<4x128x512xbf16, #tpu.memory_space<vmem>>, vector<1x128x512xbf16>
    %658 = vector.shape_cast %657 : vector<1x128x512xbf16> to vector<128x512xbf16>
    %cst_266 = arith.constant dense<0.000000e+00> : vector<8x512xf32>
    %659 = tpu.matmul %656, %658, %cst_266 {dimension_numbers = #tpu.dot_dimension_numbers<[1], [0], [0], [1], [0, 0, 1, 1], [], []>} : vector<8x128xbf16>, vector<128x512xbf16>, vector<8x512xf32> -> vector<8x512xf32>
    %c3_267 = arith.constant 3 : index
    %c0_268 = arith.constant 0 : index
    %c0_269 = arith.constant 0 : index
    %660 = vector.load %arg12[%c3_267, %c0_268, %c0_269] : memref<4x1x512xf32, #tpu.memory_space<vmem>>, vector<1x1x512xf32>
    %661 = vector.shape_cast %660 : vector<1x1x512xf32> to vector<1x512xf32>
    %662 = vector.broadcast %661 : vector<1x512xf32> to vector<8x512xf32>
    %663 = arith.addf %659, %662 : vector<8x512xf32>
    %cst_270 = arith.constant 0.000000e+00 : f32
    %664 = vector.broadcast %cst_270 : f32 to vector<8x512xf32>
    %665 = arith.maximumf %663, %664 : vector<8x512xf32>
    %666 = arith.truncf %665 : vector<8x512xf32> to vector<8x512xbf16>
    %c3_271 = arith.constant 3 : index
    %c0_272 = arith.constant 0 : index
    %c0_273 = arith.constant 0 : index
    %667 = vector.load %arg13[%c3_271, %c0_272, %c0_273] : memref<4x512x128xbf16, #tpu.memory_space<vmem>>, vector<1x512x128xbf16>
    %668 = vector.shape_cast %667 : vector<1x512x128xbf16> to vector<512x128xbf16>
    %cst_274 = arith.constant dense<0.000000e+00> : vector<8x128xf32>
    %669 = tpu.matmul %666, %668, %cst_274 {dimension_numbers = #tpu.dot_dimension_numbers<[1], [0], [0], [1], [0, 0, 1, 1], [], []>} : vector<8x512xbf16>, vector<512x128xbf16>, vector<8x128xf32> -> vector<8x128xf32>
    %c3_275 = arith.constant 3 : index
    %c0_276 = arith.constant 0 : index
    %c0_277 = arith.constant 0 : index
    %670 = vector.load %arg14[%c3_275, %c0_276, %c0_277] : memref<4x1x128xf32, #tpu.memory_space<vmem>>, vector<1x1x128xf32>
    %671 = vector.shape_cast %670 : vector<1x1x128xf32> to vector<1x128xf32>
    %672 = vector.broadcast %671 : vector<1x128xf32> to vector<8x128xf32>
    %673 = arith.addf %669, %672 : vector<8x128xf32>
    %674 = arith.addf %655, %673 : vector<8x128xf32>
    %c3_278 = arith.constant 3 : index
    %c0_279 = arith.constant 0 : index
    %c0_280 = arith.constant 0 : index
    %675 = vector.load %arg15[%c3_278, %c0_279, %c0_280] : memref<4x1x128xf32, #tpu.memory_space<vmem>>, vector<1x1x128xf32>
    %676 = vector.shape_cast %675 : vector<1x1x128xf32> to vector<1x128xf32>
    %c3_281 = arith.constant 3 : index
    %c0_282 = arith.constant 0 : index
    %c0_283 = arith.constant 0 : index
    %677 = vector.load %arg16[%c3_281, %c0_282, %c0_283] : memref<4x1x128xf32, #tpu.memory_space<vmem>>, vector<1x1x128xf32>
    %678 = vector.shape_cast %677 : vector<1x1x128xf32> to vector<1x128xf32>
    %cst_284 = arith.constant dense<0.000000e+00> : vector<8xf32>
    %679 = vector.multi_reduction <add>, %674, %cst_284 [1] : vector<8x128xf32> to vector<8xf32>
    %680 = vector.shape_cast %679 : vector<8xf32> to vector<8x1xf32>
    %cst_285 = arith.constant 1.280000e+02 : f32
    %681 = vector.broadcast %cst_285 : f32 to vector<8x1xf32>
    %682 = arith.divf %680, %681 : vector<8x1xf32>
    %683 = vector.broadcast %682 : vector<8x1xf32> to vector<8x128xf32>
    %684 = arith.subf %674, %683 : vector<8x128xf32>
    %685 = arith.mulf %684, %684 : vector<8x128xf32>
    %cst_286 = arith.constant dense<0.000000e+00> : vector<8xf32>
    %686 = vector.multi_reduction <add>, %685, %cst_286 [1] : vector<8x128xf32> to vector<8xf32>
    %687 = vector.shape_cast %686 : vector<8xf32> to vector<8x1xf32>
    %cst_287 = arith.constant 1.280000e+02 : f32
    %688 = vector.broadcast %cst_287 : f32 to vector<8x1xf32>
    %689 = arith.divf %687, %688 : vector<8x1xf32>
    %cst_288 = arith.constant 9.99999974E-6 : f32
    %690 = vector.broadcast %cst_288 : f32 to vector<8x1xf32>
    %691 = arith.addf %689, %690 : vector<8x1xf32>
    %692 = math.rsqrt %691 : vector<8x1xf32>
    %693 = vector.broadcast %692 : vector<8x1xf32> to vector<8x128xf32>
    %694 = arith.mulf %684, %693 : vector<8x128xf32>
    %695 = vector.broadcast %676 : vector<1x128xf32> to vector<8x128xf32>
    %696 = arith.mulf %694, %695 : vector<8x128xf32>
    %697 = vector.broadcast %678 : vector<1x128xf32> to vector<8x128xf32>
    %698 = arith.addf %696, %697 : vector<8x128xf32>
    %699 = arith.truncf %698 : vector<8x128xf32> to vector<8x128xbf16>
    %c0_289 = arith.constant 0 : index
    %c0_290 = arith.constant 0 : index
    %700 = vector.load %arg17[%c0_289, %c0_290] : memref<128x128xbf16, #tpu.memory_space<vmem>>, vector<128x128xbf16>
    %cst_291 = arith.constant dense<0.000000e+00> : vector<8x128xf32>
    %701 = tpu.matmul %699, %700, %cst_291 {dimension_numbers = #tpu.dot_dimension_numbers<[1], [0], [0], [1], [0, 0, 1, 1], [], []>} : vector<8x128xbf16>, vector<128x128xbf16>, vector<8x128xf32> -> vector<8x128xf32>
    %c0_292 = arith.constant 0 : index
    %c0_293 = arith.constant 0 : index
    %702 = vector.load %arg18[%c0_292, %c0_293] : memref<1x128xf32, #tpu.memory_space<vmem>>, vector<1x128xf32>
    %703 = vector.broadcast %702 : vector<1x128xf32> to vector<8x128xf32>
    %704 = arith.addf %701, %703 : vector<8x128xf32>
    %c0_294 = arith.constant 0 : index
    %c0_295 = arith.constant 0 : index
    %705 = vector.load %arg19[%c0_294, %c0_295] : memref<8x128xf32, #tpu.memory_space<vmem>>, vector<8x128xf32>
    tpu.vector_store %arg19[%c0_294, %c0_295], %704 {strides = array<i32>} : memref<8x128xf32, #tpu.memory_space<vmem>>, vector<8x128xf32>,
    return
  }
  func.func @transform_0(%arg0: i32) -> (i32, i32) {
    %c0_i32 = arith.constant 0 : i32
    %c0_i32_0 = arith.constant 0 : i32
    return %arg0, %c0_i32 : i32, i32
  }
  func.func @transform_1(%arg0: i32) -> (i32, i32) {
    %c0_i32 = arith.constant 0 : i32
    %c0_i32_0 = arith.constant 0 : i32
    %c0_i32_1 = arith.constant 0 : i32
    return %c0_i32, %c0_i32_0 : i32, i32
  }
  func.func @transform_2(%arg0: i32) -> (i32, i32) {
    %c0_i32 = arith.constant 0 : i32
    %c0_i32_0 = arith.constant 0 : i32
    %c0_i32_1 = arith.constant 0 : i32
    return %c0_i32, %c0_i32_0 : i32, i32
  }
  func.func @transform_3(%arg0: i32) -> (i32, i32) {
    %c0_i32 = arith.constant 0 : i32
    %c0_i32_0 = arith.constant 0 : i32
    %c0_i32_1 = arith.constant 0 : i32
    return %c0_i32, %c0_i32_0 : i32, i32
  }
  func.func @transform_4(%arg0: i32) -> (i32, i32, i32) {
    %c0_i32 = arith.constant 0 : i32
    %c0_i32_0 = arith.constant 0 : i32
    %c0_i32_1 = arith.constant 0 : i32
    %c0_i32_2 = arith.constant 0 : i32
    return %c0_i32, %c0_i32_0, %c0_i32_1 : i32, i32, i32
  }
  func.func @transform_5(%arg0: i32) -> (i32, i32, i32) {
    %c0_i32 = arith.constant 0 : i32
    %c0_i32_0 = arith.constant 0 : i32
    %c0_i32_1 = arith.constant 0 : i32
    %c0_i32_2 = arith.constant 0 : i32
    return %c0_i32, %c0_i32_0, %c0_i32_1 : i32, i32, i32
  }
  func.func @transform_6(%arg0: i32) -> (i32, i32, i32) {
    %c0_i32 = arith.constant 0 : i32
    %c0_i32_0 = arith.constant 0 : i32
    %c0_i32_1 = arith.constant 0 : i32
    %c0_i32_2 = arith.constant 0 : i32
    return %c0_i32, %c0_i32_0, %c0_i32_1 : i32, i32, i32
  }
  func.func @transform_7(%arg0: i32) -> (i32, i32, i32) {
    %c0_i32 = arith.constant 0 : i32
    %c0_i32_0 = arith.constant 0 : i32
    %c0_i32_1 = arith.constant 0 : i32
    %c0_i32_2 = arith.constant 0 : i32
    return %c0_i32, %c0_i32_0, %c0_i32_1 : i32, i32, i32
  }
  func.func @transform_8(%arg0: i32) -> (i32, i32, i32) {
    %c0_i32 = arith.constant 0 : i32
    %c0_i32_0 = arith.constant 0 : i32
    %c0_i32_1 = arith.constant 0 : i32
    %c0_i32_2 = arith.constant 0 : i32
    return %c0_i32, %c0_i32_0, %c0_i32_1 : i32, i32, i32
  }
  func.func @transform_9(%arg0: i32) -> (i32, i32, i32) {
    %c0_i32 = arith.constant 0 : i32
    %c0_i32_0 = arith.constant 0 : i32
    %c0_i32_1 = arith.constant 0 : i32
    %c0_i32_2 = arith.constant 0 : i32
    return %c0_i32, %c0_i32_0, %c0_i32_1 : i32, i32, i32
  }
  func.func @transform_10(%arg0: i32) -> (i32, i32, i32) {
    %c0_i32 = arith.constant 0 : i32
    %c0_i32_0 = arith.constant 0 : i32
    %c0_i32_1 = arith.constant 0 : i32
    %c0_i32_2 = arith.constant 0 : i32
    return %c0_i32, %c0_i32_0, %c0_i32_1 : i32, i32, i32
  }
  func.func @transform_11(%arg0: i32) -> (i32, i32, i32) {
    %c0_i32 = arith.constant 0 : i32
    %c0_i32_0 = arith.constant 0 : i32
    %c0_i32_1 = arith.constant 0 : i32
    %c0_i32_2 = arith.constant 0 : i32
    return %c0_i32, %c0_i32_0, %c0_i32_1 : i32, i32, i32
  }
  func.func @transform_12(%arg0: i32) -> (i32, i32, i32) {
    %c0_i32 = arith.constant 0 : i32
    %c0_i32_0 = arith.constant 0 : i32
    %c0_i32_1 = arith.constant 0 : i32
    %c0_i32_2 = arith.constant 0 : i32
    return %c0_i32, %c0_i32_0, %c0_i32_1 : i32, i32, i32
  }
  func.func @transform_13(%arg0: i32) -> (i32, i32, i32) {
    %c0_i32 = arith.constant 0 : i32
    %c0_i32_0 = arith.constant 0 : i32
    %c0_i32_1 = arith.constant 0 : i32
    %c0_i32_2 = arith.constant 0 : i32
    return %c0_i32, %c0_i32_0, %c0_i32_1 : i32, i32, i32
  }
  func.func @transform_14(%arg0: i32) -> (i32, i32, i32) {
    %c0_i32 = arith.constant 0 : i32
    %c0_i32_0 = arith.constant 0 : i32
    %c0_i32_1 = arith.constant 0 : i32
    %c0_i32_2 = arith.constant 0 : i32
    return %c0_i32, %c0_i32_0, %c0_i32_1 : i32, i32, i32
  }
  func.func @transform_15(%arg0: i32) -> (i32, i32, i32) {
    %c0_i32 = arith.constant 0 : i32
    %c0_i32_0 = arith.constant 0 : i32
    %c0_i32_1 = arith.constant 0 : i32
    %c0_i32_2 = arith.constant 0 : i32
    return %c0_i32, %c0_i32_0, %c0_i32_1 : i32, i32, i32
  }
  func.func @transform_16(%arg0: i32) -> (i32, i32) {
    %c0_i32 = arith.constant 0 : i32
    %c0_i32_0 = arith.constant 0 : i32
    %c0_i32_1 = arith.constant 0 : i32
    return %c0_i32, %c0_i32_0 : i32, i32
  }
  func.func @transform_17(%arg0: i32) -> (i32, i32) {
    %c0_i32 = arith.constant 0 : i32
    %c0_i32_0 = arith.constant 0 : i32
    %c0_i32_1 = arith.constant 0 : i32
    return %c0_i32, %c0_i32_0 : i32, i32
  }
  func.func @transform_18(%arg0: i32) -> (i32, i32) {
    %c0_i32 = arith.constant 0 : i32
    %c0_i32_0 = arith.constant 0 : i32
    return %arg0, %c0_i32 : i32, i32
  }
}

</mosaic_0001>

<llo_original>
// kernel: opta_forward.1
$region0: #{opta_forward.1}
  #allocation0 [shape = 'u32[]', space=smem, size = 0x4, offset = 0x4, fixed_abs, tag = 'smem constant byte address 0x4 - core index']
  #allocation1 [shape = 'u32[72,128]{1,0:T(1,128)}', space=vmem, size = 0x9000, scoped, tag = 'internal scratch']
  %s0 = inlined_call_operand.vmem [shape: f32[16,128], index: 0, kind: input, shape index: {}]
  %s1 = inlined_call_operand.vmem [shape: f32[8,128], index: 1, kind: input, shape index: {}]
  %s2 = inlined_call_operand.hbm [shape: bf16[128,128], index: 2, kind: input, shape index: {}]
  %s3 = inlined_call_operand.vmem [shape: f32[1,128], index: 3, kind: input, shape index: {}]
  %s4 = inlined_call_operand.hbm [shape: bf16[4,128,384], index: 4, kind: input, shape index: {}]
  %s5 = inlined_call_operand.vmem [shape: f32[4,1,384], index: 5, kind: input, shape index: {}]
  %s6 = inlined_call_operand.hbm [shape: bf16[4,128,128], index: 6, kind: input, shape index: {}]
  %s7 = inlined_call_operand.vmem [shape: f32[4,1,128], index: 7, kind: input, shape index: {}]
  %s8 = inlined_call_operand.vmem [shape: f32[4,1,128], index: 8, kind: input, shape index: {}]
  %s9 = inlined_call_operand.vmem [shape: f32[4,1,128], index: 9, kind: input, shape index: {}]
  %s10 = inlined_call_operand.hbm [shape: bf16[4,128,512], index: 10, kind: input, shape index: {}]
  %s11 = inlined_call_operand.vmem [shape: f32[4,1,512], index: 11, kind: input, shape index: {}]
  %s12 = inlined_call_operand.hbm [shape: bf16[4,512,128], index: 12, kind: input, shape index: {}]
  %s13 = inlined_call_operand.hbm [shape: f32[4,1,128], index: 13, kind: input, shape index: {}]
  %s14 = inlined_call_operand.hbm [shape: f32[4,1,128], index: 14, kind: input, shape index: {}]
  %s15 = inlined_call_operand.hbm [shape: f32[4,1,128], index: 15, kind: input, shape index: {}]
  %s16 = inlined_call_operand.hbm [shape: bf16[128,128], index: 16, kind: input, shape index: {}]
  %s17 = inlined_call_operand.hbm [shape: f32[1,128], index: 17, kind: input, shape index: {}]
  %s18 = inlined_call_operand.vmem [shape: f32[16,128], index: 18, kind: output, shape index: {}]
  %s19 = sld [smem:[#allocation0]]
  $region145: #{opta_forward.1} parent=0
    _
  %s21 = ssub.s32 1, %s19
  %s22 = scalar_select 0, %s21, %s19
  $region1: #{opta_forward.1} parent=0
    #allocation2 [shape = 'u8[32768]{0}', space=vmem, size = 0x8000, scoped, tag = 'input window, operand 2, single buffered']
    #allocation3 [shape = 's32[2]{0}', space=sflag, size = 0x8, scoped, tag = 'scoped memory for opta_forward.1']
    #allocation4 [shape = 'u8[393216]{0}', space=vmem, size = 0x60000, scoped, tag = 'input window, operand 4, single buffered']
    #allocation5 [shape = 's32[1]{0}', space=sflag, size = 0x4, scoped, tag = 'scoped memory for opta_forward.1']
    #allocation6 [shape = 'u8[131072]{0}', space=vmem, size = 0x20000, scoped, tag = 'input window, operand 6, single buffered']
    #allocation7 [shape = 'u8[524288]{0}', space=vmem, size = 0x80000, scoped, tag = 'input window, operand 10, single buffered']
    #allocation8 [shape = 's32[1]{0}', space=sflag, size = 0x4, scoped, tag = 'scoped memory for opta_forward.1']
    #allocation9 [shape = 'u8[524288]{0}', space=vmem, size = 0x80000, scoped, tag = 'input window, operand 12, single buffered']
    #allocation10 [shape = 'u8[2048]{0}', space=vmem, size = 0x800, scoped, tag = 'input window, operand 13, single buffered']
    #allocation11 [shape = 's32[1]{0}', space=sflag, size = 0x4, scoped, tag = 'scoped memory for opta_forward.1']
    #allocation12 [shape = 'u8[2048]{0}', space=vmem, size = 0x800, scoped, tag = 'input window, operand 14, single buffered']
    #allocation13 [shape = 'u8[2048]{0}', space=vmem, size = 0x800, scoped, tag = 'input window, operand 15, single buffered']
    #allocation14 [shape = 's32[1]{0}', space=sflag, size = 0x4, scoped, tag = 'scoped memory for opta_forward.1']
    #allocation15 [shape = 'u8[32768]{0}', space=vmem, size = 0x8000, scoped, tag = 'input window, operand 16, single buffered']
    #allocation16 [shape = 'u8[512]{0}', space=vmem, size = 0x400, scoped, tag = 'input window, operand 17, single buffered']
    #allocation17 [shape = 's32[1]{0}', space=sflag, size = 0x4, scoped, tag = 'scoped memory for opta_forward.1']
    %23 = vsyncpa [#allocation3], 0
    %24 = vsyncpa [#allocation5], 0
    %25 = vsyncpa [#allocation8], 0
    %26 = vsyncpa [#allocation11], 0
    %27 = vsyncpa [#allocation14], 0
    %28 = vsyncpa [#allocation17], 0
    loop: start=0, step=1, limit=4
    $region2: #{opta_forward.1} parent=1 // loop_pre_header
      _
    $region3: #{opta_forward.1} parent=1 // loop_header
      %s30 = sphi 0, %s34
      %p31 = scmp.ge.s32.totalorder %s30, 4
      %s40 = sphi 0, %s42
      %s43 = sphi 0, %s40
      %s44 = sphi 0, %s43
      %s60 = sphi 0, %s44
      %s64 = sphi 0, %s64
      %s66 = sphi 0, %s64
      %s67 = sphi 0, %s66
      %s81 = sphi 0, %s67
      %s85 = sphi 0, %s85
      %s87 = sphi 0, %s85
      %s88 = sphi 0, %s87
      %s102 = sphi 0, %s88
      %s106 = sphi 0, %s106
      %s108 = sphi 0, %s106
      %s109 = sphi 0, %s108
      %s123 = sphi 0, %s109
      %s127 = sphi 0, %s127
      %s129 = sphi 0, %s127
      %s130 = sphi 0, %s129
      %s144 = sphi 0, %s130
      %s148 = sphi 0, %s148
      %s150 = sphi 0, %s148
      %s151 = sphi 0, %s150
      %s165 = sphi 0, %s151
      %s169 = sphi 0, %s169
      %s171 = sphi 0, %s169
      %s172 = sphi 0, %s171
      %s186 = sphi 0, %s172
      %s190 = sphi 0, %s190
      %s192 = sphi 0, %s190
      %s193 = sphi 0, %s192
      %s207 = sphi 0, %s193
      %s211 = sphi 0, %s211
      %s213 = sphi 0, %s211
      %s214 = sphi 0, %s213
      %s228 = sphi 0, %s214
      %s232 = sphi 0, %s232
      %s234 = sphi 0, %s232
      %s235 = sphi 0, %s234
      %s249 = sphi 0, %s235
      %s253 = sphi 0, %s253
      %s255 = sphi 0, %s253
      %s256 = sphi 0, %s255
      %s270 = sphi 0, %s256
      %s274 = sphi 0, %s274
      %s276 = sphi 0, %s274
      %s277 = sphi 0, %s276
      %s291 = sphi 0, %s277
      %s295 = sphi 0, %s295
      %s297 = sphi 0, %s295
      %s298 = sphi 0, %s297
      %s312 = sphi 0, %s298
      %s316 = sphi 0, %s316
      %s318 = sphi 0, %s316
      %s319 = sphi 0, %s318
      %s333 = sphi 0, %s319
      %s337 = sphi 0, %s337
      %s339 = sphi 0, %s337
      %s340 = sphi 0, %s339
      %s354 = sphi 0, %s340
      %s358 = sphi 0, %s358
      %s360 = sphi 0, %s358
      %s361 = sphi 0, %s360
      %s375 = sphi 0, %s361
      %s379 = sphi 0, %s379
      %s381 = sphi 0, %s379
      %s382 = sphi 0, %s381
      %s396 = sphi 0, %s382
      %s400 = sphi 0, %s400
      %s402 = sphi 0, %s400
      %s403 = sphi 0, %s402
      %s417 = sphi 0, %s403
      %s423 = sphi 0, %s425
      %s426 = sphi 0, %s423
      %s427 = sphi 0, %s426
      %s443 = sphi 0, %s427
    $region4: #{opta_forward.1} parent=1 // loop_header_branch
      %33 = sbr.rel (%p31) target = $region8
    $region5: #{opta_forward.1} parent=1 // loop_body
      %s35 = ssub.s32 %s30, 1
      %s36 = ssub.s32 %s30, 2
      %s37 = sadd.s32 %s30, 1
      %s38 = ssub.s32 %s30, %s37
      %p39 = scmp.eq.s32.totalorder %s38, 0
      %s41 = sadd.s32 %s40, 1
      %s42 = scalar_select %p39, %s40, %s41
      %p45 = pneg %p39
      %p46 = scmp.eq.s32.totalorder %s30, 1
      %p47 = por %p45, %p46
      %p48 = scmp.ne.s32.totalorder %s40, %s43
      %p49 = scmp.eq.s32.totalorder %s30, 0
      %p50 = por %p48, %p49
      %p51 = scmp.ne.s32.totalorder %s40, %s43
      %p52 = scmp.eq.s32.totalorder %s35, 1
      %p53 = por %p51, %p52
      %p54 = scmp.ne.s32.totalorder %s43, %s44
      %p55 = scmp.eq.s32.totalorder %s35, 0
      %p56 = por %p54, %p55
      %p57 = scmp.ne.s32.totalorder %s43, %s44
      %p58 = scmp.eq.s32.totalorder %s36, 1
      %p59 = por %p57, %p58
      %p61 = scmp.ne.s32.totalorder %s44, %s60
      %p62 = scmp.eq.s32.totalorder %s36, 0
      %p63 = por %p61, %p62
      %s65 = sadd.s32 %s64, 1
      %p68 = scmp.eq.s32.totalorder %s30, 1
      %p69 = scmp.ne.s32.totalorder %s64, %s66
      %p70 = scmp.eq.s32.totalorder %s30, 0
      %p71 = por %p69, %p70
      %p72 = scmp.ne.s32.totalorder %s64, %s66
      %p73 = scmp.eq.s32.totalorder %s35, 1
      %p74 = por %p72, %p73
      %p75 = scmp.ne.s32.totalorder %s66, %s67
      %p76 = scmp.eq.s32.totalorder %s35, 0
      %p77 = por %p75, %p76
      %p78 = scmp.ne.s32.totalorder %s66, %s67
      %p79 = scmp.eq.s32.totalorder %s36, 1
      %p80 = por %p78, %p79
      %p82 = scmp.ne.s32.totalorder %s67, %s81
      %p83 = scmp.eq.s32.totalorder %s36, 0
      %p84 = por %p82, %p83
      %s86 = sadd.s32 %s85, 1
      %p89 = scmp.eq.s32.totalorder %s30, 1
      %p90 = scmp.ne.s32.totalorder %s85, %s87
      %p91 = scmp.eq.s32.totalorder %s30, 0
      %p92 = por %p90, %p91
      %p93 = scmp.ne.s32.totalorder %s85, %s87
      %p94 = scmp.eq.s32.totalorder %s35, 1
      %p95 = por %p93, %p94
      %p96 = scmp.ne.s32.totalorder %s87, %s88
      %p97 = scmp.eq.s32.totalorder %s35, 0
      %p98 = por %p96, %p97
      %p99 = scmp.ne.s32.totalorder %s87, %s88
      %p100 = scmp.eq.s32.totalorder %s36, 1
      %p101 = por %p99, %p100
      %p103 = scmp.ne.s32.totalorder %s88, %s102
      %p104 = scmp.eq.s32.totalorder %s36, 0
      %p105 = por %p103, %p104
      %s107 = sadd.s32 %s106, 1
      %p110 = scmp.eq.s32.totalorder %s30, 1
      %p111 = scmp.ne.s32.totalorder %s106, %s108
      %p112 = scmp.eq.s32.totalorder %s30, 0
      %p113 = por %p111, %p112
      %p114 = scmp.ne.s32.totalorder %s106, %s108
      %p115 = scmp.eq.s32.totalorder %s35, 1
      %p116 = por %p114, %p115
      %p117 = scmp.ne.s32.totalorder %s108, %s109
      %p118 = scmp.eq.s32.totalorder %s35, 0
      %p119 = por %p117, %p118
      %p120 = scmp.ne.s32.totalorder %s108, %s109
      %p121 = scmp.eq.s32.totalorder %s36, 1
      %p122 = por %p120, %p121
      %p124 = scmp.ne.s32.totalorder %s109, %s123
      %p125 = scmp.eq.s32.totalorder %s36, 0
      %p126 = por %p124, %p125
      %s128 = sadd.s32 %s127, 1
      %p131 = scmp.eq.s32.totalorder %s30, 1
      %p132 = scmp.ne.s32.totalorder %s127, %s129
      %p133 = scmp.eq.s32.totalorder %s30, 0
      %p134 = por %p132, %p133
      %p135 = scmp.ne.s32.totalorder %s127, %s129
      %p136 = scmp.eq.s32.totalorder %s35, 1
      %p137 = por %p135, %p136
      %p138 = scmp.ne.s32.totalorder %s129, %s130
      %p139 = scmp.eq.s32.totalorder %s35, 0
      %p140 = por %p138, %p139
      %p141 = scmp.ne.s32.totalorder %s129, %s130
      %p142 = scmp.eq.s32.totalorder %s36, 1
      %p143 = por %p141, %p142
      %p145 = scmp.ne.s32.totalorder %s130, %s144
      %p146 = scmp.eq.s32.totalorder %s36, 0
      %p147 = por %p145, %p146
      %s149 = sadd.s32 %s148, 1
      %p152 = scmp.eq.s32.totalorder %s30, 1
      %p153 = scmp.ne.s32.totalorder %s148, %s150
      %p154 = scmp.eq.s32.totalorder %s30, 0
      %p155 = por %p153, %p154
      %p156 = scmp.ne.s32.totalorder %s148, %s150
      %p157 = scmp.eq.s32.totalorder %s35, 1
      %p158 = por %p156, %p157
      %p159 = scmp.ne.s32.totalorder %s150, %s151
      %p160 = scmp.eq.s32.totalorder %s35, 0
      %p161 = por %p159, %p160
      %p162 = scmp.ne.s32.totalorder %s150, %s151
      %p163 = scmp.eq.s32.totalorder %s36, 1
      %p164 = por %p162, %p163
      %p166 = scmp.ne.s32.totalorder %s151, %s165
      %p167 = scmp.eq.s32.totalorder %s36, 0
      %p168 = por %p166, %p167
      %s170 = sadd.s32 %s169, 1
      %p173 = scmp.eq.s32.totalorder %s30, 1
      %p174 = scmp.ne.s32.totalorder %s169, %s171
      %p175 = scmp.eq.s32.totalorder %s30, 0
      %p176 = por %p174, %p175
      %p177 = scmp.ne.s32.totalorder %s169, %s171
      %p178 = scmp.eq.s32.totalorder %s35, 1
      %p179 = por %p177, %p178
      %p180 = scmp.ne.s32.totalorder %s171, %s172
      %p181 = scmp.eq.s32.totalorder %s35, 0
      %p182 = por %p180, %p181
      %p183 = scmp.ne.s32.totalorder %s171, %s172
      %p184 = scmp.eq.s32.totalorder %s36, 1
      %p185 = por %p183, %p184
      %p187 = scmp.ne.s32.totalorder %s172, %s186
      %p188 = scmp.eq.s32.totalorder %s36, 0
      %p189 = por %p187, %p188
      %s191 = sadd.s32 %s190, 1
      %p194 = scmp.eq.s32.totalorder %s30, 1
      %p195 = scmp.ne.s32.totalorder %s190, %s192
      %p196 = scmp.eq.s32.totalorder %s30, 0
      %p197 = por %p195, %p196
      %p198 = scmp.ne.s32.totalorder %s190, %s192
      %p199 = scmp.eq.s32.totalorder %s35, 1
      %p200 = por %p198, %p199
      %p201 = scmp.ne.s32.totalorder %s192, %s193
      %p202 = scmp.eq.s32.totalorder %s35, 0
      %p203 = por %p201, %p202
      %p204 = scmp.ne.s32.totalorder %s192, %s193
      %p205 = scmp.eq.s32.totalorder %s36, 1
      %p206 = por %p204, %p205
      %p208 = scmp.ne.s32.totalorder %s193, %s207
      %p209 = scmp.eq.s32.totalorder %s36, 0
      %p210 = por %p208, %p209
      %s212 = sadd.s32 %s211, 1
      %p215 = scmp.eq.s32.totalorder %s30, 1
      %p216 = scmp.ne.s32.totalorder %s211, %s213
      %p217 = scmp.eq.s32.totalorder %s30, 0
      %p218 = por %p216, %p217
      %p219 = scmp.ne.s32.totalorder %s211, %s213
      %p220 = scmp.eq.s32.totalorder %s35, 1
      %p221 = por %p219, %p220
      %p222 = scmp.ne.s32.totalorder %s213, %s214
      %p223 = scmp.eq.s32.totalorder %s35, 0
      %p224 = por %p222, %p223
      %p225 = scmp.ne.s32.totalorder %s213, %s214
      %p226 = scmp.eq.s32.totalorder %s36, 1
      %p227 = por %p225, %p226
      %p229 = scmp.ne.s32.totalorder %s214, %s228
      %p230 = scmp.eq.s32.totalorder %s36, 0
      %p231 = por %p229, %p230
      %s233 = sadd.s32 %s232, 1
      %p236 = scmp.eq.s32.totalorder %s30, 1
      %p237 = scmp.ne.s32.totalorder %s232, %s234
      %p238 = scmp.eq.s32.totalorder %s30, 0
      %p239 = por %p237, %p238
      %p240 = scmp.ne.s32.totalorder %s232, %s234
      %p241 = scmp.eq.s32.totalorder %s35, 1
      %p242 = por %p240, %p241
      %p243 = scmp.ne.s32.totalorder %s234, %s235
      %p244 = scmp.eq.s32.totalorder %s35, 0
      %p245 = por %p243, %p244
      %p246 = scmp.ne.s32.totalorder %s234, %s235
      %p247 = scmp.eq.s32.totalorder %s36, 1
      %p248 = por %p246, %p247
      %p250 = scmp.ne.s32.totalorder %s235, %s249
      %p251 = scmp.eq.s32.totalorder %s36, 0
      %p252 = por %p250, %p251
      %s254 = sadd.s32 %s253, 1
      %p257 = scmp.eq.s32.totalorder %s30, 1
      %p258 = scmp.ne.s32.totalorder %s253, %s255
      %p259 = scmp.eq.s32.totalorder %s30, 0
      %p260 = por %p258, %p259
      %p261 = scmp.ne.s32.totalorder %s253, %s255
      %p262 = scmp.eq.s32.totalorder %s35, 1
      %p263 = por %p261, %p262
      %p264 = scmp.ne.s32.totalorder %s255, %s256
      %p265 = scmp.eq.s32.totalorder %s35, 0
      %p266 = por %p264, %p265
      %p267 = scmp.ne.s32.totalorder %s255, %s256
      %p268 = scmp.eq.s32.totalorder %s36, 1
      %p269 = por %p267, %p268
      %p271 = scmp.ne.s32.totalorder %s256, %s270
      %p272 = scmp.eq.s32.totalorder %s36, 0
      %p273 = por %p271, %p272
      %s275 = sadd.s32 %s274, 1
      %p278 = scmp.eq.s32.totalorder %s30, 1
      %p279 = scmp.ne.s32.totalorder %s274, %s276
      %p280 = scmp.eq.s32.totalorder %s30, 0
      %p281 = por %p279, %p280
      %p282 = scmp.ne.s32.totalorder %s274, %s276
      %p283 = scmp.eq.s32.totalorder %s35, 1
      %p284 = por %p282, %p283
      %p285 = scmp.ne.s32.totalorder %s276, %s277
      %p286 = scmp.eq.s32.totalorder %s35, 0
      %p287 = por %p285, %p286
      %p288 = scmp.ne.s32.totalorder %s276, %s277
      %p289 = scmp.eq.s32.totalorder %s36, 1
      %p290 = por %p288, %p289
      %p292 = scmp.ne.s32.totalorder %s277, %s291
      %p293 = scmp.eq.s32.totalorder %s36, 0
      %p294 = por %p292, %p293
      %s296 = sadd.s32 %s295, 1
      %p299 = scmp.eq.s32.totalorder %s30, 1
      %p300 = scmp.ne.s32.totalorder %s295, %s297
      %p301 = scmp.eq.s32.totalorder %s30, 0
      %p302 = por %p300, %p301
      %p303 = scmp.ne.s32.totalorder %s295, %s297
      %p304 = scmp.eq.s32.totalorder %s35, 1
      %p305 = por %p303, %p304
      %p306 = scmp.ne.s32.totalorder %s297, %s298
      %p307 = scmp.eq.s32.totalorder %s35, 0
      %p308 = por %p306, %p307
      %p309 = scmp.ne.s32.totalorder %s297, %s298
      %p310 = scmp.eq.s32.totalorder %s36, 1
      %p311 = por %p309, %p310
      %p313 = scmp.ne.s32.totalorder %s298, %s312
      %p314 = scmp.eq.s32.totalorder %s36, 0
      %p315 = por %p313, %p314
      %s317 = sadd.s32 %s316, 1
      %p320 = scmp.eq.s32.totalorder %s30, 1
      %p321 = scmp.ne.s32.totalorder %s316, %s318
      %p322 = scmp.eq.s32.totalorder %s30, 0
      %p323 = por %p321, %p322
      %p324 = scmp.ne.s32.totalorder %s316, %s318
      %p325 = scmp.eq.s32.totalorder %s35, 1
      %p326 = por %p324, %p325
      %p327 = scmp.ne.s32.totalorder %s318, %s319
      %p328 = scmp.eq.s32.totalorder %s35, 0
      %p329 = por %p327, %p328
      %p330 = scmp.ne.s32.totalorder %s318, %s319
      %p331 = scmp.eq.s32.totalorder %s36, 1
      %p332 = por %p330, %p331
      %p334 = scmp.ne.s32.totalorder %s319, %s333
      %p335 = scmp.eq.s32.totalorder %s36, 0
      %p336 = por %p334, %p335
      %s338 = sadd.s32 %s337, 1
      %p341 = scmp.eq.s32.totalorder %s30, 1
      %p342 = scmp.ne.s32.totalorder %s337, %s339
      %p343 = scmp.eq.s32.totalorder %s30, 0
      %p344 = por %p342, %p343
      %p345 = scmp.ne.s32.totalorder %s337, %s339
      %p346 = scmp.eq.s32.totalorder %s35, 1
      %p347 = por %p345, %p346
      %p348 = scmp.ne.s32.totalorder %s339, %s340
      %p349 = scmp.eq.s32.totalorder %s35, 0
      %p350 = por %p348, %p349
      %p351 = scmp.ne.s32.totalorder %s339, %s340
      %p352 = scmp.eq.s32.totalorder %s36, 1
      %p353 = por %p351, %p352
      %p355 = scmp.ne.s32.totalorder %s340, %s354
      %p356 = scmp.eq.s32.totalorder %s36, 0
      %p357 = por %p355, %p356
      %s359 = sadd.s32 %s358, 1
      %p362 = scmp.eq.s32.totalorder %s30, 1
      %p363 = scmp.ne.s32.totalorder %s358, %s360
      %p364 = scmp.eq.s32.totalorder %s30, 0
      %p365 = por %p363, %p364
      %p366 = scmp.ne.s32.totalorder %s358, %s360
      %p367 = scmp.eq.s32.totalorder %s35, 1
      %p368 = por %p366, %p367
      %p369 = scmp.ne.s32.totalorder %s360, %s361
      %p370 = scmp.eq.s32.totalorder %s35, 0
      %p371 = por %p369, %p370
      %p372 = scmp.ne.s32.totalorder %s360, %s361
      %p373 = scmp.eq.s32.totalorder %s36, 1
      %p374 = por %p372, %p373
      %p376 = scmp.ne.s32.totalorder %s361, %s375
      %p377 = scmp.eq.s32.totalorder %s36, 0
      %p378 = por %p376, %p377
      %s380 = sadd.s32 %s379, 1
      %p383 = scmp.eq.s32.totalorder %s30, 1
      %p384 = scmp.ne.s32.totalorder %s379, %s381
      %p385 = scmp.eq.s32.totalorder %s30, 0
      %p386 = por %p384, %p385
      %p387 = scmp.ne.s32.totalorder %s379, %s381
      %p388 = scmp.eq.s32.totalorder %s35, 1
      %p389 = por %p387, %p388
      %p390 = scmp.ne.s32.totalorder %s381, %s382
      %p391 = scmp.eq.s32.totalorder %s35, 0
      %p392 = por %p390, %p391
      %p393 = scmp.ne.s32.totalorder %s381, %s382
      %p394 = scmp.eq.s32.totalorder %s36, 1
      %p395 = por %p393, %p394
      %p397 = scmp.ne.s32.totalorder %s382, %s396
      %p398 = scmp.eq.s32.totalorder %s36, 0
      %p399 = por %p397, %p398
      %s401 = sadd.s32 %s400, 1
      %p404 = scmp.eq.s32.totalorder %s30, 1
      %p405 = scmp.ne.s32.totalorder %s400, %s402
      %p406 = scmp.eq.s32.totalorder %s30, 0
      %p407 = por %p405, %p406
      %p408 = scmp.ne.s32.totalorder %s400, %s402
      %p409 = scmp.eq.s32.totalorder %s35, 1
      %p410 = por %p408, %p409
      %p411 = scmp.ne.s32.totalorder %s402, %s403
      %p412 = scmp.eq.s32.totalorder %s35, 0
      %p413 = por %p411, %p412
      %p414 = scmp.ne.s32.totalorder %s402, %s403
      %p415 = scmp.eq.s32.totalorder %s36, 1
      %p416 = por %p414, %p415
      %p418 = scmp.ne.s32.totalorder %s403, %s417
      %p419 = scmp.eq.s32.totalorder %s36, 0
      %p420 = por %p418, %p419
      %s421 = ssub.s32 %s30, %s37
      %p422 = scmp.eq.s32.totalorder %s421, 0
      %s424 = sadd.s32 %s423, 1
      %s425 = scalar_select %p422, %s423, %s424
      %p428 = pneg %p422
      %p429 = scmp.eq.s32.totalorder %s30, 1
      %p430 = por %p428, %p429
      %p431 = scmp.ne.s32.totalorder %s423, %s426
      %p432 = scmp.eq.s32.totalorder %s30, 0
      %p433 = por %p431, %p432
      %p434 = scmp.ne.s32.totalorder %s423, %s426
      %p435 = scmp.eq.s32.totalorder %s35, 1
      %p436 = por %p434, %p435
      %p437 = scmp.ne.s32.totalorder %s426, %s427
      %p438 = scmp.eq.s32.totalorder %s35, 0
      %p439 = por %p437, %p438
      %p440 = scmp.ne.s32.totalorder %s426, %s427
      %p441 = scmp.eq.s32.totalorder %s36, 1
      %p442 = por %p440, %p441
      %p444 = scmp.ne.s32.totalorder %s427, %s443
      %p445 = scmp.eq.s32.totalorder %s36, 0
      %p446 = por %p444, %p445
      %p447 = scmp.le.s32.totalorder 1, %s30
      %p448 = scmp.lt.s32.totalorder %s30, 3
      %p449 = pnand %p447, %p448
      %p450 = pneg %p449
      // Predicated region
      $region9: #{opta_forward.1} parent=5 // pred_check
        _
      $region10: #{opta_forward.1} parent=5 // pred_check_branch
        %452 = sbr.rel (%p449) target = $region12
      $region11: #{opta_forward.1} parent=5 // pred_region
        %s453 = ssub.s32 %s30, 1
        // Predicated region
        $region13: #{opta_forward.1} parent=11 // pred_check
          %p454 = pneg %p77
        $region14: #{opta_forward.1} parent=11 // pred_check_branch
          %456 = sbr.rel (%p454) target = $region16
        $region15: #{opta_forward.1} parent=11 // pred_region
          _
        $region16: #{opta_forward.1} parent=11 // pred_fallthru
          _
        // Predicated region
        $region17: #{opta_forward.1} parent=11 // pred_check
          %p457 = pneg %p98
        $region18: #{opta_forward.1} parent=11 // pred_check_branch
          %459 = sbr.rel (%p457) target = $region20
        $region19: #{opta_forward.1} parent=11 // pred_region
          %461 = vsyncadd [#allocation3], 0
          %s462 = sshll.u32 %s2, 4
          %s463 = int_to_ptr.hbm [resolvable:$true] %s462
          %s464 = sshll.u32 [#allocation2], 4
          %s465 = int_to_ptr.vmem [resolvable:$true] %s464
          %470 = dma.hbm_to_vmem [thread:$0]  %s463, 1024, %s465, [#allocation3], 64, 64, 4
        $region20: #{opta_forward.1} parent=11 // pred_fallthru
          _
        // Predicated region
        $region21: #{opta_forward.1} parent=11 // pred_check
          %p471 = pneg %p119
        $region22: #{opta_forward.1} parent=11 // pred_check_branch
          %473 = sbr.rel (%p471) target = $region24
        $region23: #{opta_forward.1} parent=11 // pred_region
          _
        $region24: #{opta_forward.1} parent=11 // pred_fallthru
          _
        // Predicated region
        $region25: #{opta_forward.1} parent=11 // pred_check
          %p474 = pneg %p140
        $region26: #{opta_forward.1} parent=11 // pred_check_branch
          %476 = sbr.rel (%p474) target = $region28
        $region27: #{opta_forward.1} parent=11 // pred_region
          %478 = vsyncadd [#allocation5], 0
          %s479 = sshll.u32 %s4, 4
          %s480 = int_to_ptr.hbm [resolvable:$true] %s479
          %s481 = sshll.u32 [#allocation4], 4
          %s482 = int_to_ptr.vmem [resolvable:$true] %s481
          %487 = dma.hbm_to_vmem [thread:$0]  %s480, 12288, %s482, [#allocation5], 192, 192, 12
        $region28: #{opta_forward.1} parent=11 // pred_fallthru
          _
        // Predicated region
        $region29: #{opta_forward.1} parent=11 // pred_check
          %p488 = pneg %p161
        $region30: #{opta_forward.1} parent=11 // pred_check_branch
          %490 = sbr.rel (%p488) target = $region32
        $region31: #{opta_forward.1} parent=11 // pred_region
          _
        $region32: #{opta_forward.1} parent=11 // pred_fallthru
          _
        // Predicated region
        $region33: #{opta_forward.1} parent=11 // pred_check
          %p491 = pneg %p182
        $region34: #{opta_forward.1} parent=11 // pred_check_branch
          %493 = sbr.rel (%p491) target = $region36
        $region35: #{opta_forward.1} parent=11 // pred_region
          %495 = vsyncadd [#allocation5], 0
          %s496 = sshll.u32 %s6, 4
          %s497 = int_to_ptr.hbm [resolvable:$true] %s496
          %s498 = sshll.u32 [#allocation6], 4
          %s499 = int_to_ptr.vmem [resolvable:$true] %s498
          %504 = dma.hbm_to_vmem [thread:$0]  %s497, 4096, %s499, [#allocation5], 64, 64, 4
        $region36: #{opta_forward.1} parent=11 // pred_fallthru
          _
        // Predicated region
        $region37: #{opta_forward.1} parent=11 // pred_check
          %p505 = pneg %p203
        $region38: #{opta_forward.1} parent=11 // pred_check_branch
          %507 = sbr.rel (%p505) target = $region40
        $region39: #{opta_forward.1} parent=11 // pred_region
          _
        $region40: #{opta_forward.1} parent=11 // pred_fallthru
          _
        // Predicated region
        $region41: #{opta_forward.1} parent=11 // pred_check
          %p508 = pneg %p224
        $region42: #{opta_forward.1} parent=11 // pred_check_branch
          %510 = sbr.rel (%p508) target = $region44
        $region43: #{opta_forward.1} parent=11 // pred_region
          _
        $region44: #{opta_forward.1} parent=11 // pred_fallthru
          _
        // Predicated region
        $region45: #{opta_forward.1} parent=11 // pred_check
          %p511 = pneg %p245
        $region46: #{opta_forward.1} parent=11 // pred_check_branch
          %513 = sbr.rel (%p511) target = $region48
        $region47: #{opta_forward.1} parent=11 // pred_region
          _
        $region48: #{opta_forward.1} parent=11 // pred_fallthru
          _
        // Predicated region
        $region49: #{opta_forward.1} parent=11 // pred_check
          %p514 = pneg %p266
        $region50: #{opta_forward.1} parent=11 // pred_check_branch
          %516 = sbr.rel (%p514) target = $region52
        $region51: #{opta_forward.1} parent=11 // pred_region
          %518 = vsyncadd [#allocation8], 0
          %s519 = sshll.u32 %s10, 4
          %s520 = int_to_ptr.hbm [resolvable:$true] %s519
          %s521 = sshll.u32 [#allocation7], 4
          %s522 = int_to_ptr.vmem [resolvable:$true] %s521
          %527 = dma.hbm_to_vmem [thread:$0]  %s520, 16384, %s522, [#allocation8], 256, 256, 16
        $region52: #{opta_forward.1} parent=11 // pred_fallthru
          _
        // Predicated region
        $region53: #{opta_forward.1} parent=11 // pred_check
          %p528 = pneg %p287
        $region54: #{opta_forward.1} parent=11 // pred_check_branch
          %530 = sbr.rel (%p528) target = $region56
        $region55: #{opta_forward.1} parent=11 // pred_region
          _
        $region56: #{opta_forward.1} parent=11 // pred_fallthru
          _
        // Predicated region
        $region57: #{opta_forward.1} parent=11 // pred_check
          %p531 = pneg %p308
        $region58: #{opta_forward.1} parent=11 // pred_check_branch
          %533 = sbr.rel (%p531) target = $region60
        $region59: #{opta_forward.1} parent=11 // pred_region
          %535 = vsyncadd [#allocation8], 0
          %s536 = sshll.u32 %s12, 4
          %s537 = int_to_ptr.hbm [resolvable:$true] %s536
          %s538 = sshll.u32 [#allocation9], 4
          %s539 = int_to_ptr.vmem [resolvable:$true] %s538
          %544 = dma.hbm_to_vmem [thread:$0]  %s537, 16384, %s539, [#allocation8], 64, 64, 4
        $region60: #{opta_forward.1} parent=11 // pred_fallthru
          _
        // Predicated region
        $region61: #{opta_forward.1} parent=11 // pred_check
          %p545 = pneg %p329
        $region62: #{opta_forward.1} parent=11 // pred_check_branch
          %547 = sbr.rel (%p545) target = $region64
        $region63: #{opta_forward.1} parent=11 // pred_region
          %549 = vsyncadd [#allocation11], 0
          %s550 = sshll.u32 %s13, 4
          %s551 = int_to_ptr.hbm [resolvable:$true] %s550
          %s552 = sshll.u32 [#allocation10], 4
          %s553 = int_to_ptr.vmem [resolvable:$true] %s552
          %558 = dma.hbm_to_vmem [thread:$0]  %s551, 64, %s553, [#allocation11], 16, 16, 1
        $region64: #{opta_forward.1} parent=11 // pred_fallthru
          _
        // Predicated region
        $region65: #{opta_forward.1} parent=11 // pred_check
          %p559 = pneg %p350
        $region66: #{opta_forward.1} parent=11 // pred_check_branch
          %561 = sbr.rel (%p559) target = $region68
        $region67: #{opta_forward.1} parent=11 // pred_region
          %563 = vsyncadd [#allocation11], 0
          %s564 = sshll.u32 %s14, 4
          %s565 = int_to_ptr.hbm [resolvable:$true] %s564
          %s566 = sshll.u32 [#allocation12], 4
          %s567 = int_to_ptr.vmem [resolvable:$true] %s566
          %572 = dma.hbm_to_vmem [thread:$0]  %s565, 64, %s567, [#allocation11], 16, 16, 1
        $region68: #{opta_forward.1} parent=11 // pred_fallthru
          _
        // Predicated region
        $region69: #{opta_forward.1} parent=11 // pred_check
          %p573 = pneg %p371
        $region70: #{opta_forward.1} parent=11 // pred_check_branch
          %575 = sbr.rel (%p573) target = $region72
        $region71: #{opta_forward.1} parent=11 // pred_region
          %577 = vsyncadd [#allocation14], 0
          %s578 = sshll.u32 %s15, 4
          %s579 = int_to_ptr.hbm [resolvable:$true] %s578
          %s580 = sshll.u32 [#allocation13], 4
          %s581 = int_to_ptr.vmem [resolvable:$true] %s580
          %586 = dma.hbm_to_vmem [thread:$0]  %s579, 64, %s581, [#allocation14], 16, 16, 1
        $region72: #{opta_forward.1} parent=11 // pred_fallthru
          _
        // Predicated region
        $region73: #{opta_forward.1} parent=11 // pred_check
          %p587 = pneg %p392
        $region74: #{opta_forward.1} parent=11 // pred_check_branch
          %589 = sbr.rel (%p587) target = $region76
        $region75: #{opta_forward.1} parent=11 // pred_region
          %591 = vsyncadd [#allocation14], 0
          %s592 = sshll.u32 %s16, 4
          %s593 = int_to_ptr.hbm [resolvable:$true] %s592
          %s594 = sshll.u32 [#allocation15], 4
          %s595 = int_to_ptr.vmem [resolvable:$true] %s594
          %600 = dma.hbm_to_vmem [thread:$0]  %s593, 1024, %s595, [#allocation14], 64, 64, 4
        $region76: #{opta_forward.1} parent=11 // pred_fallthru
          _
        // Predicated region
        $region77: #{opta_forward.1} parent=11 // pred_check
          %p601 = pneg %p413
        $region78: #{opta_forward.1} parent=11 // pred_check_branch
          %603 = sbr.rel (%p601) target = $region80
        $region79: #{opta_forward.1} parent=11 // pred_region
          %605 = vsyncadd [#allocation17], 0
          %s607 = sshll.u32 %s17, 4
          %s608 = int_to_ptr.hbm [resolvable:$true] %s607
          %s609 = sshll.u32 [#allocation16], 4
          %s610 = int_to_ptr.vmem [resolvable:$true] %s609
          %612 = dma.hbm_to_vmem [thread:$0]  %s608, 16, %s610, [#allocation17]
        $region80: #{opta_forward.1} parent=11 // pred_fallthru
          _
      $region12: #{opta_forward.1} parent=5 // pred_fallthru
        _
      %p613 = scmp.lt.s32.totalorder %s30, 2
      // Predicated region
      $region81: #{opta_forward.1} parent=5 // pred_check
        %p614 = pneg %p613
      $region82: #{opta_forward.1} parent=5 // pred_check_branch
        %616 = sbr.rel (%p614) target = $region84
      $region83: #{opta_forward.1} parent=5 // pred_region
        // Predicated region
        $region85: #{opta_forward.1} parent=83 // pred_check
          %p617 = pneg %p50
        $region86: #{opta_forward.1} parent=83 // pred_check_branch
          %619 = sbr.rel (%p617) target = $region88
        $region87: #{opta_forward.1} parent=83 // pred_region
          %p620 = scmp.lt.s32.totalorder %s30, 1
          %s621 = scalar_select %p620, %s30, 1
          %s622 = smul.addr %s621, 8
          %s623 = scalar_lea.vmem %s0, %s622
        $region88: #{opta_forward.1} parent=83 // pred_fallthru
          _
      $region84: #{opta_forward.1} parent=5 // pred_fallthru
        _
      %p624 = scmp.le.s32.totalorder 1, %s30
      %p625 = scmp.lt.s32.totalorder %s30, 3
      %p626 = pnand %p624, %p625
      %p627 = pneg %p626
      // Predicated region
      $region89: #{opta_forward.1} parent=5 // pred_check
        _
      $region90: #{opta_forward.1} parent=5 // pred_check_branch
        %629 = sbr.rel (%p626) target = $region92
      $region91: #{opta_forward.1} parent=5 // pred_region
        %s630 = ssub.s32 %s30, 1
        // Predicated region
        $region93: #{opta_forward.1} parent=91 // pred_check
          %p631 = pneg %p98
        $region94: #{opta_forward.1} parent=91 // pred_check_branch
          %633 = sbr.rel (%p631) target = $region96
        $region95: #{opta_forward.1} parent=91 // pred_region
          %635 = dma.done [#allocation3], 1024
        $region96: #{opta_forward.1} parent=91 // pred_fallthru
          _
        // Predicated region
        $region97: #{opta_forward.1} parent=91 // pred_check
          %p636 = pneg %p140
        $region98: #{opta_forward.1} parent=91 // pred_check_branch
          %638 = sbr.rel (%p636) target = $region100
        $region99: #{opta_forward.1} parent=91 // pred_region
          %640 = dma.done [#allocation5], 12288
        $region100: #{opta_forward.1} parent=91 // pred_fallthru
          _
        // Predicated region
        $region101: #{opta_forward.1} parent=91 // pred_check
          %p641 = pneg %p182
        $region102: #{opta_forward.1} parent=91 // pred_check_branch
          %643 = sbr.rel (%p641) target = $region104
        $region103: #{opta_forward.1} parent=91 // pred_region
          %645 = dma.done [#allocation5], 4096
        $region104: #{opta_forward.1} parent=91 // pred_fallthru
          _
        // Predicated region
        $region105: #{opta_forward.1} parent=91 // pred_check
          %p646 = pneg %p266
        $region106: #{opta_forward.1} parent=91 // pred_check_branch
          %648 = sbr.rel (%p646) target = $region108
        $region107: #{opta_forward.1} parent=91 // pred_region
          %650 = dma.done [#allocation8], 16384
        $region108: #{opta_forward.1} parent=91 // pred_fallthru
          _
        // Predicated region
        $region109: #{opta_forward.1} parent=91 // pred_check
          %p651 = pneg %p308
        $region110: #{opta_forward.1} parent=91 // pred_check_branch
          %653 = sbr.rel (%p651) target = $region112
        $region111: #{opta_forward.1} parent=91 // pred_region
          %655 = dma.done [#allocation8], 16384
        $region112: #{opta_forward.1} parent=91 // pred_fallthru
          _
        // Predicated region
        $region113: #{opta_forward.1} parent=91 // pred_check
          %p656 = pneg %p329
        $region114: #{opta_forward.1} parent=91 // pred_check_branch
          %658 = sbr.rel (%p656) target = $region116
        $region115: #{opta_forward.1} parent=91 // pred_region
          %660 = dma.done [#allocation11], 64
        $region116: #{opta_forward.1} parent=91 // pred_fallthru
          _
        // Predicated region
        $region117: #{opta_forward.1} parent=91 // pred_check
          %p661 = pneg %p350
        $region118: #{opta_forward.1} parent=91 // pred_check_branch
          %663 = sbr.rel (%p661) target = $region120
        $region119: #{opta_forward.1} parent=91 // pred_region
          %665 = dma.done [#allocation11], 64
        $region120: #{opta_forward.1} parent=91 // pred_fallthru
          _
        // Predicated region
        $region121: #{opta_forward.1} parent=91 // pred_check
          %p666 = pneg %p371
        $region122: #{opta_forward.1} parent=91 // pred_check_branch
          %668 = sbr.rel (%p666) target = $region124
        $region123: #{opta_forward.1} parent=91 // pred_region
          %670 = dma.done [#allocation14], 64
        $region124: #{opta_forward.1} parent=91 // pred_fallthru
          _
        // Predicated region
        $region125: #{opta_forward.1} parent=91 // pred_check
          %p671 = pneg %p392
        $region126: #{opta_forward.1} parent=91 // pred_check_branch
          %673 = sbr.rel (%p671) target = $region128
        $region127: #{opta_forward.1} parent=91 // pred_region
          %675 = dma.done [#allocation14], 1024
        $region128: #{opta_forward.1} parent=91 // pred_fallthru
          _
        // Predicated region
        $region129: #{opta_forward.1} parent=91 // pred_check
          %p676 = pneg %p413
        $region130: #{opta_forward.1} parent=91 // pred_check_branch
          %678 = sbr.rel (%p676) target = $region132
        $region131: #{opta_forward.1} parent=91 // pred_region
          %680 = dma.done [#allocation17], 16
        $region132: #{opta_forward.1} parent=91 // pred_fallthru
          _
        %p681 = scmp.lt.s32.totalorder %s35, 1
        %s682 = scalar_select %p681, %s35, 1
        %s683 = smul.addr %s682, 8
        %s684 = scalar_lea.vmem %s0, %s683
        %p685 = pneg %p56
        %p686 = pneg %p53
        %p687 = pneg %p77
        %p688 = pneg %p74
        %p689 = pneg %p98
        %p690 = pneg %p95
        %p691 = pneg %p119
        %p692 = pneg %p116
        %p693 = pneg %p140
        %p694 = pneg %p137
        %p695 = pneg %p161
        %p696 = pneg %p158
        %p697 = pneg %p182
        %p698 = pneg %p179
        %p699 = pneg %p203
        %p700 = pneg %p200
        %p701 = pneg %p224
        %p702 = pneg %p221
        %p703 = pneg %p245
        %p704 = pneg %p242
        %p705 = pneg %p266
        %p706 = pneg %p263
        %p707 = pneg %p287
        %p708 = pneg %p284
        %p709 = pneg %p308
        %p710 = pneg %p305
        %p711 = pneg %p329
        %p712 = pneg %p326
        %p713 = pneg %p350
        %p714 = pneg %p347
        %p715 = pneg %p371
        %p716 = pneg %p368
        %p717 = pneg %p392
        %p718 = pneg %p389
        %p719 = pneg %p413
        %p720 = pneg %p410
        %p721 = pneg %p439
        %p722 = pneg %p436
        %p723 = scmp.lt.s32.totalorder %s35, 1
        %s724 = scalar_select %p723, %s35, 1
        %s725 = smul.addr %s724, 8
        %s726 = scalar_lea.vmem %s18, %s725
        %p727 = scmp.lt.s32.totalorder %s35, 1
        %s728 = scalar_select %p727, %s35, 1
        %s729 = smul.addr %s728, 8
        %s730 = scalar_lea.vmem %s0, %s729
        %p731 = scmp.lt.s32.totalorder %s35, 1
        %s732 = scalar_select %p731, %s35, 1
        %s733 = smul.addr %s732, 8
        %s734 = scalar_lea.vmem %s18, %s733
        %v736 = vld [vmem:[%s730] sm:$0xff]
        %v737 = vpack.c.bf16 %v736, %v736
        %v738 = vld [vmem:[#allocation2] sm:$0xf]
        %v739 = vld [vmem:[#allocation2 + $0x4] sm:$0xf]
        %v740 = vld [vmem:[#allocation2 + $0x8] sm:$0xf]
        %v741 = vld [vmem:[#allocation2 + $0xc] sm:$0xf]
        %v742 = vld [vmem:[#allocation2 + $0x10] sm:$0xf]
        %v743 = vld [vmem:[#allocation2 + $0x14] sm:$0xf]
        %v744 = vld [vmem:[#allocation2 + $0x18] sm:$0xf]
        %v745 = vld [vmem:[#allocation2 + $0x1c] sm:$0xf]
        %v746 = vld [vmem:[#allocation2 + $0x20] sm:$0xf]
        %v747 = vld [vmem:[#allocation2 + $0x24] sm:$0xf]
        %v748 = vld [vmem:[#allocation2 + $0x28] sm:$0xf]
        %v749 = vld [vmem:[#allocation2 + $0x2c] sm:$0xf]
        %v750 = vld [vmem:[#allocation2 + $0x30] sm:$0xf]
        %v751 = vld [vmem:[#allocation2 + $0x34] sm:$0xf]
        %v752 = vld [vmem:[#allocation2 + $0x38] sm:$0xf]
        %v753 = vld [vmem:[#allocation2 + $0x3c] sm:$0xf]
        %v754 = vld [vmem:[%s3] sm:$0x1]
        %v756 = vperm.slane %v754, 0
        %v774 = vunpack.c.l.b16 %v738
        %v775 = vunpack.c.l.b16 %v739
        %v776 = vunpack.c.l.b16 %v740
        %v777 = vunpack.c.l.b16 %v741
        %v778 = vunpack.c.l.b16 %v742
        %v779 = vunpack.c.l.b16 %v743
        %v780 = vunpack.c.l.b16 %v744
        %v781 = vunpack.c.l.b16 %v745
        %v782 = vunpack.c.l.b16 %v746
        %v783 = vunpack.c.l.b16 %v747
        %v784 = vunpack.c.l.b16 %v748
        %v785 = vunpack.c.l.b16 %v749
        %v786 = vunpack.c.l.b16 %v750
        %v787 = vunpack.c.l.b16 %v751
        %v788 = vunpack.c.l.b16 %v752
        %v789 = vunpack.c.l.b16 %v753
        %v790 = vpack.c.b16 %v775, %v774
        %v791 = vpack.c.b16 %v777, %v776
        %v792 = vpack.c.b16 %v779, %v778
        %v793 = vpack.c.b16 %v781, %v780
        %v794 = vpack.c.b16 %v783, %v782
        %v795 = vpack.c.b16 %v785, %v784
        %v796 = vpack.c.b16 %v787, %v786
        %v797 = vpack.c.b16 %v789, %v788
        %806 = vmatpush.bf16.msra.mxu0 %v797
        %807 = vmatpush.bf16.msra.mxu0 %v796
        %808 = vmatpush.bf16.msra.mxu0 %v795
        %809 = vmatpush.bf16.msra.mxu0 %v794
        %810 = vmatpush.bf16.msra.mxu0 %v793
        %811 = vmatpush.bf16.msra.mxu0 %v792
        %812 = vmatpush.bf16.msra.mxu0 %v791
        %813 = vmatpush.bf16.msra.mxu0 %v790
        %814 = vmatmul.bf16.gmra.mxu0 %v737
        %v815 = vpop.f32.mrf.mxu0
        %v816 = vadd.f32 %v756, %v815
        %v817 = vpop.f32.mrf.mxu0
        %818 = vdwg.mxu0
        %v819 = vmax.f32 %v816, 0.0
        %v820 = vld [vmem:[%s1] sm:$0xff]
        %v821 = vadd.f32 %v819, %v820
        %v822 = vpack.c.bf16 %v821, %v821
        %v823 = vld [vmem:[#allocation4] sm:$0xff]
        %v824 = vld [vmem:[#allocation4 + $0x8] sm:$0xf]
        %v825 = vld [vmem:[#allocation4 + $0xc] sm:$0xff]
        %v826 = vld [vmem:[#allocation4 + $0x14] sm:$0xf]
        %v827 = vld [vmem:[#allocation4 + $0x18] sm:$0xff]
        %v828 = vld [vmem:[#allocation4 + $0x20] sm:$0xf]
        %v829 = vld [vmem:[#allocation4 + $0x24] sm:$0xff]
        %v830 = vld [vmem:[#allocation4 + $0x2c] sm:$0xf]
        %v831 = vld [vmem:[#allocation4 + $0x30] sm:$0xff]
        %v832 = vld [vmem:[#allocation4 + $0x38] sm:$0xf]
        %v833 = vld [vmem:[#allocation4 + $0x3c] sm:$0xff]
        %v834 = vld [vmem:[#allocation4 + $0x44] sm:$0xf]
        %v835 = vld [vmem:[#allocation4 + $0x48] sm:$0xff]
        %v836 = vld [vmem:[#allocation4 + $0x50] sm:$0xf]
        %v837 = vld [vmem:[#allocation4 + $0x54] sm:$0xff]
        %v838 = vld [vmem:[#allocation4 + $0x5c] sm:$0xf]
        %v839 = vld [vmem:[#allocation4 + $0x60] sm:$0xff]
        %v840 = vld [vmem:[#allocation4 + $0x68] sm:$0xf]
        %v841 = vld [vmem:[#allocation4 + $0x6c] sm:$0xff]
        %v842 = vld [vmem:[#allocation4 + $0x74] sm:$0xf]
        %v843 = vld [vmem:[#allocation4 + $0x78] sm:$0xff]
        %v844 = vld [vmem:[#allocation4 + $0x80] sm:$0xf]
        %v845 = vld [vmem:[#allocation4 + $0x84] sm:$0xff]
        %v846 = vld [vmem:[#allocation4 + $0x8c] sm:$0xf]
        %v847 = vld [vmem:[#allocation4 + $0x90] sm:$0xff]
        %v848 = vld [vmem:[#allocation4 + $0x98] sm:$0xf]
        %v849 = vld [vmem:[#allocation4 + $0x9c] sm:$0xff]
        %v850 = vld [vmem:[#allocation4 + $0xa4] sm:$0xf]
        %v851 = vld [vmem:[#allocation4 + $0xa8] sm:$0xff]
        %v852 = vld [vmem:[#allocation4 + $0xb0] sm:$0xf]
        %v853 = vld [vmem:[#allocation4 + $0xb4] sm:$0xff]
        %v854 = vld [vmem:[#allocation4 + $0xbc] sm:$0xf]
        %v855 = vld [vmem:[%s5] sm:$0x7]
        %v857 = vperm.slane %v855, 0
        %v858 = vperm.slane %v855, 1
        %v859 = vperm.slane %v855, 2
        %v895 = vunpack.c.l.b16 %v823
        %v896 = vunpack.c.h.b16 %v823
        %v897 = vunpack.c.l.b16 %v824
        %v898 = vunpack.c.l.b16 %v825
        %v899 = vunpack.c.h.b16 %v825
        %v900 = vunpack.c.l.b16 %v826
        %v901 = vunpack.c.l.b16 %v827
        %v902 = vunpack.c.h.b16 %v827
        %v903 = vunpack.c.l.b16 %v828
        %v904 = vunpack.c.l.b16 %v829
        %v905 = vunpack.c.h.b16 %v829
        %v906 = vunpack.c.l.b16 %v830
        %v907 = vunpack.c.l.b16 %v831
        %v908 = vunpack.c.h.b16 %v831
        %v909 = vunpack.c.l.b16 %v832
        %v910 = vunpack.c.l.b16 %v833
        %v911 = vunpack.c.h.b16 %v833
        %v912 = vunpack.c.l.b16 %v834
        %v913 = vunpack.c.l.b16 %v835
        %v914 = vunpack.c.h.b16 %v835
        %v915 = vunpack.c.l.b16 %v836
        %v916 = vunpack.c.l.b16 %v837
        %v917 = vunpack.c.h.b16 %v837
        %v918 = vunpack.c.l.b16 %v838
        %v919 = vunpack.c.l.b16 %v839
        %v920 = vunpack.c.h.b16 %v839
        %v921 = vunpack.c.l.b16 %v840
        %v922 = vunpack.c.l.b16 %v841
        %v923 = vunpack.c.h.b16 %v841
        %v924 = vunpack.c.l.b16 %v842
        %v925 = vunpack.c.l.b16 %v843
        %v926 = vunpack.c.h.b16 %v843
        %v927 = vunpack.c.l.b16 %v844
        %v928 = vunpack.c.l.b16 %v845
        %v929 = vunpack.c.h.b16 %v845
        %v930 = vunpack.c.l.b16 %v846
        %v931 = vunpack.c.l.b16 %v847
        %v932 = vunpack.c.h.b16 %v847
        %v933 = vunpack.c.l.b16 %v848
        %v934 = vunpack.c.l.b16 %v849
        %v935 = vunpack.c.h.b16 %v849
        %v936 = vunpack.c.l.b16 %v850
        %v937 = vunpack.c.l.b16 %v851
        %v938 = vunpack.c.h.b16 %v851
        %v939 = vunpack.c.l.b16 %v852
        %v940 = vunpack.c.l.b16 %v853
        %v941 = vunpack.c.h.b16 %v853
        %v942 = vunpack.c.l.b16 %v854
        %v943 = vpack.c.b16 %v898, %v895
        %v944 = vpack.c.b16 %v899, %v896
        %v945 = vpack.c.b16 %v900, %v897
        %v946 = vpack.c.b16 %v904, %v901
        %v947 = vpack.c.b16 %v905, %v902
        %v948 = vpack.c.b16 %v906, %v903
        %v949 = vpack.c.b16 %v910, %v907
        %v950 = vpack.c.b16 %v911, %v908
        %v951 = vpack.c.b16 %v912, %v909
        %v952 = vpack.c.b16 %v916, %v913
        %v953 = vpack.c.b16 %v917, %v914
        %v954 = vpack.c.b16 %v918, %v915
        %v955 = vpack.c.b16 %v922, %v919
        %v956 = vpack.c.b16 %v923, %v920
        %v957 = vpack.c.b16 %v924, %v921
        %v958 = vpack.c.b16 %v928, %v925
        %v959 = vpack.c.b16 %v929, %v926
        %v960 = vpack.c.b16 %v930, %v927
        %v961 = vpack.c.b16 %v934, %v931
        %v962 = vpack.c.b16 %v935, %v932
        %v963 = vpack.c.b16 %v936, %v933
        %v964 = vpack.c.b16 %v940, %v937
        %v965 = vpack.c.b16 %v941, %v938
        %v966 = vpack.c.b16 %v942, %v939
        %991 = vmatpush.bf16.msra.mxu0 %v964
        %992 = vmatpush.bf16.msra.mxu0 %v961
        %993 = vmatpush.bf16.msra.mxu0 %v958
        %994 = vmatpush.bf16.msra.mxu0 %v955
        %995 = vmatpush.bf16.msra.mxu0 %v952
        %996 = vmatpush.bf16.msra.mxu0 %v949
        %997 = vmatpush.bf16.msra.mxu0 %v946
        %998 = vmatpush.bf16.msra.mxu0 %v943
        %999 = vmatmul.bf16.gmra.mxu0 %v822
        %v1000 = vpop.f32.mrf.mxu0
        %v1001 = vadd.f32 %v857, %v1000
        %v1002 = vpop.f32.mrf.mxu0
        %1003 = vdwg.mxu0
        %1004 = vmatpush.bf16.msra.mxu0 %v965
        %1005 = vmatpush.bf16.msra.mxu0 %v962
        %1006 = vmatpush.bf16.msra.mxu0 %v959
        %1007 = vmatpush.bf16.msra.mxu0 %v956
        %1008 = vmatpush.bf16.msra.mxu0 %v953
        %1009 = vmatpush.bf16.msra.mxu0 %v950
        %1010 = vmatpush.bf16.msra.mxu0 %v947
        %1011 = vmatpush.bf16.msra.mxu0 %v944
        %1012 = vmatmul.bf16.gmra.mxu0 %v822
        %v1013 = vpop.f32.mrf.mxu0
        %v1014 = vadd.f32 %v858, %v1013
        %v1015 = vpop.f32.mrf.mxu0
        %1016 = vdwg.mxu0
        %1017 = vmatpush.bf16.msra.mxu0 %v966
        %1018 = vmatpush.bf16.msra.mxu0 %v963
        %1019 = vmatpush.bf16.msra.mxu0 %v960
        %1020 = vmatpush.bf16.msra.mxu0 %v957
        %1021 = vmatpush.bf16.msra.mxu0 %v954
        %1022 = vmatpush.bf16.msra.mxu0 %v951
        %1023 = vmatpush.bf16.msra.mxu0 %v948
        %1024 = vmatpush.bf16.msra.mxu0 %v945
        %1025 = vmatmul.bf16.gmra.mxu0 %v822
        %v1026 = vpop.f32.mrf.mxu0
        %v1027 = vadd.f32 %v859, %v1026
        %v1028 = vpop.f32.mrf.mxu0
        %1029 = vdwg.mxu0
        %v1030 = vpack.c.bf16 %v1001, %v1001
        %v1031 = vpack.c.bf16 %v1014, %v1014
        %v1032 = vpack.c.bf16 %v1027, %v1027
        %vm1033 = vcmask 261120
        %v1035 = vsel %vm1033, %v1030, 0
        %v1038 = vsel %vm1033, %v1031, 0
        %1040 = vmatpush.bf16.xpose.msra.mxu0 0
        %1041 = vmatpush.bf16.xpose.msra.mxu0 0
        %1042 = vmatpush.bf16.xpose.msra.mxu0 0
        %1043 = vmatpush.bf16.xpose.msra.mxu0 0
        %1044 = vmatpush.bf16.xpose.msra.mxu0 0
        %1045 = vmatpush.bf16.xpose.msra.mxu0 0
        %1046 = vmatpush.bf16.xpose.msra.mxu0 0
        %1047 = vmatpush.bf16.xpose.msra.mxu0 %v1038
        %1048 = vmatmul.bf16.gmra.mxu0 %v1035
        %v1049 = vpop.f32.mrf.mxu0
        %v1050 = vadd.f32 0.0, %v1049
        %v1051 = vpop.f32.mrf.mxu0
        %1052 = vdwg.mxu0
        %v1053 = vmul.f32 %v1050, 0.17677669
        %vm1054 = vcmask 64512
        %v1055 = vsel %vm1054, %v1053, -inf
        %1056 = vmax.xlane.f32.xlu0 %v1055
        %v1057 = vpop.xlane.xlu0 %1056
        %v1058 = vsub.f32 %v1053, %v1057
        %v1059 = vmul.f32 %v1058, 1.442695
        %v1060 = vpow.pop %v1059
        %v1061 = vsel %vm1054, %v1060, 0.0
        %1062 = vadd.xlane.f32.xlu0 %v1061
        %v1063 = vpop.xlane.xlu0 %1062
        %v1064 = vrcp.pop %v1063
        %v1065 = vmul.f32 %v1060, %v1064
        %v1066 = vpack.c.bf16 %v1065, %v1065
        %v1068 = vsel %vm1054, %v1066, 0
        %vm1070 = vcmask 1043456
        %v1072 = vsel %vm1070, %v1032, 0
        %1074 = vmatpush.bf16.msra.mxu0 0
        %1075 = vmatpush.bf16.msra.mxu0 0
        %1076 = vmatpush.bf16.msra.mxu0 0
        %1077 = vmatpush.bf16.msra.mxu0 0
        %1078 = vmatpush.bf16.msra.mxu0 0
        %1079 = vmatpush.bf16.msra.mxu0 0
        %1080 = vmatpush.bf16.msra.mxu0 0
        %1081 = vmatpush.bf16.msra.mxu0 %v1072
        %1082 = vmatmul.bf16.gmra.mxu0 %v1068
        %v1083 = vpop.f32.mrf.mxu0
        %v1084 = vadd.f32 0.0, %v1083
        %v1085 = vpop.f32.mrf.mxu0
        %1086 = vdwg.mxu0
        %1088 = vrot.lane.b32.xlu0 %v1030, 96
        %v1089 = vpop.permute.xlu0 %1088
        %1091 = vrot.lane.b32.xlu0 %v1031, 96
        %v1092 = vpop.permute.xlu0 %1091
        %v1094 = vsel %vm1033, %v1089, 0
        %v1097 = vsel %vm1033, %v1092, 0
        %1099 = vmatpush.bf16.xpose.msra.mxu0 0
        %1100 = vmatpush.bf16.xpose.msra.mxu0 0
        %1101 = vmatpush.bf16.xpose.msra.mxu0 0
        %1102 = vmatpush.bf16.xpose.msra.mxu0 0
        %1103 = vmatpush.bf16.xpose.msra.mxu0 0
        %1104 = vmatpush.bf16.xpose.msra.mxu0 0
        %1105 = vmatpush.bf16.xpose.msra.mxu0 0
        %1106 = vmatpush.bf16.xpose.msra.mxu0 %v1097
        %1107 = vmatmul.bf16.gmra.mxu0 %v1094
        %v1108 = vpop.f32.mrf.mxu0
        %v1109 = vadd.f32 0.0, %v1108
        %v1110 = vpop.f32.mrf.mxu0
        %1111 = vdwg.mxu0
        %v1112 = vmul.f32 %v1109, 0.17677669
        %v1113 = vsel %vm1054, %v1112, -inf
        %1114 = vmax.xlane.f32.xlu0 %v1113
        %v1115 = vpop.xlane.xlu0 %1114
        %v1116 = vsub.f32 %v1112, %v1115
        %v1117 = vmul.f32 %v1116, 1.442695
        %v1118 = vpow.pop %v1117
        %v1119 = vsel %vm1054, %v1118, 0.0
        %1120 = vadd.xlane.f32.xlu0 %v1119
        %v1121 = vpop.xlane.xlu0 %1120
        %v1122 = vrcp.pop %v1121
        %v1123 = vmul.f32 %v1118, %v1122
        %v1124 = vpack.c.bf16 %v1123, %v1123
        %1126 = vrot.lane.b32.xlu0 %v1032, 96
        %v1127 = vpop.permute.xlu0 %1126
        %v1129 = vsel %vm1054, %v1124, 0
        %v1132 = vsel %vm1070, %v1127, 0
        %1134 = vmatpush.bf16.msra.mxu0 0
        %1135 = vmatpush.bf16.msra.mxu0 0
        %1136 = vmatpush.bf16.msra.mxu0 0
        %1137 = vmatpush.bf16.msra.mxu0 0
        %1138 = vmatpush.bf16.msra.mxu0 0
        %1139 = vmatpush.bf16.msra.mxu0 0
        %1140 = vmatpush.bf16.msra.mxu0 0
        %1141 = vmatpush.bf16.msra.mxu0 %v1132
        %1142 = vmatmul.bf16.gmra.mxu0 %v1129
        %v1143 = vpop.f32.mrf.mxu0
        %v1144 = vadd.f32 0.0, %v1143
        %v1145 = vpop.f32.mrf.mxu0
        %1146 = vdwg.mxu0
        %1147 = vrot.lane.b32.xlu0 %v1030, 64
        %v1148 = vpop.permute.xlu0 %1147
        %1149 = vrot.lane.b32.xlu0 %v1031, 64
        %v1150 = vpop.permute.xlu0 %1149
        %v1152 = vsel %vm1033, %v1148, 0
        %v1155 = vsel %vm1033, %v1150, 0
        %1157 = vmatpush.bf16.xpose.msra.mxu0 0
        %1158 = vmatpush.bf16.xpose.msra.mxu0 0
        %1159 = vmatpush.bf16.xpose.msra.mxu0 0
        %1160 = vmatpush.bf16.xpose.msra.mxu0 0
        %1161 = vmatpush.bf16.xpose.msra.mxu0 0
        %1162 = vmatpush.bf16.xpose.msra.mxu0 0
        %1163 = vmatpush.bf16.xpose.msra.mxu0 0
        %1164 = vmatpush.bf16.xpose.msra.mxu0 %v1155
        %1165 = vmatmul.bf16.gmra.mxu0 %v1152
        %v1166 = vpop.f32.mrf.mxu0
        %v1167 = vadd.f32 0.0, %v1166
        %v1168 = vpop.f32.mrf.mxu0
        %1169 = vdwg.mxu0
        %v1170 = vmul.f32 %v1167, 0.17677669
        %v1171 = vsel %vm1054, %v1170, -inf
        %1172 = vmax.xlane.f32.xlu0 %v1171
        %v1173 = vpop.xlane.xlu0 %1172
        %v1174 = vsub.f32 %v1170, %v1173
        %v1175 = vmul.f32 %v1174, 1.442695
        %v1176 = vpow.pop %v1175
        %v1177 = vsel %vm1054, %v1176, 0.0
        %1178 = vadd.xlane.f32.xlu0 %v1177
        %v1179 = vpop.xlane.xlu0 %1178
        %v1180 = vrcp.pop %v1179
        %v1181 = vmul.f32 %v1176, %v1180
        %v1182 = vpack.c.bf16 %v1181, %v1181
        %1183 = vrot.lane.b32.xlu0 %v1032, 64
        %v1184 = vpop.permute.xlu0 %1183
        %v1186 = vsel %vm1054, %v1182, 0
        %v1189 = vsel %vm1070, %v1184, 0
        %1191 = vmatpush.bf16.msra.mxu0 0
        %1192 = vmatpush.bf16.msra.mxu0 0
        %1193 = vmatpush.bf16.msra.mxu0 0
        %1194 = vmatpush.bf16.msra.mxu0 0
        %1195 = vmatpush.bf16.msra.mxu0 0
        %1196 = vmatpush.bf16.msra.mxu0 0
        %1197 = vmatpush.bf16.msra.mxu0 0
        %1198 = vmatpush.bf16.msra.mxu0 %v1189
        %1199 = vmatmul.bf16.gmra.mxu0 %v1186
        %v1200 = vpop.f32.mrf.mxu0
        %v1201 = vadd.f32 0.0, %v1200
        %v1202 = vpop.f32.mrf.mxu0
        %1203 = vdwg.mxu0
        %1204 = vrot.lane.b32.xlu0 %v1030, 32
        %v1205 = vpop.permute.xlu0 %1204
        %1206 = vrot.lane.b32.xlu0 %v1031, 32
        %v1207 = vpop.permute.xlu0 %1206
        %v1209 = vsel %vm1033, %v1205, 0
        %v1212 = vsel %vm1033, %v1207, 0
        %1214 = vmatpush.bf16.xpose.msra.mxu0 0
        %1215 = vmatpush.bf16.xpose.msra.mxu0 0
        %1216 = vmatpush.bf16.xpose.msra.mxu0 0
        %1217 = vmatpush.bf16.xpose.msra.mxu0 0
        %1218 = vmatpush.bf16.xpose.msra.mxu0 0
        %1219 = vmatpush.bf16.xpose.msra.mxu0 0
        %1220 = vmatpush.bf16.xpose.msra.mxu0 0
        %1221 = vmatpush.bf16.xpose.msra.mxu0 %v1212
        %1222 = vmatmul.bf16.gmra.mxu0 %v1209
        %v1223 = vpop.f32.mrf.mxu0
        %v1224 = vadd.f32 0.0, %v1223
        %v1225 = vpop.f32.mrf.mxu0
        %1226 = vdwg.mxu0
        %v1227 = vmul.f32 %v1224, 0.17677669
        %v1228 = vsel %vm1054, %v1227, -inf
        %1229 = vmax.xlane.f32.xlu0 %v1228
        %v1230 = vpop.xlane.xlu0 %1229
        %v1231 = vsub.f32 %v1227, %v1230
        %v1232 = vmul.f32 %v1231, 1.442695
        %v1233 = vpow.pop %v1232
        %v1234 = vsel %vm1054, %v1233, 0.0
        %1235 = vadd.xlane.f32.xlu0 %v1234
        %v1236 = vpop.xlane.xlu0 %1235
        %v1237 = vrcp.pop %v1236
        %v1238 = vmul.f32 %v1233, %v1237
        %v1239 = vpack.c.bf16 %v1238, %v1238
        %1240 = vrot.lane.b32.xlu0 %v1032, 32
        %v1241 = vpop.permute.xlu0 %1240
        %v1243 = vsel %vm1054, %v1239, 0
        %v1246 = vsel %vm1070, %v1241, 0
        %1248 = vmatpush.bf16.msra.mxu0 0
        %1249 = vmatpush.bf16.msra.mxu0 0
        %1250 = vmatpush.bf16.msra.mxu0 0
        %1251 = vmatpush.bf16.msra.mxu0 0
        %1252 = vmatpush.bf16.msra.mxu0 0
        %1253 = vmatpush.bf16.msra.mxu0 0
        %1254 = vmatpush.bf16.msra.mxu0 0
        %1255 = vmatpush.bf16.msra.mxu0 %v1246
        %1256 = vmatmul.bf16.gmra.mxu0 %v1243
        %v1257 = vpop.f32.mrf.mxu0
        %v1258 = vadd.f32 0.0, %v1257
        %v1259 = vpop.f32.mrf.mxu0
        %1260 = vdwg.mxu0
        %1262 = vrot.lane.b32.xlu0 %v1144, 32
        %v1263 = vpop.permute.xlu0 %1262
        %1266 = vrot.lane.b32.xlu0 %v1201, 64
        %v1267 = vpop.permute.xlu0 %1266
        %1270 = vrot.lane.b32.xlu0 %v1258, 96
        %v1271 = vpop.permute.xlu0 %1270
        %v1273 = vsel %vm1033, %v1084, %v1263
        %vm1274 = vcmask 523264
        %v1275 = vsel %vm1274, %v1273, %v1267
        %vm1276 = vcmask 785408
        %v1277 = vsel %vm1276, %v1275, %v1271
        %v1278 = vpack.c.bf16 %v1277, %v1277
        %v1279 = vld [vmem:[#allocation6] sm:$0xf]
        %v1280 = vld [vmem:[#allocation6 + $0x4] sm:$0xf]
        %v1281 = vld [vmem:[#allocation6 + $0x8] sm:$0xf]
        %v1282 = vld [vmem:[#allocation6 + $0xc] sm:$0xf]
        %v1283 = vld [vmem:[#allocation6 + $0x10] sm:$0xf]
        %v1284 = vld [vmem:[#allocation6 + $0x14] sm:$0xf]
        %v1285 = vld [vmem:[#allocation6 + $0x18] sm:$0xf]
        %v1286 = vld [vmem:[#allocation6 + $0x1c] sm:$0xf]
        %v1287 = vld [vmem:[#allocation6 + $0x20] sm:$0xf]
        %v1288 = vld [vmem:[#allocation6 + $0x24] sm:$0xf]
        %v1289 = vld [vmem:[#allocation6 + $0x28] sm:$0xf]
        %v1290 = vld [vmem:[#allocation6 + $0x2c] sm:$0xf]
        %v1291 = vld [vmem:[#allocation6 + $0x30] sm:$0xf]
        %v1292 = vld [vmem:[#allocation6 + $0x34] sm:$0xf]
        %v1293 = vld [vmem:[#allocation6 + $0x38] sm:$0xf]
        %v1294 = vld [vmem:[#allocation6 + $0x3c] sm:$0xf]
        %v1295 = vld [vmem:[%s7] sm:$0x1]
        %v1297 = vperm.slane %v1295, 0
        %v1315 = vunpack.c.l.b16 %v1279
        %v1316 = vunpack.c.l.b16 %v1280
        %v1317 = vunpack.c.l.b16 %v1281
        %v1318 = vunpack.c.l.b16 %v1282
        %v1319 = vunpack.c.l.b16 %v1283
        %v1320 = vunpack.c.l.b16 %v1284
        %v1321 = vunpack.c.l.b16 %v1285
        %v1322 = vunpack.c.l.b16 %v1286
        %v1323 = vunpack.c.l.b16 %v1287
        %v1324 = vunpack.c.l.b16 %v1288
        %v1325 = vunpack.c.l.b16 %v1289
        %v1326 = vunpack.c.l.b16 %v1290
        %v1327 = vunpack.c.l.b16 %v1291
        %v1328 = vunpack.c.l.b16 %v1292
        %v1329 = vunpack.c.l.b16 %v1293
        %v1330 = vunpack.c.l.b16 %v1294
        %v1331 = vpack.c.b16 %v1316, %v1315
        %v1332 = vpack.c.b16 %v1318, %v1317
        %v1333 = vpack.c.b16 %v1320, %v1319
        %v1334 = vpack.c.b16 %v1322, %v1321
        %v1335 = vpack.c.b16 %v1324, %v1323
        %v1336 = vpack.c.b16 %v1326, %v1325
        %v1337 = vpack.c.b16 %v1328, %v1327
        %v1338 = vpack.c.b16 %v1330, %v1329
        %1347 = vmatpush.bf16.msra.mxu0 %v1338
        %1348 = vmatpush.bf16.msra.mxu0 %v1337
        %1349 = vmatpush.bf16.msra.mxu0 %v1336
        %1350 = vmatpush.bf16.msra.mxu0 %v1335
        %1351 = vmatpush.bf16.msra.mxu0 %v1334
        %1352 = vmatpush.bf16.msra.mxu0 %v1333
        %1353 = vmatpush.bf16.msra.mxu0 %v1332
        %1354 = vmatpush.bf16.msra.mxu0 %v1331
        %1355 = vmatmul.bf16.gmra.mxu0 %v1278
        %v1356 = vpop.f32.mrf.mxu0
        %v1357 = vadd.f32 %v1297, %v1356
        %v1358 = vpop.f32.mrf.mxu0
        %1359 = vdwg.mxu0
        %v1360 = vadd.f32 %v821, %v1357
        %v1361 = vld [vmem:[%s8] sm:$0x1]
        %v1362 = vld [vmem:[%s9] sm:$0x1]
        %1363 = vadd.xlane.f32.xlu0 %v1360
        %v1364 = vpop.xlane.xlu0 %1363
        %v1365 = vrcp.pop 128.0
        %v1366 = vmul.f32 128.0, %v1365
        %v1367 = vsub.f32 1.0, %v1366
        %v1368 = vmul.f32 %v1365, %v1367
        %v1369 = vadd.f32 %v1365, %v1368
        %vm1370 = vweird.f32 %v1365
        %v1371 = vsel %vm1370, %v1365, %v1369
        %v1372 = vmul.f32 %v1364, %v1371
        %v1373 = vsub.f32 %v1360, %v1372
        %v1374 = vmul.f32 %v1373, %v1373
        %1375 = vadd.xlane.f32.xlu0 %v1374
        %v1376 = vpop.xlane.xlu0 %1375
        %v1377 = vmul.f32 %v1376, %v1371
        %v1378 = vadd.f32 %v1377, 1e-05
        %v1379 = vrsqrt.pop %v1378
        %v1380 = vmul.f32 %v1379, %v1378
        %v1381 = vmul.f32 %v1380, %v1379
        %v1382 = vmul.f32 0.5, %v1381
        %v1383 = vsub.f32 1.5, %v1382
        %v1384 = vmul.f32 %v1379, %v1383
        %vm1385 = vweird.f32 %v1378
        %vm1386 = vweird.f32 %v1379
        %vm1387 = vmor %vm1385, %vm1386
        %v1388 = vsel %vm1387, %v1379, %v1384
        %v1389 = vmul.f32 %v1373, %v1388
        %v1391 = vperm.slane %v1361, 0
        %v1393 = vmul.f32 %v1389, %v1391
        %v1395 = vperm.slane %v1362, 0
        %v1397 = vadd.f32 %v1393, %v1395
        %v1398 = vpack.c.bf16 %v1397, %v1397
        %v1399 = vld [vmem:[#allocation7] sm:$0xff]
        %v1400 = vld [vmem:[#allocation7 + $0x8] sm:$0xff]
        %v1401 = vld [vmem:[#allocation7 + $0x10] sm:$0xff]
        %v1402 = vld [vmem:[#allocation7 + $0x18] sm:$0xff]
        %v1403 = vld [vmem:[#allocation7 + $0x20] sm:$0xff]
        %v1404 = vld [vmem:[#allocation7 + $0x28] sm:$0xff]
        %v1405 = vld [vmem:[#allocation7 + $0x30] sm:$0xff]
        %v1406 = vld [vmem:[#allocation7 + $0x38] sm:$0xff]
        %v1407 = vld [vmem:[#allocation7 + $0x40] sm:$0xff]
        %v1408 = vld [vmem:[#allocation7 + $0x48] sm:$0xff]
        %v1409 = vld [vmem:[#allocation7 + $0x50] sm:$0xff]
        %v1410 = vld [vmem:[#allocation7 + $0x58] sm:$0xff]
        %v1411 = vld [vmem:[#allocation7 + $0x60] sm:$0xff]
        %v1412 = vld [vmem:[#allocation7 + $0x68] sm:$0xff]
        %v1413 = vld [vmem:[#allocation7 + $0x70] sm:$0xff]
        %v1414 = vld [vmem:[#allocation7 + $0x78] sm:$0xff]
        %v1415 = vld [vmem:[#allocation7 + $0x80] sm:$0xff]
        %v1416 = vld [vmem:[#allocation7 + $0x88] sm:$0xff]
        %v1417 = vld [vmem:[#allocation7 + $0x90] sm:$0xff]
        %v1418 = vld [vmem:[#allocation7 + $0x98] sm:$0xff]
        %v1419 = vld [vmem:[#allocation7 + $0xa0] sm:$0xff]
        %v1420 = vld [vmem:[#allocation7 + $0xa8] sm:$0xff]
        %v1421 = vld [vmem:[#allocation7 + $0xb0] sm:$0xff]
        %v1422 = vld [vmem:[#allocation7 + $0xb8] sm:$0xff]
        %v1423 = vld [vmem:[#allocation7 + $0xc0] sm:$0xff]
        %v1424 = vld [vmem:[#allocation7 + $0xc8] sm:$0xff]
        %v1425 = vld [vmem:[#allocation7 + $0xd0] sm:$0xff]
        %v1426 = vld [vmem:[#allocation7 + $0xd8] sm:$0xff]
        %v1427 = vld [vmem:[#allocation7 + $0xe0] sm:$0xff]
        %v1428 = vld [vmem:[#allocation7 + $0xe8] sm:$0xff]
        %v1429 = vld [vmem:[#allocation7 + $0xf0] sm:$0xff]
        %v1430 = vld [vmem:[#allocation7 + $0xf8] sm:$0xff]
        %v1431 = vld [vmem:[%s11] sm:$0xf]
        %v1433 = vperm.slane %v1431, 0
        %v1434 = vperm.slane %v1431, 1
        %v1435 = vperm.slane %v1431, 2
        %v1436 = vperm.slane %v1431, 3
        %v1473 = vunpack.c.l.b16 %v1399
        %v1474 = vunpack.c.h.b16 %v1399
        %v1475 = vunpack.c.l.b16 %v1400
        %v1476 = vunpack.c.h.b16 %v1400
        %v1477 = vunpack.c.l.b16 %v1401
        %v1478 = vunpack.c.h.b16 %v1401
        %v1479 = vunpack.c.l.b16 %v1402
        %v1480 = vunpack.c.h.b16 %v1402
        %v1481 = vunpack.c.l.b16 %v1403
        %v1482 = vunpack.c.h.b16 %v1403
        %v1483 = vunpack.c.l.b16 %v1404
        %v1484 = vunpack.c.h.b16 %v1404
        %v1485 = vunpack.c.l.b16 %v1405
        %v1486 = vunpack.c.h.b16 %v1405
        %v1487 = vunpack.c.l.b16 %v1406
        %v1488 = vunpack.c.h.b16 %v1406
        %v1489 = vunpack.c.l.b16 %v1407
        %v1490 = vunpack.c.h.b16 %v1407
        %v1491 = vunpack.c.l.b16 %v1408
        %v1492 = vunpack.c.h.b16 %v1408
        %v1493 = vunpack.c.l.b16 %v1409
        %v1494 = vunpack.c.h.b16 %v1409
        %v1495 = vunpack.c.l.b16 %v1410
        %v1496 = vunpack.c.h.b16 %v1410
        %v1497 = vunpack.c.l.b16 %v1411
        %v1498 = vunpack.c.h.b16 %v1411
        %v1499 = vunpack.c.l.b16 %v1412
        %v1500 = vunpack.c.h.b16 %v1412
        %v1501 = vunpack.c.l.b16 %v1413
        %v1502 = vunpack.c.h.b16 %v1413
        %v1503 = vunpack.c.l.b16 %v1414
        %v1504 = vunpack.c.h.b16 %v1414
        %v1505 = vunpack.c.l.b16 %v1415
        %v1506 = vunpack.c.h.b16 %v1415
        %v1507 = vunpack.c.l.b16 %v1416
        %v1508 = vunpack.c.h.b16 %v1416
        %v1509 = vunpack.c.l.b16 %v1417
        %v1510 = vunpack.c.h.b16 %v1417
        %v1511 = vunpack.c.l.b16 %v1418
        %v1512 = vunpack.c.h.b16 %v1418
        %v1513 = vunpack.c.l.b16 %v1419
        %v1514 = vunpack.c.h.b16 %v1419
        %v1515 = vunpack.c.l.b16 %v1420
        %v1516 = vunpack.c.h.b16 %v1420
        %v1517 = vunpack.c.l.b16 %v1421
        %v1518 = vunpack.c.h.b16 %v1421
        %v1519 = vunpack.c.l.b16 %v1422
        %v1520 = vunpack.c.h.b16 %v1422
        %v1521 = vunpack.c.l.b16 %v1423
        %v1522 = vunpack.c.h.b16 %v1423
        %v1523 = vunpack.c.l.b16 %v1424
        %v1524 = vunpack.c.h.b16 %v1424
        %v1525 = vunpack.c.l.b16 %v1425
        %v1526 = vunpack.c.h.b16 %v1425
        %v1527 = vunpack.c.l.b16 %v1426
        %v1528 = vunpack.c.h.b16 %v1426
        %v1529 = vunpack.c.l.b16 %v1427
        %v1530 = vunpack.c.h.b16 %v1427
        %v1531 = vunpack.c.l.b16 %v1428
        %v1532 = vunpack.c.h.b16 %v1428
        %v1533 = vunpack.c.l.b16 %v1429
        %v1534 = vunpack.c.h.b16 %v1429
        %v1535 = vunpack.c.l.b16 %v1430
        %v1536 = vunpack.c.h.b16 %v1430
        %v1537 = vpack.c.b16 %v1477, %v1473
        %v1538 = vpack.c.b16 %v1478, %v1474
        %v1539 = vpack.c.b16 %v1479, %v1475
        %v1540 = vpack.c.b16 %v1480, %v1476
        %v1541 = vpack.c.b16 %v1485, %v1481
        %v1542 = vpack.c.b16 %v1486, %v1482
        %v1543 = vpack.c.b16 %v1487, %v1483
        %v1544 = vpack.c.b16 %v1488, %v1484
        %v1545 = vpack.c.b16 %v1493, %v1489
        %v1546 = vpack.c.b16 %v1494, %v1490
        %v1547 = vpack.c.b16 %v1495, %v1491
        %v1548 = vpack.c.b16 %v1496, %v1492
        %v1549 = vpack.c.b16 %v1501, %v1497
        %v1550 = vpack.c.b16 %v1502, %v1498
        %v1551 = vpack.c.b16 %v1503, %v1499
        %v1552 = vpack.c.b16 %v1504, %v1500
        %v1553 = vpack.c.b16 %v1509, %v1505
        %v1554 = vpack.c.b16 %v1510, %v1506
        %v1555 = vpack.c.b16 %v1511, %v1507
        %v1556 = vpack.c.b16 %v1512, %v1508
        %v1557 = vpack.c.b16 %v1517, %v1513
        %v1558 = vpack.c.b16 %v1518, %v1514
        %v1559 = vpack.c.b16 %v1519, %v1515
        %v1560 = vpack.c.b16 %v1520, %v1516
        %v1561 = vpack.c.b16 %v1525, %v1521
        %v1562 = vpack.c.b16 %v1526, %v1522
        %v1563 = vpack.c.b16 %v1527, %v1523
        %v1564 = vpack.c.b16 %v1528, %v1524
        %v1565 = vpack.c.b16 %v1533, %v1529
        %v1566 = vpack.c.b16 %v1534, %v1530
        %v1567 = vpack.c.b16 %v1535, %v1531
        %v1568 = vpack.c.b16 %v1536, %v1532
        %1601 = vmatpush.bf16.msra.mxu0 %v1565
        %1602 = vmatpush.bf16.msra.mxu0 %v1561
        %1603 = vmatpush.bf16.msra.mxu0 %v1557
        %1604 = vmatpush.bf16.msra.mxu0 %v1553
        %1605 = vmatpush.bf16.msra.mxu0 %v1549
        %1606 = vmatpush.bf16.msra.mxu0 %v1545
        %1607 = vmatpush.bf16.msra.mxu0 %v1541
        %1608 = vmatpush.bf16.msra.mxu0 %v1537
        %1609 = vmatmul.bf16.gmra.mxu0 %v1398
        %v1610 = vpop.f32.mrf.mxu0
        %v1611 = vadd.f32 %v1433, %v1610
        %v1612 = vpop.f32.mrf.mxu0
        %1613 = vdwg.mxu0
        %1614 = vmatpush.bf16.msra.mxu0 %v1566
        %1615 = vmatpush.bf16.msra.mxu0 %v1562
        %1616 = vmatpush.bf16.msra.mxu0 %v1558
        %1617 = vmatpush.bf16.msra.mxu0 %v1554
        %1618 = vmatpush.bf16.msra.mxu0 %v1550
        %1619 = vmatpush.bf16.msra.mxu0 %v1546
        %1620 = vmatpush.bf16.msra.mxu0 %v1542
        %1621 = vmatpush.bf16.msra.mxu0 %v1538
        %1622 = vmatmul.bf16.gmra.mxu0 %v1398
        %v1623 = vpop.f32.mrf.mxu0
        %v1624 = vadd.f32 %v1434, %v1623
        %v1625 = vpop.f32.mrf.mxu0
        %1626 = vdwg.mxu0
        %1627 = vmatpush.bf16.msra.mxu0 %v1567
        %1628 = vmatpush.bf16.msra.mxu0 %v1563
        %1629 = vmatpush.bf16.msra.mxu0 %v1559
        %1630 = vmatpush.bf16.msra.mxu0 %v1555
        %1631 = vmatpush.bf16.msra.mxu0 %v1551
        %1632 = vmatpush.bf16.msra.mxu0 %v1547
        %1633 = vmatpush.bf16.msra.mxu0 %v1543
        %1634 = vmatpush.bf16.msra.mxu0 %v1539
        %1635 = vmatmul.bf16.gmra.mxu0 %v1398
        %v1636 = vpop.f32.mrf.mxu0
        %v1637 = vadd.f32 %v1435, %v1636
        %v1638 = vpop.f32.mrf.mxu0
        %1639 = vdwg.mxu0
        %1640 = vmatpush.bf16.msra.mxu0 %v1568
        %1641 = vmatpush.bf16.msra.mxu0 %v1564
        %1642 = vmatpush.bf16.msra.mxu0 %v1560
        %1643 = vmatpush.bf16.msra.mxu0 %v1556
        %1644 = vmatpush.bf16.msra.mxu0 %v1552
        %1645 = vmatpush.bf16.msra.mxu0 %v1548
        %1646 = vmatpush.bf16.msra.mxu0 %v1544
        %1647 = vmatpush.bf16.msra.mxu0 %v1540
        %1648 = vmatmul.bf16.gmra.mxu0 %v1398
        %v1649 = vpop.f32.mrf.mxu0
        %v1650 = vadd.f32 %v1436, %v1649
        %v1651 = vpop.f32.mrf.mxu0
        %1652 = vdwg.mxu0
        %v1653 = vmax.f32 %v1611, 0.0
        %v1654 = vmax.f32 %v1624, 0.0
        %v1655 = vmax.f32 %v1637, 0.0
        %v1656 = vmax.f32 %v1650, 0.0
        %v1657 = vpack.c.bf16 %v1653, %v1653
        %v1658 = vpack.c.bf16 %v1654, %v1654
        %v1659 = vpack.c.bf16 %v1655, %v1655
        %v1660 = vpack.c.bf16 %v1656, %v1656
        %v1661 = vld [vmem:[#allocation9] sm:$0xf]
        %v1662 = vld [vmem:[#allocation9 + $0x4] sm:$0xf]
        %v1663 = vld [vmem:[#allocation9 + $0x8] sm:$0xf]
        %v1664 = vld [vmem:[#allocation9 + $0xc] sm:$0xf]
        %v1665 = vld [vmem:[#allocation9 + $0x10] sm:$0xf]
        %v1666 = vld [vmem:[#allocation9 + $0x14] sm:$0xf]
        %v1667 = vld [vmem:[#allocation9 + $0x18] sm:$0xf]
        %v1668 = vld [vmem:[#allocation9 + $0x1c] sm:$0xf]
        %v1669 = vld [vmem:[#allocation9 + $0x20] sm:$0xf]
        %v1670 = vld [vmem:[#allocation9 + $0x24] sm:$0xf]
        %v1671 = vld [vmem:[#allocation9 + $0x28] sm:$0xf]
        %v1672 = vld [vmem:[#allocation9 + $0x2c] sm:$0xf]
        %v1673 = vld [vmem:[#allocation9 + $0x30] sm:$0xf]
        %v1674 = vld [vmem:[#allocation9 + $0x34] sm:$0xf]
        %v1675 = vld [vmem:[#allocation9 + $0x38] sm:$0xf]
        %v1676 = vld [vmem:[#allocation9 + $0x3c] sm:$0xf]
        %v1677 = vld [vmem:[#allocation9 + $0x40] sm:$0xf]
        %v1678 = vld [vmem:[#allocation9 + $0x44] sm:$0xf]
        %v1679 = vld [vmem:[#allocation9 + $0x48] sm:$0xf]
        %v1680 = vld [vmem:[#allocation9 + $0x4c] sm:$0xf]
        %v1681 = vld [vmem:[#allocation9 + $0x50] sm:$0xf]
        %v1682 = vld [vmem:[#allocation9 + $0x54] sm:$0xf]
        %v1683 = vld [vmem:[#allocation9 + $0x58] sm:$0xf]
        %v1684 = vld [vmem:[#allocation9 + $0x5c] sm:$0xf]
        %v1685 = vld [vmem:[#allocation9 + $0x60] sm:$0xf]
        %v1686 = vld [vmem:[#allocation9 + $0x64] sm:$0xf]
        %v1687 = vld [vmem:[#allocation9 + $0x68] sm:$0xf]
        %v1688 = vld [vmem:[#allocation9 + $0x6c] sm:$0xf]
        %v1689 = vld [vmem:[#allocation9 + $0x70] sm:$0xf]
        %v1690 = vld [vmem:[#allocation9 + $0x74] sm:$0xf]
        %v1691 = vld [vmem:[#allocation9 + $0x78] sm:$0xf]
        %v1692 = vld [vmem:[#allocation9 + $0x7c] sm:$0xf]
        %v1693 = vld [vmem:[#allocation9 + $0x80] sm:$0xf]
        %v1694 = vld [vmem:[#allocation9 + $0x84] sm:$0xf]
        %v1695 = vld [vmem:[#allocation9 + $0x88] sm:$0xf]
        %v1696 = vld [vmem:[#allocation9 + $0x8c] sm:$0xf]
        %v1697 = vld [vmem:[#allocation9 + $0x90] sm:$0xf]
        %v1698 = vld [vmem:[#allocation9 + $0x94] sm:$0xf]
        %v1699 = vld [vmem:[#allocation9 + $0x98] sm:$0xf]
        %v1700 = vld [vmem:[#allocation9 + $0x9c] sm:$0xf]
        %v1701 = vld [vmem:[#allocation9 + $0xa0] sm:$0xf]
        %v1702 = vld [vmem:[#allocation9 + $0xa4] sm:$0xf]
        %v1703 = vld [vmem:[#allocation9 + $0xa8] sm:$0xf]
        %v1704 = vld [vmem:[#allocation9 + $0xac] sm:$0xf]
        %v1705 = vld [vmem:[#allocation9 + $0xb0] sm:$0xf]
        %v1706 = vld [vmem:[#allocation9 + $0xb4] sm:$0xf]
        %v1707 = vld [vmem:[#allocation9 + $0xb8] sm:$0xf]
        %v1708 = vld [vmem:[#allocation9 + $0xbc] sm:$0xf]
        %v1709 = vld [vmem:[#allocation9 + $0xc0] sm:$0xf]
        %v1710 = vld [vmem:[#allocation9 + $0xc4] sm:$0xf]
        %v1711 = vld [vmem:[#allocation9 + $0xc8] sm:$0xf]
        %v1712 = vld [vmem:[#allocation9 + $0xcc] sm:$0xf]
        %v1713 = vld [vmem:[#allocation9 + $0xd0] sm:$0xf]
        %v1714 = vld [vmem:[#allocation9 + $0xd4] sm:$0xf]
        %v1715 = vld [vmem:[#allocation9 + $0xd8] sm:$0xf]
        %v1716 = vld [vmem:[#allocation9 + $0xdc] sm:$0xf]
        %v1717 = vld [vmem:[#allocation9 + $0xe0] sm:$0xf]
        %v1718 = vld [vmem:[#allocation9 + $0xe4] sm:$0xf]
        %v1719 = vld [vmem:[#allocation9 + $0xe8] sm:$0xf]
        %v1720 = vld [vmem:[#allocation9 + $0xec] sm:$0xf]
        %v1721 = vld [vmem:[#allocation9 + $0xf0] sm:$0xf]
        %v1722 = vld [vmem:[#allocation9 + $0xf4] sm:$0xf]
        %v1723 = vld [vmem:[#allocation9 + $0xf8] sm:$0xf]
        %v1724 = vld [vmem:[#allocation9 + $0xfc] sm:$0xf]
        %v1725 = vld [vmem:[#allocation10] sm:$0x1]
        %v1727 = vperm.slane %v1725, 0
        %v1793 = vunpack.c.l.b16 %v1661
        %v1794 = vunpack.c.l.b16 %v1662
        %v1795 = vunpack.c.l.b16 %v1663
        %v1796 = vunpack.c.l.b16 %v1664
        %v1797 = vunpack.c.l.b16 %v1665
        %v1798 = vunpack.c.l.b16 %v1666
        %v1799 = vunpack.c.l.b16 %v1667
        %v1800 = vunpack.c.l.b16 %v1668
        %v1801 = vunpack.c.l.b16 %v1669
        %v1802 = vunpack.c.l.b16 %v1670
        %v1803 = vunpack.c.l.b16 %v1671
        %v1804 = vunpack.c.l.b16 %v1672
        %v1805 = vunpack.c.l.b16 %v1673
        %v1806 = vunpack.c.l.b16 %v1674
        %v1807 = vunpack.c.l.b16 %v1675
        %v1808 = vunpack.c.l.b16 %v1676
        %v1809 = vunpack.c.l.b16 %v1677
        %v1810 = vunpack.c.l.b16 %v1678
        %v1811 = vunpack.c.l.b16 %v1679
        %v1812 = vunpack.c.l.b16 %v1680
        %v1813 = vunpack.c.l.b16 %v1681
        %v1814 = vunpack.c.l.b16 %v1682
        %v1815 = vunpack.c.l.b16 %v1683
        %v1816 = vunpack.c.l.b16 %v1684
        %v1817 = vunpack.c.l.b16 %v1685
        %v1818 = vunpack.c.l.b16 %v1686
        %v1819 = vunpack.c.l.b16 %v1687
        %v1820 = vunpack.c.l.b16 %v1688
        %v1821 = vunpack.c.l.b16 %v1689
        %v1822 = vunpack.c.l.b16 %v1690
        %v1823 = vunpack.c.l.b16 %v1691
        %v1824 = vunpack.c.l.b16 %v1692
        %v1825 = vunpack.c.l.b16 %v1693
        %v1826 = vunpack.c.l.b16 %v1694
        %v1827 = vunpack.c.l.b16 %v1695
        %v1828 = vunpack.c.l.b16 %v1696
        %v1829 = vunpack.c.l.b16 %v1697
        %v1830 = vunpack.c.l.b16 %v1698
        %v1831 = vunpack.c.l.b16 %v1699
        %v1832 = vunpack.c.l.b16 %v1700
        %v1833 = vunpack.c.l.b16 %v1701
        %v1834 = vunpack.c.l.b16 %v1702
        %v1835 = vunpack.c.l.b16 %v1703
        %v1836 = vunpack.c.l.b16 %v1704
        %v1837 = vunpack.c.l.b16 %v1705
        %v1838 = vunpack.c.l.b16 %v1706
        %v1839 = vunpack.c.l.b16 %v1707
        %v1840 = vunpack.c.l.b16 %v1708
        %v1841 = vunpack.c.l.b16 %v1709
        %v1842 = vunpack.c.l.b16 %v1710
        %v1843 = vunpack.c.l.b16 %v1711
        %v1844 = vunpack.c.l.b16 %v1712
        %v1845 = vunpack.c.l.b16 %v1713
        %v1846 = vunpack.c.l.b16 %v1714
        %v1847 = vunpack.c.l.b16 %v1715
        %v1848 = vunpack.c.l.b16 %v1716
        %v1849 = vunpack.c.l.b16 %v1717
        %v1850 = vunpack.c.l.b16 %v1718
        %v1851 = vunpack.c.l.b16 %v1719
        %v1852 = vunpack.c.l.b16 %v1720
        %v1853 = vunpack.c.l.b16 %v1721
        %v1854 = vunpack.c.l.b16 %v1722
        %v1855 = vunpack.c.l.b16 %v1723
        %v1856 = vunpack.c.l.b16 %v1724
        %v1857 = vpack.c.b16 %v1794, %v1793
        %v1858 = vpack.c.b16 %v1796, %v1795
        %v1859 = vpack.c.b16 %v1798, %v1797
        %v1860 = vpack.c.b16 %v1800, %v1799
        %v1861 = vpack.c.b16 %v1802, %v1801
        %v1862 = vpack.c.b16 %v1804, %v1803
        %v1863 = vpack.c.b16 %v1806, %v1805
        %v1864 = vpack.c.b16 %v1808, %v1807
        %v1865 = vpack.c.b16 %v1810, %v1809
        %v1866 = vpack.c.b16 %v1812, %v1811
        %v1867 = vpack.c.b16 %v1814, %v1813
        %v1868 = vpack.c.b16 %v1816, %v1815
        %v1869 = vpack.c.b16 %v1818, %v1817
        %v1870 = vpack.c.b16 %v1820, %v1819
        %v1871 = vpack.c.b16 %v1822, %v1821
        %v1872 = vpack.c.b16 %v1824, %v1823
        %v1873 = vpack.c.b16 %v1826, %v1825
        %v1874 = vpack.c.b16 %v1828, %v1827
        %v1875 = vpack.c.b16 %v1830, %v1829
        %v1876 = vpack.c.b16 %v1832, %v1831
        %v1877 = vpack.c.b16 %v1834, %v1833
        %v1878 = vpack.c.b16 %v1836, %v1835
        %v1879 = vpack.c.b16 %v1838, %v1837
        %v1880 = vpack.c.b16 %v1840, %v1839
        %v1881 = vpack.c.b16 %v1842, %v1841
        %v1882 = vpack.c.b16 %v1844, %v1843
        %v1883 = vpack.c.b16 %v1846, %v1845
        %v1884 = vpack.c.b16 %v1848, %v1847
        %v1885 = vpack.c.b16 %v1850, %v1849
        %v1886 = vpack.c.b16 %v1852, %v1851
        %v1887 = vpack.c.b16 %v1854, %v1853
        %v1888 = vpack.c.b16 %v1856, %v1855
        %1921 = vmatpush.bf16.msra.mxu0 %v1864
        %1922 = vmatpush.bf16.msra.mxu0 %v1863
        %1923 = vmatpush.bf16.msra.mxu0 %v1862
        %1924 = vmatpush.bf16.msra.mxu0 %v1861
        %1925 = vmatpush.bf16.msra.mxu0 %v1860
        %1926 = vmatpush.bf16.msra.mxu0 %v1859
        %1927 = vmatpush.bf16.msra.mxu0 %v1858
        %1928 = vmatpush.bf16.msra.mxu0 %v1857
        %1929 = vmatmul.bf16.gmra.mxu0 %v1657
        %v1930 = vpop.f32.mrf.mxu0
        %v1931 = vadd.f32 %v1727, %v1930
        %v1932 = vpop.f32.mrf.mxu0
        %1933 = vdwg.mxu0
        %1934 = vmatpush.bf16.msra.mxu0 %v1872
        %1935 = vmatpush.bf16.msra.mxu0 %v1871
        %1936 = vmatpush.bf16.msra.mxu0 %v1870
        %1937 = vmatpush.bf16.msra.mxu0 %v1869
        %1938 = vmatpush.bf16.msra.mxu0 %v1868
        %1939 = vmatpush.bf16.msra.mxu0 %v1867
        %1940 = vmatpush.bf16.msra.mxu0 %v1866
        %1941 = vmatpush.bf16.msra.mxu0 %v1865
        %1942 = vmatmul.bf16.gmra.mxu0 %v1658
        %v1943 = vpop.f32.mrf.mxu0
        %v1944 = vadd.f32 %v1931, %v1943
        %v1945 = vpop.f32.mrf.mxu0
        %1946 = vdwg.mxu0
        %1947 = vmatpush.bf16.msra.mxu0 %v1880
        %1948 = vmatpush.bf16.msra.mxu0 %v1879
        %1949 = vmatpush.bf16.msra.mxu0 %v1878
        %1950 = vmatpush.bf16.msra.mxu0 %v1877
        %1951 = vmatpush.bf16.msra.mxu0 %v1876
        %1952 = vmatpush.bf16.msra.mxu0 %v1875
        %1953 = vmatpush.bf16.msra.mxu0 %v1874
        %1954 = vmatpush.bf16.msra.mxu0 %v1873
        %1955 = vmatmul.bf16.gmra.mxu0 %v1659
        %v1956 = vpop.f32.mrf.mxu0
        %v1957 = vadd.f32 %v1944, %v1956
        %v1958 = vpop.f32.mrf.mxu0
        %1959 = vdwg.mxu0
        %1960 = vmatpush.bf16.msra.mxu0 %v1888
        %1961 = vmatpush.bf16.msra.mxu0 %v1887
        %1962 = vmatpush.bf16.msra.mxu0 %v1886
        %1963 = vmatpush.bf16.msra.mxu0 %v1885
        %1964 = vmatpush.bf16.msra.mxu0 %v1884
        %1965 = vmatpush.bf16.msra.mxu0 %v1883
        %1966 = vmatpush.bf16.msra.mxu0 %v1882
        %1967 = vmatpush.bf16.msra.mxu0 %v1881
        %1968 = vmatmul.bf16.gmra.mxu0 %v1660
        %v1969 = vpop.f32.mrf.mxu0
        %v1970 = vadd.f32 %v1957, %v1969
        %v1971 = vpop.f32.mrf.mxu0
        %1972 = vdwg.mxu0
        %v1973 = vadd.f32 %v1397, %v1970
        %v1974 = vld [vmem:[#allocation12] sm:$0x1]
        %v1975 = vld [vmem:[#allocation13] sm:$0x1]
        %1976 = vadd.xlane.f32.xlu0 %v1973
        %v1977 = vpop.xlane.xlu0 %1976
        %v1978 = vmul.f32 %v1977, %v1371
        %v1979 = vsub.f32 %v1973, %v1978
        %v1980 = vmul.f32 %v1979, %v1979
        %1981 = vadd.xlane.f32.xlu0 %v1980
        %v1982 = vpop.xlane.xlu0 %1981
        %v1983 = vmul.f32 %v1982, %v1371
        %v1984 = vadd.f32 %v1983, 1e-05
        %v1985 = vrsqrt.pop %v1984
        %v1986 = vmul.f32 %v1985, %v1984
        %v1987 = vmul.f32 %v1986, %v1985
        %v1988 = vmul.f32 0.5, %v1987
        %v1989 = vsub.f32 1.5, %v1988
        %v1990 = vmul.f32 %v1985, %v1989
        %vm1991 = vweird.f32 %v1984
        %vm1992 = vweird.f32 %v1985
        %vm1993 = vmor %vm1991, %vm1992
        %v1994 = vsel %vm1993, %v1985, %v1990
        %v1995 = vmul.f32 %v1979, %v1994
        %v1997 = vperm.slane %v1974, 0
        %v1999 = vmul.f32 %v1995, %v1997
        %v2001 = vperm.slane %v1975, 0
        %v2003 = vadd.f32 %v1999, %v2001
        %v2004 = vpack.c.bf16 %v2003, %v2003
        %s2005 = scalar_lea.vmem [#allocation4], 192
        %v2006 = vld [vmem:[%s2005] sm:$0xff]
        %v2007 = vld [vmem:[%s2005 + $0x8] sm:$0xf]
        %v2008 = vld [vmem:[%s2005 + $0xc] sm:$0xff]
        %v2009 = vld [vmem:[%s2005 + $0x14] sm:$0xf]
        %v2010 = vld [vmem:[%s2005 + $0x18] sm:$0xff]
        %v2011 = vld [vmem:[%s2005 + $0x20] sm:$0xf]
        %v2012 = vld [vmem:[%s2005 + $0x24] sm:$0xff]
        %v2013 = vld [vmem:[%s2005 + $0x2c] sm:$0xf]
        %v2014 = vld [vmem:[%s2005 + $0x30] sm:$0xff]
        %v2015 = vld [vmem:[%s2005 + $0x38] sm:$0xf]
        %v2016 = vld [vmem:[%s2005 + $0x3c] sm:$0xff]
        %v2017 = vld [vmem:[%s2005 + $0x44] sm:$0xf]
        %v2018 = vld [vmem:[%s2005 + $0x48] sm:$0xff]
        %v2019 = vld [vmem:[%s2005 + $0x50] sm:$0xf]
        %v2020 = vld [vmem:[%s2005 + $0x54] sm:$0xff]
        %v2021 = vld [vmem:[%s2005 + $0x5c] sm:$0xf]
        %v2022 = vld [vmem:[%s2005 + $0x60] sm:$0xff]
        %v2023 = vld [vmem:[%s2005 + $0x68] sm:$0xf]
        %v2024 = vld [vmem:[%s2005 + $0x6c] sm:$0xff]
        %v2025 = vld [vmem:[%s2005 + $0x74] sm:$0xf]
        %v2026 = vld [vmem:[%s2005 + $0x78] sm:$0xff]
        %v2027 = vld [vmem:[%s2005 + $0x80] sm:$0xf]
        %v2028 = vld [vmem:[%s2005 + $0x84] sm:$0xff]
        %v2029 = vld [vmem:[%s2005 + $0x8c] sm:$0xf]
        %v2030 = vld [vmem:[%s2005 + $0x90] sm:$0xff]
        %v2031 = vld [vmem:[%s2005 + $0x98] sm:$0xf]
        %v2032 = vld [vmem:[%s2005 + $0x9c] sm:$0xff]
        %v2033 = vld [vmem:[%s2005 + $0xa4] sm:$0xf]
        %v2034 = vld [vmem:[%s2005 + $0xa8] sm:$0xff]
        %v2035 = vld [vmem:[%s2005 + $0xb0] sm:$0xf]
        %v2036 = vld [vmem:[%s2005 + $0xb4] sm:$0xff]
        %v2037 = vld [vmem:[%s2005 + $0xbc] sm:$0xf]
        %s2038 = scalar_lea.vmem %s5, 3
        %v2039 = vld [vmem:[%s2038] sm:$0x7]
        %v2041 = vperm.slane %v2039, 0
        %v2042 = vperm.slane %v2039, 1
        %v2043 = vperm.slane %v2039, 2
        %v2079 = vunpack.c.l.b16 %v2006
        %v2080 = vunpack.c.h.b16 %v2006
        %v2081 = vunpack.c.l.b16 %v2007
        %v2082 = vunpack.c.l.b16 %v2008
        %v2083 = vunpack.c.h.b16 %v2008
        %v2084 = vunpack.c.l.b16 %v2009
        %v2085 = vunpack.c.l.b16 %v2010
        %v2086 = vunpack.c.h.b16 %v2010
        %v2087 = vunpack.c.l.b16 %v2011
        %v2088 = vunpack.c.l.b16 %v2012
        %v2089 = vunpack.c.h.b16 %v2012
        %v2090 = vunpack.c.l.b16 %v2013
        %v2091 = vunpack.c.l.b16 %v2014
        %v2092 = vunpack.c.h.b16 %v2014
        %v2093 = vunpack.c.l.b16 %v2015
        %v2094 = vunpack.c.l.b16 %v2016
        %v2095 = vunpack.c.h.b16 %v2016
        %v2096 = vunpack.c.l.b16 %v2017
        %v2097 = vunpack.c.l.b16 %v2018
        %v2098 = vunpack.c.h.b16 %v2018
        %v2099 = vunpack.c.l.b16 %v2019
        %v2100 = vunpack.c.l.b16 %v2020
        %v2101 = vunpack.c.h.b16 %v2020
        %v2102 = vunpack.c.l.b16 %v2021
        %v2103 = vunpack.c.l.b16 %v2022
        %v2104 = vunpack.c.h.b16 %v2022
        %v2105 = vunpack.c.l.b16 %v2023
        %v2106 = vunpack.c.l.b16 %v2024
        %v2107 = vunpack.c.h.b16 %v2024
        %v2108 = vunpack.c.l.b16 %v2025
        %v2109 = vunpack.c.l.b16 %v2026
        %v2110 = vunpack.c.h.b16 %v2026
        %v2111 = vunpack.c.l.b16 %v2027
        %v2112 = vunpack.c.l.b16 %v2028
        %v2113 = vunpack.c.h.b16 %v2028
        %v2114 = vunpack.c.l.b16 %v2029
        %v2115 = vunpack.c.l.b16 %v2030
        %v2116 = vunpack.c.h.b16 %v2030
        %v2117 = vunpack.c.l.b16 %v2031
        %v2118 = vunpack.c.l.b16 %v2032
        %v2119 = vunpack.c.h.b16 %v2032
        %v2120 = vunpack.c.l.b16 %v2033
        %v2121 = vunpack.c.l.b16 %v2034
        %v2122 = vunpack.c.h.b16 %v2034
        %v2123 = vunpack.c.l.b16 %v2035
        %v2124 = vunpack.c.l.b16 %v2036
        %v2125 = vunpack.c.h.b16 %v2036
        %v2126 = vunpack.c.l.b16 %v2037
        %v2127 = vpack.c.b16 %v2082, %v2079
        %v2128 = vpack.c.b16 %v2083, %v2080
        %v2129 = vpack.c.b16 %v2084, %v2081
        %v2130 = vpack.c.b16 %v2088, %v2085
        %v2131 = vpack.c.b16 %v2089, %v2086
        %v2132 = vpack.c.b16 %v2090, %v2087
        %v2133 = vpack.c.b16 %v2094, %v2091
        %v2134 = vpack.c.b16 %v2095, %v2092
        %v2135 = vpack.c.b16 %v2096, %v2093
        %v2136 = vpack.c.b16 %v2100, %v2097
        %v2137 = vpack.c.b16 %v2101, %v2098
        %v2138 = vpack.c.b16 %v2102, %v2099
        %v2139 = vpack.c.b16 %v2106, %v2103
        %v2140 = vpack.c.b16 %v2107, %v2104
        %v2141 = vpack.c.b16 %v2108, %v2105
        %v2142 = vpack.c.b16 %v2112, %v2109
        %v2143 = vpack.c.b16 %v2113, %v2110
        %v2144 = vpack.c.b16 %v2114, %v2111
        %v2145 = vpack.c.b16 %v2118, %v2115
        %v2146 = vpack.c.b16 %v2119, %v2116
        %v2147 = vpack.c.b16 %v2120, %v2117
        %v2148 = vpack.c.b16 %v2124, %v2121
        %v2149 = vpack.c.b16 %v2125, %v2122
        %v2150 = vpack.c.b16 %v2126, %v2123
        %2175 = vmatpush.bf16.msra.mxu0 %v2148
        %2176 = vmatpush.bf16.msra.mxu0 %v2145
        %2177 = vmatpush.bf16.msra.mxu0 %v2142
        %2178 = vmatpush.bf16.msra.mxu0 %v2139
        %2179 = vmatpush.bf16.msra.mxu0 %v2136
        %2180 = vmatpush.bf16.msra.mxu0 %v2133
        %2181 = vmatpush.bf16.msra.mxu0 %v2130
        %2182 = vmatpush.bf16.msra.mxu0 %v2127
        %2183 = vmatmul.bf16.gmra.mxu0 %v2004
        %v2184 = vpop.f32.mrf.mxu0
        %v2185 = vadd.f32 %v2041, %v2184
        %v2186 = vpop.f32.mrf.mxu0
        %2187 = vdwg.mxu0
        %2188 = vmatpush.bf16.msra.mxu0 %v2149
        %2189 = vmatpush.bf16.msra.mxu0 %v2146
        %2190 = vmatpush.bf16.msra.mxu0 %v2143
        %2191 = vmatpush.bf16.msra.mxu0 %v2140
        %2192 = vmatpush.bf16.msra.mxu0 %v2137
        %2193 = vmatpush.bf16.msra.mxu0 %v2134
        %2194 = vmatpush.bf16.msra.mxu0 %v2131
        %2195 = vmatpush.bf16.msra.mxu0 %v2128
        %2196 = vmatmul.bf16.gmra.mxu0 %v2004
        %v2197 = vpop.f32.mrf.mxu0
        %v2198 = vadd.f32 %v2042, %v2197
        %v2199 = vpop.f32.mrf.mxu0
        %2200 = vdwg.mxu0
        %2201 = vmatpush.bf16.msra.mxu0 %v2150
        %2202 = vmatpush.bf16.msra.mxu0 %v2147
        %2203 = vmatpush.bf16.msra.mxu0 %v2144
        %2204 = vmatpush.bf16.msra.mxu0 %v2141
        %2205 = vmatpush.bf16.msra.mxu0 %v2138
        %2206 = vmatpush.bf16.msra.mxu0 %v2135
        %2207 = vmatpush.bf16.msra.mxu0 %v2132
        %2208 = vmatpush.bf16.msra.mxu0 %v2129
        %2209 = vmatmul.bf16.gmra.mxu0 %v2004
        %v2210 = vpop.f32.mrf.mxu0
        %v2211 = vadd.f32 %v2043, %v2210
        %v2212 = vpop.f32.mrf.mxu0
        %2213 = vdwg.mxu0
        %v2214 = vpack.c.bf16 %v2185, %v2185
        %v2215 = vpack.c.bf16 %v2198, %v2198
        %v2216 = vpack.c.bf16 %v2211, %v2211
        %v2218 = vsel %vm1033, %v2214, 0
        %v2221 = vsel %vm1033, %v2215, 0
        %2223 = vmatpush.bf16.xpose.msra.mxu0 0
        %2224 = vmatpush.bf16.xpose.msra.mxu0 0
        %2225 = vmatpush.bf16.xpose.msra.mxu0 0
        %2226 = vmatpush.bf16.xpose.msra.mxu0 0
        %2227 = vmatpush.bf16.xpose.msra.mxu0 0
        %2228 = vmatpush.bf16.xpose.msra.mxu0 0
        %2229 = vmatpush.bf16.xpose.msra.mxu0 0
        %2230 = vmatpush.bf16.xpose.msra.mxu0 %v2221
        %2231 = vmatmul.bf16.gmra.mxu0 %v2218
        %v2232 = vpop.f32.mrf.mxu0
        %v2233 = vadd.f32 0.0, %v2232
        %v2234 = vpop.f32.mrf.mxu0
        %2235 = vdwg.mxu0
        %v2236 = vmul.f32 %v2233, 0.17677669
        %v2237 = vsel %vm1054, %v2236, -inf
        %2238 = vmax.xlane.f32.xlu0 %v2237
        %v2239 = vpop.xlane.xlu0 %2238
        %v2240 = vsub.f32 %v2236, %v2239
        %v2241 = vmul.f32 %v2240, 1.442695
        %v2242 = vpow.pop %v2241
        %v2243 = vsel %vm1054, %v2242, 0.0
        %2244 = vadd.xlane.f32.xlu0 %v2243
        %v2245 = vpop.xlane.xlu0 %2244
        %v2246 = vrcp.pop %v2245
        %v2247 = vmul.f32 %v2242, %v2246
        %v2248 = vpack.c.bf16 %v2247, %v2247
        %v2250 = vsel %vm1054, %v2248, 0
        %v2253 = vsel %vm1070, %v2216, 0
        %2255 = vmatpush.bf16.msra.mxu0 0
        %2256 = vmatpush.bf16.msra.mxu0 0
        %2257 = vmatpush.bf16.msra.mxu0 0
        %2258 = vmatpush.bf16.msra.mxu0 0
        %2259 = vmatpush.bf16.msra.mxu0 0
        %2260 = vmatpush.bf16.msra.mxu0 0
        %2261 = vmatpush.bf16.msra.mxu0 0
        %2262 = vmatpush.bf16.msra.mxu0 %v2253
        %2263 = vmatmul.bf16.gmra.mxu0 %v2250
        %v2264 = vpop.f32.mrf.mxu0
        %v2265 = vadd.f32 0.0, %v2264
        %v2266 = vpop.f32.mrf.mxu0
        %2267 = vdwg.mxu0
        %2269 = vrot.lane.b32.xlu0 %v2214, 96
        %v2270 = vpop.permute.xlu0 %2269
        %2272 = vrot.lane.b32.xlu0 %v2215, 96
        %v2273 = vpop.permute.xlu0 %2272
        %v2275 = vsel %vm1033, %v2270, 0
        %v2278 = vsel %vm1033, %v2273, 0
        %2280 = vmatpush.bf16.xpose.msra.mxu0 0
        %2281 = vmatpush.bf16.xpose.msra.mxu0 0
        %2282 = vmatpush.bf16.xpose.msra.mxu0 0
        %2283 = vmatpush.bf16.xpose.msra.mxu0 0
        %2284 = vmatpush.bf16.xpose.msra.mxu0 0
        %2285 = vmatpush.bf16.xpose.msra.mxu0 0
        %2286 = vmatpush.bf16.xpose.msra.mxu0 0
        %2287 = vmatpush.bf16.xpose.msra.mxu0 %v2278
        %2288 = vmatmul.bf16.gmra.mxu0 %v2275
        %v2289 = vpop.f32.mrf.mxu0
        %v2290 = vadd.f32 0.0, %v2289
        %v2291 = vpop.f32.mrf.mxu0
        %2292 = vdwg.mxu0
        %v2293 = vmul.f32 %v2290, 0.17677669
        %v2294 = vsel %vm1054, %v2293, -inf
        %2295 = vmax.xlane.f32.xlu0 %v2294
        %v2296 = vpop.xlane.xlu0 %2295
        %v2297 = vsub.f32 %v2293, %v2296
        %v2298 = vmul.f32 %v2297, 1.442695
        %v2299 = vpow.pop %v2298
        %v2300 = vsel %vm1054, %v2299, 0.0
        %2301 = vadd.xlane.f32.xlu0 %v2300
        %v2302 = vpop.xlane.xlu0 %2301
        %v2303 = vrcp.pop %v2302
        %v2304 = vmul.f32 %v2299, %v2303
        %v2305 = vpack.c.bf16 %v2304, %v2304
        %2307 = vrot.lane.b32.xlu0 %v2216, 96
        %v2308 = vpop.permute.xlu0 %2307
        %v2310 = vsel %vm1054, %v2305, 0
        %v2313 = vsel %vm1070, %v2308, 0
        %2315 = vmatpush.bf16.msra.mxu0 0
        %2316 = vmatpush.bf16.msra.mxu0 0
        %2317 = vmatpush.bf16.msra.mxu0 0
        %2318 = vmatpush.bf16.msra.mxu0 0
        %2319 = vmatpush.bf16.msra.mxu0 0
        %2320 = vmatpush.bf16.msra.mxu0 0
        %2321 = vmatpush.bf16.msra.mxu0 0
        %2322 = vmatpush.bf16.msra.mxu0 %v2313
        %2323 = vmatmul.bf16.gmra.mxu0 %v2310
        %v2324 = vpop.f32.mrf.mxu0
        %v2325 = vadd.f32 0.0, %v2324
        %v2326 = vpop.f32.mrf.mxu0
        %2327 = vdwg.mxu0
        %2328 = vrot.lane.b32.xlu0 %v2214, 64
        %v2329 = vpop.permute.xlu0 %2328
        %2330 = vrot.lane.b32.xlu0 %v2215, 64
        %v2331 = vpop.permute.xlu0 %2330
        %v2333 = vsel %vm1033, %v2329, 0
        %v2336 = vsel %vm1033, %v2331, 0
        %2338 = vmatpush.bf16.xpose.msra.mxu0 0
        %2339 = vmatpush.bf16.xpose.msra.mxu0 0
        %2340 = vmatpush.bf16.xpose.msra.mxu0 0
        %2341 = vmatpush.bf16.xpose.msra.mxu0 0
        %2342 = vmatpush.bf16.xpose.msra.mxu0 0
        %2343 = vmatpush.bf16.xpose.msra.mxu0 0
        %2344 = vmatpush.bf16.xpose.msra.mxu0 0
        %2345 = vmatpush.bf16.xpose.msra.mxu0 %v2336
        %2346 = vmatmul.bf16.gmra.mxu0 %v2333
        %v2347 = vpop.f32.mrf.mxu0
        %v2348 = vadd.f32 0.0, %v2347
        %v2349 = vpop.f32.mrf.mxu0
        %2350 = vdwg.mxu0
        %v2351 = vmul.f32 %v2348, 0.17677669
        %v2352 = vsel %vm1054, %v2351, -inf
        %2353 = vmax.xlane.f32.xlu0 %v2352
        %v2354 = vpop.xlane.xlu0 %2353
        %v2355 = vsub.f32 %v2351, %v2354
        %v2356 = vmul.f32 %v2355, 1.442695
        %v2357 = vpow.pop %v2356
        %v2358 = vsel %vm1054, %v2357, 0.0
        %2359 = vadd.xlane.f32.xlu0 %v2358
        %v2360 = vpop.xlane.xlu0 %2359
        %v2361 = vrcp.pop %v2360
        %v2362 = vmul.f32 %v2357, %v2361
        %v2363 = vpack.c.bf16 %v2362, %v2362
        %2364 = vrot.lane.b32.xlu0 %v2216, 64
        %v2365 = vpop.permute.xlu0 %2364
        %v2367 = vsel %vm1054, %v2363, 0
        %v2370 = vsel %vm1070, %v2365, 0
        %2372 = vmatpush.bf16.msra.mxu0 0
        %2373 = vmatpush.bf16.msra.mxu0 0
        %2374 = vmatpush.bf16.msra.mxu0 0
        %2375 = vmatpush.bf16.msra.mxu0 0
        %2376 = vmatpush.bf16.msra.mxu0 0
        %2377 = vmatpush.bf16.msra.mxu0 0
        %2378 = vmatpush.bf16.msra.mxu0 0
        %2379 = vmatpush.bf16.msra.mxu0 %v2370
        %2380 = vmatmul.bf16.gmra.mxu0 %v2367
        %v2381 = vpop.f32.mrf.mxu0
        %v2382 = vadd.f32 0.0, %v2381
        %v2383 = vpop.f32.mrf.mxu0
        %2384 = vdwg.mxu0
        %2385 = vrot.lane.b32.xlu0 %v2214, 32
        %v2386 = vpop.permute.xlu0 %2385
        %2387 = vrot.lane.b32.xlu0 %v2215, 32
        %v2388 = vpop.permute.xlu0 %2387
        %v2390 = vsel %vm1033, %v2386, 0
        %v2393 = vsel %vm1033, %v2388, 0
        %2395 = vmatpush.bf16.xpose.msra.mxu0 0
        %2396 = vmatpush.bf16.xpose.msra.mxu0 0
        %2397 = vmatpush.bf16.xpose.msra.mxu0 0
        %2398 = vmatpush.bf16.xpose.msra.mxu0 0
        %2399 = vmatpush.bf16.xpose.msra.mxu0 0
        %2400 = vmatpush.bf16.xpose.msra.mxu0 0
        %2401 = vmatpush.bf16.xpose.msra.mxu0 0
        %2402 = vmatpush.bf16.xpose.msra.mxu0 %v2393
        %2403 = vmatmul.bf16.gmra.mxu0 %v2390
        %v2404 = vpop.f32.mrf.mxu0
        %v2405 = vadd.f32 0.0, %v2404
        %v2406 = vpop.f32.mrf.mxu0
        %2407 = vdwg.mxu0
        %v2408 = vmul.f32 %v2405, 0.17677669
        %v2409 = vsel %vm1054, %v2408, -inf
        %2410 = vmax.xlane.f32.xlu0 %v2409
        %v2411 = vpop.xlane.xlu0 %2410
        %v2412 = vsub.f32 %v2408, %v2411
        %v2413 = vmul.f32 %v2412, 1.442695
        %v2414 = vpow.pop %v2413
        %v2415 = vsel %vm1054, %v2414, 0.0
        %2416 = vadd.xlane.f32.xlu0 %v2415
        %v2417 = vpop.xlane.xlu0 %2416
        %v2418 = vrcp.pop %v2417
        %v2419 = vmul.f32 %v2414, %v2418
        %v2420 = vpack.c.bf16 %v2419, %v2419
        %2421 = vrot.lane.b32.xlu0 %v2216, 32
        %v2422 = vpop.permute.xlu0 %2421
        %v2424 = vsel %vm1054, %v2420, 0
        %v2427 = vsel %vm1070, %v2422, 0
        %2429 = vmatpush.bf16.msra.mxu0 0
        %2430 = vmatpush.bf16.msra.mxu0 0
        %2431 = vmatpush.bf16.msra.mxu0 0
        %2432 = vmatpush.bf16.msra.mxu0 0
        %2433 = vmatpush.bf16.msra.mxu0 0
        %2434 = vmatpush.bf16.msra.mxu0 0
        %2435 = vmatpush.bf16.msra.mxu0 0
        %2436 = vmatpush.bf16.msra.mxu0 %v2427
        %2437 = vmatmul.bf16.gmra.mxu0 %v2424
        %v2438 = vpop.f32.mrf.mxu0
        %v2439 = vadd.f32 0.0, %v2438
        %v2440 = vpop.f32.mrf.mxu0
        %2441 = vdwg.mxu0
        %2443 = vrot.lane.b32.xlu0 %v2325, 32
        %v2444 = vpop.permute.xlu0 %2443
        %2447 = vrot.lane.b32.xlu0 %v2382, 64
        %v2448 = vpop.permute.xlu0 %2447
        %2451 = vrot.lane.b32.xlu0 %v2439, 96
        %v2452 = vpop.permute.xlu0 %2451
        %v2454 = vsel %vm1033, %v2265, %v2444
        %v2455 = vsel %vm1274, %v2454, %v2448
        %v2456 = vsel %vm1276, %v2455, %v2452
        %v2457 = vpack.c.bf16 %v2456, %v2456
        %s2458 = scalar_lea.vmem [#allocation6], 64
        %v2459 = vld [vmem:[%s2458] sm:$0xf]
        %v2460 = vld [vmem:[%s2458 + $0x4] sm:$0xf]
        %v2461 = vld [vmem:[%s2458 + $0x8] sm:$0xf]
        %v2462 = vld [vmem:[%s2458 + $0xc] sm:$0xf]
        %v2463 = vld [vmem:[%s2458 + $0x10] sm:$0xf]
        %v2464 = vld [vmem:[%s2458 + $0x14] sm:$0xf]
        %v2465 = vld [vmem:[%s2458 + $0x18] sm:$0xf]
        %v2466 = vld [vmem:[%s2458 + $0x1c] sm:$0xf]
        %v2467 = vld [vmem:[%s2458 + $0x20] sm:$0xf]
        %v2468 = vld [vmem:[%s2458 + $0x24] sm:$0xf]
        %v2469 = vld [vmem:[%s2458 + $0x28] sm:$0xf]
        %v2470 = vld [vmem:[%s2458 + $0x2c] sm:$0xf]
        %v2471 = vld [vmem:[%s2458 + $0x30] sm:$0xf]
        %v2472 = vld [vmem:[%s2458 + $0x34] sm:$0xf]
        %v2473 = vld [vmem:[%s2458 + $0x38] sm:$0xf]
        %v2474 = vld [vmem:[%s2458 + $0x3c] sm:$0xf]
        %s2475 = scalar_lea.vmem %s7, 1
        %v2476 = vld [vmem:[%s2475] sm:$0x1]
        %v2478 = vperm.slane %v2476, 0
        %v2496 = vunpack.c.l.b16 %v2459
        %v2497 = vunpack.c.l.b16 %v2460
        %v2498 = vunpack.c.l.b16 %v2461
        %v2499 = vunpack.c.l.b16 %v2462
        %v2500 = vunpack.c.l.b16 %v2463
        %v2501 = vunpack.c.l.b16 %v2464
        %v2502 = vunpack.c.l.b16 %v2465
        %v2503 = vunpack.c.l.b16 %v2466
        %v2504 = vunpack.c.l.b16 %v2467
        %v2505 = vunpack.c.l.b16 %v2468
        %v2506 = vunpack.c.l.b16 %v2469
        %v2507 = vunpack.c.l.b16 %v2470
        %v2508 = vunpack.c.l.b16 %v2471
        %v2509 = vunpack.c.l.b16 %v2472
        %v2510 = vunpack.c.l.b16 %v2473
        %v2511 = vunpack.c.l.b16 %v2474
        %v2512 = vpack.c.b16 %v2497, %v2496
        %v2513 = vpack.c.b16 %v2499, %v2498
        %v2514 = vpack.c.b16 %v2501, %v2500
        %v2515 = vpack.c.b16 %v2503, %v2502
        %v2516 = vpack.c.b16 %v2505, %v2504
        %v2517 = vpack.c.b16 %v2507, %v2506
        %v2518 = vpack.c.b16 %v2509, %v2508
        %v2519 = vpack.c.b16 %v2511, %v2510
        %2528 = vmatpush.bf16.msra.mxu0 %v2519
        %2529 = vmatpush.bf16.msra.mxu0 %v2518
        %2530 = vmatpush.bf16.msra.mxu0 %v2517
        %2531 = vmatpush.bf16.msra.mxu0 %v2516
        %2532 = vmatpush.bf16.msra.mxu0 %v2515
        %2533 = vmatpush.bf16.msra.mxu0 %v2514
        %2534 = vmatpush.bf16.msra.mxu0 %v2513
        %2535 = vmatpush.bf16.msra.mxu0 %v2512
        %2536 = vmatmul.bf16.gmra.mxu0 %v2457
        %v2537 = vpop.f32.mrf.mxu0
        %v2538 = vadd.f32 %v2478, %v2537
        %v2539 = vpop.f32.mrf.mxu0
        %2540 = vdwg.mxu0
        %v2541 = vadd.f32 %v2003, %v2538
        %s2542 = scalar_lea.vmem %s8, 1
        %v2543 = vld [vmem:[%s2542] sm:$0x1]
        %s2544 = scalar_lea.vmem %s9, 1
        %v2545 = vld [vmem:[%s2544] sm:$0x1]
        %2546 = vadd.xlane.f32.xlu0 %v2541
        %v2547 = vpop.xlane.xlu0 %2546
        %v2548 = vmul.f32 %v2547, %v1371
        %v2549 = vsub.f32 %v2541, %v2548
        %v2550 = vmul.f32 %v2549, %v2549
        %2551 = vadd.xlane.f32.xlu0 %v2550
        %v2552 = vpop.xlane.xlu0 %2551
        %v2553 = vmul.f32 %v2552, %v1371
        %v2554 = vadd.f32 %v2553, 1e-05
        %v2555 = vrsqrt.pop %v2554
        %v2556 = vmul.f32 %v2555, %v2554
        %v2557 = vmul.f32 %v2556, %v2555
        %v2558 = vmul.f32 0.5, %v2557
        %v2559 = vsub.f32 1.5, %v2558
        %v2560 = vmul.f32 %v2555, %v2559
        %vm2561 = vweird.f32 %v2554
        %vm2562 = vweird.f32 %v2555
        %vm2563 = vmor %vm2561, %vm2562
        %v2564 = vsel %vm2563, %v2555, %v2560
        %v2565 = vmul.f32 %v2549, %v2564
        %v2567 = vperm.slane %v2543, 0
        %v2569 = vmul.f32 %v2565, %v2567
        %v2571 = vperm.slane %v2545, 0
        %v2573 = vadd.f32 %v2569, %v2571
        %v2574 = vpack.c.bf16 %v2573, %v2573
        %s2575 = scalar_lea.vmem [#allocation7], 256
        %v2576 = vld [vmem:[%s2575] sm:$0xff]
        %v2577 = vld [vmem:[%s2575 + $0x8] sm:$0xff]
        %v2578 = vld [vmem:[%s2575 + $0x10] sm:$0xff]
        %v2579 = vld [vmem:[%s2575 + $0x18] sm:$0xff]
        %v2580 = vld [vmem:[%s2575 + $0x20] sm:$0xff]
        %v2581 = vld [vmem:[%s2575 + $0x28] sm:$0xff]
        %v2582 = vld [vmem:[%s2575 + $0x30] sm:$0xff]
        %v2583 = vld [vmem:[%s2575 + $0x38] sm:$0xff]
        %v2584 = vld [vmem:[%s2575 + $0x40] sm:$0xff]
        %v2585 = vld [vmem:[%s2575 + $0x48] sm:$0xff]
        %v2586 = vld [vmem:[%s2575 + $0x50] sm:$0xff]
        %v2587 = vld [vmem:[%s2575 + $0x58] sm:$0xff]
        %v2588 = vld [vmem:[%s2575 + $0x60] sm:$0xff]
        %v2589 = vld [vmem:[%s2575 + $0x68] sm:$0xff]
        %v2590 = vld [vmem:[%s2575 + $0x70] sm:$0xff]
        %v2591 = vld [vmem:[%s2575 + $0x78] sm:$0xff]
        %v2592 = vld [vmem:[%s2575 + $0x80] sm:$0xff]
        %v2593 = vld [vmem:[%s2575 + $0x88] sm:$0xff]
        %v2594 = vld [vmem:[%s2575 + $0x90] sm:$0xff]
        %v2595 = vld [vmem:[%s2575 + $0x98] sm:$0xff]
        %v2596 = vld [vmem:[%s2575 + $0xa0] sm:$0xff]
        %v2597 = vld [vmem:[%s2575 + $0xa8] sm:$0xff]
        %v2598 = vld [vmem:[%s2575 + $0xb0] sm:$0xff]
        %v2599 = vld [vmem:[%s2575 + $0xb8] sm:$0xff]
        %v2600 = vld [vmem:[%s2575 + $0xc0] sm:$0xff]
        %v2601 = vld [vmem:[%s2575 + $0xc8] sm:$0xff]
        %v2602 = vld [vmem:[%s2575 + $0xd0] sm:$0xff]
        %v2603 = vld [vmem:[%s2575 + $0xd8] sm:$0xff]
        %v2604 = vld [vmem:[%s2575 + $0xe0] sm:$0xff]
        %v2605 = vld [vmem:[%s2575 + $0xe8] sm:$0xff]
        %v2606 = vld [vmem:[%s2575 + $0xf0] sm:$0xff]
        %v2607 = vld [vmem:[%s2575 + $0xf8] sm:$0xff]
        %s2608 = scalar_lea.vmem %s11, 4
        %v2609 = vld [vmem:[%s2608] sm:$0xf]
        %v2611 = vperm.slane %v2609, 0
        %v2612 = vperm.slane %v2609, 1
        %v2613 = vperm.slane %v2609, 2
        %v2614 = vperm.slane %v2609, 3
        %v2651 = vunpack.c.l.b16 %v2576
        %v2652 = vunpack.c.h.b16 %v2576
        %v2653 = vunpack.c.l.b16 %v2577
        %v2654 = vunpack.c.h.b16 %v2577
        %v2655 = vunpack.c.l.b16 %v2578
        %v2656 = vunpack.c.h.b16 %v2578
        %v2657 = vunpack.c.l.b16 %v2579
        %v2658 = vunpack.c.h.b16 %v2579
        %v2659 = vunpack.c.l.b16 %v2580
        %v2660 = vunpack.c.h.b16 %v2580
        %v2661 = vunpack.c.l.b16 %v2581
        %v2662 = vunpack.c.h.b16 %v2581
        %v2663 = vunpack.c.l.b16 %v2582
        %v2664 = vunpack.c.h.b16 %v2582
        %v2665 = vunpack.c.l.b16 %v2583
        %v2666 = vunpack.c.h.b16 %v2583
        %v2667 = vunpack.c.l.b16 %v2584
        %v2668 = vunpack.c.h.b16 %v2584
        %v2669 = vunpack.c.l.b16 %v2585
        %v2670 = vunpack.c.h.b16 %v2585
        %v2671 = vunpack.c.l.b16 %v2586
        %v2672 = vunpack.c.h.b16 %v2586
        %v2673 = vunpack.c.l.b16 %v2587
        %v2674 = vunpack.c.h.b16 %v2587
        %v2675 = vunpack.c.l.b16 %v2588
        %v2676 = vunpack.c.h.b16 %v2588
        %v2677 = vunpack.c.l.b16 %v2589
        %v2678 = vunpack.c.h.b16 %v2589
        %v2679 = vunpack.c.l.b16 %v2590
        %v2680 = vunpack.c.h.b16 %v2590
        %v2681 = vunpack.c.l.b16 %v2591
        %v2682 = vunpack.c.h.b16 %v2591
        %v2683 = vunpack.c.l.b16 %v2592
        %v2684 = vunpack.c.h.b16 %v2592
        %v2685 = vunpack.c.l.b16 %v2593
        %v2686 = vunpack.c.h.b16 %v2593
        %v2687 = vunpack.c.l.b16 %v2594
        %v2688 = vunpack.c.h.b16 %v2594
        %v2689 = vunpack.c.l.b16 %v2595
        %v2690 = vunpack.c.h.b16 %v2595
        %v2691 = vunpack.c.l.b16 %v2596
        %v2692 = vunpack.c.h.b16 %v2596
        %v2693 = vunpack.c.l.b16 %v2597
        %v2694 = vunpack.c.h.b16 %v2597
        %v2695 = vunpack.c.l.b16 %v2598
        %v2696 = vunpack.c.h.b16 %v2598
        %v2697 = vunpack.c.l.b16 %v2599
        %v2698 = vunpack.c.h.b16 %v2599
        %v2699 = vunpack.c.l.b16 %v2600
        %v2700 = vunpack.c.h.b16 %v2600
        %v2701 = vunpack.c.l.b16 %v2601
        %v2702 = vunpack.c.h.b16 %v2601
        %v2703 = vunpack.c.l.b16 %v2602
        %v2704 = vunpack.c.h.b16 %v2602
        %v2705 = vunpack.c.l.b16 %v2603
        %v2706 = vunpack.c.h.b16 %v2603
        %v2707 = vunpack.c.l.b16 %v2604
        %v2708 = vunpack.c.h.b16 %v2604
        %v2709 = vunpack.c.l.b16 %v2605
        %v2710 = vunpack.c.h.b16 %v2605
        %v2711 = vunpack.c.l.b16 %v2606
        %v2712 = vunpack.c.h.b16 %v2606
        %v2713 = vunpack.c.l.b16 %v2607
        %v2714 = vunpack.c.h.b16 %v2607
        %v2715 = vpack.c.b16 %v2655, %v2651
        %v2716 = vpack.c.b16 %v2656, %v2652
        %v2717 = vpack.c.b16 %v2657, %v2653
        %v2718 = vpack.c.b16 %v2658, %v2654
        %v2719 = vpack.c.b16 %v2663, %v2659
        %v2720 = vpack.c.b16 %v2664, %v2660
        %v2721 = vpack.c.b16 %v2665, %v2661
        %v2722 = vpack.c.b16 %v2666, %v2662
        %v2723 = vpack.c.b16 %v2671, %v2667
        %v2724 = vpack.c.b16 %v2672, %v2668
        %v2725 = vpack.c.b16 %v2673, %v2669
        %v2726 = vpack.c.b16 %v2674, %v2670
        %v2727 = vpack.c.b16 %v2679, %v2675
        %v2728 = vpack.c.b16 %v2680, %v2676
        %v2729 = vpack.c.b16 %v2681, %v2677
        %v2730 = vpack.c.b16 %v2682, %v2678
        %v2731 = vpack.c.b16 %v2687, %v2683
        %v2732 = vpack.c.b16 %v2688, %v2684
        %v2733 = vpack.c.b16 %v2689, %v2685
        %v2734 = vpack.c.b16 %v2690, %v2686
        %v2735 = vpack.c.b16 %v2695, %v2691
        %v2736 = vpack.c.b16 %v2696, %v2692
        %v2737 = vpack.c.b16 %v2697, %v2693
        %v2738 = vpack.c.b16 %v2698, %v2694
        %v2739 = vpack.c.b16 %v2703, %v2699
        %v2740 = vpack.c.b16 %v2704, %v2700
        %v2741 = vpack.c.b16 %v2705, %v2701
        %v2742 = vpack.c.b16 %v2706, %v2702
        %v2743 = vpack.c.b16 %v2711, %v2707
        %v2744 = vpack.c.b16 %v2712, %v2708
        %v2745 = vpack.c.b16 %v2713, %v2709
        %v2746 = vpack.c.b16 %v2714, %v2710
        %2779 = vmatpush.bf16.msra.mxu0 %v2743
        %2780 = vmatpush.bf16.msra.mxu0 %v2739
        %2781 = vmatpush.bf16.msra.mxu0 %v2735
        %2782 = vmatpush.bf16.msra.mxu0 %v2731
        %2783 = vmatpush.bf16.msra.mxu0 %v2727
        %2784 = vmatpush.bf16.msra.mxu0 %v2723
        %2785 = vmatpush.bf16.msra.mxu0 %v2719
        %2786 = vmatpush.bf16.msra.mxu0 %v2715
        %2787 = vmatmul.bf16.gmra.mxu0 %v2574
        %v2788 = vpop.f32.mrf.mxu0
        %v2789 = vadd.f32 %v2611, %v2788
        %v2790 = vpop.f32.mrf.mxu0
        %2791 = vdwg.mxu0
        %2792 = vmatpush.bf16.msra.mxu0 %v2744
        %2793 = vmatpush.bf16.msra.mxu0 %v2740
        %2794 = vmatpush.bf16.msra.mxu0 %v2736
        %2795 = vmatpush.bf16.msra.mxu0 %v2732
        %2796 = vmatpush.bf16.msra.mxu0 %v2728
        %2797 = vmatpush.bf16.msra.mxu0 %v2724
        %2798 = vmatpush.bf16.msra.mxu0 %v2720
        %2799 = vmatpush.bf16.msra.mxu0 %v2716
        %2800 = vmatmul.bf16.gmra.mxu0 %v2574
        %v2801 = vpop.f32.mrf.mxu0
        %v2802 = vadd.f32 %v2612, %v2801
        %v2803 = vpop.f32.mrf.mxu0
        %2804 = vdwg.mxu0
        %2805 = vmatpush.bf16.msra.mxu0 %v2745
        %2806 = vmatpush.bf16.msra.mxu0 %v2741
        %2807 = vmatpush.bf16.msra.mxu0 %v2737
        %2808 = vmatpush.bf16.msra.mxu0 %v2733
        %2809 = vmatpush.bf16.msra.mxu0 %v2729
        %2810 = vmatpush.bf16.msra.mxu0 %v2725
        %2811 = vmatpush.bf16.msra.mxu0 %v2721
        %2812 = vmatpush.bf16.msra.mxu0 %v2717
        %2813 = vmatmul.bf16.gmra.mxu0 %v2574
        %v2814 = vpop.f32.mrf.mxu0
        %v2815 = vadd.f32 %v2613, %v2814
        %v2816 = vpop.f32.mrf.mxu0
        %2817 = vdwg.mxu0
        %2818 = vmatpush.bf16.msra.mxu0 %v2746
        %2819 = vmatpush.bf16.msra.mxu0 %v2742
        %2820 = vmatpush.bf16.msra.mxu0 %v2738
        %2821 = vmatpush.bf16.msra.mxu0 %v2734
        %2822 = vmatpush.bf16.msra.mxu0 %v2730
        %2823 = vmatpush.bf16.msra.mxu0 %v2726
        %2824 = vmatpush.bf16.msra.mxu0 %v2722
        %2825 = vmatpush.bf16.msra.mxu0 %v2718
        %2826 = vmatmul.bf16.gmra.mxu0 %v2574
        %v2827 = vpop.f32.mrf.mxu0
        %v2828 = vadd.f32 %v2614, %v2827
        %v2829 = vpop.f32.mrf.mxu0
        %2830 = vdwg.mxu0
        %v2831 = vmax.f32 %v2789, 0.0
        %v2832 = vmax.f32 %v2802, 0.0
        %v2833 = vmax.f32 %v2815, 0.0
        %v2834 = vmax.f32 %v2828, 0.0
        %v2835 = vpack.c.bf16 %v2831, %v2831
        %v2836 = vpack.c.bf16 %v2832, %v2832
        %v2837 = vpack.c.bf16 %v2833, %v2833
        %v2838 = vpack.c.bf16 %v2834, %v2834
        %s2839 = scalar_lea.vmem [#allocation9], 256
        %v2840 = vld [vmem:[%s2839] sm:$0xf]
        %v2841 = vld [vmem:[%s2839 + $0x4] sm:$0xf]
        %v2842 = vld [vmem:[%s2839 + $0x8] sm:$0xf]
        %v2843 = vld [vmem:[%s2839 + $0xc] sm:$0xf]
        %v2844 = vld [vmem:[%s2839 + $0x10] sm:$0xf]
        %v2845 = vld [vmem:[%s2839 + $0x14] sm:$0xf]
        %v2846 = vld [vmem:[%s2839 + $0x18] sm:$0xf]
        %v2847 = vld [vmem:[%s2839 + $0x1c] sm:$0xf]
        %v2848 = vld [vmem:[%s2839 + $0x20] sm:$0xf]
        %v2849 = vld [vmem:[%s2839 + $0x24] sm:$0xf]
        %v2850 = vld [vmem:[%s2839 + $0x28] sm:$0xf]
        %v2851 = vld [vmem:[%s2839 + $0x2c] sm:$0xf]
        %v2852 = vld [vmem:[%s2839 + $0x30] sm:$0xf]
        %v2853 = vld [vmem:[%s2839 + $0x34] sm:$0xf]
        %v2854 = vld [vmem:[%s2839 + $0x38] sm:$0xf]
        %v2855 = vld [vmem:[%s2839 + $0x3c] sm:$0xf]
        %v2856 = vld [vmem:[%s2839 + $0x40] sm:$0xf]
        %v2857 = vld [vmem:[%s2839 + $0x44] sm:$0xf]
        %v2858 = vld [vmem:[%s2839 + $0x48] sm:$0xf]
        %v2859 = vld [vmem:[%s2839 + $0x4c] sm:$0xf]
        %v2860 = vld [vmem:[%s2839 + $0x50] sm:$0xf]
        %v2861 = vld [vmem:[%s2839 + $0x54] sm:$0xf]
        %v2862 = vld [vmem:[%s2839 + $0x58] sm:$0xf]
        %v2863 = vld [vmem:[%s2839 + $0x5c] sm:$0xf]
        %v2864 = vld [vmem:[%s2839 + $0x60] sm:$0xf]
        %v2865 = vld [vmem:[%s2839 + $0x64] sm:$0xf]
        %v2866 = vld [vmem:[%s2839 + $0x68] sm:$0xf]
        %v2867 = vld [vmem:[%s2839 + $0x6c] sm:$0xf]
        %v2868 = vld [vmem:[%s2839 + $0x70] sm:$0xf]
        %v2869 = vld [vmem:[%s2839 + $0x74] sm:$0xf]
        %v2870 = vld [vmem:[%s2839 + $0x78] sm:$0xf]
        %v2871 = vld [vmem:[%s2839 + $0x7c] sm:$0xf]
        %v2872 = vld [vmem:[%s2839 + $0x80] sm:$0xf]
        %v2873 = vld [vmem:[%s2839 + $0x84] sm:$0xf]
        %v2874 = vld [vmem:[%s2839 + $0x88] sm:$0xf]
        %v2875 = vld [vmem:[%s2839 + $0x8c] sm:$0xf]
        %v2876 = vld [vmem:[%s2839 + $0x90] sm:$0xf]
        %v2877 = vld [vmem:[%s2839 + $0x94] sm:$0xf]
        %v2878 = vld [vmem:[%s2839 + $0x98] sm:$0xf]
        %v2879 = vld [vmem:[%s2839 + $0x9c] sm:$0xf]
        %v2880 = vld [vmem:[%s2839 + $0xa0] sm:$0xf]
        %v2881 = vld [vmem:[%s2839 + $0xa4] sm:$0xf]
        %v2882 = vld [vmem:[%s2839 + $0xa8] sm:$0xf]
        %v2883 = vld [vmem:[%s2839 + $0xac] sm:$0xf]
        %v2884 = vld [vmem:[%s2839 + $0xb0] sm:$0xf]
        %v2885 = vld [vmem:[%s2839 + $0xb4] sm:$0xf]
        %v2886 = vld [vmem:[%s2839 + $0xb8] sm:$0xf]
        %v2887 = vld [vmem:[%s2839 + $0xbc] sm:$0xf]
        %v2888 = vld [vmem:[%s2839 + $0xc0] sm:$0xf]
        %v2889 = vld [vmem:[%s2839 + $0xc4] sm:$0xf]
        %v2890 = vld [vmem:[%s2839 + $0xc8] sm:$0xf]
        %v2891 = vld [vmem:[%s2839 + $0xcc] sm:$0xf]
        %v2892 = vld [vmem:[%s2839 + $0xd0] sm:$0xf]
        %v2893 = vld [vmem:[%s2839 + $0xd4] sm:$0xf]
        %v2894 = vld [vmem:[%s2839 + $0xd8] sm:$0xf]
        %v2895 = vld [vmem:[%s2839 + $0xdc] sm:$0xf]
        %v2896 = vld [vmem:[%s2839 + $0xe0] sm:$0xf]
        %v2897 = vld [vmem:[%s2839 + $0xe4] sm:$0xf]
        %v2898 = vld [vmem:[%s2839 + $0xe8] sm:$0xf]
        %v2899 = vld [vmem:[%s2839 + $0xec] sm:$0xf]
        %v2900 = vld [vmem:[%s2839 + $0xf0] sm:$0xf]
        %v2901 = vld [vmem:[%s2839 + $0xf4] sm:$0xf]
        %v2902 = vld [vmem:[%s2839 + $0xf8] sm:$0xf]
        %v2903 = vld [vmem:[%s2839 + $0xfc] sm:$0xf]
        %s2904 = scalar_lea.vmem [#allocation10], 1
        %v2905 = vld [vmem:[%s2904] sm:$0x1]
        %v2907 = vperm.slane %v2905, 0
        %v2973 = vunpack.c.l.b16 %v2840
        %v2974 = vunpack.c.l.b16 %v2841
        %v2975 = vunpack.c.l.b16 %v2842
        %v2976 = vunpack.c.l.b16 %v2843
        %v2977 = vunpack.c.l.b16 %v2844
        %v2978 = vunpack.c.l.b16 %v2845
        %v2979 = vunpack.c.l.b16 %v2846
        %v2980 = vunpack.c.l.b16 %v2847
        %v2981 = vunpack.c.l.b16 %v2848
        %v2982 = vunpack.c.l.b16 %v2849
        %v2983 = vunpack.c.l.b16 %v2850
        %v2984 = vunpack.c.l.b16 %v2851
        %v2985 = vunpack.c.l.b16 %v2852
        %v2986 = vunpack.c.l.b16 %v2853
        %v2987 = vunpack.c.l.b16 %v2854
        %v2988 = vunpack.c.l.b16 %v2855
        %v2989 = vunpack.c.l.b16 %v2856
        %v2990 = vunpack.c.l.b16 %v2857
        %v2991 = vunpack.c.l.b16 %v2858
        %v2992 = vunpack.c.l.b16 %v2859
        %v2993 = vunpack.c.l.b16 %v2860
        %v2994 = vunpack.c.l.b16 %v2861
        %v2995 = vunpack.c.l.b16 %v2862
        %v2996 = vunpack.c.l.b16 %v2863
        %v2997 = vunpack.c.l.b16 %v2864
        %v2998 = vunpack.c.l.b16 %v2865
        %v2999 = vunpack.c.l.b16 %v2866
        %v3000 = vunpack.c.l.b16 %v2867
        %v3001 = vunpack.c.l.b16 %v2868
        %v3002 = vunpack.c.l.b16 %v2869
        %v3003 = vunpack.c.l.b16 %v2870
        %v3004 = vunpack.c.l.b16 %v2871
        %v3005 = vunpack.c.l.b16 %v2872
        %v3006 = vunpack.c.l.b16 %v2873
        %v3007 = vunpack.c.l.b16 %v2874
        %v3008 = vunpack.c.l.b16 %v2875
        %v3009 = vunpack.c.l.b16 %v2876
        %v3010 = vunpack.c.l.b16 %v2877
        %v3011 = vunpack.c.l.b16 %v2878
        %v3012 = vunpack.c.l.b16 %v2879
        %v3013 = vunpack.c.l.b16 %v2880
        %v3014 = vunpack.c.l.b16 %v2881
        %v3015 = vunpack.c.l.b16 %v2882
        %v3016 = vunpack.c.l.b16 %v2883
        %v3017 = vunpack.c.l.b16 %v2884
        %v3018 = vunpack.c.l.b16 %v2885
        %v3019 = vunpack.c.l.b16 %v2886
        %v3020 = vunpack.c.l.b16 %v2887
        %v3021 = vunpack.c.l.b16 %v2888
        %v3022 = vunpack.c.l.b16 %v2889
        %v3023 = vunpack.c.l.b16 %v2890
        %v3024 = vunpack.c.l.b16 %v2891
        %v3025 = vunpack.c.l.b16 %v2892
        %v3026 = vunpack.c.l.b16 %v2893
        %v3027 = vunpack.c.l.b16 %v2894
        %v3028 = vunpack.c.l.b16 %v2895
        %v3029 = vunpack.c.l.b16 %v2896
        %v3030 = vunpack.c.l.b16 %v2897
        %v3031 = vunpack.c.l.b16 %v2898
        %v3032 = vunpack.c.l.b16 %v2899
        %v3033 = vunpack.c.l.b16 %v2900
        %v3034 = vunpack.c.l.b16 %v2901
        %v3035 = vunpack.c.l.b16 %v2902
        %v3036 = vunpack.c.l.b16 %v2903
        %v3037 = vpack.c.b16 %v2974, %v2973
        %v3038 = vpack.c.b16 %v2976, %v2975
        %v3039 = vpack.c.b16 %v2978, %v2977
        %v3040 = vpack.c.b16 %v2980, %v2979
        %v3041 = vpack.c.b16 %v2982, %v2981
        %v3042 = vpack.c.b16 %v2984, %v2983
        %v3043 = vpack.c.b16 %v2986, %v2985
        %v3044 = vpack.c.b16 %v2988, %v2987
        %v3045 = vpack.c.b16 %v2990, %v2989
        %v3046 = vpack.c.b16 %v2992, %v2991
        %v3047 = vpack.c.b16 %v2994, %v2993
        %v3048 = vpack.c.b16 %v2996, %v2995
        %v3049 = vpack.c.b16 %v2998, %v2997
        %v3050 = vpack.c.b16 %v3000, %v2999
        %v3051 = vpack.c.b16 %v3002, %v3001
        %v3052 = vpack.c.b16 %v3004, %v3003
        %v3053 = vpack.c.b16 %v3006, %v3005
        %v3054 = vpack.c.b16 %v3008, %v3007
        %v3055 = vpack.c.b16 %v3010, %v3009
        %v3056 = vpack.c.b16 %v3012, %v3011
        %v3057 = vpack.c.b16 %v3014, %v3013
        %v3058 = vpack.c.b16 %v3016, %v3015
        %v3059 = vpack.c.b16 %v3018, %v3017
        %v3060 = vpack.c.b16 %v3020, %v3019
        %v3061 = vpack.c.b16 %v3022, %v3021
        %v3062 = vpack.c.b16 %v3024, %v3023
        %v3063 = vpack.c.b16 %v3026, %v3025
        %v3064 = vpack.c.b16 %v3028, %v3027
        %v3065 = vpack.c.b16 %v3030, %v3029
        %v3066 = vpack.c.b16 %v3032, %v3031
        %v3067 = vpack.c.b16 %v3034, %v3033
        %v3068 = vpack.c.b16 %v3036, %v3035
        %3101 = vmatpush.bf16.msra.mxu0 %v3044
        %3102 = vmatpush.bf16.msra.mxu0 %v3043
        %3103 = vmatpush.bf16.msra.mxu0 %v3042
        %3104 = vmatpush.bf16.msra.mxu0 %v3041
        %3105 = vmatpush.bf16.msra.mxu0 %v3040
        %3106 = vmatpush.bf16.msra.mxu0 %v3039
        %3107 = vmatpush.bf16.msra.mxu0 %v3038
        %3108 = vmatpush.bf16.msra.mxu0 %v3037
        %3109 = vmatmul.bf16.gmra.mxu0 %v2835
        %v3110 = vpop.f32.mrf.mxu0
        %v3111 = vadd.f32 %v2907, %v3110
        %v3112 = vpop.f32.mrf.mxu0
        %3113 = vdwg.mxu0
        %3114 = vmatpush.bf16.msra.mxu0 %v3052
        %3115 = vmatpush.bf16.msra.mxu0 %v3051
        %3116 = vmatpush.bf16.msra.mxu0 %v3050
        %3117 = vmatpush.bf16.msra.mxu0 %v3049
        %3118 = vmatpush.bf16.msra.mxu0 %v3048
        %3119 = vmatpush.bf16.msra.mxu0 %v3047
        %3120 = vmatpush.bf16.msra.mxu0 %v3046
        %3121 = vmatpush.bf16.msra.mxu0 %v3045
        %3122 = vmatmul.bf16.gmra.mxu0 %v2836
        %v3123 = vpop.f32.mrf.mxu0
        %v3124 = vadd.f32 %v3111, %v3123
        %v3125 = vpop.f32.mrf.mxu0
        %3126 = vdwg.mxu0
        %3127 = vmatpush.bf16.msra.mxu0 %v3060
        %3128 = vmatpush.bf16.msra.mxu0 %v3059
        %3129 = vmatpush.bf16.msra.mxu0 %v3058
        %3130 = vmatpush.bf16.msra.mxu0 %v3057
        %3131 = vmatpush.bf16.msra.mxu0 %v3056
        %3132 = vmatpush.bf16.msra.mxu0 %v3055
        %3133 = vmatpush.bf16.msra.mxu0 %v3054
        %3134 = vmatpush.bf16.msra.mxu0 %v3053
        %3135 = vmatmul.bf16.gmra.mxu0 %v2837
        %v3136 = vpop.f32.mrf.mxu0
        %v3137 = vadd.f32 %v3124, %v3136
        %v3138 = vpop.f32.mrf.mxu0
        %3139 = vdwg.mxu0
        %3140 = vmatpush.bf16.msra.mxu0 %v3068
        %3141 = vmatpush.bf16.msra.mxu0 %v3067
        %3142 = vmatpush.bf16.msra.mxu0 %v3066
        %3143 = vmatpush.bf16.msra.mxu0 %v3065
        %3144 = vmatpush.bf16.msra.mxu0 %v3064
        %3145 = vmatpush.bf16.msra.mxu0 %v3063
        %3146 = vmatpush.bf16.msra.mxu0 %v3062
        %3147 = vmatpush.bf16.msra.mxu0 %v3061
        %3148 = vmatmul.bf16.gmra.mxu0 %v2838
        %v3149 = vpop.f32.mrf.mxu0
        %v3150 = vadd.f32 %v3137, %v3149
        %v3151 = vpop.f32.mrf.mxu0
        %3152 = vdwg.mxu0
        %v3153 = vadd.f32 %v2573, %v3150
        %s3154 = scalar_lea.vmem [#allocation12], 1
        %v3155 = vld [vmem:[%s3154] sm:$0x1]
        %s3156 = scalar_lea.vmem [#allocation13], 1
        %v3157 = vld [vmem:[%s3156] sm:$0x1]
        %3158 = vadd.xlane.f32.xlu0 %v3153
        %v3159 = vpop.xlane.xlu0 %3158
        %v3160 = vmul.f32 %v3159, %v1371
        %v3161 = vsub.f32 %v3153, %v3160
        %v3162 = vmul.f32 %v3161, %v3161
        %3163 = vadd.xlane.f32.xlu0 %v3162
        %v3164 = vpop.xlane.xlu0 %3163
        %v3165 = vmul.f32 %v3164, %v1371
        %v3166 = vadd.f32 %v3165, 1e-05
        %v3167 = vrsqrt.pop %v3166
        %v3168 = vmul.f32 %v3167, %v3166
        %v3169 = vmul.f32 %v3168, %v3167
        %v3170 = vmul.f32 0.5, %v3169
        %v3171 = vsub.f32 1.5, %v3170
        %v3172 = vmul.f32 %v3167, %v3171
        %vm3173 = vweird.f32 %v3166
        %vm3174 = vweird.f32 %v3167
        %vm3175 = vmor %vm3173, %vm3174
        %v3176 = vsel %vm3175, %v3167, %v3172
        %v3177 = vmul.f32 %v3161, %v3176
        %v3179 = vperm.slane %v3155, 0
        %v3181 = vmul.f32 %v3177, %v3179
        %v3183 = vperm.slane %v3157, 0
        %v3185 = vadd.f32 %v3181, %v3183
        %v3186 = vpack.c.bf16 %v3185, %v3185
        %s3187 = scalar_lea.vmem [#allocation4], 384
        %v3188 = vld [vmem:[%s3187] sm:$0xff]
        %v3189 = vld [vmem:[%s3187 + $0x8] sm:$0xf]
        %v3190 = vld [vmem:[%s3187 + $0xc] sm:$0xff]
        %v3191 = vld [vmem:[%s3187 + $0x14] sm:$0xf]
        %v3192 = vld [vmem:[%s3187 + $0x18] sm:$0xff]
        %v3193 = vld [vmem:[%s3187 + $0x20] sm:$0xf]
        %v3194 = vld [vmem:[%s3187 + $0x24] sm:$0xff]
        %v3195 = vld [vmem:[%s3187 + $0x2c] sm:$0xf]
        %v3196 = vld [vmem:[%s3187 + $0x30] sm:$0xff]
        %v3197 = vld [vmem:[%s3187 + $0x38] sm:$0xf]
        %v3198 = vld [vmem:[%s3187 + $0x3c] sm:$0xff]
        %v3199 = vld [vmem:[%s3187 + $0x44] sm:$0xf]
        %v3200 = vld [vmem:[%s3187 + $0x48] sm:$0xff]
        %v3201 = vld [vmem:[%s3187 + $0x50] sm:$0xf]
        %v3202 = vld [vmem:[%s3187 + $0x54] sm:$0xff]
        %v3203 = vld [vmem:[%s3187 + $0x5c] sm:$0xf]
        %v3204 = vld [vmem:[%s3187 + $0x60] sm:$0xff]
        %v3205 = vld [vmem:[%s3187 + $0x68] sm:$0xf]
        %v3206 = vld [vmem:[%s3187 + $0x6c] sm:$0xff]
        %v3207 = vld [vmem:[%s3187 + $0x74] sm:$0xf]
        %v3208 = vld [vmem:[%s3187 + $0x78] sm:$0xff]
        %v3209 = vld [vmem:[%s3187 + $0x80] sm:$0xf]
        %v3210 = vld [vmem:[%s3187 + $0x84] sm:$0xff]
        %v3211 = vld [vmem:[%s3187 + $0x8c] sm:$0xf]
        %v3212 = vld [vmem:[%s3187 + $0x90] sm:$0xff]
        %v3213 = vld [vmem:[%s3187 + $0x98] sm:$0xf]
        %v3214 = vld [vmem:[%s3187 + $0x9c] sm:$0xff]
        %v3215 = vld [vmem:[%s3187 + $0xa4] sm:$0xf]
        %v3216 = vld [vmem:[%s3187 + $0xa8] sm:$0xff]
        %v3217 = vld [vmem:[%s3187 + $0xb0] sm:$0xf]
        %v3218 = vld [vmem:[%s3187 + $0xb4] sm:$0xff]
        %v3219 = vld [vmem:[%s3187 + $0xbc] sm:$0xf]
        %s3220 = scalar_lea.vmem %s5, 6
        %v3221 = vld [vmem:[%s3220] sm:$0x7]
        %v3223 = vperm.slane %v3221, 0
        %v3224 = vperm.slane %v3221, 1
        %v3225 = vperm.slane %v3221, 2
        %v3261 = vunpack.c.l.b16 %v3188
        %v3262 = vunpack.c.h.b16 %v3188
        %v3263 = vunpack.c.l.b16 %v3189
        %v3264 = vunpack.c.l.b16 %v3190
        %v3265 = vunpack.c.h.b16 %v3190
        %v3266 = vunpack.c.l.b16 %v3191
        %v3267 = vunpack.c.l.b16 %v3192
        %v3268 = vunpack.c.h.b16 %v3192
        %v3269 = vunpack.c.l.b16 %v3193
        %v3270 = vunpack.c.l.b16 %v3194
        %v3271 = vunpack.c.h.b16 %v3194
        %v3272 = vunpack.c.l.b16 %v3195
        %v3273 = vunpack.c.l.b16 %v3196
        %v3274 = vunpack.c.h.b16 %v3196
        %v3275 = vunpack.c.l.b16 %v3197
        %v3276 = vunpack.c.l.b16 %v3198
        %v3277 = vunpack.c.h.b16 %v3198
        %v3278 = vunpack.c.l.b16 %v3199
        %v3279 = vunpack.c.l.b16 %v3200
        %v3280 = vunpack.c.h.b16 %v3200
        %v3281 = vunpack.c.l.b16 %v3201
        %v3282 = vunpack.c.l.b16 %v3202
        %v3283 = vunpack.c.h.b16 %v3202
        %v3284 = vunpack.c.l.b16 %v3203
        %v3285 = vunpack.c.l.b16 %v3204
        %v3286 = vunpack.c.h.b16 %v3204
        %v3287 = vunpack.c.l.b16 %v3205
        %v3288 = vunpack.c.l.b16 %v3206
        %v3289 = vunpack.c.h.b16 %v3206
        %v3290 = vunpack.c.l.b16 %v3207
        %v3291 = vunpack.c.l.b16 %v3208
        %v3292 = vunpack.c.h.b16 %v3208
        %v3293 = vunpack.c.l.b16 %v3209
        %v3294 = vunpack.c.l.b16 %v3210
        %v3295 = vunpack.c.h.b16 %v3210
        %v3296 = vunpack.c.l.b16 %v3211
        %v3297 = vunpack.c.l.b16 %v3212
        %v3298 = vunpack.c.h.b16 %v3212
        %v3299 = vunpack.c.l.b16 %v3213
        %v3300 = vunpack.c.l.b16 %v3214
        %v3301 = vunpack.c.h.b16 %v3214
        %v3302 = vunpack.c.l.b16 %v3215
        %v3303 = vunpack.c.l.b16 %v3216
        %v3304 = vunpack.c.h.b16 %v3216
        %v3305 = vunpack.c.l.b16 %v3217
        %v3306 = vunpack.c.l.b16 %v3218
        %v3307 = vunpack.c.h.b16 %v3218
        %v3308 = vunpack.c.l.b16 %v3219
        %v3309 = vpack.c.b16 %v3264, %v3261
        %v3310 = vpack.c.b16 %v3265, %v3262
        %v3311 = vpack.c.b16 %v3266, %v3263
        %v3312 = vpack.c.b16 %v3270, %v3267
        %v3313 = vpack.c.b16 %v3271, %v3268
        %v3314 = vpack.c.b16 %v3272, %v3269
        %v3315 = vpack.c.b16 %v3276, %v3273
        %v3316 = vpack.c.b16 %v3277, %v3274
        %v3317 = vpack.c.b16 %v3278, %v3275
        %v3318 = vpack.c.b16 %v3282, %v3279
        %v3319 = vpack.c.b16 %v3283, %v3280
        %v3320 = vpack.c.b16 %v3284, %v3281
        %v3321 = vpack.c.b16 %v3288, %v3285
        %v3322 = vpack.c.b16 %v3289, %v3286
        %v3323 = vpack.c.b16 %v3290, %v3287
        %v3324 = vpack.c.b16 %v3294, %v3291
        %v3325 = vpack.c.b16 %v3295, %v3292
        %v3326 = vpack.c.b16 %v3296, %v3293
        %v3327 = vpack.c.b16 %v3300, %v3297
        %v3328 = vpack.c.b16 %v3301, %v3298
        %v3329 = vpack.c.b16 %v3302, %v3299
        %v3330 = vpack.c.b16 %v3306, %v3303
        %v3331 = vpack.c.b16 %v3307, %v3304
        %v3332 = vpack.c.b16 %v3308, %v3305
        %3357 = vmatpush.bf16.msra.mxu0 %v3330
        %3358 = vmatpush.bf16.msra.mxu0 %v3327
        %3359 = vmatpush.bf16.msra.mxu0 %v3324
        %3360 = vmatpush.bf16.msra.mxu0 %v3321
        %3361 = vmatpush.bf16.msra.mxu0 %v3318
        %3362 = vmatpush.bf16.msra.mxu0 %v3315
        %3363 = vmatpush.bf16.msra.mxu0 %v3312
        %3364 = vmatpush.bf16.msra.mxu0 %v3309
        %3365 = vmatmul.bf16.gmra.mxu0 %v3186
        %v3366 = vpop.f32.mrf.mxu0
        %v3367 = vadd.f32 %v3223, %v3366
        %v3368 = vpop.f32.mrf.mxu0
        %3369 = vdwg.mxu0
        %3370 = vmatpush.bf16.msra.mxu0 %v3331
        %3371 = vmatpush.bf16.msra.mxu0 %v3328
        %3372 = vmatpush.bf16.msra.mxu0 %v3325
        %3373 = vmatpush.bf16.msra.mxu0 %v3322
        %3374 = vmatpush.bf16.msra.mxu0 %v3319
        %3375 = vmatpush.bf16.msra.mxu0 %v3316
        %3376 = vmatpush.bf16.msra.mxu0 %v3313
        %3377 = vmatpush.bf16.msra.mxu0 %v3310
        %3378 = vmatmul.bf16.gmra.mxu0 %v3186
        %v3379 = vpop.f32.mrf.mxu0
        %v3380 = vadd.f32 %v3224, %v3379
        %v3381 = vpop.f32.mrf.mxu0
        %3382 = vdwg.mxu0
        %3383 = vmatpush.bf16.msra.mxu0 %v3332
        %3384 = vmatpush.bf16.msra.mxu0 %v3329
        %3385 = vmatpush.bf16.msra.mxu0 %v3326
        %3386 = vmatpush.bf16.msra.mxu0 %v3323
        %3387 = vmatpush.bf16.msra.mxu0 %v3320
        %3388 = vmatpush.bf16.msra.mxu0 %v3317
        %3389 = vmatpush.bf16.msra.mxu0 %v3314
        %3390 = vmatpush.bf16.msra.mxu0 %v3311
        %3391 = vmatmul.bf16.gmra.mxu0 %v3186
        %v3392 = vpop.f32.mrf.mxu0
        %v3393 = vadd.f32 %v3225, %v3392
        %v3394 = vpop.f32.mrf.mxu0
        %3395 = vdwg.mxu0
        %v3396 = vpack.c.bf16 %v3367, %v3367
        %v3397 = vpack.c.bf16 %v3380, %v3380
        %v3398 = vpack.c.bf16 %v3393, %v3393
        %v3400 = vsel %vm1033, %v3396, 0
        %v3403 = vsel %vm1033, %v3397, 0
        %3405 = vmatpush.bf16.xpose.msra.mxu0 0
        %3406 = vmatpush.bf16.xpose.msra.mxu0 0
        %3407 = vmatpush.bf16.xpose.msra.mxu0 0
        %3408 = vmatpush.bf16.xpose.msra.mxu0 0
        %3409 = vmatpush.bf16.xpose.msra.mxu0 0
        %3410 = vmatpush.bf16.xpose.msra.mxu0 0
        %3411 = vmatpush.bf16.xpose.msra.mxu0 0
        %3412 = vmatpush.bf16.xpose.msra.mxu0 %v3403
        %3413 = vmatmul.bf16.gmra.mxu0 %v3400
        %v3414 = vpop.f32.mrf.mxu0
        %v3415 = vadd.f32 0.0, %v3414
        %v3416 = vpop.f32.mrf.mxu0
        %3417 = vdwg.mxu0
        %v3418 = vmul.f32 %v3415, 0.17677669
        %v3419 = vsel %vm1054, %v3418, -inf
        %3420 = vmax.xlane.f32.xlu0 %v3419
        %v3421 = vpop.xlane.xlu0 %3420
        %v3422 = vsub.f32 %v3418, %v3421
        %v3423 = vmul.f32 %v3422, 1.442695
        %v3424 = vpow.pop %v3423
        %v3425 = vsel %vm1054, %v3424, 0.0
        %3426 = vadd.xlane.f32.xlu0 %v3425
        %v3427 = vpop.xlane.xlu0 %3426
        %v3428 = vrcp.pop %v3427
        %v3429 = vmul.f32 %v3424, %v3428
        %v3430 = vpack.c.bf16 %v3429, %v3429
        %v3432 = vsel %vm1054, %v3430, 0
        %v3435 = vsel %vm1070, %v3398, 0
        %3437 = vmatpush.bf16.msra.mxu0 0
        %3438 = vmatpush.bf16.msra.mxu0 0
        %3439 = vmatpush.bf16.msra.mxu0 0
        %3440 = vmatpush.bf16.msra.mxu0 0
        %3441 = vmatpush.bf16.msra.mxu0 0
        %3442 = vmatpush.bf16.msra.mxu0 0
        %3443 = vmatpush.bf16.msra.mxu0 0
        %3444 = vmatpush.bf16.msra.mxu0 %v3435
        %3445 = vmatmul.bf16.gmra.mxu0 %v3432
        %v3446 = vpop.f32.mrf.mxu0
        %v3447 = vadd.f32 0.0, %v3446
        %v3448 = vpop.f32.mrf.mxu0
        %3449 = vdwg.mxu0
        %3451 = vrot.lane.b32.xlu0 %v3396, 96
        %v3452 = vpop.permute.xlu0 %3451
        %3454 = vrot.lane.b32.xlu0 %v3397, 96
        %v3455 = vpop.permute.xlu0 %3454
        %v3457 = vsel %vm1033, %v3452, 0
        %v3460 = vsel %vm1033, %v3455, 0
        %3462 = vmatpush.bf16.xpose.msra.mxu0 0
        %3463 = vmatpush.bf16.xpose.msra.mxu0 0
        %3464 = vmatpush.bf16.xpose.msra.mxu0 0
        %3465 = vmatpush.bf16.xpose.msra.mxu0 0
        %3466 = vmatpush.bf16.xpose.msra.mxu0 0
        %3467 = vmatpush.bf16.xpose.msra.mxu0 0
        %3468 = vmatpush.bf16.xpose.msra.mxu0 0
        %3469 = vmatpush.bf16.xpose.msra.mxu0 %v3460
        %3470 = vmatmul.bf16.gmra.mxu0 %v3457
        %v3471 = vpop.f32.mrf.mxu0
        %v3472 = vadd.f32 0.0, %v3471
        %v3473 = vpop.f32.mrf.mxu0
        %3474 = vdwg.mxu0
        %v3475 = vmul.f32 %v3472, 0.17677669
        %v3476 = vsel %vm1054, %v3475, -inf
        %3477 = vmax.xlane.f32.xlu0 %v3476
        %v3478 = vpop.xlane.xlu0 %3477
        %v3479 = vsub.f32 %v3475, %v3478
        %v3480 = vmul.f32 %v3479, 1.442695
        %v3481 = vpow.pop %v3480
        %v3482 = vsel %vm1054, %v3481, 0.0
        %3483 = vadd.xlane.f32.xlu0 %v3482
        %v3484 = vpop.xlane.xlu0 %3483
        %v3485 = vrcp.pop %v3484
        %v3486 = vmul.f32 %v3481, %v3485
        %v3487 = vpack.c.bf16 %v3486, %v3486
        %3489 = vrot.lane.b32.xlu0 %v3398, 96
        %v3490 = vpop.permute.xlu0 %3489
        %v3492 = vsel %vm1054, %v3487, 0
        %v3495 = vsel %vm1070, %v3490, 0
        %3497 = vmatpush.bf16.msra.mxu0 0
        %3498 = vmatpush.bf16.msra.mxu0 0
        %3499 = vmatpush.bf16.msra.mxu0 0
        %3500 = vmatpush.bf16.msra.mxu0 0
        %3501 = vmatpush.bf16.msra.mxu0 0
        %3502 = vmatpush.bf16.msra.mxu0 0
        %3503 = vmatpush.bf16.msra.mxu0 0
        %3504 = vmatpush.bf16.msra.mxu0 %v3495
        %3505 = vmatmul.bf16.gmra.mxu0 %v3492
        %v3506 = vpop.f32.mrf.mxu0
        %v3507 = vadd.f32 0.0, %v3506
        %v3508 = vpop.f32.mrf.mxu0
        %3509 = vdwg.mxu0
        %3510 = vrot.lane.b32.xlu0 %v3396, 64
        %v3511 = vpop.permute.xlu0 %3510
        %3512 = vrot.lane.b32.xlu0 %v3397, 64
        %v3513 = vpop.permute.xlu0 %3512
        %v3515 = vsel %vm1033, %v3511, 0
        %v3518 = vsel %vm1033, %v3513, 0
        %3520 = vmatpush.bf16.xpose.msra.mxu0 0
        %3521 = vmatpush.bf16.xpose.msra.mxu0 0
        %3522 = vmatpush.bf16.xpose.msra.mxu0 0
        %3523 = vmatpush.bf16.xpose.msra.mxu0 0
        %3524 = vmatpush.bf16.xpose.msra.mxu0 0
        %3525 = vmatpush.bf16.xpose.msra.mxu0 0
        %3526 = vmatpush.bf16.xpose.msra.mxu0 0
        %3527 = vmatpush.bf16.xpose.msra.mxu0 %v3518
        %3528 = vmatmul.bf16.gmra.mxu0 %v3515
        %v3529 = vpop.f32.mrf.mxu0
        %v3530 = vadd.f32 0.0, %v3529
        %v3531 = vpop.f32.mrf.mxu0
        %3532 = vdwg.mxu0
        %v3533 = vmul.f32 %v3530, 0.17677669
        %v3534 = vsel %vm1054, %v3533, -inf
        %3535 = vmax.xlane.f32.xlu0 %v3534
        %v3536 = vpop.xlane.xlu0 %3535
        %v3537 = vsub.f32 %v3533, %v3536
        %v3538 = vmul.f32 %v3537, 1.442695
        %v3539 = vpow.pop %v3538
        %v3540 = vsel %vm1054, %v3539, 0.0
        %3541 = vadd.xlane.f32.xlu0 %v3540
        %v3542 = vpop.xlane.xlu0 %3541
        %v3543 = vrcp.pop %v3542
        %v3544 = vmul.f32 %v3539, %v3543
        %v3545 = vpack.c.bf16 %v3544, %v3544
        %3546 = vrot.lane.b32.xlu0 %v3398, 64
        %v3547 = vpop.permute.xlu0 %3546
        %v3549 = vsel %vm1054, %v3545, 0
        %v3552 = vsel %vm1070, %v3547, 0
        %3554 = vmatpush.bf16.msra.mxu0 0
        %3555 = vmatpush.bf16.msra.mxu0 0
        %3556 = vmatpush.bf16.msra.mxu0 0
        %3557 = vmatpush.bf16.msra.mxu0 0
        %3558 = vmatpush.bf16.msra.mxu0 0
        %3559 = vmatpush.bf16.msra.mxu0 0
        %3560 = vmatpush.bf16.msra.mxu0 0
        %3561 = vmatpush.bf16.msra.mxu0 %v3552
        %3562 = vmatmul.bf16.gmra.mxu0 %v3549
        %v3563 = vpop.f32.mrf.mxu0
        %v3564 = vadd.f32 0.0, %v3563
        %v3565 = vpop.f32.mrf.mxu0
        %3566 = vdwg.mxu0
        %3567 = vrot.lane.b32.xlu0 %v3396, 32
        %v3568 = vpop.permute.xlu0 %3567
        %3569 = vrot.lane.b32.xlu0 %v3397, 32
        %v3570 = vpop.permute.xlu0 %3569
        %v3572 = vsel %vm1033, %v3568, 0
        %v3575 = vsel %vm1033, %v3570, 0
        %3577 = vmatpush.bf16.xpose.msra.mxu0 0
        %3578 = vmatpush.bf16.xpose.msra.mxu0 0
        %3579 = vmatpush.bf16.xpose.msra.mxu0 0
        %3580 = vmatpush.bf16.xpose.msra.mxu0 0
        %3581 = vmatpush.bf16.xpose.msra.mxu0 0
        %3582 = vmatpush.bf16.xpose.msra.mxu0 0
        %3583 = vmatpush.bf16.xpose.msra.mxu0 0
        %3584 = vmatpush.bf16.xpose.msra.mxu0 %v3575
        %3585 = vmatmul.bf16.gmra.mxu0 %v3572
        %v3586 = vpop.f32.mrf.mxu0
        %v3587 = vadd.f32 0.0, %v3586
        %v3588 = vpop.f32.mrf.mxu0
        %3589 = vdwg.mxu0
        %v3590 = vmul.f32 %v3587, 0.17677669
        %v3591 = vsel %vm1054, %v3590, -inf
        %3592 = vmax.xlane.f32.xlu0 %v3591
        %v3593 = vpop.xlane.xlu0 %3592
        %v3594 = vsub.f32 %v3590, %v3593
        %v3595 = vmul.f32 %v3594, 1.442695
        %v3596 = vpow.pop %v3595
        %v3597 = vsel %vm1054, %v3596, 0.0
        %3598 = vadd.xlane.f32.xlu0 %v3597
        %v3599 = vpop.xlane.xlu0 %3598
        %v3600 = vrcp.pop %v3599
        %v3601 = vmul.f32 %v3596, %v3600
        %v3602 = vpack.c.bf16 %v3601, %v3601
        %3603 = vrot.lane.b32.xlu0 %v3398, 32
        %v3604 = vpop.permute.xlu0 %3603
        %v3606 = vsel %vm1054, %v3602, 0
        %v3609 = vsel %vm1070, %v3604, 0
        %3611 = vmatpush.bf16.msra.mxu0 0
        %3612 = vmatpush.bf16.msra.mxu0 0
        %3613 = vmatpush.bf16.msra.mxu0 0
        %3614 = vmatpush.bf16.msra.mxu0 0
        %3615 = vmatpush.bf16.msra.mxu0 0
        %3616 = vmatpush.bf16.msra.mxu0 0
        %3617 = vmatpush.bf16.msra.mxu0 0
        %3618 = vmatpush.bf16.msra.mxu0 %v3609
        %3619 = vmatmul.bf16.gmra.mxu0 %v3606
        %v3620 = vpop.f32.mrf.mxu0
        %v3621 = vadd.f32 0.0, %v3620
        %v3622 = vpop.f32.mrf.mxu0
        %3623 = vdwg.mxu0
        %3625 = vrot.lane.b32.xlu0 %v3507, 32
        %v3626 = vpop.permute.xlu0 %3625
        %3629 = vrot.lane.b32.xlu0 %v3564, 64
        %v3630 = vpop.permute.xlu0 %3629
        %3633 = vrot.lane.b32.xlu0 %v3621, 96
        %v3634 = vpop.permute.xlu0 %3633
        %v3636 = vsel %vm1033, %v3447, %v3626
        %v3637 = vsel %vm1274, %v3636, %v3630
        %v3638 = vsel %vm1276, %v3637, %v3634
        %v3639 = vpack.c.bf16 %v3638, %v3638
        %s3640 = scalar_lea.vmem [#allocation6], 128
        %v3641 = vld [vmem:[%s3640] sm:$0xf]
        %v3642 = vld [vmem:[%s3640 + $0x4] sm:$0xf]
        %v3643 = vld [vmem:[%s3640 + $0x8] sm:$0xf]
        %v3644 = vld [vmem:[%s3640 + $0xc] sm:$0xf]
        %v3645 = vld [vmem:[%s3640 + $0x10] sm:$0xf]
        %v3646 = vld [vmem:[%s3640 + $0x14] sm:$0xf]
        %v3647 = vld [vmem:[%s3640 + $0x18] sm:$0xf]
        %v3648 = vld [vmem:[%s3640 + $0x1c] sm:$0xf]
        %v3649 = vld [vmem:[%s3640 + $0x20] sm:$0xf]
        %v3650 = vld [vmem:[%s3640 + $0x24] sm:$0xf]
        %v3651 = vld [vmem:[%s3640 + $0x28] sm:$0xf]
        %v3652 = vld [vmem:[%s3640 + $0x2c] sm:$0xf]
        %v3653 = vld [vmem:[%s3640 + $0x30] sm:$0xf]
        %v3654 = vld [vmem:[%s3640 + $0x34] sm:$0xf]
        %v3655 = vld [vmem:[%s3640 + $0x38] sm:$0xf]
        %v3656 = vld [vmem:[%s3640 + $0x3c] sm:$0xf]
        %s3657 = scalar_lea.vmem %s7, 2
        %v3658 = vld [vmem:[%s3657] sm:$0x1]
        %v3660 = vperm.slane %v3658, 0
        %v3678 = vunpack.c.l.b16 %v3641
        %v3679 = vunpack.c.l.b16 %v3642
        %v3680 = vunpack.c.l.b16 %v3643
        %v3681 = vunpack.c.l.b16 %v3644
        %v3682 = vunpack.c.l.b16 %v3645
        %v3683 = vunpack.c.l.b16 %v3646
        %v3684 = vunpack.c.l.b16 %v3647
        %v3685 = vunpack.c.l.b16 %v3648
        %v3686 = vunpack.c.l.b16 %v3649
        %v3687 = vunpack.c.l.b16 %v3650
        %v3688 = vunpack.c.l.b16 %v3651
        %v3689 = vunpack.c.l.b16 %v3652
        %v3690 = vunpack.c.l.b16 %v3653
        %v3691 = vunpack.c.l.b16 %v3654
        %v3692 = vunpack.c.l.b16 %v3655
        %v3693 = vunpack.c.l.b16 %v3656
        %v3694 = vpack.c.b16 %v3679, %v3678
        %v3695 = vpack.c.b16 %v3681, %v3680
        %v3696 = vpack.c.b16 %v3683, %v3682
        %v3697 = vpack.c.b16 %v3685, %v3684
        %v3698 = vpack.c.b16 %v3687, %v3686
        %v3699 = vpack.c.b16 %v3689, %v3688
        %v3700 = vpack.c.b16 %v3691, %v3690
        %v3701 = vpack.c.b16 %v3693, %v3692
        %3710 = vmatpush.bf16.msra.mxu0 %v3701
        %3711 = vmatpush.bf16.msra.mxu0 %v3700
        %3712 = vmatpush.bf16.msra.mxu0 %v3699
        %3713 = vmatpush.bf16.msra.mxu0 %v3698
        %3714 = vmatpush.bf16.msra.mxu0 %v3697
        %3715 = vmatpush.bf16.msra.mxu0 %v3696
        %3716 = vmatpush.bf16.msra.mxu0 %v3695
        %3717 = vmatpush.bf16.msra.mxu0 %v3694
        %3718 = vmatmul.bf16.gmra.mxu0 %v3639
        %v3719 = vpop.f32.mrf.mxu0
        %v3720 = vadd.f32 %v3660, %v3719
        %v3721 = vpop.f32.mrf.mxu0
        %3722 = vdwg.mxu0
        %v3723 = vadd.f32 %v3185, %v3720
        %s3724 = scalar_lea.vmem %s8, 2
        %v3725 = vld [vmem:[%s3724] sm:$0x1]
        %s3726 = scalar_lea.vmem %s9, 2
        %v3727 = vld [vmem:[%s3726] sm:$0x1]
        %3728 = vadd.xlane.f32.xlu0 %v3723
        %v3729 = vpop.xlane.xlu0 %3728
        %v3730 = vmul.f32 %v3729, %v1371
        %v3731 = vsub.f32 %v3723, %v3730
        %v3732 = vmul.f32 %v3731, %v3731
        %3733 = vadd.xlane.f32.xlu0 %v3732
        %v3734 = vpop.xlane.xlu0 %3733
        %v3735 = vmul.f32 %v3734, %v1371
        %v3736 = vadd.f32 %v3735, 1e-05
        %v3737 = vrsqrt.pop %v3736
        %v3738 = vmul.f32 %v3737, %v3736
        %v3739 = vmul.f32 %v3738, %v3737
        %v3740 = vmul.f32 0.5, %v3739
        %v3741 = vsub.f32 1.5, %v3740
        %v3742 = vmul.f32 %v3737, %v3741
        %vm3743 = vweird.f32 %v3736
        %vm3744 = vweird.f32 %v3737
        %vm3745 = vmor %vm3743, %vm3744
        %v3746 = vsel %vm3745, %v3737, %v3742
        %v3747 = vmul.f32 %v3731, %v3746
        %v3749 = vperm.slane %v3725, 0
        %v3751 = vmul.f32 %v3747, %v3749
        %v3753 = vperm.slane %v3727, 0
        %v3755 = vadd.f32 %v3751, %v3753
        %v3756 = vpack.c.bf16 %v3755, %v3755
        %s3757 = scalar_lea.vmem [#allocation7], 512
        %v3758 = vld [vmem:[%s3757] sm:$0xff]
        %v3759 = vld [vmem:[%s3757 + $0x8] sm:$0xff]
        %v3760 = vld [vmem:[%s3757 + $0x10] sm:$0xff]
        %v3761 = vld [vmem:[%s3757 + $0x18] sm:$0xff]
        %v3762 = vld [vmem:[%s3757 + $0x20] sm:$0xff]
        %v3763 = vld [vmem:[%s3757 + $0x28] sm:$0xff]
        %v3764 = vld [vmem:[%s3757 + $0x30] sm:$0xff]
        %v3765 = vld [vmem:[%s3757 + $0x38] sm:$0xff]
        %v3766 = vld [vmem:[%s3757 + $0x40] sm:$0xff]
        %v3767 = vld [vmem:[%s3757 + $0x48] sm:$0xff]
        %v3768 = vld [vmem:[%s3757 + $0x50] sm:$0xff]
        %v3769 = vld [vmem:[%s3757 + $0x58] sm:$0xff]
        %v3770 = vld [vmem:[%s3757 + $0x60] sm:$0xff]
        %v3771 = vld [vmem:[%s3757 + $0x68] sm:$0xff]
        %v3772 = vld [vmem:[%s3757 + $0x70] sm:$0xff]
        %v3773 = vld [vmem:[%s3757 + $0x78] sm:$0xff]
        %v3774 = vld [vmem:[%s3757 + $0x80] sm:$0xff]
        %v3775 = vld [vmem:[%s3757 + $0x88] sm:$0xff]
        %v3776 = vld [vmem:[%s3757 + $0x90] sm:$0xff]
        %v3777 = vld [vmem:[%s3757 + $0x98] sm:$0xff]
        %v3778 = vld [vmem:[%s3757 + $0xa0] sm:$0xff]
        %v3779 = vld [vmem:[%s3757 + $0xa8] sm:$0xff]
        %v3780 = vld [vmem:[%s3757 + $0xb0] sm:$0xff]
        %v3781 = vld [vmem:[%s3757 + $0xb8] sm:$0xff]
        %v3782 = vld [vmem:[%s3757 + $0xc0] sm:$0xff]
        %v3783 = vld [vmem:[%s3757 + $0xc8] sm:$0xff]
        %v3784 = vld [vmem:[%s3757 + $0xd0] sm:$0xff]
        %v3785 = vld [vmem:[%s3757 + $0xd8] sm:$0xff]
        %v3786 = vld [vmem:[%s3757 + $0xe0] sm:$0xff]
        %v3787 = vld [vmem:[%s3757 + $0xe8] sm:$0xff]
        %v3788 = vld [vmem:[%s3757 + $0xf0] sm:$0xff]
        %v3789 = vld [vmem:[%s3757 + $0xf8] sm:$0xff]
        %s3790 = scalar_lea.vmem %s11, 8
        %v3791 = vld [vmem:[%s3790] sm:$0xf]
        %v3793 = vperm.slane %v3791, 0
        %v3794 = vperm.slane %v3791, 1
        %v3795 = vperm.slane %v3791, 2
        %v3796 = vperm.slane %v3791, 3
        %v3833 = vunpack.c.l.b16 %v3758
        %v3834 = vunpack.c.h.b16 %v3758
        %v3835 = vunpack.c.l.b16 %v3759
        %v3836 = vunpack.c.h.b16 %v3759
        %v3837 = vunpack.c.l.b16 %v3760
        %v3838 = vunpack.c.h.b16 %v3760
        %v3839 = vunpack.c.l.b16 %v3761
        %v3840 = vunpack.c.h.b16 %v3761
        %v3841 = vunpack.c.l.b16 %v3762
        %v3842 = vunpack.c.h.b16 %v3762
        %v3843 = vunpack.c.l.b16 %v3763
        %v3844 = vunpack.c.h.b16 %v3763
        %v3845 = vunpack.c.l.b16 %v3764
        %v3846 = vunpack.c.h.b16 %v3764
        %v3847 = vunpack.c.l.b16 %v3765
        %v3848 = vunpack.c.h.b16 %v3765
        %v3849 = vunpack.c.l.b16 %v3766
        %v3850 = vunpack.c.h.b16 %v3766
        %v3851 = vunpack.c.l.b16 %v3767
        %v3852 = vunpack.c.h.b16 %v3767
        %v3853 = vunpack.c.l.b16 %v3768
        %v3854 = vunpack.c.h.b16 %v3768
        %v3855 = vunpack.c.l.b16 %v3769
        %v3856 = vunpack.c.h.b16 %v3769
        %v3857 = vunpack.c.l.b16 %v3770
        %v3858 = vunpack.c.h.b16 %v3770
        %v3859 = vunpack.c.l.b16 %v3771
        %v3860 = vunpack.c.h.b16 %v3771
        %v3861 = vunpack.c.l.b16 %v3772
        %v3862 = vunpack.c.h.b16 %v3772
        %v3863 = vunpack.c.l.b16 %v3773
        %v3864 = vunpack.c.h.b16 %v3773
        %v3865 = vunpack.c.l.b16 %v3774
        %v3866 = vunpack.c.h.b16 %v3774
        %v3867 = vunpack.c.l.b16 %v3775
        %v3868 = vunpack.c.h.b16 %v3775
        %v3869 = vunpack.c.l.b16 %v3776
        %v3870 = vunpack.c.h.b16 %v3776
        %v3871 = vunpack.c.l.b16 %v3777
        %v3872 = vunpack.c.h.b16 %v3777
        %v3873 = vunpack.c.l.b16 %v3778
        %v3874 = vunpack.c.h.b16 %v3778
        %v3875 = vunpack.c.l.b16 %v3779
        %v3876 = vunpack.c.h.b16 %v3779
        %v3877 = vunpack.c.l.b16 %v3780
        %v3878 = vunpack.c.h.b16 %v3780
        %v3879 = vunpack.c.l.b16 %v3781
        %v3880 = vunpack.c.h.b16 %v3781
        %v3881 = vunpack.c.l.b16 %v3782
        %v3882 = vunpack.c.h.b16 %v3782
        %v3883 = vunpack.c.l.b16 %v3783
        %v3884 = vunpack.c.h.b16 %v3783
        %v3885 = vunpack.c.l.b16 %v3784
        %v3886 = vunpack.c.h.b16 %v3784
        %v3887 = vunpack.c.l.b16 %v3785
        %v3888 = vunpack.c.h.b16 %v3785
        %v3889 = vunpack.c.l.b16 %v3786
        %v3890 = vunpack.c.h.b16 %v3786
        %v3891 = vunpack.c.l.b16 %v3787
        %v3892 = vunpack.c.h.b16 %v3787
        %v3893 = vunpack.c.l.b16 %v3788
        %v3894 = vunpack.c.h.b16 %v3788
        %v3895 = vunpack.c.l.b16 %v3789
        %v3896 = vunpack.c.h.b16 %v3789
        %v3897 = vpack.c.b16 %v3837, %v3833
        %v3898 = vpack.c.b16 %v3838, %v3834
        %v3899 = vpack.c.b16 %v3839, %v3835
        %v3900 = vpack.c.b16 %v3840, %v3836
        %v3901 = vpack.c.b16 %v3845, %v3841
        %v3902 = vpack.c.b16 %v3846, %v3842
        %v3903 = vpack.c.b16 %v3847, %v3843
        %v3904 = vpack.c.b16 %v3848, %v3844
        %v3905 = vpack.c.b16 %v3853, %v3849
        %v3906 = vpack.c.b16 %v3854, %v3850
        %v3907 = vpack.c.b16 %v3855, %v3851
        %v3908 = vpack.c.b16 %v3856, %v3852
        %v3909 = vpack.c.b16 %v3861, %v3857
        %v3910 = vpack.c.b16 %v3862, %v3858
        %v3911 = vpack.c.b16 %v3863, %v3859
        %v3912 = vpack.c.b16 %v3864, %v3860
        %v3913 = vpack.c.b16 %v3869, %v3865
        %v3914 = vpack.c.b16 %v3870, %v3866
        %v3915 = vpack.c.b16 %v3871, %v3867
        %v3916 = vpack.c.b16 %v3872, %v3868
        %v3917 = vpack.c.b16 %v3877, %v3873
        %v3918 = vpack.c.b16 %v3878, %v3874
        %v3919 = vpack.c.b16 %v3879, %v3875
        %v3920 = vpack.c.b16 %v3880, %v3876
        %v3921 = vpack.c.b16 %v3885, %v3881
        %v3922 = vpack.c.b16 %v3886, %v3882
        %v3923 = vpack.c.b16 %v3887, %v3883
        %v3924 = vpack.c.b16 %v3888, %v3884
        %v3925 = vpack.c.b16 %v3893, %v3889
        %v3926 = vpack.c.b16 %v3894, %v3890
        %v3927 = vpack.c.b16 %v3895, %v3891
        %v3928 = vpack.c.b16 %v3896, %v3892
        %3961 = vmatpush.bf16.msra.mxu0 %v3925
        %3962 = vmatpush.bf16.msra.mxu0 %v3921
        %3963 = vmatpush.bf16.msra.mxu0 %v3917
        %3964 = vmatpush.bf16.msra.mxu0 %v3913
        %3965 = vmatpush.bf16.msra.mxu0 %v3909
        %3966 = vmatpush.bf16.msra.mxu0 %v3905
        %3967 = vmatpush.bf16.msra.mxu0 %v3901
        %3968 = vmatpush.bf16.msra.mxu0 %v3897
        %3969 = vmatmul.bf16.gmra.mxu0 %v3756
        %v3970 = vpop.f32.mrf.mxu0
        %v3971 = vadd.f32 %v3793, %v3970
        %v3972 = vpop.f32.mrf.mxu0
        %3973 = vdwg.mxu0
        %3974 = vmatpush.bf16.msra.mxu0 %v3926
        %3975 = vmatpush.bf16.msra.mxu0 %v3922
        %3976 = vmatpush.bf16.msra.mxu0 %v3918
        %3977 = vmatpush.bf16.msra.mxu0 %v3914
        %3978 = vmatpush.bf16.msra.mxu0 %v3910
        %3979 = vmatpush.bf16.msra.mxu0 %v3906
        %3980 = vmatpush.bf16.msra.mxu0 %v3902
        %3981 = vmatpush.bf16.msra.mxu0 %v3898
        %3982 = vmatmul.bf16.gmra.mxu0 %v3756
        %v3983 = vpop.f32.mrf.mxu0
        %v3984 = vadd.f32 %v3794, %v3983
        %v3985 = vpop.f32.mrf.mxu0
        %3986 = vdwg.mxu0
        %3987 = vmatpush.bf16.msra.mxu0 %v3927
        %3988 = vmatpush.bf16.msra.mxu0 %v3923
        %3989 = vmatpush.bf16.msra.mxu0 %v3919
        %3990 = vmatpush.bf16.msra.mxu0 %v3915
        %3991 = vmatpush.bf16.msra.mxu0 %v3911
        %3992 = vmatpush.bf16.msra.mxu0 %v3907
        %3993 = vmatpush.bf16.msra.mxu0 %v3903
        %3994 = vmatpush.bf16.msra.mxu0 %v3899
        %3995 = vmatmul.bf16.gmra.mxu0 %v3756
        %v3996 = vpop.f32.mrf.mxu0
        %v3997 = vadd.f32 %v3795, %v3996
        %v3998 = vpop.f32.mrf.mxu0
        %3999 = vdwg.mxu0
        %4000 = vmatpush.bf16.msra.mxu0 %v3928
        %4001 = vmatpush.bf16.msra.mxu0 %v3924
        %4002 = vmatpush.bf16.msra.mxu0 %v3920
        %4003 = vmatpush.bf16.msra.mxu0 %v3916
        %4004 = vmatpush.bf16.msra.mxu0 %v3912
        %4005 = vmatpush.bf16.msra.mxu0 %v3908
        %4006 = vmatpush.bf16.msra.mxu0 %v3904
        %4007 = vmatpush.bf16.msra.mxu0 %v3900
        %4008 = vmatmul.bf16.gmra.mxu0 %v3756
        %v4009 = vpop.f32.mrf.mxu0
        %v4010 = vadd.f32 %v3796, %v4009
        %v4011 = vpop.f32.mrf.mxu0
        %4012 = vdwg.mxu0
        %v4013 = vmax.f32 %v3971, 0.0
        %v4014 = vmax.f32 %v3984, 0.0
        %v4015 = vmax.f32 %v3997, 0.0
        %v4016 = vmax.f32 %v4010, 0.0
        %v4017 = vpack.c.bf16 %v4013, %v4013
        %v4018 = vpack.c.bf16 %v4014, %v4014
        %v4019 = vpack.c.bf16 %v4015, %v4015
        %v4020 = vpack.c.bf16 %v4016, %v4016
        %s4021 = scalar_lea.vmem [#allocation9], 512
        %v4022 = vld [vmem:[%s4021] sm:$0xf]
        %v4023 = vld [vmem:[%s4021 + $0x4] sm:$0xf]
        %v4024 = vld [vmem:[%s4021 + $0x8] sm:$0xf]
        %v4025 = vld [vmem:[%s4021 + $0xc] sm:$0xf]
        %v4026 = vld [vmem:[%s4021 + $0x10] sm:$0xf]
        %v4027 = vld [vmem:[%s4021 + $0x14] sm:$0xf]
        %v4028 = vld [vmem:[%s4021 + $0x18] sm:$0xf]
        %v4029 = vld [vmem:[%s4021 + $0x1c] sm:$0xf]
        %v4030 = vld [vmem:[%s4021 + $0x20] sm:$0xf]
        %v4031 = vld [vmem:[%s4021 + $0x24] sm:$0xf]
        %v4032 = vld [vmem:[%s4021 + $0x28] sm:$0xf]
        %v4033 = vld [vmem:[%s4021 + $0x2c] sm:$0xf]
        %v4034 = vld [vmem:[%s4021 + $0x30] sm:$0xf]
        %v4035 = vld [vmem:[%s4021 + $0x34] sm:$0xf]
        %v4036 = vld [vmem:[%s4021 + $0x38] sm:$0xf]
        %v4037 = vld [vmem:[%s4021 + $0x3c] sm:$0xf]
        %v4038 = vld [vmem:[%s4021 + $0x40] sm:$0xf]
        %v4039 = vld [vmem:[%s4021 + $0x44] sm:$0xf]
        %v4040 = vld [vmem:[%s4021 + $0x48] sm:$0xf]
        %v4041 = vld [vmem:[%s4021 + $0x4c] sm:$0xf]
        %v4042 = vld [vmem:[%s4021 + $0x50] sm:$0xf]
        %v4043 = vld [vmem:[%s4021 + $0x54] sm:$0xf]
        %v4044 = vld [vmem:[%s4021 + $0x58] sm:$0xf]
        %v4045 = vld [vmem:[%s4021 + $0x5c] sm:$0xf]
        %v4046 = vld [vmem:[%s4021 + $0x60] sm:$0xf]
        %v4047 = vld [vmem:[%s4021 + $0x64] sm:$0xf]
        %v4048 = vld [vmem:[%s4021 + $0x68] sm:$0xf]
        %v4049 = vld [vmem:[%s4021 + $0x6c] sm:$0xf]
        %v4050 = vld [vmem:[%s4021 + $0x70] sm:$0xf]
        %v4051 = vld [vmem:[%s4021 + $0x74] sm:$0xf]
        %v4052 = vld [vmem:[%s4021 + $0x78] sm:$0xf]
        %v4053 = vld [vmem:[%s4021 + $0x7c] sm:$0xf]
        %v4054 = vld [vmem:[%s4021 + $0x80] sm:$0xf]
        %v4055 = vld [vmem:[%s4021 + $0x84] sm:$0xf]
        %v4056 = vld [vmem:[%s4021 + $0x88] sm:$0xf]
        %v4057 = vld [vmem:[%s4021 + $0x8c] sm:$0xf]
        %v4058 = vld [vmem:[%s4021 + $0x90] sm:$0xf]
        %v4059 = vld [vmem:[%s4021 + $0x94] sm:$0xf]
        %v4060 = vld [vmem:[%s4021 + $0x98] sm:$0xf]
        %v4061 = vld [vmem:[%s4021 + $0x9c] sm:$0xf]
        %v4062 = vld [vmem:[%s4021 + $0xa0] sm:$0xf]
        %v4063 = vld [vmem:[%s4021 + $0xa4] sm:$0xf]
        %v4064 = vld [vmem:[%s4021 + $0xa8] sm:$0xf]
        %v4065 = vld [vmem:[%s4021 + $0xac] sm:$0xf]
        %v4066 = vld [vmem:[%s4021 + $0xb0] sm:$0xf]
        %v4067 = vld [vmem:[%s4021 + $0xb4] sm:$0xf]
        %v4068 = vld [vmem:[%s4021 + $0xb8] sm:$0xf]
        %v4069 = vld [vmem:[%s4021 + $0xbc] sm:$0xf]
        %v4070 = vld [vmem:[%s4021 + $0xc0] sm:$0xf]
        %v4071 = vld [vmem:[%s4021 + $0xc4] sm:$0xf]
        %v4072 = vld [vmem:[%s4021 + $0xc8] sm:$0xf]
        %v4073 = vld [vmem:[%s4021 + $0xcc] sm:$0xf]
        %v4074 = vld [vmem:[%s4021 + $0xd0] sm:$0xf]
        %v4075 = vld [vmem:[%s4021 + $0xd4] sm:$0xf]
        %v4076 = vld [vmem:[%s4021 + $0xd8] sm:$0xf]
        %v4077 = vld [vmem:[%s4021 + $0xdc] sm:$0xf]
        %v4078 = vld [vmem:[%s4021 + $0xe0] sm:$0xf]
        %v4079 = vld [vmem:[%s4021 + $0xe4] sm:$0xf]
        %v4080 = vld [vmem:[%s4021 + $0xe8] sm:$0xf]
        %v4081 = vld [vmem:[%s4021 + $0xec] sm:$0xf]
        %v4082 = vld [vmem:[%s4021 + $0xf0] sm:$0xf]
        %v4083 = vld [vmem:[%s4021 + $0xf4] sm:$0xf]
        %v4084 = vld [vmem:[%s4021 + $0xf8] sm:$0xf]
        %v4085 = vld [vmem:[%s4021 + $0xfc] sm:$0xf]
        %s4086 = scalar_lea.vmem [#allocation10], 2
        %v4087 = vld [vmem:[%s4086] sm:$0x1]
        %v4089 = vperm.slane %v4087, 0
        %v4155 = vunpack.c.l.b16 %v4022
        %v4156 = vunpack.c.l.b16 %v4023
        %v4157 = vunpack.c.l.b16 %v4024
        %v4158 = vunpack.c.l.b16 %v4025
        %v4159 = vunpack.c.l.b16 %v4026
        %v4160 = vunpack.c.l.b16 %v4027
        %v4161 = vunpack.c.l.b16 %v4028
        %v4162 = vunpack.c.l.b16 %v4029
        %v4163 = vunpack.c.l.b16 %v4030
        %v4164 = vunpack.c.l.b16 %v4031
        %v4165 = vunpack.c.l.b16 %v4032
        %v4166 = vunpack.c.l.b16 %v4033
        %v4167 = vunpack.c.l.b16 %v4034
        %v4168 = vunpack.c.l.b16 %v4035
        %v4169 = vunpack.c.l.b16 %v4036
        %v4170 = vunpack.c.l.b16 %v4037
        %v4171 = vunpack.c.l.b16 %v4038
        %v4172 = vunpack.c.l.b16 %v4039
        %v4173 = vunpack.c.l.b16 %v4040
        %v4174 = vunpack.c.l.b16 %v4041
        %v4175 = vunpack.c.l.b16 %v4042
        %v4176 = vunpack.c.l.b16 %v4043
        %v4177 = vunpack.c.l.b16 %v4044
        %v4178 = vunpack.c.l.b16 %v4045
        %v4179 = vunpack.c.l.b16 %v4046
        %v4180 = vunpack.c.l.b16 %v4047
        %v4181 = vunpack.c.l.b16 %v4048
        %v4182 = vunpack.c.l.b16 %v4049
        %v4183 = vunpack.c.l.b16 %v4050
        %v4184 = vunpack.c.l.b16 %v4051
        %v4185 = vunpack.c.l.b16 %v4052
        %v4186 = vunpack.c.l.b16 %v4053
        %v4187 = vunpack.c.l.b16 %v4054
        %v4188 = vunpack.c.l.b16 %v4055
        %v4189 = vunpack.c.l.b16 %v4056
        %v4190 = vunpack.c.l.b16 %v4057
        %v4191 = vunpack.c.l.b16 %v4058
        %v4192 = vunpack.c.l.b16 %v4059
        %v4193 = vunpack.c.l.b16 %v4060
        %v4194 = vunpack.c.l.b16 %v4061
        %v4195 = vunpack.c.l.b16 %v4062
        %v4196 = vunpack.c.l.b16 %v4063
        %v4197 = vunpack.c.l.b16 %v4064
        %v4198 = vunpack.c.l.b16 %v4065
        %v4199 = vunpack.c.l.b16 %v4066
        %v4200 = vunpack.c.l.b16 %v4067
        %v4201 = vunpack.c.l.b16 %v4068
        %v4202 = vunpack.c.l.b16 %v4069
        %v4203 = vunpack.c.l.b16 %v4070
        %v4204 = vunpack.c.l.b16 %v4071
        %v4205 = vunpack.c.l.b16 %v4072
        %v4206 = vunpack.c.l.b16 %v4073
        %v4207 = vunpack.c.l.b16 %v4074
        %v4208 = vunpack.c.l.b16 %v4075
        %v4209 = vunpack.c.l.b16 %v4076
        %v4210 = vunpack.c.l.b16 %v4077
        %v4211 = vunpack.c.l.b16 %v4078
        %v4212 = vunpack.c.l.b16 %v4079
        %v4213 = vunpack.c.l.b16 %v4080
        %v4214 = vunpack.c.l.b16 %v4081
        %v4215 = vunpack.c.l.b16 %v4082
        %v4216 = vunpack.c.l.b16 %v4083
        %v4217 = vunpack.c.l.b16 %v4084
        %v4218 = vunpack.c.l.b16 %v4085
        %v4219 = vpack.c.b16 %v4156, %v4155
        %v4220 = vpack.c.b16 %v4158, %v4157
        %v4221 = vpack.c.b16 %v4160, %v4159
        %v4222 = vpack.c.b16 %v4162, %v4161
        %v4223 = vpack.c.b16 %v4164, %v4163
        %v4224 = vpack.c.b16 %v4166, %v4165
        %v4225 = vpack.c.b16 %v4168, %v4167
        %v4226 = vpack.c.b16 %v4170, %v4169
        %v4227 = vpack.c.b16 %v4172, %v4171
        %v4228 = vpack.c.b16 %v4174, %v4173
        %v4229 = vpack.c.b16 %v4176, %v4175
        %v4230 = vpack.c.b16 %v4178, %v4177
        %v4231 = vpack.c.b16 %v4180, %v4179
        %v4232 = vpack.c.b16 %v4182, %v4181
        %v4233 = vpack.c.b16 %v4184, %v4183
        %v4234 = vpack.c.b16 %v4186, %v4185
        %v4235 = vpack.c.b16 %v4188, %v4187
        %v4236 = vpack.c.b16 %v4190, %v4189
        %v4237 = vpack.c.b16 %v4192, %v4191
        %v4238 = vpack.c.b16 %v4194, %v4193
        %v4239 = vpack.c.b16 %v4196, %v4195
        %v4240 = vpack.c.b16 %v4198, %v4197
        %v4241 = vpack.c.b16 %v4200, %v4199
        %v4242 = vpack.c.b16 %v4202, %v4201
        %v4243 = vpack.c.b16 %v4204, %v4203
        %v4244 = vpack.c.b16 %v4206, %v4205
        %v4245 = vpack.c.b16 %v4208, %v4207
        %v4246 = vpack.c.b16 %v4210, %v4209
        %v4247 = vpack.c.b16 %v4212, %v4211
        %v4248 = vpack.c.b16 %v4214, %v4213
        %v4249 = vpack.c.b16 %v4216, %v4215
        %v4250 = vpack.c.b16 %v4218, %v4217
        %4283 = vmatpush.bf16.msra.mxu0 %v4226
        %4284 = vmatpush.bf16.msra.mxu0 %v4225
        %4285 = vmatpush.bf16.msra.mxu0 %v4224
        %4286 = vmatpush.bf16.msra.mxu0 %v4223
        %4287 = vmatpush.bf16.msra.mxu0 %v4222
        %4288 = vmatpush.bf16.msra.mxu0 %v4221
        %4289 = vmatpush.bf16.msra.mxu0 %v4220
        %4290 = vmatpush.bf16.msra.mxu0 %v4219
        %4291 = vmatmul.bf16.gmra.mxu0 %v4017
        %v4292 = vpop.f32.mrf.mxu0
        %v4293 = vadd.f32 %v4089, %v4292
        %v4294 = vpop.f32.mrf.mxu0
        %4295 = vdwg.mxu0
        %4296 = vmatpush.bf16.msra.mxu0 %v4234
        %4297 = vmatpush.bf16.msra.mxu0 %v4233
        %4298 = vmatpush.bf16.msra.mxu0 %v4232
        %4299 = vmatpush.bf16.msra.mxu0 %v4231
        %4300 = vmatpush.bf16.msra.mxu0 %v4230
        %4301 = vmatpush.bf16.msra.mxu0 %v4229
        %4302 = vmatpush.bf16.msra.mxu0 %v4228
        %4303 = vmatpush.bf16.msra.mxu0 %v4227
        %4304 = vmatmul.bf16.gmra.mxu0 %v4018
        %v4305 = vpop.f32.mrf.mxu0
        %v4306 = vadd.f32 %v4293, %v4305
        %v4307 = vpop.f32.mrf.mxu0
        %4308 = vdwg.mxu0
        %4309 = vmatpush.bf16.msra.mxu0 %v4242
        %4310 = vmatpush.bf16.msra.mxu0 %v4241
        %4311 = vmatpush.bf16.msra.mxu0 %v4240
        %4312 = vmatpush.bf16.msra.mxu0 %v4239
        %4313 = vmatpush.bf16.msra.mxu0 %v4238
        %4314 = vmatpush.bf16.msra.mxu0 %v4237
        %4315 = vmatpush.bf16.msra.mxu0 %v4236
        %4316 = vmatpush.bf16.msra.mxu0 %v4235
        %4317 = vmatmul.bf16.gmra.mxu0 %v4019
        %v4318 = vpop.f32.mrf.mxu0
        %v4319 = vadd.f32 %v4306, %v4318
        %v4320 = vpop.f32.mrf.mxu0
        %4321 = vdwg.mxu0
        %4322 = vmatpush.bf16.msra.mxu0 %v4250
        %4323 = vmatpush.bf16.msra.mxu0 %v4249
        %4324 = vmatpush.bf16.msra.mxu0 %v4248
        %4325 = vmatpush.bf16.msra.mxu0 %v4247
        %4326 = vmatpush.bf16.msra.mxu0 %v4246
        %4327 = vmatpush.bf16.msra.mxu0 %v4245
        %4328 = vmatpush.bf16.msra.mxu0 %v4244
        %4329 = vmatpush.bf16.msra.mxu0 %v4243
        %4330 = vmatmul.bf16.gmra.mxu0 %v4020
        %v4331 = vpop.f32.mrf.mxu0
        %v4332 = vadd.f32 %v4319, %v4331
        %v4333 = vpop.f32.mrf.mxu0
        %4334 = vdwg.mxu0
        %v4335 = vadd.f32 %v3755, %v4332
        %s4336 = scalar_lea.vmem [#allocation12], 2
        %v4337 = vld [vmem:[%s4336] sm:$0x1]
        %s4338 = scalar_lea.vmem [#allocation13], 2
        %v4339 = vld [vmem:[%s4338] sm:$0x1]
        %4340 = vadd.xlane.f32.xlu0 %v4335
        %v4341 = vpop.xlane.xlu0 %4340
        %v4342 = vmul.f32 %v4341, %v1371
        %v4343 = vsub.f32 %v4335, %v4342
        %v4344 = vmul.f32 %v4343, %v4343
        %4345 = vadd.xlane.f32.xlu0 %v4344
        %v4346 = vpop.xlane.xlu0 %4345
        %v4347 = vmul.f32 %v4346, %v1371
        %v4348 = vadd.f32 %v4347, 1e-05
        %v4349 = vrsqrt.pop %v4348
        %v4350 = vmul.f32 %v4349, %v4348
        %v4351 = vmul.f32 %v4350, %v4349
        %v4352 = vmul.f32 0.5, %v4351
        %v4353 = vsub.f32 1.5, %v4352
        %v4354 = vmul.f32 %v4349, %v4353
        %vm4355 = vweird.f32 %v4348
        %vm4356 = vweird.f32 %v4349
        %vm4357 = vmor %vm4355, %vm4356
        %v4358 = vsel %vm4357, %v4349, %v4354
        %v4359 = vmul.f32 %v4343, %v4358
        %v4361 = vperm.slane %v4337, 0
        %v4363 = vmul.f32 %v4359, %v4361
        %v4365 = vperm.slane %v4339, 0
        %v4367 = vadd.f32 %v4363, %v4365
        %v4368 = vpack.c.bf16 %v4367, %v4367
        %s4369 = scalar_lea.vmem [#allocation4], 576
        %v4370 = vld [vmem:[%s4369] sm:$0xff]
        %v4371 = vld [vmem:[%s4369 + $0x8] sm:$0xf]
        %v4372 = vld [vmem:[%s4369 + $0xc] sm:$0xff]
        %v4373 = vld [vmem:[%s4369 + $0x14] sm:$0xf]
        %v4374 = vld [vmem:[%s4369 + $0x18] sm:$0xff]
        %v4375 = vld [vmem:[%s4369 + $0x20] sm:$0xf]
        %v4376 = vld [vmem:[%s4369 + $0x24] sm:$0xff]
        %v4377 = vld [vmem:[%s4369 + $0x2c] sm:$0xf]
        %v4378 = vld [vmem:[%s4369 + $0x30] sm:$0xff]
        %v4379 = vld [vmem:[%s4369 + $0x38] sm:$0xf]
        %v4380 = vld [vmem:[%s4369 + $0x3c] sm:$0xff]
        %v4381 = vld [vmem:[%s4369 + $0x44] sm:$0xf]
        %v4382 = vld [vmem:[%s4369 + $0x48] sm:$0xff]
        %v4383 = vld [vmem:[%s4369 + $0x50] sm:$0xf]
        %v4384 = vld [vmem:[%s4369 + $0x54] sm:$0xff]
        %v4385 = vld [vmem:[%s4369 + $0x5c] sm:$0xf]
        %v4386 = vld [vmem:[%s4369 + $0x60] sm:$0xff]
        %v4387 = vld [vmem:[%s4369 + $0x68] sm:$0xf]
        %v4388 = vld [vmem:[%s4369 + $0x6c] sm:$0xff]
        %v4389 = vld [vmem:[%s4369 + $0x74] sm:$0xf]
        %v4390 = vld [vmem:[%s4369 + $0x78] sm:$0xff]
        %v4391 = vld [vmem:[%s4369 + $0x80] sm:$0xf]
        %v4392 = vld [vmem:[%s4369 + $0x84] sm:$0xff]
        %v4393 = vld [vmem:[%s4369 + $0x8c] sm:$0xf]
        %v4394 = vld [vmem:[%s4369 + $0x90] sm:$0xff]
        %v4395 = vld [vmem:[%s4369 + $0x98] sm:$0xf]
        %v4396 = vld [vmem:[%s4369 + $0x9c] sm:$0xff]
        %v4397 = vld [vmem:[%s4369 + $0xa4] sm:$0xf]
        %v4398 = vld [vmem:[%s4369 + $0xa8] sm:$0xff]
        %v4399 = vld [vmem:[%s4369 + $0xb0] sm:$0xf]
        %v4400 = vld [vmem:[%s4369 + $0xb4] sm:$0xff]
        %v4401 = vld [vmem:[%s4369 + $0xbc] sm:$0xf]
        %s4402 = scalar_lea.vmem %s5, 9
        %v4403 = vld [vmem:[%s4402] sm:$0x7]
        %v4405 = vperm.slane %v4403, 0
        %v4406 = vperm.slane %v4403, 1
        %v4407 = vperm.slane %v4403, 2
        %v4443 = vunpack.c.l.b16 %v4370
        %v4444 = vunpack.c.h.b16 %v4370
        %v4445 = vunpack.c.l.b16 %v4371
        %v4446 = vunpack.c.l.b16 %v4372
        %v4447 = vunpack.c.h.b16 %v4372
        %v4448 = vunpack.c.l.b16 %v4373
        %v4449 = vunpack.c.l.b16 %v4374
        %v4450 = vunpack.c.h.b16 %v4374
        %v4451 = vunpack.c.l.b16 %v4375
        %v4452 = vunpack.c.l.b16 %v4376
        %v4453 = vunpack.c.h.b16 %v4376
        %v4454 = vunpack.c.l.b16 %v4377
        %v4455 = vunpack.c.l.b16 %v4378
        %v4456 = vunpack.c.h.b16 %v4378
        %v4457 = vunpack.c.l.b16 %v4379
        %v4458 = vunpack.c.l.b16 %v4380
        %v4459 = vunpack.c.h.b16 %v4380
        %v4460 = vunpack.c.l.b16 %v4381
        %v4461 = vunpack.c.l.b16 %v4382
        %v4462 = vunpack.c.h.b16 %v4382
        %v4463 = vunpack.c.l.b16 %v4383
        %v4464 = vunpack.c.l.b16 %v4384
        %v4465 = vunpack.c.h.b16 %v4384
        %v4466 = vunpack.c.l.b16 %v4385
        %v4467 = vunpack.c.l.b16 %v4386
        %v4468 = vunpack.c.h.b16 %v4386
        %v4469 = vunpack.c.l.b16 %v4387
        %v4470 = vunpack.c.l.b16 %v4388
        %v4471 = vunpack.c.h.b16 %v4388
        %v4472 = vunpack.c.l.b16 %v4389
        %v4473 = vunpack.c.l.b16 %v4390
        %v4474 = vunpack.c.h.b16 %v4390
        %v4475 = vunpack.c.l.b16 %v4391
        %v4476 = vunpack.c.l.b16 %v4392
        %v4477 = vunpack.c.h.b16 %v4392
        %v4478 = vunpack.c.l.b16 %v4393
        %v4479 = vunpack.c.l.b16 %v4394
        %v4480 = vunpack.c.h.b16 %v4394
        %v4481 = vunpack.c.l.b16 %v4395
        %v4482 = vunpack.c.l.b16 %v4396
        %v4483 = vunpack.c.h.b16 %v4396
        %v4484 = vunpack.c.l.b16 %v4397
        %v4485 = vunpack.c.l.b16 %v4398
        %v4486 = vunpack.c.h.b16 %v4398
        %v4487 = vunpack.c.l.b16 %v4399
        %v4488 = vunpack.c.l.b16 %v4400
        %v4489 = vunpack.c.h.b16 %v4400
        %v4490 = vunpack.c.l.b16 %v4401
        %v4491 = vpack.c.b16 %v4446, %v4443
        %v4492 = vpack.c.b16 %v4447, %v4444
        %v4493 = vpack.c.b16 %v4448, %v4445
        %v4494 = vpack.c.b16 %v4452, %v4449
        %v4495 = vpack.c.b16 %v4453, %v4450
        %v4496 = vpack.c.b16 %v4454, %v4451
        %v4497 = vpack.c.b16 %v4458, %v4455
        %v4498 = vpack.c.b16 %v4459, %v4456
        %v4499 = vpack.c.b16 %v4460, %v4457
        %v4500 = vpack.c.b16 %v4464, %v4461
        %v4501 = vpack.c.b16 %v4465, %v4462
        %v4502 = vpack.c.b16 %v4466, %v4463
        %v4503 = vpack.c.b16 %v4470, %v4467
        %v4504 = vpack.c.b16 %v4471, %v4468
        %v4505 = vpack.c.b16 %v4472, %v4469
        %v4506 = vpack.c.b16 %v4476, %v4473
        %v4507 = vpack.c.b16 %v4477, %v4474
        %v4508 = vpack.c.b16 %v4478, %v4475
        %v4509 = vpack.c.b16 %v4482, %v4479
        %v4510 = vpack.c.b16 %v4483, %v4480
        %v4511 = vpack.c.b16 %v4484, %v4481
        %v4512 = vpack.c.b16 %v4488, %v4485
        %v4513 = vpack.c.b16 %v4489, %v4486
        %v4514 = vpack.c.b16 %v4490, %v4487
        %4539 = vmatpush.bf16.msra.mxu0 %v4512
        %4540 = vmatpush.bf16.msra.mxu0 %v4509
        %4541 = vmatpush.bf16.msra.mxu0 %v4506
        %4542 = vmatpush.bf16.msra.mxu0 %v4503
        %4543 = vmatpush.bf16.msra.mxu0 %v4500
        %4544 = vmatpush.bf16.msra.mxu0 %v4497
        %4545 = vmatpush.bf16.msra.mxu0 %v4494
        %4546 = vmatpush.bf16.msra.mxu0 %v4491
        %4547 = vmatmul.bf16.gmra.mxu0 %v4368
        %v4548 = vpop.f32.mrf.mxu0
        %v4549 = vadd.f32 %v4405, %v4548
        %v4550 = vpop.f32.mrf.mxu0
        %4551 = vdwg.mxu0
        %4552 = vmatpush.bf16.msra.mxu0 %v4513
        %4553 = vmatpush.bf16.msra.mxu0 %v4510
        %4554 = vmatpush.bf16.msra.mxu0 %v4507
        %4555 = vmatpush.bf16.msra.mxu0 %v4504
        %4556 = vmatpush.bf16.msra.mxu0 %v4501
        %4557 = vmatpush.bf16.msra.mxu0 %v4498
        %4558 = vmatpush.bf16.msra.mxu0 %v4495
        %4559 = vmatpush.bf16.msra.mxu0 %v4492
        %4560 = vmatmul.bf16.gmra.mxu0 %v4368
        %v4561 = vpop.f32.mrf.mxu0
        %v4562 = vadd.f32 %v4406, %v4561
        %v4563 = vpop.f32.mrf.mxu0
        %4564 = vdwg.mxu0
        %4565 = vmatpush.bf16.msra.mxu0 %v4514
        %4566 = vmatpush.bf16.msra.mxu0 %v4511
        %4567 = vmatpush.bf16.msra.mxu0 %v4508
        %4568 = vmatpush.bf16.msra.mxu0 %v4505
        %4569 = vmatpush.bf16.msra.mxu0 %v4502
        %4570 = vmatpush.bf16.msra.mxu0 %v4499
        %4571 = vmatpush.bf16.msra.mxu0 %v4496
        %4572 = vmatpush.bf16.msra.mxu0 %v4493
        %4573 = vmatmul.bf16.gmra.mxu0 %v4368
        %v4574 = vpop.f32.mrf.mxu0
        %v4575 = vadd.f32 %v4407, %v4574
        %v4576 = vpop.f32.mrf.mxu0
        %4577 = vdwg.mxu0
        %v4578 = vpack.c.bf16 %v4549, %v4549
        %v4579 = vpack.c.bf16 %v4562, %v4562
        %v4580 = vpack.c.bf16 %v4575, %v4575
        %v4582 = vsel %vm1033, %v4578, 0
        %v4585 = vsel %vm1033, %v4579, 0
        %4587 = vmatpush.bf16.xpose.msra.mxu0 0
        %4588 = vmatpush.bf16.xpose.msra.mxu0 0
        %4589 = vmatpush.bf16.xpose.msra.mxu0 0
        %4590 = vmatpush.bf16.xpose.msra.mxu0 0
        %4591 = vmatpush.bf16.xpose.msra.mxu0 0
        %4592 = vmatpush.bf16.xpose.msra.mxu0 0
        %4593 = vmatpush.bf16.xpose.msra.mxu0 0
        %4594 = vmatpush.bf16.xpose.msra.mxu0 %v4585
        %4595 = vmatmul.bf16.gmra.mxu0 %v4582
        %v4596 = vpop.f32.mrf.mxu0
        %v4597 = vadd.f32 0.0, %v4596
        %v4598 = vpop.f32.mrf.mxu0
        %4599 = vdwg.mxu0
        %v4600 = vmul.f32 %v4597, 0.17677669
        %v4601 = vsel %vm1054, %v4600, -inf
        %4602 = vmax.xlane.f32.xlu0 %v4601
        %v4603 = vpop.xlane.xlu0 %4602
        %v4604 = vsub.f32 %v4600, %v4603
        %v4605 = vmul.f32 %v4604, 1.442695
        %v4606 = vpow.pop %v4605
        %v4607 = vsel %vm1054, %v4606, 0.0
        %4608 = vadd.xlane.f32.xlu0 %v4607
        %v4609 = vpop.xlane.xlu0 %4608
        %v4610 = vrcp.pop %v4609
        %v4611 = vmul.f32 %v4606, %v4610
        %v4612 = vpack.c.bf16 %v4611, %v4611
        %v4614 = vsel %vm1054, %v4612, 0
        %v4617 = vsel %vm1070, %v4580, 0
        %4619 = vmatpush.bf16.msra.mxu0 0
        %4620 = vmatpush.bf16.msra.mxu0 0
        %4621 = vmatpush.bf16.msra.mxu0 0
        %4622 = vmatpush.bf16.msra.mxu0 0
        %4623 = vmatpush.bf16.msra.mxu0 0
        %4624 = vmatpush.bf16.msra.mxu0 0
        %4625 = vmatpush.bf16.msra.mxu0 0
        %4626 = vmatpush.bf16.msra.mxu0 %v4617
        %4627 = vmatmul.bf16.gmra.mxu0 %v4614
        %v4628 = vpop.f32.mrf.mxu0
        %v4629 = vadd.f32 0.0, %v4628
        %v4630 = vpop.f32.mrf.mxu0
        %4631 = vdwg.mxu0
        %4633 = vrot.lane.b32.xlu0 %v4578, 96
        %v4634 = vpop.permute.xlu0 %4633
        %4636 = vrot.lane.b32.xlu0 %v4579, 96
        %v4637 = vpop.permute.xlu0 %4636
        %v4639 = vsel %vm1033, %v4634, 0
        %v4642 = vsel %vm1033, %v4637, 0
        %4644 = vmatpush.bf16.xpose.msra.mxu0 0
        %4645 = vmatpush.bf16.xpose.msra.mxu0 0
        %4646 = vmatpush.bf16.xpose.msra.mxu0 0
        %4647 = vmatpush.bf16.xpose.msra.mxu0 0
        %4648 = vmatpush.bf16.xpose.msra.mxu0 0
        %4649 = vmatpush.bf16.xpose.msra.mxu0 0
        %4650 = vmatpush.bf16.xpose.msra.mxu0 0
        %4651 = vmatpush.bf16.xpose.msra.mxu0 %v4642
        %4652 = vmatmul.bf16.gmra.mxu0 %v4639
        %v4653 = vpop.f32.mrf.mxu0
        %v4654 = vadd.f32 0.0, %v4653
        %v4655 = vpop.f32.mrf.mxu0
        %4656 = vdwg.mxu0
        %v4657 = vmul.f32 %v4654, 0.17677669
        %v4658 = vsel %vm1054, %v4657, -inf
        %4659 = vmax.xlane.f32.xlu0 %v4658
        %v4660 = vpop.xlane.xlu0 %4659
        %v4661 = vsub.f32 %v4657, %v4660
        %v4662 = vmul.f32 %v4661, 1.442695
        %v4663 = vpow.pop %v4662
        %v4664 = vsel %vm1054, %v4663, 0.0
        %4665 = vadd.xlane.f32.xlu0 %v4664
        %v4666 = vpop.xlane.xlu0 %4665
        %v4667 = vrcp.pop %v4666
        %v4668 = vmul.f32 %v4663, %v4667
        %v4669 = vpack.c.bf16 %v4668, %v4668
        %4671 = vrot.lane.b32.xlu0 %v4580, 96
        %v4672 = vpop.permute.xlu0 %4671
        %v4674 = vsel %vm1054, %v4669, 0
        %v4677 = vsel %vm1070, %v4672, 0
        %4679 = vmatpush.bf16.msra.mxu0 0
        %4680 = vmatpush.bf16.msra.mxu0 0
        %4681 = vmatpush.bf16.msra.mxu0 0
        %4682 = vmatpush.bf16.msra.mxu0 0
        %4683 = vmatpush.bf16.msra.mxu0 0
        %4684 = vmatpush.bf16.msra.mxu0 0
        %4685 = vmatpush.bf16.msra.mxu0 0
        %4686 = vmatpush.bf16.msra.mxu0 %v4677
        %4687 = vmatmul.bf16.gmra.mxu0 %v4674
        %v4688 = vpop.f32.mrf.mxu0
        %v4689 = vadd.f32 0.0, %v4688
        %v4690 = vpop.f32.mrf.mxu0
        %4691 = vdwg.mxu0
        %4692 = vrot.lane.b32.xlu0 %v4578, 64
        %v4693 = vpop.permute.xlu0 %4692
        %4694 = vrot.lane.b32.xlu0 %v4579, 64
        %v4695 = vpop.permute.xlu0 %4694
        %v4697 = vsel %vm1033, %v4693, 0
        %v4700 = vsel %vm1033, %v4695, 0
        %4702 = vmatpush.bf16.xpose.msra.mxu0 0
        %4703 = vmatpush.bf16.xpose.msra.mxu0 0
        %4704 = vmatpush.bf16.xpose.msra.mxu0 0
        %4705 = vmatpush.bf16.xpose.msra.mxu0 0
        %4706 = vmatpush.bf16.xpose.msra.mxu0 0
        %4707 = vmatpush.bf16.xpose.msra.mxu0 0
        %4708 = vmatpush.bf16.xpose.msra.mxu0 0
        %4709 = vmatpush.bf16.xpose.msra.mxu0 %v4700
        %4710 = vmatmul.bf16.gmra.mxu0 %v4697
        %v4711 = vpop.f32.mrf.mxu0
        %v4712 = vadd.f32 0.0, %v4711
        %v4713 = vpop.f32.mrf.mxu0
        %4714 = vdwg.mxu0
        %v4715 = vmul.f32 %v4712, 0.17677669
        %v4716 = vsel %vm1054, %v4715, -inf
        %4717 = vmax.xlane.f32.xlu0 %v4716
        %v4718 = vpop.xlane.xlu0 %4717
        %v4719 = vsub.f32 %v4715, %v4718
        %v4720 = vmul.f32 %v4719, 1.442695
        %v4721 = vpow.pop %v4720
        %v4722 = vsel %vm1054, %v4721, 0.0
        %4723 = vadd.xlane.f32.xlu0 %v4722
        %v4724 = vpop.xlane.xlu0 %4723
        %v4725 = vrcp.pop %v4724
        %v4726 = vmul.f32 %v4721, %v4725
        %v4727 = vpack.c.bf16 %v4726, %v4726
        %4728 = vrot.lane.b32.xlu0 %v4580, 64
        %v4729 = vpop.permute.xlu0 %4728
        %v4731 = vsel %vm1054, %v4727, 0
        %v4734 = vsel %vm1070, %v4729, 0
        %4736 = vmatpush.bf16.msra.mxu0 0
        %4737 = vmatpush.bf16.msra.mxu0 0
        %4738 = vmatpush.bf16.msra.mxu0 0
        %4739 = vmatpush.bf16.msra.mxu0 0
        %4740 = vmatpush.bf16.msra.mxu0 0
        %4741 = vmatpush.bf16.msra.mxu0 0
        %4742 = vmatpush.bf16.msra.mxu0 0
        %4743 = vmatpush.bf16.msra.mxu0 %v4734
        %4744 = vmatmul.bf16.gmra.mxu0 %v4731
        %v4745 = vpop.f32.mrf.mxu0
        %v4746 = vadd.f32 0.0, %v4745
        %v4747 = vpop.f32.mrf.mxu0
        %4748 = vdwg.mxu0
        %4749 = vrot.lane.b32.xlu0 %v4578, 32
        %v4750 = vpop.permute.xlu0 %4749
        %4751 = vrot.lane.b32.xlu0 %v4579, 32
        %v4752 = vpop.permute.xlu0 %4751
        %v4754 = vsel %vm1033, %v4750, 0
        %v4757 = vsel %vm1033, %v4752, 0
        %4759 = vmatpush.bf16.xpose.msra.mxu0 0
        %4760 = vmatpush.bf16.xpose.msra.mxu0 0
        %4761 = vmatpush.bf16.xpose.msra.mxu0 0
        %4762 = vmatpush.bf16.xpose.msra.mxu0 0
        %4763 = vmatpush.bf16.xpose.msra.mxu0 0
        %4764 = vmatpush.bf16.xpose.msra.mxu0 0
        %4765 = vmatpush.bf16.xpose.msra.mxu0 0
        %4766 = vmatpush.bf16.xpose.msra.mxu0 %v4757
        %4767 = vmatmul.bf16.gmra.mxu0 %v4754
        %v4768 = vpop.f32.mrf.mxu0
        %v4769 = vadd.f32 0.0, %v4768
        %v4770 = vpop.f32.mrf.mxu0
        %4771 = vdwg.mxu0
        %v4772 = vmul.f32 %v4769, 0.17677669
        %v4773 = vsel %vm1054, %v4772, -inf
        %4774 = vmax.xlane.f32.xlu0 %v4773
        %v4775 = vpop.xlane.xlu0 %4774
        %v4776 = vsub.f32 %v4772, %v4775
        %v4777 = vmul.f32 %v4776, 1.442695
        %v4778 = vpow.pop %v4777
        %v4779 = vsel %vm1054, %v4778, 0.0
        %4780 = vadd.xlane.f32.xlu0 %v4779
        %v4781 = vpop.xlane.xlu0 %4780
        %v4782 = vrcp.pop %v4781
        %v4783 = vmul.f32 %v4778, %v4782
        %v4784 = vpack.c.bf16 %v4783, %v4783
        %4785 = vrot.lane.b32.xlu0 %v4580, 32
        %v4786 = vpop.permute.xlu0 %4785
        %v4788 = vsel %vm1054, %v4784, 0
        %v4791 = vsel %vm1070, %v4786, 0
        %4793 = vmatpush.bf16.msra.mxu0 0
        %4794 = vmatpush.bf16.msra.mxu0 0
        %4795 = vmatpush.bf16.msra.mxu0 0
        %4796 = vmatpush.bf16.msra.mxu0 0
        %4797 = vmatpush.bf16.msra.mxu0 0
        %4798 = vmatpush.bf16.msra.mxu0 0
        %4799 = vmatpush.bf16.msra.mxu0 0
        %4800 = vmatpush.bf16.msra.mxu0 %v4791
        %4801 = vmatmul.bf16.gmra.mxu0 %v4788
        %v4802 = vpop.f32.mrf.mxu0
        %v4803 = vadd.f32 0.0, %v4802
        %v4804 = vpop.f32.mrf.mxu0
        %4805 = vdwg.mxu0
        %4807 = vrot.lane.b32.xlu0 %v4689, 32
        %v4808 = vpop.permute.xlu0 %4807
        %4811 = vrot.lane.b32.xlu0 %v4746, 64
        %v4812 = vpop.permute.xlu0 %4811
        %4815 = vrot.lane.b32.xlu0 %v4803, 96
        %v4816 = vpop.permute.xlu0 %4815
        %v4818 = vsel %vm1033, %v4629, %v4808
        %v4819 = vsel %vm1274, %v4818, %v4812
        %v4820 = vsel %vm1276, %v4819, %v4816
        %v4821 = vpack.c.bf16 %v4820, %v4820
        %s4822 = scalar_lea.vmem [#allocation6], 192
        %v4823 = vld [vmem:[%s4822] sm:$0xf]
        %v4824 = vld [vmem:[%s4822 + $0x4] sm:$0xf]
        %v4825 = vld [vmem:[%s4822 + $0x8] sm:$0xf]
        %v4826 = vld [vmem:[%s4822 + $0xc] sm:$0xf]
        %v4827 = vld [vmem:[%s4822 + $0x10] sm:$0xf]
        %v4828 = vld [vmem:[%s4822 + $0x14] sm:$0xf]
        %v4829 = vld [vmem:[%s4822 + $0x18] sm:$0xf]
        %v4830 = vld [vmem:[%s4822 + $0x1c] sm:$0xf]
        %v4831 = vld [vmem:[%s4822 + $0x20] sm:$0xf]
        %v4832 = vld [vmem:[%s4822 + $0x24] sm:$0xf]
        %v4833 = vld [vmem:[%s4822 + $0x28] sm:$0xf]
        %v4834 = vld [vmem:[%s4822 + $0x2c] sm:$0xf]
        %v4835 = vld [vmem:[%s4822 + $0x30] sm:$0xf]
        %v4836 = vld [vmem:[%s4822 + $0x34] sm:$0xf]
        %v4837 = vld [vmem:[%s4822 + $0x38] sm:$0xf]
        %v4838 = vld [vmem:[%s4822 + $0x3c] sm:$0xf]
        %s4839 = scalar_lea.vmem %s7, 3
        %v4840 = vld [vmem:[%s4839] sm:$0x1]
        %v4842 = vperm.slane %v4840, 0
        %v4860 = vunpack.c.l.b16 %v4823
        %v4861 = vunpack.c.l.b16 %v4824
        %v4862 = vunpack.c.l.b16 %v4825
        %v4863 = vunpack.c.l.b16 %v4826
        %v4864 = vunpack.c.l.b16 %v4827
        %v4865 = vunpack.c.l.b16 %v4828
        %v4866 = vunpack.c.l.b16 %v4829
        %v4867 = vunpack.c.l.b16 %v4830
        %v4868 = vunpack.c.l.b16 %v4831
        %v4869 = vunpack.c.l.b16 %v4832
        %v4870 = vunpack.c.l.b16 %v4833
        %v4871 = vunpack.c.l.b16 %v4834
        %v4872 = vunpack.c.l.b16 %v4835
        %v4873 = vunpack.c.l.b16 %v4836
        %v4874 = vunpack.c.l.b16 %v4837
        %v4875 = vunpack.c.l.b16 %v4838
        %v4876 = vpack.c.b16 %v4861, %v4860
        %v4877 = vpack.c.b16 %v4863, %v4862
        %v4878 = vpack.c.b16 %v4865, %v4864
        %v4879 = vpack.c.b16 %v4867, %v4866
        %v4880 = vpack.c.b16 %v4869, %v4868
        %v4881 = vpack.c.b16 %v4871, %v4870
        %v4882 = vpack.c.b16 %v4873, %v4872
        %v4883 = vpack.c.b16 %v4875, %v4874
        %4892 = vmatpush.bf16.msra.mxu0 %v4883
        %4893 = vmatpush.bf16.msra.mxu0 %v4882
        %4894 = vmatpush.bf16.msra.mxu0 %v4881
        %4895 = vmatpush.bf16.msra.mxu0 %v4880
        %4896 = vmatpush.bf16.msra.mxu0 %v4879
        %4897 = vmatpush.bf16.msra.mxu0 %v4878
        %4898 = vmatpush.bf16.msra.mxu0 %v4877
        %4899 = vmatpush.bf16.msra.mxu0 %v4876
        %4900 = vmatmul.bf16.gmra.mxu0 %v4821
        %v4901 = vpop.f32.mrf.mxu0
        %v4902 = vadd.f32 %v4842, %v4901
        %v4903 = vpop.f32.mrf.mxu0
        %4904 = vdwg.mxu0
        %v4905 = vadd.f32 %v4367, %v4902
        %s4906 = scalar_lea.vmem %s8, 3
        %v4907 = vld [vmem:[%s4906] sm:$0x1]
        %s4908 = scalar_lea.vmem %s9, 3
        %v4909 = vld [vmem:[%s4908] sm:$0x1]
        %4910 = vadd.xlane.f32.xlu0 %v4905
        %v4911 = vpop.xlane.xlu0 %4910
        %v4912 = vmul.f32 %v4911, %v1371
        %v4913 = vsub.f32 %v4905, %v4912
        %v4914 = vmul.f32 %v4913, %v4913
        %4915 = vadd.xlane.f32.xlu0 %v4914
        %v4916 = vpop.xlane.xlu0 %4915
        %v4917 = vmul.f32 %v4916, %v1371
        %v4918 = vadd.f32 %v4917, 1e-05
        %v4919 = vrsqrt.pop %v4918
        %v4920 = vmul.f32 %v4919, %v4918
        %v4921 = vmul.f32 %v4920, %v4919
        %v4922 = vmul.f32 0.5, %v4921
        %v4923 = vsub.f32 1.5, %v4922
        %v4924 = vmul.f32 %v4919, %v4923
        %vm4925 = vweird.f32 %v4918
        %vm4926 = vweird.f32 %v4919
        %vm4927 = vmor %vm4925, %vm4926
        %v4928 = vsel %vm4927, %v4919, %v4924
        %v4929 = vmul.f32 %v4913, %v4928
        %v4931 = vperm.slane %v4907, 0
        %v4933 = vmul.f32 %v4929, %v4931
        %v4935 = vperm.slane %v4909, 0
        %v4937 = vadd.f32 %v4933, %v4935
        %v4938 = vpack.c.bf16 %v4937, %v4937
        %s4939 = scalar_lea.vmem [#allocation7], 768
        %v4940 = vld [vmem:[%s4939] sm:$0xff]
        %v4941 = vld [vmem:[%s4939 + $0x8] sm:$0xff]
        %v4942 = vld [vmem:[%s4939 + $0x10] sm:$0xff]
        %v4943 = vld [vmem:[%s4939 + $0x18] sm:$0xff]
        %v4944 = vld [vmem:[%s4939 + $0x20] sm:$0xff]
        %v4945 = vld [vmem:[%s4939 + $0x28] sm:$0xff]
        %v4946 = vld [vmem:[%s4939 + $0x30] sm:$0xff]
        %v4947 = vld [vmem:[%s4939 + $0x38] sm:$0xff]
        %v4948 = vld [vmem:[%s4939 + $0x40] sm:$0xff]
        %v4949 = vld [vmem:[%s4939 + $0x48] sm:$0xff]
        %v4950 = vld [vmem:[%s4939 + $0x50] sm:$0xff]
        %v4951 = vld [vmem:[%s4939 + $0x58] sm:$0xff]
        %v4952 = vld [vmem:[%s4939 + $0x60] sm:$0xff]
        %v4953 = vld [vmem:[%s4939 + $0x68] sm:$0xff]
        %v4954 = vld [vmem:[%s4939 + $0x70] sm:$0xff]
        %v4955 = vld [vmem:[%s4939 + $0x78] sm:$0xff]
        %v4956 = vld [vmem:[%s4939 + $0x80] sm:$0xff]
        %v4957 = vld [vmem:[%s4939 + $0x88] sm:$0xff]
        %v4958 = vld [vmem:[%s4939 + $0x90] sm:$0xff]
        %v4959 = vld [vmem:[%s4939 + $0x98] sm:$0xff]
        %v4960 = vld [vmem:[%s4939 + $0xa0] sm:$0xff]
        %v4961 = vld [vmem:[%s4939 + $0xa8] sm:$0xff]
        %v4962 = vld [vmem:[%s4939 + $0xb0] sm:$0xff]
        %v4963 = vld [vmem:[%s4939 + $0xb8] sm:$0xff]
        %v4964 = vld [vmem:[%s4939 + $0xc0] sm:$0xff]
        %v4965 = vld [vmem:[%s4939 + $0xc8] sm:$0xff]
        %v4966 = vld [vmem:[%s4939 + $0xd0] sm:$0xff]
        %v4967 = vld [vmem:[%s4939 + $0xd8] sm:$0xff]
        %v4968 = vld [vmem:[%s4939 + $0xe0] sm:$0xff]
        %v4969 = vld [vmem:[%s4939 + $0xe8] sm:$0xff]
        %v4970 = vld [vmem:[%s4939 + $0xf0] sm:$0xff]
        %v4971 = vld [vmem:[%s4939 + $0xf8] sm:$0xff]
        %s4972 = scalar_lea.vmem %s11, 12
        %v4973 = vld [vmem:[%s4972] sm:$0xf]
        %v4975 = vperm.slane %v4973, 0
        %v4976 = vperm.slane %v4973, 1
        %v4977 = vperm.slane %v4973, 2
        %v4978 = vperm.slane %v4973, 3
        %v5015 = vunpack.c.l.b16 %v4940
        %v5016 = vunpack.c.h.b16 %v4940
        %v5017 = vunpack.c.l.b16 %v4941
        %v5018 = vunpack.c.h.b16 %v4941
        %v5019 = vunpack.c.l.b16 %v4942
        %v5020 = vunpack.c.h.b16 %v4942
        %v5021 = vunpack.c.l.b16 %v4943
        %v5022 = vunpack.c.h.b16 %v4943
        %v5023 = vunpack.c.l.b16 %v4944
        %v5024 = vunpack.c.h.b16 %v4944
        %v5025 = vunpack.c.l.b16 %v4945
        %v5026 = vunpack.c.h.b16 %v4945
        %v5027 = vunpack.c.l.b16 %v4946
        %v5028 = vunpack.c.h.b16 %v4946
        %v5029 = vunpack.c.l.b16 %v4947
        %v5030 = vunpack.c.h.b16 %v4947
        %v5031 = vunpack.c.l.b16 %v4948
        %v5032 = vunpack.c.h.b16 %v4948
        %v5033 = vunpack.c.l.b16 %v4949
        %v5034 = vunpack.c.h.b16 %v4949
        %v5035 = vunpack.c.l.b16 %v4950
        %v5036 = vunpack.c.h.b16 %v4950
        %v5037 = vunpack.c.l.b16 %v4951
        %v5038 = vunpack.c.h.b16 %v4951
        %v5039 = vunpack.c.l.b16 %v4952
        %v5040 = vunpack.c.h.b16 %v4952
        %v5041 = vunpack.c.l.b16 %v4953
        %v5042 = vunpack.c.h.b16 %v4953
        %v5043 = vunpack.c.l.b16 %v4954
        %v5044 = vunpack.c.h.b16 %v4954
        %v5045 = vunpack.c.l.b16 %v4955
        %v5046 = vunpack.c.h.b16 %v4955
        %v5047 = vunpack.c.l.b16 %v4956
        %v5048 = vunpack.c.h.b16 %v4956
        %v5049 = vunpack.c.l.b16 %v4957
        %v5050 = vunpack.c.h.b16 %v4957
        %v5051 = vunpack.c.l.b16 %v4958
        %v5052 = vunpack.c.h.b16 %v4958
        %v5053 = vunpack.c.l.b16 %v4959
        %v5054 = vunpack.c.h.b16 %v4959
        %v5055 = vunpack.c.l.b16 %v4960
        %v5056 = vunpack.c.h.b16 %v4960
        %v5057 = vunpack.c.l.b16 %v4961
        %v5058 = vunpack.c.h.b16 %v4961
        %v5059 = vunpack.c.l.b16 %v4962
        %v5060 = vunpack.c.h.b16 %v4962
        %v5061 = vunpack.c.l.b16 %v4963
        %v5062 = vunpack.c.h.b16 %v4963
        %v5063 = vunpack.c.l.b16 %v4964
        %v5064 = vunpack.c.h.b16 %v4964
        %v5065 = vunpack.c.l.b16 %v4965
        %v5066 = vunpack.c.h.b16 %v4965
        %v5067 = vunpack.c.l.b16 %v4966
        %v5068 = vunpack.c.h.b16 %v4966
        %v5069 = vunpack.c.l.b16 %v4967
        %v5070 = vunpack.c.h.b16 %v4967
        %v5071 = vunpack.c.l.b16 %v4968
        %v5072 = vunpack.c.h.b16 %v4968
        %v5073 = vunpack.c.l.b16 %v4969
        %v5074 = vunpack.c.h.b16 %v4969
        %v5075 = vunpack.c.l.b16 %v4970
        %v5076 = vunpack.c.h.b16 %v4970
        %v5077 = vunpack.c.l.b16 %v4971
        %v5078 = vunpack.c.h.b16 %v4971
        %v5079 = vpack.c.b16 %v5019, %v5015
        %v5080 = vpack.c.b16 %v5020, %v5016
        %v5081 = vpack.c.b16 %v5021, %v5017
        %v5082 = vpack.c.b16 %v5022, %v5018
        %v5083 = vpack.c.b16 %v5027, %v5023
        %v5084 = vpack.c.b16 %v5028, %v5024
        %v5085 = vpack.c.b16 %v5029, %v5025
        %v5086 = vpack.c.b16 %v5030, %v5026
        %v5087 = vpack.c.b16 %v5035, %v5031
        %v5088 = vpack.c.b16 %v5036, %v5032
        %v5089 = vpack.c.b16 %v5037, %v5033
        %v5090 = vpack.c.b16 %v5038, %v5034
        %v5091 = vpack.c.b16 %v5043, %v5039
        %v5092 = vpack.c.b16 %v5044, %v5040
        %v5093 = vpack.c.b16 %v5045, %v5041
        %v5094 = vpack.c.b16 %v5046, %v5042
        %v5095 = vpack.c.b16 %v5051, %v5047
        %v5096 = vpack.c.b16 %v5052, %v5048
        %v5097 = vpack.c.b16 %v5053, %v5049
        %v5098 = vpack.c.b16 %v5054, %v5050
        %v5099 = vpack.c.b16 %v5059, %v5055
        %v5100 = vpack.c.b16 %v5060, %v5056
        %v5101 = vpack.c.b16 %v5061, %v5057
        %v5102 = vpack.c.b16 %v5062, %v5058
        %v5103 = vpack.c.b16 %v5067, %v5063
        %v5104 = vpack.c.b16 %v5068, %v5064
        %v5105 = vpack.c.b16 %v5069, %v5065
        %v5106 = vpack.c.b16 %v5070, %v5066
        %v5107 = vpack.c.b16 %v5075, %v5071
        %v5108 = vpack.c.b16 %v5076, %v5072
        %v5109 = vpack.c.b16 %v5077, %v5073
        %v5110 = vpack.c.b16 %v5078, %v5074
        %5143 = vmatpush.bf16.msra.mxu0 %v5107
        %5144 = vmatpush.bf16.msra.mxu0 %v5103
        %5145 = vmatpush.bf16.msra.mxu0 %v5099
        %5146 = vmatpush.bf16.msra.mxu0 %v5095
        %5147 = vmatpush.bf16.msra.mxu0 %v5091
        %5148 = vmatpush.bf16.msra.mxu0 %v5087
        %5149 = vmatpush.bf16.msra.mxu0 %v5083
        %5150 = vmatpush.bf16.msra.mxu0 %v5079
        %5151 = vmatmul.bf16.gmra.mxu0 %v4938
        %v5152 = vpop.f32.mrf.mxu0
        %v5153 = vadd.f32 %v4975, %v5152
        %v5154 = vpop.f32.mrf.mxu0
        %5155 = vdwg.mxu0
        %5156 = vmatpush.bf16.msra.mxu0 %v5108
        %5157 = vmatpush.bf16.msra.mxu0 %v5104
        %5158 = vmatpush.bf16.msra.mxu0 %v5100
        %5159 = vmatpush.bf16.msra.mxu0 %v5096
        %5160 = vmatpush.bf16.msra.mxu0 %v5092
        %5161 = vmatpush.bf16.msra.mxu0 %v5088
        %5162 = vmatpush.bf16.msra.mxu0 %v5084
        %5163 = vmatpush.bf16.msra.mxu0 %v5080
        %5164 = vmatmul.bf16.gmra.mxu0 %v4938
        %v5165 = vpop.f32.mrf.mxu0
        %v5166 = vadd.f32 %v4976, %v5165
        %v5167 = vpop.f32.mrf.mxu0
        %5168 = vdwg.mxu0
        %5169 = vmatpush.bf16.msra.mxu0 %v5109
        %5170 = vmatpush.bf16.msra.mxu0 %v5105
        %5171 = vmatpush.bf16.msra.mxu0 %v5101
        %5172 = vmatpush.bf16.msra.mxu0 %v5097
        %5173 = vmatpush.bf16.msra.mxu0 %v5093
        %5174 = vmatpush.bf16.msra.mxu0 %v5089
        %5175 = vmatpush.bf16.msra.mxu0 %v5085
        %5176 = vmatpush.bf16.msra.mxu0 %v5081
        %5177 = vmatmul.bf16.gmra.mxu0 %v4938
        %v5178 = vpop.f32.mrf.mxu0
        %v5179 = vadd.f32 %v4977, %v5178
        %v5180 = vpop.f32.mrf.mxu0
        %5181 = vdwg.mxu0
        %5182 = vmatpush.bf16.msra.mxu0 %v5110
        %5183 = vmatpush.bf16.msra.mxu0 %v5106
        %5184 = vmatpush.bf16.msra.mxu0 %v5102
        %5185 = vmatpush.bf16.msra.mxu0 %v5098
        %5186 = vmatpush.bf16.msra.mxu0 %v5094
        %5187 = vmatpush.bf16.msra.mxu0 %v5090
        %5188 = vmatpush.bf16.msra.mxu0 %v5086
        %5189 = vmatpush.bf16.msra.mxu0 %v5082
        %5190 = vmatmul.bf16.gmra.mxu0 %v4938
        %v5191 = vpop.f32.mrf.mxu0
        %v5192 = vadd.f32 %v4978, %v5191
        %v5193 = vpop.f32.mrf.mxu0
        %5194 = vdwg.mxu0
        %v5195 = vmax.f32 %v5153, 0.0
        %v5196 = vmax.f32 %v5166, 0.0
        %v5197 = vmax.f32 %v5179, 0.0
        %v5198 = vmax.f32 %v5192, 0.0
        %v5199 = vpack.c.bf16 %v5195, %v5195
        %v5200 = vpack.c.bf16 %v5196, %v5196
        %v5201 = vpack.c.bf16 %v5197, %v5197
        %v5202 = vpack.c.bf16 %v5198, %v5198
        %s5203 = scalar_lea.vmem [#allocation9], 768
        %v5204 = vld [vmem:[%s5203] sm:$0xf]
        %v5205 = vld [vmem:[%s5203 + $0x4] sm:$0xf]
        %v5206 = vld [vmem:[%s5203 + $0x8] sm:$0xf]
        %v5207 = vld [vmem:[%s5203 + $0xc] sm:$0xf]
        %v5208 = vld [vmem:[%s5203 + $0x10] sm:$0xf]
        %v5209 = vld [vmem:[%s5203 + $0x14] sm:$0xf]
        %v5210 = vld [vmem:[%s5203 + $0x18] sm:$0xf]
        %v5211 = vld [vmem:[%s5203 + $0x1c] sm:$0xf]
        %v5212 = vld [vmem:[%s5203 + $0x20] sm:$0xf]
        %v5213 = vld [vmem:[%s5203 + $0x24] sm:$0xf]
        %v5214 = vld [vmem:[%s5203 + $0x28] sm:$0xf]
        %v5215 = vld [vmem:[%s5203 + $0x2c] sm:$0xf]
        %v5216 = vld [vmem:[%s5203 + $0x30] sm:$0xf]
        %v5217 = vld [vmem:[%s5203 + $0x34] sm:$0xf]
        %v5218 = vld [vmem:[%s5203 + $0x38] sm:$0xf]
        %v5219 = vld [vmem:[%s5203 + $0x3c] sm:$0xf]
        %v5220 = vld [vmem:[%s5203 + $0x40] sm:$0xf]
        %v5221 = vld [vmem:[%s5203 + $0x44] sm:$0xf]
        %v5222 = vld [vmem:[%s5203 + $0x48] sm:$0xf]
        %v5223 = vld [vmem:[%s5203 + $0x4c] sm:$0xf]
        %v5224 = vld [vmem:[%s5203 + $0x50] sm:$0xf]
        %v5225 = vld [vmem:[%s5203 + $0x54] sm:$0xf]
        %v5226 = vld [vmem:[%s5203 + $0x58] sm:$0xf]
        %v5227 = vld [vmem:[%s5203 + $0x5c] sm:$0xf]
        %v5228 = vld [vmem:[%s5203 + $0x60] sm:$0xf]
        %v5229 = vld [vmem:[%s5203 + $0x64] sm:$0xf]
        %v5230 = vld [vmem:[%s5203 + $0x68] sm:$0xf]
        %v5231 = vld [vmem:[%s5203 + $0x6c] sm:$0xf]
        %v5232 = vld [vmem:[%s5203 + $0x70] sm:$0xf]
        %v5233 = vld [vmem:[%s5203 + $0x74] sm:$0xf]
        %v5234 = vld [vmem:[%s5203 + $0x78] sm:$0xf]
        %v5235 = vld [vmem:[%s5203 + $0x7c] sm:$0xf]
        %v5236 = vld [vmem:[%s5203 + $0x80] sm:$0xf]
        %v5237 = vld [vmem:[%s5203 + $0x84] sm:$0xf]
        %v5238 = vld [vmem:[%s5203 + $0x88] sm:$0xf]
        %v5239 = vld [vmem:[%s5203 + $0x8c] sm:$0xf]
        %v5240 = vld [vmem:[%s5203 + $0x90] sm:$0xf]
        %v5241 = vld [vmem:[%s5203 + $0x94] sm:$0xf]
        %v5242 = vld [vmem:[%s5203 + $0x98] sm:$0xf]
        %v5243 = vld [vmem:[%s5203 + $0x9c] sm:$0xf]
        %v5244 = vld [vmem:[%s5203 + $0xa0] sm:$0xf]
        %v5245 = vld [vmem:[%s5203 + $0xa4] sm:$0xf]
        %v5246 = vld [vmem:[%s5203 + $0xa8] sm:$0xf]
        %v5247 = vld [vmem:[%s5203 + $0xac] sm:$0xf]
        %v5248 = vld [vmem:[%s5203 + $0xb0] sm:$0xf]
        %v5249 = vld [vmem:[%s5203 + $0xb4] sm:$0xf]
        %v5250 = vld [vmem:[%s5203 + $0xb8] sm:$0xf]
        %v5251 = vld [vmem:[%s5203 + $0xbc] sm:$0xf]
        %v5252 = vld [vmem:[%s5203 + $0xc0] sm:$0xf]
        %v5253 = vld [vmem:[%s5203 + $0xc4] sm:$0xf]
        %v5254 = vld [vmem:[%s5203 + $0xc8] sm:$0xf]
        %v5255 = vld [vmem:[%s5203 + $0xcc] sm:$0xf]
        %v5256 = vld [vmem:[%s5203 + $0xd0] sm:$0xf]
        %v5257 = vld [vmem:[%s5203 + $0xd4] sm:$0xf]
        %v5258 = vld [vmem:[%s5203 + $0xd8] sm:$0xf]
        %v5259 = vld [vmem:[%s5203 + $0xdc] sm:$0xf]
        %v5260 = vld [vmem:[%s5203 + $0xe0] sm:$0xf]
        %v5261 = vld [vmem:[%s5203 + $0xe4] sm:$0xf]
        %v5262 = vld [vmem:[%s5203 + $0xe8] sm:$0xf]
        %v5263 = vld [vmem:[%s5203 + $0xec] sm:$0xf]
        %v5264 = vld [vmem:[%s5203 + $0xf0] sm:$0xf]
        %v5265 = vld [vmem:[%s5203 + $0xf4] sm:$0xf]
        %v5266 = vld [vmem:[%s5203 + $0xf8] sm:$0xf]
        %v5267 = vld [vmem:[%s5203 + $0xfc] sm:$0xf]
        %s5268 = scalar_lea.vmem [#allocation10], 3
        %v5269 = vld [vmem:[%s5268] sm:$0x1]
        %v5271 = vperm.slane %v5269, 0
        %v5337 = vunpack.c.l.b16 %v5204
        %v5338 = vunpack.c.l.b16 %v5205
        %v5339 = vunpack.c.l.b16 %v5206
        %v5340 = vunpack.c.l.b16 %v5207
        %v5341 = vunpack.c.l.b16 %v5208
        %v5342 = vunpack.c.l.b16 %v5209
        %v5343 = vunpack.c.l.b16 %v5210
        %v5344 = vunpack.c.l.b16 %v5211
        %v5345 = vunpack.c.l.b16 %v5212
        %v5346 = vunpack.c.l.b16 %v5213
        %v5347 = vunpack.c.l.b16 %v5214
        %v5348 = vunpack.c.l.b16 %v5215
        %v5349 = vunpack.c.l.b16 %v5216
        %v5350 = vunpack.c.l.b16 %v5217
        %v5351 = vunpack.c.l.b16 %v5218
        %v5352 = vunpack.c.l.b16 %v5219
        %v5353 = vunpack.c.l.b16 %v5220
        %v5354 = vunpack.c.l.b16 %v5221
        %v5355 = vunpack.c.l.b16 %v5222
        %v5356 = vunpack.c.l.b16 %v5223
        %v5357 = vunpack.c.l.b16 %v5224
        %v5358 = vunpack.c.l.b16 %v5225
        %v5359 = vunpack.c.l.b16 %v5226
        %v5360 = vunpack.c.l.b16 %v5227
        %v5361 = vunpack.c.l.b16 %v5228
        %v5362 = vunpack.c.l.b16 %v5229
        %v5363 = vunpack.c.l.b16 %v5230
        %v5364 = vunpack.c.l.b16 %v5231
        %v5365 = vunpack.c.l.b16 %v5232
        %v5366 = vunpack.c.l.b16 %v5233
        %v5367 = vunpack.c.l.b16 %v5234
        %v5368 = vunpack.c.l.b16 %v5235
        %v5369 = vunpack.c.l.b16 %v5236
        %v5370 = vunpack.c.l.b16 %v5237
        %v5371 = vunpack.c.l.b16 %v5238
        %v5372 = vunpack.c.l.b16 %v5239
        %v5373 = vunpack.c.l.b16 %v5240
        %v5374 = vunpack.c.l.b16 %v5241
        %v5375 = vunpack.c.l.b16 %v5242
        %v5376 = vunpack.c.l.b16 %v5243
        %v5377 = vunpack.c.l.b16 %v5244
        %v5378 = vunpack.c.l.b16 %v5245
        %v5379 = vunpack.c.l.b16 %v5246
        %v5380 = vunpack.c.l.b16 %v5247
        %v5381 = vunpack.c.l.b16 %v5248
        %v5382 = vunpack.c.l.b16 %v5249
        %v5383 = vunpack.c.l.b16 %v5250
        %v5384 = vunpack.c.l.b16 %v5251
        %v5385 = vunpack.c.l.b16 %v5252
        %v5386 = vunpack.c.l.b16 %v5253
        %v5387 = vunpack.c.l.b16 %v5254
        %v5388 = vunpack.c.l.b16 %v5255
        %v5389 = vunpack.c.l.b16 %v5256
        %v5390 = vunpack.c.l.b16 %v5257
        %v5391 = vunpack.c.l.b16 %v5258
        %v5392 = vunpack.c.l.b16 %v5259
        %v5393 = vunpack.c.l.b16 %v5260
        %v5394 = vunpack.c.l.b16 %v5261
        %v5395 = vunpack.c.l.b16 %v5262
        %v5396 = vunpack.c.l.b16 %v5263
        %v5397 = vunpack.c.l.b16 %v5264
        %v5398 = vunpack.c.l.b16 %v5265
        %v5399 = vunpack.c.l.b16 %v5266
        %v5400 = vunpack.c.l.b16 %v5267
        %v5401 = vpack.c.b16 %v5338, %v5337
        %v5402 = vpack.c.b16 %v5340, %v5339
        %v5403 = vpack.c.b16 %v5342, %v5341
        %v5404 = vpack.c.b16 %v5344, %v5343
        %v5405 = vpack.c.b16 %v5346, %v5345
        %v5406 = vpack.c.b16 %v5348, %v5347
        %v5407 = vpack.c.b16 %v5350, %v5349
        %v5408 = vpack.c.b16 %v5352, %v5351
        %v5409 = vpack.c.b16 %v5354, %v5353
        %v5410 = vpack.c.b16 %v5356, %v5355
        %v5411 = vpack.c.b16 %v5358, %v5357
        %v5412 = vpack.c.b16 %v5360, %v5359
        %v5413 = vpack.c.b16 %v5362, %v5361
        %v5414 = vpack.c.b16 %v5364, %v5363
        %v5415 = vpack.c.b16 %v5366, %v5365
        %v5416 = vpack.c.b16 %v5368, %v5367
        %v5417 = vpack.c.b16 %v5370, %v5369
        %v5418 = vpack.c.b16 %v5372, %v5371
        %v5419 = vpack.c.b16 %v5374, %v5373
        %v5420 = vpack.c.b16 %v5376, %v5375
        %v5421 = vpack.c.b16 %v5378, %v5377
        %v5422 = vpack.c.b16 %v5380, %v5379
        %v5423 = vpack.c.b16 %v5382, %v5381
        %v5424 = vpack.c.b16 %v5384, %v5383
        %v5425 = vpack.c.b16 %v5386, %v5385
        %v5426 = vpack.c.b16 %v5388, %v5387
        %v5427 = vpack.c.b16 %v5390, %v5389
        %v5428 = vpack.c.b16 %v5392, %v5391
        %v5429 = vpack.c.b16 %v5394, %v5393
        %v5430 = vpack.c.b16 %v5396, %v5395
        %v5431 = vpack.c.b16 %v5398, %v5397
        %v5432 = vpack.c.b16 %v5400, %v5399
        %5465 = vmatpush.bf16.msra.mxu0 %v5408
        %5466 = vmatpush.bf16.msra.mxu0 %v5407
        %5467 = vmatpush.bf16.msra.mxu0 %v5406
        %5468 = vmatpush.bf16.msra.mxu0 %v5405
        %5469 = vmatpush.bf16.msra.mxu0 %v5404
        %5470 = vmatpush.bf16.msra.mxu0 %v5403
        %5471 = vmatpush.bf16.msra.mxu0 %v5402
        %5472 = vmatpush.bf16.msra.mxu0 %v5401
        %5473 = vmatmul.bf16.gmra.mxu0 %v5199
        %v5474 = vpop.f32.mrf.mxu0
        %v5475 = vadd.f32 %v5271, %v5474
        %v5476 = vpop.f32.mrf.mxu0
        %5477 = vdwg.mxu0
        %5478 = vmatpush.bf16.msra.mxu0 %v5416
        %5479 = vmatpush.bf16.msra.mxu0 %v5415
        %5480 = vmatpush.bf16.msra.mxu0 %v5414
        %5481 = vmatpush.bf16.msra.mxu0 %v5413
        %5482 = vmatpush.bf16.msra.mxu0 %v5412
        %5483 = vmatpush.bf16.msra.mxu0 %v5411
        %5484 = vmatpush.bf16.msra.mxu0 %v5410
        %5485 = vmatpush.bf16.msra.mxu0 %v5409
        %5486 = vmatmul.bf16.gmra.mxu0 %v5200
        %v5487 = vpop.f32.mrf.mxu0
        %v5488 = vadd.f32 %v5475, %v5487
        %v5489 = vpop.f32.mrf.mxu0
        %5490 = vdwg.mxu0
        %5491 = vmatpush.bf16.msra.mxu0 %v5424
        %5492 = vmatpush.bf16.msra.mxu0 %v5423
        %5493 = vmatpush.bf16.msra.mxu0 %v5422
        %5494 = vmatpush.bf16.msra.mxu0 %v5421
        %5495 = vmatpush.bf16.msra.mxu0 %v5420
        %5496 = vmatpush.bf16.msra.mxu0 %v5419
        %5497 = vmatpush.bf16.msra.mxu0 %v5418
        %5498 = vmatpush.bf16.msra.mxu0 %v5417
        %5499 = vmatmul.bf16.gmra.mxu0 %v5201
        %v5500 = vpop.f32.mrf.mxu0
        %v5501 = vadd.f32 %v5488, %v5500
        %v5502 = vpop.f32.mrf.mxu0
        %5503 = vdwg.mxu0
        %5504 = vmatpush.bf16.msra.mxu0 %v5432
        %5505 = vmatpush.bf16.msra.mxu0 %v5431
        %5506 = vmatpush.bf16.msra.mxu0 %v5430
        %5507 = vmatpush.bf16.msra.mxu0 %v5429
        %5508 = vmatpush.bf16.msra.mxu0 %v5428
        %5509 = vmatpush.bf16.msra.mxu0 %v5427
        %5510 = vmatpush.bf16.msra.mxu0 %v5426
        %5511 = vmatpush.bf16.msra.mxu0 %v5425
        %5512 = vmatmul.bf16.gmra.mxu0 %v5202
        %v5513 = vpop.f32.mrf.mxu0
        %v5514 = vadd.f32 %v5501, %v5513
        %v5515 = vpop.f32.mrf.mxu0
        %5516 = vdwg.mxu0
        %v5517 = vadd.f32 %v4937, %v5514
        %s5518 = scalar_lea.vmem [#allocation12], 3
        %v5519 = vld [vmem:[%s5518] sm:$0x1]
        %s5520 = scalar_lea.vmem [#allocation13], 3
        %v5521 = vld [vmem:[%s5520] sm:$0x1]
        %5522 = vadd.xlane.f32.xlu0 %v5517
        %v5523 = vpop.xlane.xlu0 %5522
        %v5524 = vmul.f32 %v5523, %v1371
        %v5525 = vsub.f32 %v5517, %v5524
        %v5526 = vmul.f32 %v5525, %v5525
        %5527 = vadd.xlane.f32.xlu0 %v5526
        %v5528 = vpop.xlane.xlu0 %5527
        %v5529 = vmul.f32 %v5528, %v1371
        %v5530 = vadd.f32 %v5529, 1e-05
        %v5531 = vrsqrt.pop %v5530
        %v5532 = vmul.f32 %v5531, %v5530
        %v5533 = vmul.f32 %v5532, %v5531
        %v5534 = vmul.f32 0.5, %v5533
        %v5535 = vsub.f32 1.5, %v5534
        %v5536 = vmul.f32 %v5531, %v5535
        %vm5537 = vweird.f32 %v5530
        %vm5538 = vweird.f32 %v5531
        %vm5539 = vmor %vm5537, %vm5538
        %v5540 = vsel %vm5539, %v5531, %v5536
        %v5541 = vmul.f32 %v5525, %v5540
        %v5543 = vperm.slane %v5519, 0
        %v5545 = vmul.f32 %v5541, %v5543
        %v5547 = vperm.slane %v5521, 0
        %v5549 = vadd.f32 %v5545, %v5547
        %v5550 = vpack.c.bf16 %v5549, %v5549
        %v5551 = vld [vmem:[#allocation15] sm:$0xf]
        %v5552 = vld [vmem:[#allocation15 + $0x4] sm:$0xf]
        %v5553 = vld [vmem:[#allocation15 + $0x8] sm:$0xf]
        %v5554 = vld [vmem:[#allocation15 + $0xc] sm:$0xf]
        %v5555 = vld [vmem:[#allocation15 + $0x10] sm:$0xf]
        %v5556 = vld [vmem:[#allocation15 + $0x14] sm:$0xf]
        %v5557 = vld [vmem:[#allocation15 + $0x18] sm:$0xf]
        %v5558 = vld [vmem:[#allocation15 + $0x1c] sm:$0xf]
        %v5559 = vld [vmem:[#allocation15 + $0x20] sm:$0xf]
        %v5560 = vld [vmem:[#allocation15 + $0x24] sm:$0xf]
        %v5561 = vld [vmem:[#allocation15 + $0x28] sm:$0xf]
        %v5562 = vld [vmem:[#allocation15 + $0x2c] sm:$0xf]
        %v5563 = vld [vmem:[#allocation15 + $0x30] sm:$0xf]
        %v5564 = vld [vmem:[#allocation15 + $0x34] sm:$0xf]
        %v5565 = vld [vmem:[#allocation15 + $0x38] sm:$0xf]
        %v5566 = vld [vmem:[#allocation15 + $0x3c] sm:$0xf]
        %v5567 = vld [vmem:[#allocation16] sm:$0x1]
        %v5569 = vperm.slane %v5567, 0
        %v5587 = vunpack.c.l.b16 %v5551
        %v5588 = vunpack.c.l.b16 %v5552
        %v5589 = vunpack.c.l.b16 %v5553
        %v5590 = vunpack.c.l.b16 %v5554
        %v5591 = vunpack.c.l.b16 %v5555
        %v5592 = vunpack.c.l.b16 %v5556
        %v5593 = vunpack.c.l.b16 %v5557
        %v5594 = vunpack.c.l.b16 %v5558
        %v5595 = vunpack.c.l.b16 %v5559
        %v5596 = vunpack.c.l.b16 %v5560
        %v5597 = vunpack.c.l.b16 %v5561
        %v5598 = vunpack.c.l.b16 %v5562
        %v5599 = vunpack.c.l.b16 %v5563
        %v5600 = vunpack.c.l.b16 %v5564
        %v5601 = vunpack.c.l.b16 %v5565
        %v5602 = vunpack.c.l.b16 %v5566
        %v5603 = vpack.c.b16 %v5588, %v5587
        %v5604 = vpack.c.b16 %v5590, %v5589
        %v5605 = vpack.c.b16 %v5592, %v5591
        %v5606 = vpack.c.b16 %v5594, %v5593
        %v5607 = vpack.c.b16 %v5596, %v5595
        %v5608 = vpack.c.b16 %v5598, %v5597
        %v5609 = vpack.c.b16 %v5600, %v5599
        %v5610 = vpack.c.b16 %v5602, %v5601
        %5619 = vmatpush.bf16.msra.mxu0 %v5610
        %5620 = vmatpush.bf16.msra.mxu0 %v5609
        %5621 = vmatpush.bf16.msra.mxu0 %v5608
        %5622 = vmatpush.bf16.msra.mxu0 %v5607
        %5623 = vmatpush.bf16.msra.mxu0 %v5606
        %5624 = vmatpush.bf16.msra.mxu0 %v5605
        %5625 = vmatpush.bf16.msra.mxu0 %v5604
        %5626 = vmatpush.bf16.msra.mxu0 %v5603
        %5627 = vmatmul.bf16.gmra.mxu0 %v5550
        %v5628 = vpop.f32.mrf.mxu0
        %v5629 = vadd.f32 %v5569, %v5628
        %v5630 = vpop.f32.mrf.mxu0
        %5631 = vdwg.mxu0
        %5632 = vst [vmem:[%s734] sm:$0xff] %v5629
        %p5633 = scmp.lt.s32.totalorder %s35, 1
        %s5634 = scalar_select %p5633, %s35, 1
        %s5635 = smul.addr %s5634, 8
        %s5636 = scalar_lea.vmem %s18, %s5635
        // Predicated region
        $region133: #{opta_forward.1} parent=91 // pred_check
          %p5637 = pneg %p436
        $region134: #{opta_forward.1} parent=91 // pred_check_branch
          %5639 = sbr.rel (%p5637) target = $region136
        $region135: #{opta_forward.1} parent=91 // pred_region
          _
        $region136: #{opta_forward.1} parent=91 // pred_fallthru
          _
      $region92: #{opta_forward.1} parent=5 // pred_fallthru
        _
      %p5640 = scmp.le.s32.totalorder 2, %s30
      // Predicated region
      $region137: #{opta_forward.1} parent=5 // pred_check
        %p5641 = pneg %p5640
      $region138: #{opta_forward.1} parent=5 // pred_check_branch
        %5643 = sbr.rel (%p5641) target = $region140
      $region139: #{opta_forward.1} parent=5 // pred_region
        %s5644 = ssub.s32 %s30, 2
        // Predicated region
        $region141: #{opta_forward.1} parent=139 // pred_check
          %p5645 = pneg %p442
        $region142: #{opta_forward.1} parent=139 // pred_check_branch
          %5647 = sbr.rel (%p5645) target = $region144
        $region143: #{opta_forward.1} parent=139 // pred_region
          %p5648 = scmp.lt.s32.totalorder %s36, 1
          %s5649 = scalar_select %p5648, %s36, 1
          %s5650 = smul.addr %s5649, 8
          %s5651 = scalar_lea.vmem %s18, %s5650
        $region144: #{opta_forward.1} parent=139 // pred_fallthru
          _
      $region140: #{opta_forward.1} parent=5 // pred_fallthru
        _
    $region6: #{opta_forward.1} parent=1 // loop_footer
      %s34 = sadd.s32 1, %s30
    $region7: #{opta_forward.1} parent=1 // loop_footer_branch
      %29 = sbr.rel target = $region3
    $region8: #{opta_forward.1} parent=1 // loop_exit
      _
    %5652 = vsyncpa [#allocation3], 1
    %s5653 = scalar_lea.sflag [#allocation3], 1
    %5654 = vsyncpa %s5653, 1
    %5655 = vsyncpa [#allocation5], 1
    %5656 = vsyncpa [#allocation8], 1
    %5657 = vsyncpa [#allocation11], 1
    %5658 = vsyncpa [#allocation14], 1
    %5659 = vsyncpa [#allocation17], 1

</llo_original>
